<compile_context>
chip_gen: v7x
topology: tpu7x:2x2x1
jax: 0.10.0
libtpu: 0.0.40
codegen_flags: <defaults>
</compile_context>

<pallas_src>
import jax
import jax.numpy as jnp
from jax import lax
from jax.experimental import pallas as pl
from jax.experimental.pallas import tpu as pltpu

NUM_GROUPS = 32          # AdaptiveGroupNorm default
GN_EPS = 1e-5            # nn.GroupNorm default
VMEM_LIMIT = 48 * 1024 * 1024


def _pick_tile(S, target=2048):
    """Largest divisor of S that is <= target and a multiple of 8 (else S)."""
    if S <= target:
        return S
    for t in range(target, 7, -1):
        if S % t == 0 and t % 8 == 0:
            return t
    return S


# ---------------------------------------------------------------------------
# Pallas kernel 1: 3x3x3 conv (padding=1) with
#   - all 27 taps stacked into a single K=27*Cin matmul (in-VMEM im2col),
#   - optional fused per-channel affine + ReLU on the *input* (previous GN),
#   - fused GroupNorm statistics ([sum; sumsq] per channel) as a second,
#     depth-resident output.
# Input:  x (N, D, H, W, Cin) bf16 (unpadded; halos handled in-kernel)
# Output: y (N, D, H*W, Cout) bf16, stats (N, 2, Cout) fp32
# ---------------------------------------------------------------------------
def conv3d_3x3_fused(x, w, b, *, input_ss=None, out_dtype=jnp.bfloat16):
    N, D, H, W, Cin = x.shape
    Cout = w.shape[0]
    HW = H * W
    Hp, Wp = H + 2, W + 2
    K = 27 * Cin
    apply_in = input_ss is not None

    # torch layout (Cout, Cin, kd, kh, kw) -> (kd, kh, kw, Cin, Cout) -> (K, Cout)
    wf = jnp.transpose(w, (2, 3, 4, 1, 0)).reshape(K, Cout).astype(jnp.bfloat16)
    bf = b.reshape(1, Cout).astype(jnp.float32)

    def kernel(*refs):
        if apply_in:
            (ss_ref, xm_ref, x0_ref, xp_ref, w_ref, b_ref,
             y_ref, st_ref, pad_ref) = refs
        else:
            (xm_ref, x0_ref, xp_ref, w_ref, b_ref,
             y_ref, st_ref, pad_ref) = refs

        d = pl.program_id(1)
        nd = pl.num_programs(1)

        @pl.when(d == 0)
        def _init():
            # Halo'd scratch: interior is overwritten every step, the halo must
            # stay zero (= the conv's zero padding).  Zeroed once per batch
            # element so it is safe under N-parallel megacore partitioning.
            pad_ref[...] = jnp.zeros_like(pad_ref)
            st_ref[...] = jnp.zeros_like(st_ref)

        if apply_in:
            in_scale = ss_ref[0, 0:1, :].reshape(1, 1, Cin)
            in_shift = ss_ref[0, 1:2, :].reshape(1, 1, Cin)

        plane_refs = (xm_ref, x0_ref, xp_ref)   # depth taps d-1, d, d+1
        for slot in range(3):
            v = plane_refs[slot][0, 0].astype(jnp.float32)        # (H, W, Cin)
            if apply_in:
                # fused previous GroupNorm affine + ReLU (zero padding of the
                # *normalized* activation == zeros left in the scratch halo)
                v = jnp.maximum(v * in_scale + in_shift, 0.0)
            if slot == 0:
                v = v * (d > 0).astype(v.dtype)
            elif slot == 2:
                v = v * (d < nd - 1).astype(v.dtype)
            pad_ref[slot, 1:H + 1, 1:W + 1, :] = v.astype(jnp.bfloat16)

        # in-VMEM im2col: stack all 27 taps along the contraction axis
        cols = []
        for slot in range(3):
            for kh in range(3):
                for kw in range(3):
                    cols.append(
                        pad_ref[slot, kh:kh + H, kw:kw + W, :].reshape(HW, Cin))
        patch = jnp.concatenate(cols, axis=-1)                    # (HW, 27*Cin)

        acc = jnp.dot(patch, w_ref[...],
                      preferred_element_type=jnp.float32) + b_ref[...]

        # fused GroupNorm statistics, accumulated over the resident depth axis.
        # NOTE: E[x^2]-mean^2 form in fp32 (single pass); fine at these
        # magnitudes, switch to a two-pass scheme if the mean dominates.
        st_ref[...] += jnp.concatenate(
            [jnp.sum(acc, axis=0, keepdims=True),
             jnp.sum(acc * acc, axis=0, keepdims=True)], axis=0)[None]

        y_ref[...] = acc.reshape(1, 1, HW, Cout).astype(y_ref.dtype)

    in_specs = []
    args = []
    if apply_in:
        in_specs.append(pl.BlockSpec((1, 2, Cin), lambda n, d: (n, 0, 0)))
        args.append(input_ss)
    in_specs += [
        # depth taps d-1 / d / d+1: block size 1 along D so block index ==
        # element offset; clamp at the boundaries and zero-mask in the kernel.
        pl.BlockSpec((1, 1, H, W, Cin),
                     lambda n, d: (n, jnp.maximum(d - 1, 0), 0, 0, 0)),
        pl.BlockSpec((1, 1, H, W, Cin),
                     lambda n, d: (n, d, 0, 0, 0)),
        pl.BlockSpec((1, 1, H, W, Cin),
                     lambda n, d: (n, jnp.minimum(d + 1, D - 1), 0, 0, 0)),
        # constant-index weight block -> fetched once, stays resident
        pl.BlockSpec((K, Cout), lambda n, d: (0, 0)),
        pl.BlockSpec((1, Cout), lambda n, d: (0, 0)),
    ]
    args += [x, x, x, wf, bf]

    out_specs = [
        pl.BlockSpec((1, 1, HW, Cout), lambda n, d: (n, d, 0, 0)),
        # stats: constant block index along d -> VMEM-resident accumulator
        pl.BlockSpec((1, 2, Cout), lambda n, d: (n, 0, 0)),
    ]
    out_shape = (jax.ShapeDtypeStruct((N, D, HW, Cout), out_dtype),
                 jax.ShapeDtypeStruct((N, 2, Cout), jnp.float32))

    return pl.pallas_call(
        kernel,
        out_shape=out_shape,
        grid_spec=pltpu.PrefetchScalarGridSpec(
            num_scalar_prefetch=0,
            grid=(N, D),
            in_specs=in_specs,
            out_specs=out_specs,
            scratch_shapes=[pltpu.VMEM((3, Hp, Wp, Cin), jnp.bfloat16)],
        ),
        compiler_params=pltpu.CompilerParams(
            dimension_semantics=("parallel", "arbitrary"),
            vmem_limit_bytes=VMEM_LIMIT),
    )(*args)


# ---------------------------------------------------------------------------
# Tiny inter-kernel step (plain JAX, (N,2,C) only): turn the fused per-channel
# [sum; sumsq] into per-channel (scale, shift) of the fused GN+adaptive affine.
# ---------------------------------------------------------------------------
def _gn_scale_shift(stats, gamma, beta, num_groups, spatial):
    N, _, C = stats.shape
    gsz = C // num_groups
    cnt = jnp.float32(spatial * gsz)
    s = stats[:, 0, :].reshape(N, num_groups, gsz).sum(-1, keepdims=True)
    q = stats[:, 1, :].reshape(N, num_groups, gsz).sum(-1, keepdims=True)
    mean = s / cnt
    var = q / cnt - mean * mean
    inv = lax.rsqrt(var + GN_EPS)
    mean = jnp.broadcast_to(mean, (N, num_groups, gsz)).reshape(N, C)
    inv = jnp.broadcast_to(inv, (N, num_groups, gsz)).reshape(N, C)
    scale = inv * gamma.reshape(1, C)
    shift = beta.reshape(1, C) - mean * scale
    return jnp.stack([scale, shift], axis=1).astype(jnp.float32)   # (N, 2, C)


# ---------------------------------------------------------------------------
# Pallas kernel 2: lane-dense GN apply + fused residual 1x1x1 conv + ReLU.
# Operates on the folded (S/fold, fold*C) = (*, 128) layout.
#   out = relu(y*scale + shift + x @ Wr_blockdiag + br)
# ---------------------------------------------------------------------------
def gn_apply_residual(y, ss, xres, wres, bres, *, out_dtype=jnp.float32):
    N, S4, L = y.shape
    Lin = xres.shape[-1]
    ts = _pick_tile(S4)
    nt = S4 // ts

    def kernel(y_ref, ss_ref, x_ref, wr_ref, br_ref, o_ref):
        yv = y_ref[0].astype(jnp.float32)                          # (ts, L)
        out = yv * ss_ref[0, 0:1, :] + ss_ref[0, 1:2, :]
        res = jnp.dot(x_ref[0], wr_ref[...],
                      preferred_element_type=jnp.float32) + br_ref[...]
        o_ref[...] = jnp.maximum(out + res, 0.0)[None].astype(o_ref.dtype)

    return pl.pallas_call(
        kernel,
        out_shape=jax.ShapeDtypeStruct((N, S4, L), out_dtype),
        grid_spec=pltpu.PrefetchScalarGridSpec(
            num_scalar_prefetch=0,
            grid=(N, nt),
            in_specs=[
                pl.BlockSpec((1, ts, L), lambda n, s: (n, s, 0)),
                pl.BlockSpec((1, 2, L), lambda n, s: (n, 0, 0)),
                pl.BlockSpec((1, ts, Lin), lambda n, s: (n, s, 0)),
                pl.BlockSpec((Lin, L), lambda n, s: (0, 0)),
                pl.BlockSpec((1, L), lambda n, s: (0, 0)),
            ],
            out_specs=pl.BlockSpec((1, ts, L), lambda n, s: (n, s, 0)),
        ),
        compiler_params=pltpu.CompilerParams(
            dimension_semantics=("parallel", "parallel"),
            vmem_limit_bytes=VMEM_LIMIT),
    )(y, ss, xres, wres, bres)


# ---------------------------------------------------------------------------
# Full forward (matches ResBlock3D_Adaptive with upsample=False, Cin != Cout)
# ---------------------------------------------------------------------------
def resblock3d_adaptive_forward(x_ncdhw, p):
    N, Cin, D, H, W = x_ncdhw.shape
    Cout = p["conv1_w"].shape[0]
    S = D * H * W
    assert Cout % NUM_GROUPS == 0

    # GroupNorm affine fused with the adaptive affine
    gamma1 = p["gn1_w"] * p["ad1_w"]
    beta1 = p["gn1_b"] * p["ad1_w"] + p["ad1_b"]
    gamma2 = p["gn2_w"] * p["ad2_w"]
    beta2 = p["gn2_b"] * p["ad2_w"] + p["ad2_b"]

    xt = jnp.transpose(x_ncdhw, (0, 2, 3, 4, 1)).astype(jnp.bfloat16)  # NDHWC

    # conv1 (3x3x3, pad 1) + fused GN1 statistics
    y1, st1 = conv3d_3x3_fused(xt, p["conv1_w"], p["conv1_b"])
    ss1 = _gn_scale_shift(st1, gamma1, beta1, NUM_GROUPS, S)

    # conv2 with norm1+ReLU fused into its input path, + fused GN2 statistics
    y2, st2 = conv3d_3x3_fused(y1.reshape(N, D, H, W, Cout),
                               p["conv2_w"], p["conv2_b"], input_ss=ss1)
    ss2 = _gn_scale_shift(st2, gamma2, beta2, NUM_GROUPS, S)

    # norm2 apply + residual 1x1x1 conv + ReLU on a lane-dense folded layout
    fold = 1
    if Cout < 128 and 128 % Cout == 0 and S % (128 // Cout) == 0:
        fold = 128 // Cout
    wr = jnp.transpose(p["res_w"][:, :, 0, 0, 0], (1, 0))          # (Cin, Cout)
    wrf = jnp.kron(jnp.eye(fold, dtype=wr.dtype), wr).astype(jnp.bfloat16)
    brf = jnp.tile(p["res_b"].reshape(1, Cout).astype(jnp.float32), (1, fold))
    ss2f = jnp.tile(ss2, (1, 1, fold))
    yf = y2.reshape(N, S // fold, fold * Cout)     # free HBM reshapes
    xf = xt.reshape(N, S // fold, fold * Cin)

    out = gn_apply_residual(yf, ss2f, xf, wrf, brf, out_dtype=jnp.float32)

    # TODO(synk): F.interpolate trilinear upsample not implemented (module is
    # instantiated with upsample=False, so this path is never taken).
    out = out.reshape(N, D, H, W, Cout)
    return jnp.transpose(out, (0, 4, 1, 2, 3))          # back to NCDHW


# ---------------------------------------------------------------------------
# Pure-JAX fp32 reference (PyTorch semantics) for sanity checking
# ---------------------------------------------------------------------------
def reference_forward(x, p):
    def conv3d(x, w, b, pad):
        y = lax.conv_general_dilated(
            x, w, window_strides=(1, 1, 1), padding=[(pad, pad)] * 3,
            dimension_numbers=("NCDHW", "OIDHW", "NCDHW"))
        return y + b.reshape(1, -1, 1, 1, 1)

    def agn(x, gn_w, gn_b, ad_w, ad_b):
        N, C, D, H, W = x.shape
        xg = x.reshape(N, NUM_GROUPS, -1)
        mu = xg.mean(axis=-1, keepdims=True)
        var = ((xg - mu) ** 2).mean(axis=-1, keepdims=True)
        xn = ((xg - mu) / jnp.sqrt(var + GN_EPS)).reshape(N, C, D, H, W)
        xn = xn * gn_w.reshape(1, C, 1, 1, 1) + gn_b.reshape(1, C, 1, 1, 1)
        return xn * ad_w.reshape(1, C, 1, 1, 1) + ad_b.reshape(1, C, 1, 1, 1)

    out = conv3d(x, p["conv1_w"], p["conv1_b"], 1)
    out = jax.nn.relu(agn(out, p["gn1_w"], p["gn1_b"], p["ad1_w"], p["ad1_b"]))
    out = conv3d(out, p["conv2_w"], p["conv2_b"], 1)
    out = agn(out, p["gn2_w"], p["gn2_b"], p["ad2_w"], p["ad2_b"])
    res = conv3d(x, p["res_w"], p["res_b"], 0)
    return jax.nn.relu(out + res)


# ---------------------------------------------------------------------------
if __name__ == "__main__":
    key = jax.random.PRNGKey(0)
    ks = jax.random.split(key, 16)
    Cin, Cout = 8, 32              # Cout must be divisible by 32 (GroupNorm)
    N, D, H, W = 2, 4, 8, 8

    f32 = jnp.float32
    params = {
        "conv1_w": 0.05 * jax.random.normal(ks[0], (Cout, Cin, 3, 3, 3), f32),
        "conv1_b": 0.05 * jax.random.normal(ks[1], (Cout,), f32),
        "conv2_w": 0.05 * jax.random.normal(ks[2], (Cout, Cout, 3, 3, 3), f32),
        "conv2_b": 0.05 * jax.random.normal(ks[3], (Cout,), f32),
        "res_w":   0.05 * jax.random.normal(ks[4], (Cout, Cin, 1, 1, 1), f32),
        "res_b":   0.05 * jax.random.normal(ks[5], (Cout,), f32),
        "gn1_w": 1.0 + 0.1 * jax.random.normal(ks[6], (Cout,), f32),
        "gn1_b": 0.1 * jax.random.normal(ks[7], (Cout,), f32),
        "gn2_w": 1.0 + 0.1 * jax.random.normal(ks[8], (Cout,), f32),
        "gn2_b": 0.1 * jax.random.normal(ks[9], (Cout,), f32),
        "ad1_w": 1.0 + 0.1 * jax.random.normal(ks[10], (Cout,), f32),
        "ad1_b": 0.1 * jax.random.normal(ks[11], (Cout,), f32),
        "ad2_w": 1.0 + 0.1 * jax.random.normal(ks[12], (Cout,), f32),
        "ad2_b": 0.1 * jax.random.normal(ks[13], (Cout,), f32),
    }
    x = jax.random.normal(ks[14], (N, Cin, D, H, W), f32)

    fwd = jax.jit(resblock3d_adaptive_forward)
    out = jax.block_until_ready(fwd(x, params))
    assert out.shape == (N, Cout, D, H, W), out.shape

    ref = jax.block_until_ready(reference_forward(x, params))
    # Tolerance relaxed vs. fp32: MXU operands and inter-kernel activations
    # are bf16 (fp32 accumulation / fp32 GroupNorm statistics and affine).
    if not jnp.allclose(out, ref, atol=5e-2, rtol=5e-2):
        raise AssertionError(
            f"mismatch: max abs err {float(jnp.max(jnp.abs(out - ref)))}")

    print("KERNEL_OK")
</pallas_src>

<mosaic_0001>
module attributes {stable_mosaic.version = 11 : i64} {
  func.func @kernel(%arg0: i32, %arg1: i32, %arg2: memref<1x1x8x8x8xbf16, #tpu.memory_space<vmem>>, %arg3: memref<1x1x8x8x8xbf16, #tpu.memory_space<vmem>>, %arg4: memref<1x1x8x8x8xbf16, #tpu.memory_space<vmem>>, %arg5: memref<216x32xbf16, #tpu.memory_space<vmem>>, %arg6: memref<1x32xf32, #tpu.memory_space<vmem>>, %arg7: memref<1x1x64x32xbf16, #tpu.memory_space<vmem>>, %arg8: memref<1x2x32xf32, #tpu.memory_space<vmem>>, %arg9: memref<3x10x10x8xbf16, #tpu.memory_space<vmem>>) attributes {dimension_semantics = [#tpu.dimension_semantics<parallel>, #tpu.dimension_semantics<arbitrary>], iteration_bounds = array<i64: 2, 4>, scalar_prefetch = 0 : i64, scratch_operands = 1 : i64, tpu.core_type = #tpu.core_type<tc>, window_params = [{transform_indices = @transform_0, window_bounds = array<i64: 1, 1, 8, 8, 8>}, {transform_indices = @transform_1, window_bounds = array<i64: 1, 1, 8, 8, 8>}, {transform_indices = @transform_2, window_bounds = array<i64: 1, 1, 8, 8, 8>}, {pipeline_mode = #tpu.pipeline_mode<synchronous>, transform_indices = @transform_3, window_bounds = array<i64: 216, 32>}, {pipeline_mode = #tpu.pipeline_mode<synchronous>, transform_indices = @transform_4, window_bounds = array<i64: 1, 32>}, {transform_indices = @transform_5, window_bounds = array<i64: 1, 1, 64, 32>}, {transform_indices = @transform_6, window_bounds = array<i64: 1, 2, 32>}]} {
    %c0_i32 = arith.constant 0 : i32
    %0 = arith.cmpi eq, %arg1, %c0_i32 : i32
    %1 = arith.extui %0 : i1 to i32
    %c0_i32_0 = arith.constant 0 : i32
    %2 = arith.cmpi ne, %1, %c0_i32_0 : i32
    scf.if %2 {
      %cst_150 = arith.constant 0.000000e+00 : bf16
      %136 = vector.broadcast %cst_150 : bf16 to vector<3x10x10x8xbf16>
      %c0_151 = arith.constant 0 : index
      %c0_152 = arith.constant 0 : index
      %c0_153 = arith.constant 0 : index
      %c0_154 = arith.constant 0 : index
      %137 = vector.load %arg9[%c0_151, %c0_152, %c0_153, %c0_154] : memref<3x10x10x8xbf16, #tpu.memory_space<vmem>>, vector<3x10x10x8xbf16>
      tpu.vector_store %arg9[%c0_151, %c0_152, %c0_153, %c0_154], %136 {strides = array<i32>} : memref<3x10x10x8xbf16, #tpu.memory_space<vmem>>, vector<3x10x10x8xbf16>,
      %cst_155 = arith.constant 0.000000e+00 : f32
      %138 = vector.broadcast %cst_155 : f32 to vector<1x2x32xf32>
      %c0_156 = arith.constant 0 : index
      %c0_157 = arith.constant 0 : index
      %c0_158 = arith.constant 0 : index
      %139 = vector.load %arg8[%c0_156, %c0_157, %c0_158] : memref<1x2x32xf32, #tpu.memory_space<vmem>>, vector<1x2x32xf32>
      tpu.vector_store %arg8[%c0_156, %c0_157, %c0_158], %138 {strides = array<i32>} : memref<1x2x32xf32, #tpu.memory_space<vmem>>, vector<1x2x32xf32>,
    } else {
    }
    %c0 = arith.constant 0 : index
    %c0_1 = arith.constant 0 : index
    %c0_2 = arith.constant 0 : index
    %c0_3 = arith.constant 0 : index
    %c0_4 = arith.constant 0 : index
    %3 = vector.load %arg2[%c0, %c0_1, %c0_2, %c0_3, %c0_4] : memref<1x1x8x8x8xbf16, #tpu.memory_space<vmem>>, vector<1x1x8x8x8xbf16>
    %4 = vector.shape_cast %3 : vector<1x1x8x8x8xbf16> to vector<8x8x8xbf16>
    %5 = arith.extf %4 : vector<8x8x8xbf16> to vector<8x8x8xf32>
    %c0_i32_5 = arith.constant 0 : i32
    %6 = arith.cmpi sgt, %arg1, %c0_i32_5 : i32
    %7 = arith.extui %6 : i1 to i32
    %8 = arith.sitofp %7 : i32 to f32
    %9 = vector.broadcast %8 : f32 to vector<8x8x8xf32>
    %10 = arith.mulf %5, %9 : vector<8x8x8xf32>
    %11 = arith.truncf %10 : vector<8x8x8xf32> to vector<8x8x8xbf16>
    %c0_6 = arith.constant 0 : index
    %c1 = arith.constant 1 : index
    %c1_7 = arith.constant 1 : index
    %c0_8 = arith.constant 0 : index
    %12 = vector.load %arg9[%c0_6, %c1, %c1_7, %c0_8] : memref<3x10x10x8xbf16, #tpu.memory_space<vmem>>, vector<1x8x8x8xbf16>
    %13 = vector.shape_cast %12 : vector<1x8x8x8xbf16> to vector<8x8x8xbf16>
    %14 = vector.shape_cast %11 : vector<8x8x8xbf16> to vector<1x8x8x8xbf16>
    tpu.vector_store %arg9[%c0_6, %c1, %c1_7, %c0_8], %14 {strides = array<i32>} : memref<3x10x10x8xbf16, #tpu.memory_space<vmem>>, vector<1x8x8x8xbf16>,
    %c0_9 = arith.constant 0 : index
    %c0_10 = arith.constant 0 : index
    %c0_11 = arith.constant 0 : index
    %c0_12 = arith.constant 0 : index
    %c0_13 = arith.constant 0 : index
    %15 = vector.load %arg3[%c0_9, %c0_10, %c0_11, %c0_12, %c0_13] : memref<1x1x8x8x8xbf16, #tpu.memory_space<vmem>>, vector<1x1x8x8x8xbf16>
    %16 = vector.shape_cast %15 : vector<1x1x8x8x8xbf16> to vector<8x8x8xbf16>
    %17 = arith.extf %16 : vector<8x8x8xbf16> to vector<8x8x8xf32>
    %18 = arith.truncf %17 : vector<8x8x8xf32> to vector<8x8x8xbf16>
    %c1_14 = arith.constant 1 : index
    %c1_15 = arith.constant 1 : index
    %c1_16 = arith.constant 1 : index
    %c0_17 = arith.constant 0 : index
    %19 = vector.load %arg9[%c1_14, %c1_15, %c1_16, %c0_17] : memref<3x10x10x8xbf16, #tpu.memory_space<vmem>>, vector<1x8x8x8xbf16>
    %20 = vector.shape_cast %19 : vector<1x8x8x8xbf16> to vector<8x8x8xbf16>
    %21 = vector.shape_cast %18 : vector<8x8x8xbf16> to vector<1x8x8x8xbf16>
    tpu.vector_store %arg9[%c1_14, %c1_15, %c1_16, %c0_17], %21 {strides = array<i32>} : memref<3x10x10x8xbf16, #tpu.memory_space<vmem>>, vector<1x8x8x8xbf16>,
    %c0_18 = arith.constant 0 : index
    %c0_19 = arith.constant 0 : index
    %c0_20 = arith.constant 0 : index
    %c0_21 = arith.constant 0 : index
    %c0_22 = arith.constant 0 : index
    %22 = vector.load %arg4[%c0_18, %c0_19, %c0_20, %c0_21, %c0_22] : memref<1x1x8x8x8xbf16, #tpu.memory_space<vmem>>, vector<1x1x8x8x8xbf16>
    %23 = vector.shape_cast %22 : vector<1x1x8x8x8xbf16> to vector<8x8x8xbf16>
    %24 = arith.extf %23 : vector<8x8x8xbf16> to vector<8x8x8xf32>
    %c3_i32 = arith.constant 3 : i32
    %25 = arith.cmpi slt, %arg1, %c3_i32 : i32
    %26 = arith.extui %25 : i1 to i32
    %27 = arith.sitofp %26 : i32 to f32
    %28 = vector.broadcast %27 : f32 to vector<8x8x8xf32>
    %29 = arith.mulf %24, %28 : vector<8x8x8xf32>
    %30 = arith.truncf %29 : vector<8x8x8xf32> to vector<8x8x8xbf16>
    %c2 = arith.constant 2 : index
    %c1_23 = arith.constant 1 : index
    %c1_24 = arith.constant 1 : index
    %c0_25 = arith.constant 0 : index
    %31 = vector.load %arg9[%c2, %c1_23, %c1_24, %c0_25] : memref<3x10x10x8xbf16, #tpu.memory_space<vmem>>, vector<1x8x8x8xbf16>
    %32 = vector.shape_cast %31 : vector<1x8x8x8xbf16> to vector<8x8x8xbf16>
    %33 = vector.shape_cast %30 : vector<8x8x8xbf16> to vector<1x8x8x8xbf16>
    tpu.vector_store %arg9[%c2, %c1_23, %c1_24, %c0_25], %33 {strides = array<i32>} : memref<3x10x10x8xbf16, #tpu.memory_space<vmem>>, vector<1x8x8x8xbf16>,
    %c0_26 = arith.constant 0 : index
    %c0_27 = arith.constant 0 : index
    %c0_28 = arith.constant 0 : index
    %c0_29 = arith.constant 0 : index
    %34 = vector.load %arg9[%c0_26, %c0_27, %c0_28, %c0_29] : memref<3x10x10x8xbf16, #tpu.memory_space<vmem>>, vector<1x8x8x8xbf16>
    %35 = vector.shape_cast %34 : vector<1x8x8x8xbf16> to vector<8x8x8xbf16>
    %36 = vector.shape_cast %35 : vector<8x8x8xbf16> to vector<64x8xbf16>
    %c0_30 = arith.constant 0 : index
    %c0_31 = arith.constant 0 : index
    %c1_32 = arith.constant 1 : index
    %c0_33 = arith.constant 0 : index
    %37 = vector.load %arg9[%c0_30, %c0_31, %c1_32, %c0_33] : memref<3x10x10x8xbf16, #tpu.memory_space<vmem>>, vector<1x8x8x8xbf16>
    %38 = vector.shape_cast %37 : vector<1x8x8x8xbf16> to vector<8x8x8xbf16>
    %39 = vector.shape_cast %38 : vector<8x8x8xbf16> to vector<64x8xbf16>
    %c0_34 = arith.constant 0 : index
    %c0_35 = arith.constant 0 : index
    %c2_36 = arith.constant 2 : index
    %c0_37 = arith.constant 0 : index
    %40 = vector.load %arg9[%c0_34, %c0_35, %c2_36, %c0_37] : memref<3x10x10x8xbf16, #tpu.memory_space<vmem>>, vector<1x8x8x8xbf16>
    %41 = vector.shape_cast %40 : vector<1x8x8x8xbf16> to vector<8x8x8xbf16>
    %42 = vector.shape_cast %41 : vector<8x8x8xbf16> to vector<64x8xbf16>
    %c0_38 = arith.constant 0 : index
    %c1_39 = arith.constant 1 : index
    %c0_40 = arith.constant 0 : index
    %c0_41 = arith.constant 0 : index
    %43 = vector.load %arg9[%c0_38, %c1_39, %c0_40, %c0_41] : memref<3x10x10x8xbf16, #tpu.memory_space<vmem>>, vector<1x8x8x8xbf16>
    %44 = vector.shape_cast %43 : vector<1x8x8x8xbf16> to vector<8x8x8xbf16>
    %45 = vector.shape_cast %44 : vector<8x8x8xbf16> to vector<64x8xbf16>
    %c0_42 = arith.constant 0 : index
    %c1_43 = arith.constant 1 : index
    %c1_44 = arith.constant 1 : index
    %c0_45 = arith.constant 0 : index
    %46 = vector.load %arg9[%c0_42, %c1_43, %c1_44, %c0_45] : memref<3x10x10x8xbf16, #tpu.memory_space<vmem>>, vector<1x8x8x8xbf16>
    %47 = vector.shape_cast %46 : vector<1x8x8x8xbf16> to vector<8x8x8xbf16>
    %48 = vector.shape_cast %47 : vector<8x8x8xbf16> to vector<64x8xbf16>
    %c0_46 = arith.constant 0 : index
    %c1_47 = arith.constant 1 : index
    %c2_48 = arith.constant 2 : index
    %c0_49 = arith.constant 0 : index
    %49 = vector.load %arg9[%c0_46, %c1_47, %c2_48, %c0_49] : memref<3x10x10x8xbf16, #tpu.memory_space<vmem>>, vector<1x8x8x8xbf16>
    %50 = vector.shape_cast %49 : vector<1x8x8x8xbf16> to vector<8x8x8xbf16>
    %51 = vector.shape_cast %50 : vector<8x8x8xbf16> to vector<64x8xbf16>
    %c0_50 = arith.constant 0 : index
    %c2_51 = arith.constant 2 : index
    %c0_52 = arith.constant 0 : index
    %c0_53 = arith.constant 0 : index
    %52 = vector.load %arg9[%c0_50, %c2_51, %c0_52, %c0_53] : memref<3x10x10x8xbf16, #tpu.memory_space<vmem>>, vector<1x8x8x8xbf16>
    %53 = vector.shape_cast %52 : vector<1x8x8x8xbf16> to vector<8x8x8xbf16>
    %54 = vector.shape_cast %53 : vector<8x8x8xbf16> to vector<64x8xbf16>
    %c0_54 = arith.constant 0 : index
    %c2_55 = arith.constant 2 : index
    %c1_56 = arith.constant 1 : index
    %c0_57 = arith.constant 0 : index
    %55 = vector.load %arg9[%c0_54, %c2_55, %c1_56, %c0_57] : memref<3x10x10x8xbf16, #tpu.memory_space<vmem>>, vector<1x8x8x8xbf16>
    %56 = vector.shape_cast %55 : vector<1x8x8x8xbf16> to vector<8x8x8xbf16>
    %57 = vector.shape_cast %56 : vector<8x8x8xbf16> to vector<64x8xbf16>
    %c0_58 = arith.constant 0 : index
    %c2_59 = arith.constant 2 : index
    %c2_60 = arith.constant 2 : index
    %c0_61 = arith.constant 0 : index
    %58 = vector.load %arg9[%c0_58, %c2_59, %c2_60, %c0_61] : memref<3x10x10x8xbf16, #tpu.memory_space<vmem>>, vector<1x8x8x8xbf16>
    %59 = vector.shape_cast %58 : vector<1x8x8x8xbf16> to vector<8x8x8xbf16>
    %60 = vector.shape_cast %59 : vector<8x8x8xbf16> to vector<64x8xbf16>
    %c1_62 = arith.constant 1 : index
    %c0_63 = arith.constant 0 : index
    %c0_64 = arith.constant 0 : index
    %c0_65 = arith.constant 0 : index
    %61 = vector.load %arg9[%c1_62, %c0_63, %c0_64, %c0_65] : memref<3x10x10x8xbf16, #tpu.memory_space<vmem>>, vector<1x8x8x8xbf16>
    %62 = vector.shape_cast %61 : vector<1x8x8x8xbf16> to vector<8x8x8xbf16>
    %63 = vector.shape_cast %62 : vector<8x8x8xbf16> to vector<64x8xbf16>
    %c1_66 = arith.constant 1 : index
    %c0_67 = arith.constant 0 : index
    %c1_68 = arith.constant 1 : index
    %c0_69 = arith.constant 0 : index
    %64 = vector.load %arg9[%c1_66, %c0_67, %c1_68, %c0_69] : memref<3x10x10x8xbf16, #tpu.memory_space<vmem>>, vector<1x8x8x8xbf16>
    %65 = vector.shape_cast %64 : vector<1x8x8x8xbf16> to vector<8x8x8xbf16>
    %66 = vector.shape_cast %65 : vector<8x8x8xbf16> to vector<64x8xbf16>
    %c1_70 = arith.constant 1 : index
    %c0_71 = arith.constant 0 : index
    %c2_72 = arith.constant 2 : index
    %c0_73 = arith.constant 0 : index
    %67 = vector.load %arg9[%c1_70, %c0_71, %c2_72, %c0_73] : memref<3x10x10x8xbf16, #tpu.memory_space<vmem>>, vector<1x8x8x8xbf16>
    %68 = vector.shape_cast %67 : vector<1x8x8x8xbf16> to vector<8x8x8xbf16>
    %69 = vector.shape_cast %68 : vector<8x8x8xbf16> to vector<64x8xbf16>
    %c1_74 = arith.constant 1 : index
    %c1_75 = arith.constant 1 : index
    %c0_76 = arith.constant 0 : index
    %c0_77 = arith.constant 0 : index
    %70 = vector.load %arg9[%c1_74, %c1_75, %c0_76, %c0_77] : memref<3x10x10x8xbf16, #tpu.memory_space<vmem>>, vector<1x8x8x8xbf16>
    %71 = vector.shape_cast %70 : vector<1x8x8x8xbf16> to vector<8x8x8xbf16>
    %72 = vector.shape_cast %71 : vector<8x8x8xbf16> to vector<64x8xbf16>
    %c1_78 = arith.constant 1 : index
    %c1_79 = arith.constant 1 : index
    %c1_80 = arith.constant 1 : index
    %c0_81 = arith.constant 0 : index
    %73 = vector.load %arg9[%c1_78, %c1_79, %c1_80, %c0_81] : memref<3x10x10x8xbf16, #tpu.memory_space<vmem>>, vector<1x8x8x8xbf16>
    %74 = vector.shape_cast %73 : vector<1x8x8x8xbf16> to vector<8x8x8xbf16>
    %75 = vector.shape_cast %74 : vector<8x8x8xbf16> to vector<64x8xbf16>
    %c1_82 = arith.constant 1 : index
    %c1_83 = arith.constant 1 : index
    %c2_84 = arith.constant 2 : index
    %c0_85 = arith.constant 0 : index
    %76 = vector.load %arg9[%c1_82, %c1_83, %c2_84, %c0_85] : memref<3x10x10x8xbf16, #tpu.memory_space<vmem>>, vector<1x8x8x8xbf16>
    %77 = vector.shape_cast %76 : vector<1x8x8x8xbf16> to vector<8x8x8xbf16>
    %78 = vector.shape_cast %77 : vector<8x8x8xbf16> to vector<64x8xbf16>
    %c1_86 = arith.constant 1 : index
    %c2_87 = arith.constant 2 : index
    %c0_88 = arith.constant 0 : index
    %c0_89 = arith.constant 0 : index
    %79 = vector.load %arg9[%c1_86, %c2_87, %c0_88, %c0_89] : memref<3x10x10x8xbf16, #tpu.memory_space<vmem>>, vector<1x8x8x8xbf16>
    %80 = vector.shape_cast %79 : vector<1x8x8x8xbf16> to vector<8x8x8xbf16>
    %81 = vector.shape_cast %80 : vector<8x8x8xbf16> to vector<64x8xbf16>
    %c1_90 = arith.constant 1 : index
    %c2_91 = arith.constant 2 : index
    %c1_92 = arith.constant 1 : index
    %c0_93 = arith.constant 0 : index
    %82 = vector.load %arg9[%c1_90, %c2_91, %c1_92, %c0_93] : memref<3x10x10x8xbf16, #tpu.memory_space<vmem>>, vector<1x8x8x8xbf16>
    %83 = vector.shape_cast %82 : vector<1x8x8x8xbf16> to vector<8x8x8xbf16>
    %84 = vector.shape_cast %83 : vector<8x8x8xbf16> to vector<64x8xbf16>
    %c1_94 = arith.constant 1 : index
    %c2_95 = arith.constant 2 : index
    %c2_96 = arith.constant 2 : index
    %c0_97 = arith.constant 0 : index
    %85 = vector.load %arg9[%c1_94, %c2_95, %c2_96, %c0_97] : memref<3x10x10x8xbf16, #tpu.memory_space<vmem>>, vector<1x8x8x8xbf16>
    %86 = vector.shape_cast %85 : vector<1x8x8x8xbf16> to vector<8x8x8xbf16>
    %87 = vector.shape_cast %86 : vector<8x8x8xbf16> to vector<64x8xbf16>
    %c2_98 = arith.constant 2 : index
    %c0_99 = arith.constant 0 : index
    %c0_100 = arith.constant 0 : index
    %c0_101 = arith.constant 0 : index
    %88 = vector.load %arg9[%c2_98, %c0_99, %c0_100, %c0_101] : memref<3x10x10x8xbf16, #tpu.memory_space<vmem>>, vector<1x8x8x8xbf16>
    %89 = vector.shape_cast %88 : vector<1x8x8x8xbf16> to vector<8x8x8xbf16>
    %90 = vector.shape_cast %89 : vector<8x8x8xbf16> to vector<64x8xbf16>
    %c2_102 = arith.constant 2 : index
    %c0_103 = arith.constant 0 : index
    %c1_104 = arith.constant 1 : index
    %c0_105 = arith.constant 0 : index
    %91 = vector.load %arg9[%c2_102, %c0_103, %c1_104, %c0_105] : memref<3x10x10x8xbf16, #tpu.memory_space<vmem>>, vector<1x8x8x8xbf16>
    %92 = vector.shape_cast %91 : vector<1x8x8x8xbf16> to vector<8x8x8xbf16>
    %93 = vector.shape_cast %92 : vector<8x8x8xbf16> to vector<64x8xbf16>
    %c2_106 = arith.constant 2 : index
    %c0_107 = arith.constant 0 : index
    %c2_108 = arith.constant 2 : index
    %c0_109 = arith.constant 0 : index
    %94 = vector.load %arg9[%c2_106, %c0_107, %c2_108, %c0_109] : memref<3x10x10x8xbf16, #tpu.memory_space<vmem>>, vector<1x8x8x8xbf16>
    %95 = vector.shape_cast %94 : vector<1x8x8x8xbf16> to vector<8x8x8xbf16>
    %96 = vector.shape_cast %95 : vector<8x8x8xbf16> to vector<64x8xbf16>
    %c2_110 = arith.constant 2 : index
    %c1_111 = arith.constant 1 : index
    %c0_112 = arith.constant 0 : index
    %c0_113 = arith.constant 0 : index
    %97 = vector.load %arg9[%c2_110, %c1_111, %c0_112, %c0_113] : memref<3x10x10x8xbf16, #tpu.memory_space<vmem>>, vector<1x8x8x8xbf16>
    %98 = vector.shape_cast %97 : vector<1x8x8x8xbf16> to vector<8x8x8xbf16>
    %99 = vector.shape_cast %98 : vector<8x8x8xbf16> to vector<64x8xbf16>
    %c2_114 = arith.constant 2 : index
    %c1_115 = arith.constant 1 : index
    %c1_116 = arith.constant 1 : index
    %c0_117 = arith.constant 0 : index
    %100 = vector.load %arg9[%c2_114, %c1_115, %c1_116, %c0_117] : memref<3x10x10x8xbf16, #tpu.memory_space<vmem>>, vector<1x8x8x8xbf16>
    %101 = vector.shape_cast %100 : vector<1x8x8x8xbf16> to vector<8x8x8xbf16>
    %102 = vector.shape_cast %101 : vector<8x8x8xbf16> to vector<64x8xbf16>
    %c2_118 = arith.constant 2 : index
    %c1_119 = arith.constant 1 : index
    %c2_120 = arith.constant 2 : index
    %c0_121 = arith.constant 0 : index
    %103 = vector.load %arg9[%c2_118, %c1_119, %c2_120, %c0_121] : memref<3x10x10x8xbf16, #tpu.memory_space<vmem>>, vector<1x8x8x8xbf16>
    %104 = vector.shape_cast %103 : vector<1x8x8x8xbf16> to vector<8x8x8xbf16>
    %105 = vector.shape_cast %104 : vector<8x8x8xbf16> to vector<64x8xbf16>
    %c2_122 = arith.constant 2 : index
    %c2_123 = arith.constant 2 : index
    %c0_124 = arith.constant 0 : index
    %c0_125 = arith.constant 0 : index
    %106 = vector.load %arg9[%c2_122, %c2_123, %c0_124, %c0_125] : memref<3x10x10x8xbf16, #tpu.memory_space<vmem>>, vector<1x8x8x8xbf16>
    %107 = vector.shape_cast %106 : vector<1x8x8x8xbf16> to vector<8x8x8xbf16>
    %108 = vector.shape_cast %107 : vector<8x8x8xbf16> to vector<64x8xbf16>
    %c2_126 = arith.constant 2 : index
    %c2_127 = arith.constant 2 : index
    %c1_128 = arith.constant 1 : index
    %c0_129 = arith.constant 0 : index
    %109 = vector.load %arg9[%c2_126, %c2_127, %c1_128, %c0_129] : memref<3x10x10x8xbf16, #tpu.memory_space<vmem>>, vector<1x8x8x8xbf16>
    %110 = vector.shape_cast %109 : vector<1x8x8x8xbf16> to vector<8x8x8xbf16>
    %111 = vector.shape_cast %110 : vector<8x8x8xbf16> to vector<64x8xbf16>
    %c2_130 = arith.constant 2 : index
    %c2_131 = arith.constant 2 : index
    %c2_132 = arith.constant 2 : index
    %c0_133 = arith.constant 0 : index
    %112 = vector.load %arg9[%c2_130, %c2_131, %c2_132, %c0_133] : memref<3x10x10x8xbf16, #tpu.memory_space<vmem>>, vector<1x8x8x8xbf16>
    %113 = vector.shape_cast %112 : vector<1x8x8x8xbf16> to vector<8x8x8xbf16>
    %114 = vector.shape_cast %113 : vector<8x8x8xbf16> to vector<64x8xbf16>
    %115 = tpu.concatenate %36, %39, %42, %45, %48, %51, %54, %57, %60, %63, %66, %69, %72, %75, %78, %81 in 1 : vector<64x8xbf16>, vector<64x8xbf16>, vector<64x8xbf16>, vector<64x8xbf16>, vector<64x8xbf16>, vector<64x8xbf16>, vector<64x8xbf16>, vector<64x8xbf16>, vector<64x8xbf16>, vector<64x8xbf16>, vector<64x8xbf16>, vector<64x8xbf16>, vector<64x8xbf16>, vector<64x8xbf16>, vector<64x8xbf16>, vector<64x8xbf16> -> vector<64x128xbf16>
    %116 = tpu.concatenate %84, %87, %90, %93, %96, %99, %102, %105, %108, %111, %114 in 1 : vector<64x8xbf16>, vector<64x8xbf16>, vector<64x8xbf16>, vector<64x8xbf16>, vector<64x8xbf16>, vector<64x8xbf16>, vector<64x8xbf16>, vector<64x8xbf16>, vector<64x8xbf16>, vector<64x8xbf16>, vector<64x8xbf16> -> vector<64x88xbf16>
    %117 = tpu.concatenate %115, %116 in 1 : vector<64x128xbf16>, vector<64x88xbf16> -> vector<64x216xbf16>
    %c0_134 = arith.constant 0 : index
    %c0_135 = arith.constant 0 : index
    %118 = vector.load %arg5[%c0_134, %c0_135] : memref<216x32xbf16, #tpu.memory_space<vmem>>, vector<216x32xbf16>
    %cst = arith.constant dense<0.000000e+00> : vector<64x32xf32>
    %119 = tpu.matmul %117, %118, %cst {dimension_numbers = #tpu.dot_dimension_numbers<[1], [0], [0], [1], [0, 0, 1, 1], [], []>} : vector<64x216xbf16>, vector<216x32xbf16>, vector<64x32xf32> -> vector<64x32xf32>
    %c0_136 = arith.constant 0 : index
    %c0_137 = arith.constant 0 : index
    %120 = vector.load %arg6[%c0_136, %c0_137] : memref<1x32xf32, #tpu.memory_space<vmem>>, vector<1x32xf32>
    %121 = vector.broadcast %120 : vector<1x32xf32> to vector<64x32xf32>
    %122 = arith.addf %119, %121 : vector<64x32xf32>
    %c0_138 = arith.constant 0 : index
    %c0_139 = arith.constant 0 : index
    %c0_140 = arith.constant 0 : index
    %123 = vector.load %arg8[%c0_138, %c0_139, %c0_140] : memref<1x2x32xf32, #tpu.memory_space<vmem>>, vector<1x2x32xf32>
    %cst_141 = arith.constant dense<0.000000e+00> : vector<32xf32>
    %124 = vector.multi_reduction <add>, %122, %cst_141 [0] : vector<64x32xf32> to vector<32xf32>
    %125 = vector.shape_cast %124 : vector<32xf32> to vector<1x32xf32>
    %126 = arith.mulf %122, %122 : vector<64x32xf32>
    %cst_142 = arith.constant dense<0.000000e+00> : vector<32xf32>
    %127 = vector.multi_reduction <add>, %126, %cst_142 [0] : vector<64x32xf32> to vector<32xf32>
    %128 = vector.shape_cast %127 : vector<32xf32> to vector<1x32xf32>
    %129 = tpu.concatenate %125, %128 in 0 : vector<1x32xf32>, vector<1x32xf32> -> vector<2x32xf32>
    %130 = vector.shape_cast %129 : vector<2x32xf32> to vector<1x2x32xf32>
    %131 = arith.addf %123, %130 : vector<1x2x32xf32>
    %c0_143 = arith.constant 0 : index
    %c0_144 = arith.constant 0 : index
    %c0_145 = arith.constant 0 : index
    %132 = vector.load %arg8[%c0_143, %c0_144, %c0_145] : memref<1x2x32xf32, #tpu.memory_space<vmem>>, vector<1x2x32xf32>
    tpu.vector_store %arg8[%c0_143, %c0_144, %c0_145], %131 {strides = array<i32>} : memref<1x2x32xf32, #tpu.memory_space<vmem>>, vector<1x2x32xf32>,
    %133 = vector.shape_cast %122 : vector<64x32xf32> to vector<1x1x64x32xf32>
    %134 = arith.truncf %133 : vector<1x1x64x32xf32> to vector<1x1x64x32xbf16>
    %c0_146 = arith.constant 0 : index
    %c0_147 = arith.constant 0 : index
    %c0_148 = arith.constant 0 : index
    %c0_149 = arith.constant 0 : index
    %135 = vector.load %arg7[%c0_146, %c0_147, %c0_148, %c0_149] : memref<1x1x64x32xbf16, #tpu.memory_space<vmem>>, vector<1x1x64x32xbf16>
    tpu.vector_store %arg7[%c0_146, %c0_147, %c0_148, %c0_149], %134 {strides = array<i32>} : memref<1x1x64x32xbf16, #tpu.memory_space<vmem>>, vector<1x1x64x32xbf16>,
    return
  }
  func.func @transform_0(%arg0: i32, %arg1: i32) -> (i32, i32, i32, i32, i32) {
    %c1_i32 = arith.constant 1 : i32
    %0 = arith.subi %arg1, %c1_i32 : i32
    %c0_i32 = arith.constant 0 : i32
    %1 = arith.maxsi %0, %c0_i32 : i32
    %c0_i32_0 = arith.constant 0 : i32
    %c0_i32_1 = arith.constant 0 : i32
    %c0_i32_2 = arith.constant 0 : i32
    %c0_i32_3 = arith.constant 0 : i32
    return %arg0, %1, %c0_i32_0, %c0_i32_1, %c0_i32_2 : i32, i32, i32, i32, i32
  }
  func.func @transform_1(%arg0: i32, %arg1: i32) -> (i32, i32, i32, i32, i32) {
    %c0_i32 = arith.constant 0 : i32
    %c0_i32_0 = arith.constant 0 : i32
    %c0_i32_1 = arith.constant 0 : i32
    %c0_i32_2 = arith.constant 0 : i32
    return %arg0, %arg1, %c0_i32, %c0_i32_0, %c0_i32_1 : i32, i32, i32, i32, i32
  }
  func.func @transform_2(%arg0: i32, %arg1: i32) -> (i32, i32, i32, i32, i32) {
    %c1_i32 = arith.constant 1 : i32
    %0 = arith.addi %arg1, %c1_i32 : i32
    %c3_i32 = arith.constant 3 : i32
    %1 = arith.minsi %0, %c3_i32 : i32
    %c0_i32 = arith.constant 0 : i32
    %c0_i32_0 = arith.constant 0 : i32
    %c0_i32_1 = arith.constant 0 : i32
    %c0_i32_2 = arith.constant 0 : i32
    return %arg0, %1, %c0_i32, %c0_i32_0, %c0_i32_1 : i32, i32, i32, i32, i32
  }
  func.func @transform_3(%arg0: i32, %arg1: i32) -> (i32, i32) {
    %c0_i32 = arith.constant 0 : i32
    %c0_i32_0 = arith.constant 0 : i32
    %c0_i32_1 = arith.constant 0 : i32
    return %c0_i32, %c0_i32_0 : i32, i32
  }
  func.func @transform_4(%arg0: i32, %arg1: i32) -> (i32, i32) {
    %c0_i32 = arith.constant 0 : i32
    %c0_i32_0 = arith.constant 0 : i32
    %c0_i32_1 = arith.constant 0 : i32
    return %c0_i32, %c0_i32_0 : i32, i32
  }
  func.func @transform_5(%arg0: i32, %arg1: i32) -> (i32, i32, i32, i32) {
    %c0_i32 = arith.constant 0 : i32
    %c0_i32_0 = arith.constant 0 : i32
    %c0_i32_1 = arith.constant 0 : i32
    return %arg0, %arg1, %c0_i32, %c0_i32_0 : i32, i32, i32, i32
  }
  func.func @transform_6(%arg0: i32, %arg1: i32) -> (i32, i32, i32) {
    %c0_i32 = arith.constant 0 : i32
    %c0_i32_0 = arith.constant 0 : i32
    %c0_i32_1 = arith.constant 0 : i32
    return %arg0, %c0_i32, %c0_i32_0 : i32, i32, i32
  }
}

module attributes {stable_mosaic.version = 11 : i64} {
  func.func @kernel(%arg0: i32, %arg1: i32, %arg2: memref<1x2x32xf32, #tpu.memory_space<vmem>>, %arg3: memref<1x1x8x8x32xbf16, #tpu.memory_space<vmem>>, %arg4: memref<1x1x8x8x32xbf16, #tpu.memory_space<vmem>>, %arg5: memref<1x1x8x8x32xbf16, #tpu.memory_space<vmem>>, %arg6: memref<864x32xbf16, #tpu.memory_space<vmem>>, %arg7: memref<1x32xf32, #tpu.memory_space<vmem>>, %arg8: memref<1x1x64x32xbf16, #tpu.memory_space<vmem>>, %arg9: memref<1x2x32xf32, #tpu.memory_space<vmem>>, %arg10: memref<3x10x10x32xbf16, #tpu.memory_space<vmem>>) attributes {dimension_semantics = [#tpu.dimension_semantics<parallel>, #tpu.dimension_semantics<arbitrary>], iteration_bounds = array<i64: 2, 4>, scalar_prefetch = 0 : i64, scratch_operands = 1 : i64, tpu.core_type = #tpu.core_type<tc>, window_params = [{transform_indices = @transform_0, window_bounds = array<i64: 1, 2, 32>}, {transform_indices = @transform_1, window_bounds = array<i64: 1, 1, 8, 8, 32>}, {transform_indices = @transform_2, window_bounds = array<i64: 1, 1, 8, 8, 32>}, {transform_indices = @transform_3, window_bounds = array<i64: 1, 1, 8, 8, 32>}, {pipeline_mode = #tpu.pipeline_mode<synchronous>, transform_indices = @transform_4, window_bounds = array<i64: 864, 32>}, {pipeline_mode = #tpu.pipeline_mode<synchronous>, transform_indices = @transform_5, window_bounds = array<i64: 1, 32>}, {transform_indices = @transform_6, window_bounds = array<i64: 1, 1, 64, 32>}, {transform_indices = @transform_7, window_bounds = array<i64: 1, 2, 32>}]} {
    %c0_i32 = arith.constant 0 : i32
    %0 = arith.cmpi eq, %arg1, %c0_i32 : i32
    %1 = arith.extui %0 : i1 to i32
    %c0_i32_0 = arith.constant 0 : i32
    %2 = arith.cmpi ne, %1, %c0_i32_0 : i32
    scf.if %2 {
      %cst_159 = arith.constant 0.000000e+00 : bf16
      %160 = vector.broadcast %cst_159 : bf16 to vector<3x10x10x32xbf16>
      %c0_160 = arith.constant 0 : index
      %c0_161 = arith.constant 0 : index
      %c0_162 = arith.constant 0 : index
      %c0_163 = arith.constant 0 : index
      %161 = vector.load %arg10[%c0_160, %c0_161, %c0_162, %c0_163] : memref<3x10x10x32xbf16, #tpu.memory_space<vmem>>, vector<3x10x10x32xbf16>
      tpu.vector_store %arg10[%c0_160, %c0_161, %c0_162, %c0_163], %160 {strides = array<i32>} : memref<3x10x10x32xbf16, #tpu.memory_space<vmem>>, vector<3x10x10x32xbf16>,
      %cst_164 = arith.constant 0.000000e+00 : f32
      %162 = vector.broadcast %cst_164 : f32 to vector<1x2x32xf32>
      %c0_165 = arith.constant 0 : index
      %c0_166 = arith.constant 0 : index
      %c0_167 = arith.constant 0 : index
      %163 = vector.load %arg9[%c0_165, %c0_166, %c0_167] : memref<1x2x32xf32, #tpu.memory_space<vmem>>, vector<1x2x32xf32>
      tpu.vector_store %arg9[%c0_165, %c0_166, %c0_167], %162 {strides = array<i32>} : memref<1x2x32xf32, #tpu.memory_space<vmem>>, vector<1x2x32xf32>,
    } else {
    }
    %c0 = arith.constant 0 : index
    %c0_1 = arith.constant 0 : index
    %c0_2 = arith.constant 0 : index
    %3 = vector.load %arg2[%c0, %c0_1, %c0_2] : memref<1x2x32xf32, #tpu.memory_space<vmem>>, vector<1x1x32xf32>
    %4 = vector.shape_cast %3 : vector<1x1x32xf32> to vector<1x32xf32>
    %5 = vector.shape_cast %4 : vector<1x32xf32> to vector<1x1x32xf32>
    %c0_3 = arith.constant 0 : index
    %c1 = arith.constant 1 : index
    %c0_4 = arith.constant 0 : index
    %6 = vector.load %arg2[%c0_3, %c1, %c0_4] : memref<1x2x32xf32, #tpu.memory_space<vmem>>, vector<1x1x32xf32>
    %7 = vector.shape_cast %6 : vector<1x1x32xf32> to vector<1x32xf32>
    %8 = vector.shape_cast %7 : vector<1x32xf32> to vector<1x1x32xf32>
    %c0_5 = arith.constant 0 : index
    %c0_6 = arith.constant 0 : index
    %c0_7 = arith.constant 0 : index
    %c0_8 = arith.constant 0 : index
    %c0_9 = arith.constant 0 : index
    %9 = vector.load %arg3[%c0_5, %c0_6, %c0_7, %c0_8, %c0_9] : memref<1x1x8x8x32xbf16, #tpu.memory_space<vmem>>, vector<1x1x8x8x32xbf16>
    %10 = vector.shape_cast %9 : vector<1x1x8x8x32xbf16> to vector<8x8x32xbf16>
    %11 = arith.extf %10 : vector<8x8x32xbf16> to vector<8x8x32xf32>
    %12 = vector.broadcast %5 : vector<1x1x32xf32> to vector<8x8x32xf32>
    %13 = arith.mulf %11, %12 : vector<8x8x32xf32>
    %14 = vector.broadcast %8 : vector<1x1x32xf32> to vector<8x8x32xf32>
    %15 = arith.addf %13, %14 : vector<8x8x32xf32>
    %cst = arith.constant 0.000000e+00 : f32
    %16 = vector.broadcast %cst : f32 to vector<8x8x32xf32>
    %17 = arith.maximumf %15, %16 : vector<8x8x32xf32>
    %c0_i32_10 = arith.constant 0 : i32
    %18 = arith.cmpi sgt, %arg1, %c0_i32_10 : i32
    %19 = arith.extui %18 : i1 to i32
    %20 = arith.sitofp %19 : i32 to f32
    %21 = vector.broadcast %20 : f32 to vector<8x8x32xf32>
    %22 = arith.mulf %17, %21 : vector<8x8x32xf32>
    %23 = arith.truncf %22 : vector<8x8x32xf32> to vector<8x8x32xbf16>
    %c0_11 = arith.constant 0 : index
    %c1_12 = arith.constant 1 : index
    %c1_13 = arith.constant 1 : index
    %c0_14 = arith.constant 0 : index
    %24 = vector.load %arg10[%c0_11, %c1_12, %c1_13, %c0_14] : memref<3x10x10x32xbf16, #tpu.memory_space<vmem>>, vector<1x8x8x32xbf16>
    %25 = vector.shape_cast %24 : vector<1x8x8x32xbf16> to vector<8x8x32xbf16>
    %26 = vector.shape_cast %23 : vector<8x8x32xbf16> to vector<1x8x8x32xbf16>
    tpu.vector_store %arg10[%c0_11, %c1_12, %c1_13, %c0_14], %26 {strides = array<i32>} : memref<3x10x10x32xbf16, #tpu.memory_space<vmem>>, vector<1x8x8x32xbf16>,
    %c0_15 = arith.constant 0 : index
    %c0_16 = arith.constant 0 : index
    %c0_17 = arith.constant 0 : index
    %c0_18 = arith.constant 0 : index
    %c0_19 = arith.constant 0 : index
    %27 = vector.load %arg4[%c0_15, %c0_16, %c0_17, %c0_18, %c0_19] : memref<1x1x8x8x32xbf16, #tpu.memory_space<vmem>>, vector<1x1x8x8x32xbf16>
    %28 = vector.shape_cast %27 : vector<1x1x8x8x32xbf16> to vector<8x8x32xbf16>
    %29 = arith.extf %28 : vector<8x8x32xbf16> to vector<8x8x32xf32>
    %30 = vector.broadcast %5 : vector<1x1x32xf32> to vector<8x8x32xf32>
    %31 = arith.mulf %29, %30 : vector<8x8x32xf32>
    %32 = vector.broadcast %8 : vector<1x1x32xf32> to vector<8x8x32xf32>
    %33 = arith.addf %31, %32 : vector<8x8x32xf32>
    %cst_20 = arith.constant 0.000000e+00 : f32
    %34 = vector.broadcast %cst_20 : f32 to vector<8x8x32xf32>
    %35 = arith.maximumf %33, %34 : vector<8x8x32xf32>
    %36 = arith.truncf %35 : vector<8x8x32xf32> to vector<8x8x32xbf16>
    %c1_21 = arith.constant 1 : index
    %c1_22 = arith.constant 1 : index
    %c1_23 = arith.constant 1 : index
    %c0_24 = arith.constant 0 : index
    %37 = vector.load %arg10[%c1_21, %c1_22, %c1_23, %c0_24] : memref<3x10x10x32xbf16, #tpu.memory_space<vmem>>, vector<1x8x8x32xbf16>
    %38 = vector.shape_cast %37 : vector<1x8x8x32xbf16> to vector<8x8x32xbf16>
    %39 = vector.shape_cast %36 : vector<8x8x32xbf16> to vector<1x8x8x32xbf16>
    tpu.vector_store %arg10[%c1_21, %c1_22, %c1_23, %c0_24], %39 {strides = array<i32>} : memref<3x10x10x32xbf16, #tpu.memory_space<vmem>>, vector<1x8x8x32xbf16>,
    %c0_25 = arith.constant 0 : index
    %c0_26 = arith.constant 0 : index
    %c0_27 = arith.constant 0 : index
    %c0_28 = arith.constant 0 : index
    %c0_29 = arith.constant 0 : index
    %40 = vector.load %arg5[%c0_25, %c0_26, %c0_27, %c0_28, %c0_29] : memref<1x1x8x8x32xbf16, #tpu.memory_space<vmem>>, vector<1x1x8x8x32xbf16>
    %41 = vector.shape_cast %40 : vector<1x1x8x8x32xbf16> to vector<8x8x32xbf16>
    %42 = arith.extf %41 : vector<8x8x32xbf16> to vector<8x8x32xf32>
    %43 = vector.broadcast %5 : vector<1x1x32xf32> to vector<8x8x32xf32>
    %44 = arith.mulf %42, %43 : vector<8x8x32xf32>
    %45 = vector.broadcast %8 : vector<1x1x32xf32> to vector<8x8x32xf32>
    %46 = arith.addf %44, %45 : vector<8x8x32xf32>
    %cst_30 = arith.constant 0.000000e+00 : f32
    %47 = vector.broadcast %cst_30 : f32 to vector<8x8x32xf32>
    %48 = arith.maximumf %46, %47 : vector<8x8x32xf32>
    %c3_i32 = arith.constant 3 : i32
    %49 = arith.cmpi slt, %arg1, %c3_i32 : i32
    %50 = arith.extui %49 : i1 to i32
    %51 = arith.sitofp %50 : i32 to f32
    %52 = vector.broadcast %51 : f32 to vector<8x8x32xf32>
    %53 = arith.mulf %48, %52 : vector<8x8x32xf32>
    %54 = arith.truncf %53 : vector<8x8x32xf32> to vector<8x8x32xbf16>
    %c2 = arith.constant 2 : index
    %c1_31 = arith.constant 1 : index
    %c1_32 = arith.constant 1 : index
    %c0_33 = arith.constant 0 : index
    %55 = vector.load %arg10[%c2, %c1_31, %c1_32, %c0_33] : memref<3x10x10x32xbf16, #tpu.memory_space<vmem>>, vector<1x8x8x32xbf16>
    %56 = vector.shape_cast %55 : vector<1x8x8x32xbf16> to vector<8x8x32xbf16>
    %57 = vector.shape_cast %54 : vector<8x8x32xbf16> to vector<1x8x8x32xbf16>
    tpu.vector_store %arg10[%c2, %c1_31, %c1_32, %c0_33], %57 {strides = array<i32>} : memref<3x10x10x32xbf16, #tpu.memory_space<vmem>>, vector<1x8x8x32xbf16>,
    %c0_34 = arith.constant 0 : index
    %c0_35 = arith.constant 0 : index
    %c0_36 = arith.constant 0 : index
    %c0_37 = arith.constant 0 : index
    %58 = vector.load %arg10[%c0_34, %c0_35, %c0_36, %c0_37] : memref<3x10x10x32xbf16, #tpu.memory_space<vmem>>, vector<1x8x8x32xbf16>
    %59 = vector.shape_cast %58 : vector<1x8x8x32xbf16> to vector<8x8x32xbf16>
    %60 = vector.shape_cast %59 : vector<8x8x32xbf16> to vector<64x32xbf16>
    %c0_38 = arith.constant 0 : index
    %c0_39 = arith.constant 0 : index
    %c1_40 = arith.constant 1 : index
    %c0_41 = arith.constant 0 : index
    %61 = vector.load %arg10[%c0_38, %c0_39, %c1_40, %c0_41] : memref<3x10x10x32xbf16, #tpu.memory_space<vmem>>, vector<1x8x8x32xbf16>
    %62 = vector.shape_cast %61 : vector<1x8x8x32xbf16> to vector<8x8x32xbf16>
    %63 = vector.shape_cast %62 : vector<8x8x32xbf16> to vector<64x32xbf16>
    %c0_42 = arith.constant 0 : index
    %c0_43 = arith.constant 0 : index
    %c2_44 = arith.constant 2 : index
    %c0_45 = arith.constant 0 : index
    %64 = vector.load %arg10[%c0_42, %c0_43, %c2_44, %c0_45] : memref<3x10x10x32xbf16, #tpu.memory_space<vmem>>, vector<1x8x8x32xbf16>
    %65 = vector.shape_cast %64 : vector<1x8x8x32xbf16> to vector<8x8x32xbf16>
    %66 = vector.shape_cast %65 : vector<8x8x32xbf16> to vector<64x32xbf16>
    %c0_46 = arith.constant 0 : index
    %c1_47 = arith.constant 1 : index
    %c0_48 = arith.constant 0 : index
    %c0_49 = arith.constant 0 : index
    %67 = vector.load %arg10[%c0_46, %c1_47, %c0_48, %c0_49] : memref<3x10x10x32xbf16, #tpu.memory_space<vmem>>, vector<1x8x8x32xbf16>
    %68 = vector.shape_cast %67 : vector<1x8x8x32xbf16> to vector<8x8x32xbf16>
    %69 = vector.shape_cast %68 : vector<8x8x32xbf16> to vector<64x32xbf16>
    %c0_50 = arith.constant 0 : index
    %c1_51 = arith.constant 1 : index
    %c1_52 = arith.constant 1 : index
    %c0_53 = arith.constant 0 : index
    %70 = vector.load %arg10[%c0_50, %c1_51, %c1_52, %c0_53] : memref<3x10x10x32xbf16, #tpu.memory_space<vmem>>, vector<1x8x8x32xbf16>
    %71 = vector.shape_cast %70 : vector<1x8x8x32xbf16> to vector<8x8x32xbf16>
    %72 = vector.shape_cast %71 : vector<8x8x32xbf16> to vector<64x32xbf16>
    %c0_54 = arith.constant 0 : index
    %c1_55 = arith.constant 1 : index
    %c2_56 = arith.constant 2 : index
    %c0_57 = arith.constant 0 : index
    %73 = vector.load %arg10[%c0_54, %c1_55, %c2_56, %c0_57] : memref<3x10x10x32xbf16, #tpu.memory_space<vmem>>, vector<1x8x8x32xbf16>
    %74 = vector.shape_cast %73 : vector<1x8x8x32xbf16> to vector<8x8x32xbf16>
    %75 = vector.shape_cast %74 : vector<8x8x32xbf16> to vector<64x32xbf16>
    %c0_58 = arith.constant 0 : index
    %c2_59 = arith.constant 2 : index
    %c0_60 = arith.constant 0 : index
    %c0_61 = arith.constant 0 : index
    %76 = vector.load %arg10[%c0_58, %c2_59, %c0_60, %c0_61] : memref<3x10x10x32xbf16, #tpu.memory_space<vmem>>, vector<1x8x8x32xbf16>
    %77 = vector.shape_cast %76 : vector<1x8x8x32xbf16> to vector<8x8x32xbf16>
    %78 = vector.shape_cast %77 : vector<8x8x32xbf16> to vector<64x32xbf16>
    %c0_62 = arith.constant 0 : index
    %c2_63 = arith.constant 2 : index
    %c1_64 = arith.constant 1 : index
    %c0_65 = arith.constant 0 : index
    %79 = vector.load %arg10[%c0_62, %c2_63, %c1_64, %c0_65] : memref<3x10x10x32xbf16, #tpu.memory_space<vmem>>, vector<1x8x8x32xbf16>
    %80 = vector.shape_cast %79 : vector<1x8x8x32xbf16> to vector<8x8x32xbf16>
    %81 = vector.shape_cast %80 : vector<8x8x32xbf16> to vector<64x32xbf16>
    %c0_66 = arith.constant 0 : index
    %c2_67 = arith.constant 2 : index
    %c2_68 = arith.constant 2 : index
    %c0_69 = arith.constant 0 : index
    %82 = vector.load %arg10[%c0_66, %c2_67, %c2_68, %c0_69] : memref<3x10x10x32xbf16, #tpu.memory_space<vmem>>, vector<1x8x8x32xbf16>
    %83 = vector.shape_cast %82 : vector<1x8x8x32xbf16> to vector<8x8x32xbf16>
    %84 = vector.shape_cast %83 : vector<8x8x32xbf16> to vector<64x32xbf16>
    %c1_70 = arith.constant 1 : index
    %c0_71 = arith.constant 0 : index
    %c0_72 = arith.constant 0 : index
    %c0_73 = arith.constant 0 : index
    %85 = vector.load %arg10[%c1_70, %c0_71, %c0_72, %c0_73] : memref<3x10x10x32xbf16, #tpu.memory_space<vmem>>, vector<1x8x8x32xbf16>
    %86 = vector.shape_cast %85 : vector<1x8x8x32xbf16> to vector<8x8x32xbf16>
    %87 = vector.shape_cast %86 : vector<8x8x32xbf16> to vector<64x32xbf16>
    %c1_74 = arith.constant 1 : index
    %c0_75 = arith.constant 0 : index
    %c1_76 = arith.constant 1 : index
    %c0_77 = arith.constant 0 : index
    %88 = vector.load %arg10[%c1_74, %c0_75, %c1_76, %c0_77] : memref<3x10x10x32xbf16, #tpu.memory_space<vmem>>, vector<1x8x8x32xbf16>
    %89 = vector.shape_cast %88 : vector<1x8x8x32xbf16> to vector<8x8x32xbf16>
    %90 = vector.shape_cast %89 : vector<8x8x32xbf16> to vector<64x32xbf16>
    %c1_78 = arith.constant 1 : index
    %c0_79 = arith.constant 0 : index
    %c2_80 = arith.constant 2 : index
    %c0_81 = arith.constant 0 : index
    %91 = vector.load %arg10[%c1_78, %c0_79, %c2_80, %c0_81] : memref<3x10x10x32xbf16, #tpu.memory_space<vmem>>, vector<1x8x8x32xbf16>
    %92 = vector.shape_cast %91 : vector<1x8x8x32xbf16> to vector<8x8x32xbf16>
    %93 = vector.shape_cast %92 : vector<8x8x32xbf16> to vector<64x32xbf16>
    %c1_82 = arith.constant 1 : index
    %c1_83 = arith.constant 1 : index
    %c0_84 = arith.constant 0 : index
    %c0_85 = arith.constant 0 : index
    %94 = vector.load %arg10[%c1_82, %c1_83, %c0_84, %c0_85] : memref<3x10x10x32xbf16, #tpu.memory_space<vmem>>, vector<1x8x8x32xbf16>
    %95 = vector.shape_cast %94 : vector<1x8x8x32xbf16> to vector<8x8x32xbf16>
    %96 = vector.shape_cast %95 : vector<8x8x32xbf16> to vector<64x32xbf16>
    %c1_86 = arith.constant 1 : index
    %c1_87 = arith.constant 1 : index
    %c1_88 = arith.constant 1 : index
    %c0_89 = arith.constant 0 : index
    %97 = vector.load %arg10[%c1_86, %c1_87, %c1_88, %c0_89] : memref<3x10x10x32xbf16, #tpu.memory_space<vmem>>, vector<1x8x8x32xbf16>
    %98 = vector.shape_cast %97 : vector<1x8x8x32xbf16> to vector<8x8x32xbf16>
    %99 = vector.shape_cast %98 : vector<8x8x32xbf16> to vector<64x32xbf16>
    %c1_90 = arith.constant 1 : index
    %c1_91 = arith.constant 1 : index
    %c2_92 = arith.constant 2 : index
    %c0_93 = arith.constant 0 : index
    %100 = vector.load %arg10[%c1_90, %c1_91, %c2_92, %c0_93] : memref<3x10x10x32xbf16, #tpu.memory_space<vmem>>, vector<1x8x8x32xbf16>
    %101 = vector.shape_cast %100 : vector<1x8x8x32xbf16> to vector<8x8x32xbf16>
    %102 = vector.shape_cast %101 : vector<8x8x32xbf16> to vector<64x32xbf16>
    %c1_94 = arith.constant 1 : index
    %c2_95 = arith.constant 2 : index
    %c0_96 = arith.constant 0 : index
    %c0_97 = arith.constant 0 : index
    %103 = vector.load %arg10[%c1_94, %c2_95, %c0_96, %c0_97] : memref<3x10x10x32xbf16, #tpu.memory_space<vmem>>, vector<1x8x8x32xbf16>
    %104 = vector.shape_cast %103 : vector<1x8x8x32xbf16> to vector<8x8x32xbf16>
    %105 = vector.shape_cast %104 : vector<8x8x32xbf16> to vector<64x32xbf16>
    %c1_98 = arith.constant 1 : index
    %c2_99 = arith.constant 2 : index
    %c1_100 = arith.constant 1 : index
    %c0_101 = arith.constant 0 : index
    %106 = vector.load %arg10[%c1_98, %c2_99, %c1_100, %c0_101] : memref<3x10x10x32xbf16, #tpu.memory_space<vmem>>, vector<1x8x8x32xbf16>
    %107 = vector.shape_cast %106 : vector<1x8x8x32xbf16> to vector<8x8x32xbf16>
    %108 = vector.shape_cast %107 : vector<8x8x32xbf16> to vector<64x32xbf16>
    %c1_102 = arith.constant 1 : index
    %c2_103 = arith.constant 2 : index
    %c2_104 = arith.constant 2 : index
    %c0_105 = arith.constant 0 : index
    %109 = vector.load %arg10[%c1_102, %c2_103, %c2_104, %c0_105] : memref<3x10x10x32xbf16, #tpu.memory_space<vmem>>, vector<1x8x8x32xbf16>
    %110 = vector.shape_cast %109 : vector<1x8x8x32xbf16> to vector<8x8x32xbf16>
    %111 = vector.shape_cast %110 : vector<8x8x32xbf16> to vector<64x32xbf16>
    %c2_106 = arith.constant 2 : index
    %c0_107 = arith.constant 0 : index
    %c0_108 = arith.constant 0 : index
    %c0_109 = arith.constant 0 : index
    %112 = vector.load %arg10[%c2_106, %c0_107, %c0_108, %c0_109] : memref<3x10x10x32xbf16, #tpu.memory_space<vmem>>, vector<1x8x8x32xbf16>
    %113 = vector.shape_cast %112 : vector<1x8x8x32xbf16> to vector<8x8x32xbf16>
    %114 = vector.shape_cast %113 : vector<8x8x32xbf16> to vector<64x32xbf16>
    %c2_110 = arith.constant 2 : index
    %c0_111 = arith.constant 0 : index
    %c1_112 = arith.constant 1 : index
    %c0_113 = arith.constant 0 : index
    %115 = vector.load %arg10[%c2_110, %c0_111, %c1_112, %c0_113] : memref<3x10x10x32xbf16, #tpu.memory_space<vmem>>, vector<1x8x8x32xbf16>
    %116 = vector.shape_cast %115 : vector<1x8x8x32xbf16> to vector<8x8x32xbf16>
    %117 = vector.shape_cast %116 : vector<8x8x32xbf16> to vector<64x32xbf16>
    %c2_114 = arith.constant 2 : index
    %c0_115 = arith.constant 0 : index
    %c2_116 = arith.constant 2 : index
    %c0_117 = arith.constant 0 : index
    %118 = vector.load %arg10[%c2_114, %c0_115, %c2_116, %c0_117] : memref<3x10x10x32xbf16, #tpu.memory_space<vmem>>, vector<1x8x8x32xbf16>
    %119 = vector.shape_cast %118 : vector<1x8x8x32xbf16> to vector<8x8x32xbf16>
    %120 = vector.shape_cast %119 : vector<8x8x32xbf16> to vector<64x32xbf16>
    %c2_118 = arith.constant 2 : index
    %c1_119 = arith.constant 1 : index
    %c0_120 = arith.constant 0 : index
    %c0_121 = arith.constant 0 : index
    %121 = vector.load %arg10[%c2_118, %c1_119, %c0_120, %c0_121] : memref<3x10x10x32xbf16, #tpu.memory_space<vmem>>, vector<1x8x8x32xbf16>
    %122 = vector.shape_cast %121 : vector<1x8x8x32xbf16> to vector<8x8x32xbf16>
    %123 = vector.shape_cast %122 : vector<8x8x32xbf16> to vector<64x32xbf16>
    %c2_122 = arith.constant 2 : index
    %c1_123 = arith.constant 1 : index
    %c1_124 = arith.constant 1 : index
    %c0_125 = arith.constant 0 : index
    %124 = vector.load %arg10[%c2_122, %c1_123, %c1_124, %c0_125] : memref<3x10x10x32xbf16, #tpu.memory_space<vmem>>, vector<1x8x8x32xbf16>
    %125 = vector.shape_cast %124 : vector<1x8x8x32xbf16> to vector<8x8x32xbf16>
    %126 = vector.shape_cast %125 : vector<8x8x32xbf16> to vector<64x32xbf16>
    %c2_126 = arith.constant 2 : index
    %c1_127 = arith.constant 1 : index
    %c2_128 = arith.constant 2 : index
    %c0_129 = arith.constant 0 : index
    %127 = vector.load %arg10[%c2_126, %c1_127, %c2_128, %c0_129] : memref<3x10x10x32xbf16, #tpu.memory_space<vmem>>, vector<1x8x8x32xbf16>
    %128 = vector.shape_cast %127 : vector<1x8x8x32xbf16> to vector<8x8x32xbf16>
    %129 = vector.shape_cast %128 : vector<8x8x32xbf16> to vector<64x32xbf16>
    %c2_130 = arith.constant 2 : index
    %c2_131 = arith.constant 2 : index
    %c0_132 = arith.constant 0 : index
    %c0_133 = arith.constant 0 : index
    %130 = vector.load %arg10[%c2_130, %c2_131, %c0_132, %c0_133] : memref<3x10x10x32xbf16, #tpu.memory_space<vmem>>, vector<1x8x8x32xbf16>
    %131 = vector.shape_cast %130 : vector<1x8x8x32xbf16> to vector<8x8x32xbf16>
    %132 = vector.shape_cast %131 : vector<8x8x32xbf16> to vector<64x32xbf16>
    %c2_134 = arith.constant 2 : index
    %c2_135 = arith.constant 2 : index
    %c1_136 = arith.constant 1 : index
    %c0_137 = arith.constant 0 : index
    %133 = vector.load %arg10[%c2_134, %c2_135, %c1_136, %c0_137] : memref<3x10x10x32xbf16, #tpu.memory_space<vmem>>, vector<1x8x8x32xbf16>
    %134 = vector.shape_cast %133 : vector<1x8x8x32xbf16> to vector<8x8x32xbf16>
    %135 = vector.shape_cast %134 : vector<8x8x32xbf16> to vector<64x32xbf16>
    %c2_138 = arith.constant 2 : index
    %c2_139 = arith.constant 2 : index
    %c2_140 = arith.constant 2 : index
    %c0_141 = arith.constant 0 : index
    %136 = vector.load %arg10[%c2_138, %c2_139, %c2_140, %c0_141] : memref<3x10x10x32xbf16, #tpu.memory_space<vmem>>, vector<1x8x8x32xbf16>
    %137 = vector.shape_cast %136 : vector<1x8x8x32xbf16> to vector<8x8x32xbf16>
    %138 = vector.shape_cast %137 : vector<8x8x32xbf16> to vector<64x32xbf16>
    %139 = tpu.concatenate %60, %63, %66, %69, %72, %75, %78, %81, %84, %87, %90, %93, %96, %99, %102, %105 in 1 : vector<64x32xbf16>, vector<64x32xbf16>, vector<64x32xbf16>, vector<64x32xbf16>, vector<64x32xbf16>, vector<64x32xbf16>, vector<64x32xbf16>, vector<64x32xbf16>, vector<64x32xbf16>, vector<64x32xbf16>, vector<64x32xbf16>, vector<64x32xbf16>, vector<64x32xbf16>, vector<64x32xbf16>, vector<64x32xbf16>, vector<64x32xbf16> -> vector<64x512xbf16>
    %140 = tpu.concatenate %108, %111, %114, %117, %120, %123, %126, %129, %132, %135, %138 in 1 : vector<64x32xbf16>, vector<64x32xbf16>, vector<64x32xbf16>, vector<64x32xbf16>, vector<64x32xbf16>, vector<64x32xbf16>, vector<64x32xbf16>, vector<64x32xbf16>, vector<64x32xbf16>, vector<64x32xbf16>, vector<64x32xbf16> -> vector<64x352xbf16>
    %141 = tpu.concatenate %139, %140 in 1 : vector<64x512xbf16>, vector<64x352xbf16> -> vector<64x864xbf16>
    %c0_142 = arith.constant 0 : index
    %c0_143 = arith.constant 0 : index
    %142 = vector.load %arg6[%c0_142, %c0_143] : memref<864x32xbf16, #tpu.memory_space<vmem>>, vector<864x32xbf16>
    %cst_144 = arith.constant dense<0.000000e+00> : vector<64x32xf32>
    %143 = tpu.matmul %141, %142, %cst_144 {dimension_numbers = #tpu.dot_dimension_numbers<[1], [0], [0], [1], [0, 0, 1, 1], [], []>} : vector<64x864xbf16>, vector<864x32xbf16>, vector<64x32xf32> -> vector<64x32xf32>
    %c0_145 = arith.constant 0 : index
    %c0_146 = arith.constant 0 : index
    %144 = vector.load %arg7[%c0_145, %c0_146] : memref<1x32xf32, #tpu.memory_space<vmem>>, vector<1x32xf32>
    %145 = vector.broadcast %144 : vector<1x32xf32> to vector<64x32xf32>
    %146 = arith.addf %143, %145 : vector<64x32xf32>
    %c0_147 = arith.constant 0 : index
    %c0_148 = arith.constant 0 : index
    %c0_149 = arith.constant 0 : index
    %147 = vector.load %arg9[%c0_147, %c0_148, %c0_149] : memref<1x2x32xf32, #tpu.memory_space<vmem>>, vector<1x2x32xf32>
    %cst_150 = arith.constant dense<0.000000e+00> : vector<32xf32>
    %148 = vector.multi_reduction <add>, %146, %cst_150 [0] : vector<64x32xf32> to vector<32xf32>
    %149 = vector.shape_cast %148 : vector<32xf32> to vector<1x32xf32>
    %150 = arith.mulf %146, %146 : vector<64x32xf32>
    %cst_151 = arith.constant dense<0.000000e+00> : vector<32xf32>
    %151 = vector.multi_reduction <add>, %150, %cst_151 [0] : vector<64x32xf32> to vector<32xf32>
    %152 = vector.shape_cast %151 : vector<32xf32> to vector<1x32xf32>
    %153 = tpu.concatenate %149, %152 in 0 : vector<1x32xf32>, vector<1x32xf32> -> vector<2x32xf32>
    %154 = vector.shape_cast %153 : vector<2x32xf32> to vector<1x2x32xf32>
    %155 = arith.addf %147, %154 : vector<1x2x32xf32>
    %c0_152 = arith.constant 0 : index
    %c0_153 = arith.constant 0 : index
    %c0_154 = arith.constant 0 : index
    %156 = vector.load %arg9[%c0_152, %c0_153, %c0_154] : memref<1x2x32xf32, #tpu.memory_space<vmem>>, vector<1x2x32xf32>
    tpu.vector_store %arg9[%c0_152, %c0_153, %c0_154], %155 {strides = array<i32>} : memref<1x2x32xf32, #tpu.memory_space<vmem>>, vector<1x2x32xf32>,
    %157 = vector.shape_cast %146 : vector<64x32xf32> to vector<1x1x64x32xf32>
    %158 = arith.truncf %157 : vector<1x1x64x32xf32> to vector<1x1x64x32xbf16>
    %c0_155 = arith.constant 0 : index
    %c0_156 = arith.constant 0 : index
    %c0_157 = arith.constant 0 : index
    %c0_158 = arith.constant 0 : index
    %159 = vector.load %arg8[%c0_155, %c0_156, %c0_157, %c0_158] : memref<1x1x64x32xbf16, #tpu.memory_space<vmem>>, vector<1x1x64x32xbf16>
    tpu.vector_store %arg8[%c0_155, %c0_156, %c0_157, %c0_158], %158 {strides = array<i32>} : memref<1x1x64x32xbf16, #tpu.memory_space<vmem>>, vector<1x1x64x32xbf16>,
    return
  }
  func.func @transform_0(%arg0: i32, %arg1: i32) -> (i32, i32, i32) {
    %c0_i32 = arith.constant 0 : i32
    %c0_i32_0 = arith.constant 0 : i32
    %c0_i32_1 = arith.constant 0 : i32
    return %arg0, %c0_i32, %c0_i32_0 : i32, i32, i32
  }
  func.func @transform_1(%arg0: i32, %arg1: i32) -> (i32, i32, i32, i32, i32) {
    %c1_i32 = arith.constant 1 : i32
    %0 = arith.subi %arg1, %c1_i32 : i32
    %c0_i32 = arith.constant 0 : i32
    %1 = arith.maxsi %0, %c0_i32 : i32
    %c0_i32_0 = arith.constant 0 : i32
    %c0_i32_1 = arith.constant 0 : i32
    %c0_i32_2 = arith.constant 0 : i32
    %c0_i32_3 = arith.constant 0 : i32
    return %arg0, %1, %c0_i32_0, %c0_i32_1, %c0_i32_2 : i32, i32, i32, i32, i32
  }
  func.func @transform_2(%arg0: i32, %arg1: i32) -> (i32, i32, i32, i32, i32) {
    %c0_i32 = arith.constant 0 : i32
    %c0_i32_0 = arith.constant 0 : i32
    %c0_i32_1 = arith.constant 0 : i32
    %c0_i32_2 = arith.constant 0 : i32
    return %arg0, %arg1, %c0_i32, %c0_i32_0, %c0_i32_1 : i32, i32, i32, i32, i32
  }
  func.func @transform_3(%arg0: i32, %arg1: i32) -> (i32, i32, i32, i32, i32) {
    %c1_i32 = arith.constant 1 : i32
    %0 = arith.addi %arg1, %c1_i32 : i32
    %c3_i32 = arith.constant 3 : i32
    %1 = arith.minsi %0, %c3_i32 : i32
    %c0_i32 = arith.constant 0 : i32
    %c0_i32_0 = arith.constant 0 : i32
    %c0_i32_1 = arith.constant 0 : i32
    %c0_i32_2 = arith.constant 0 : i32
    return %arg0, %1, %c0_i32, %c0_i32_0, %c0_i32_1 : i32, i32, i32, i32, i32
  }
  func.func @transform_4(%arg0: i32, %arg1: i32) -> (i32, i32) {
    %c0_i32 = arith.constant 0 : i32
    %c0_i32_0 = arith.constant 0 : i32
    %c0_i32_1 = arith.constant 0 : i32
    return %c0_i32, %c0_i32_0 : i32, i32
  }
  func.func @transform_5(%arg0: i32, %arg1: i32) -> (i32, i32) {
    %c0_i32 = arith.constant 0 : i32
    %c0_i32_0 = arith.constant 0 : i32
    %c0_i32_1 = arith.constant 0 : i32
    return %c0_i32, %c0_i32_0 : i32, i32
  }
  func.func @transform_6(%arg0: i32, %arg1: i32) -> (i32, i32, i32, i32) {
    %c0_i32 = arith.constant 0 : i32
    %c0_i32_0 = arith.constant 0 : i32
    %c0_i32_1 = arith.constant 0 : i32
    return %arg0, %arg1, %c0_i32, %c0_i32_0 : i32, i32, i32, i32
  }
  func.func @transform_7(%arg0: i32, %arg1: i32) -> (i32, i32, i32) {
    %c0_i32 = arith.constant 0 : i32
    %c0_i32_0 = arith.constant 0 : i32
    %c0_i32_1 = arith.constant 0 : i32
    return %arg0, %c0_i32, %c0_i32_0 : i32, i32, i32
  }
}

module attributes {stable_mosaic.version = 11 : i64} {
  func.func @kernel(%arg0: i32, %arg1: i32, %arg2: memref<1x64x128xbf16, #tpu.memory_space<vmem>>, %arg3: memref<1x2x128xf32, #tpu.memory_space<vmem>>, %arg4: memref<1x64x32xbf16, #tpu.memory_space<vmem>>, %arg5: memref<32x128xbf16, #tpu.memory_space<vmem>>, %arg6: memref<1x128xf32, #tpu.memory_space<vmem>>, %arg7: memref<1x64x128xf32, #tpu.memory_space<vmem>>) attributes {dimension_semantics = [#tpu.dimension_semantics<parallel>, #tpu.dimension_semantics<parallel>], iteration_bounds = array<i64: 2, 1>, scalar_prefetch = 0 : i64, scratch_operands = 0 : i64, tpu.core_type = #tpu.core_type<tc>, window_params = [{transform_indices = @transform_0, window_bounds = array<i64: 1, 64, 128>}, {transform_indices = @transform_1, window_bounds = array<i64: 1, 2, 128>}, {transform_indices = @transform_2, window_bounds = array<i64: 1, 64, 32>}, {pipeline_mode = #tpu.pipeline_mode<synchronous>, transform_indices = @transform_3, window_bounds = array<i64: 32, 128>}, {pipeline_mode = #tpu.pipeline_mode<synchronous>, transform_indices = @transform_4, window_bounds = array<i64: 1, 128>}, {transform_indices = @transform_5, window_bounds = array<i64: 1, 64, 128>}]} {
    %c0 = arith.constant 0 : index
    %c0_0 = arith.constant 0 : index
    %c0_1 = arith.constant 0 : index
    %0 = vector.load %arg2[%c0, %c0_0, %c0_1] : memref<1x64x128xbf16, #tpu.memory_space<vmem>>, vector<1x64x128xbf16>
    %1 = vector.shape_cast %0 : vector<1x64x128xbf16> to vector<64x128xbf16>
    %2 = arith.extf %1 : vector<64x128xbf16> to vector<64x128xf32>
    %c0_2 = arith.constant 0 : index
    %c0_3 = arith.constant 0 : index
    %c0_4 = arith.constant 0 : index
    %3 = vector.load %arg3[%c0_2, %c0_3, %c0_4] : memref<1x2x128xf32, #tpu.memory_space<vmem>>, vector<1x1x128xf32>
    %4 = vector.shape_cast %3 : vector<1x1x128xf32> to vector<1x128xf32>
    %5 = vector.broadcast %4 : vector<1x128xf32> to vector<64x128xf32>
    %6 = arith.mulf %2, %5 : vector<64x128xf32>
    %c0_5 = arith.constant 0 : index
    %c1 = arith.constant 1 : index
    %c0_6 = arith.constant 0 : index
    %7 = vector.load %arg3[%c0_5, %c1, %c0_6] : memref<1x2x128xf32, #tpu.memory_space<vmem>>, vector<1x1x128xf32>
    %8 = vector.shape_cast %7 : vector<1x1x128xf32> to vector<1x128xf32>
    %9 = vector.broadcast %8 : vector<1x128xf32> to vector<64x128xf32>
    %10 = arith.addf %6, %9 : vector<64x128xf32>
    %c0_7 = arith.constant 0 : index
    %c0_8 = arith.constant 0 : index
    %c0_9 = arith.constant 0 : index
    %11 = vector.load %arg4[%c0_7, %c0_8, %c0_9] : memref<1x64x32xbf16, #tpu.memory_space<vmem>>, vector<1x64x32xbf16>
    %12 = vector.shape_cast %11 : vector<1x64x32xbf16> to vector<64x32xbf16>
    %c0_10 = arith.constant 0 : index
    %c0_11 = arith.constant 0 : index
    %13 = vector.load %arg5[%c0_10, %c0_11] : memref<32x128xbf16, #tpu.memory_space<vmem>>, vector<32x128xbf16>
    %cst = arith.constant dense<0.000000e+00> : vector<64x128xf32>
    %14 = tpu.matmul %12, %13, %cst {dimension_numbers = #tpu.dot_dimension_numbers<[1], [0], [0], [1], [0, 0, 1, 1], [], []>} : vector<64x32xbf16>, vector<32x128xbf16>, vector<64x128xf32> -> vector<64x128xf32>
    %c0_12 = arith.constant 0 : index
    %c0_13 = arith.constant 0 : index
    %15 = vector.load %arg6[%c0_12, %c0_13] : memref<1x128xf32, #tpu.memory_space<vmem>>, vector<1x128xf32>
    %16 = vector.broadcast %15 : vector<1x128xf32> to vector<64x128xf32>
    %17 = arith.addf %14, %16 : vector<64x128xf32>
    %18 = arith.addf %10, %17 : vector<64x128xf32>
    %cst_14 = arith.constant 0.000000e+00 : f32
    %19 = vector.broadcast %cst_14 : f32 to vector<64x128xf32>
    %20 = arith.maximumf %18, %19 : vector<64x128xf32>
    %21 = vector.shape_cast %20 : vector<64x128xf32> to vector<1x64x128xf32>
    %c0_15 = arith.constant 0 : index
    %c0_16 = arith.constant 0 : index
    %c0_17 = arith.constant 0 : index
    %22 = vector.load %arg7[%c0_15, %c0_16, %c0_17] : memref<1x64x128xf32, #tpu.memory_space<vmem>>, vector<1x64x128xf32>
    tpu.vector_store %arg7[%c0_15, %c0_16, %c0_17], %21 {strides = array<i32>} : memref<1x64x128xf32, #tpu.memory_space<vmem>>, vector<1x64x128xf32>,
    return
  }
  func.func @transform_0(%arg0: i32, %arg1: i32) -> (i32, i32, i32) {
    %c0_i32 = arith.constant 0 : i32
    %c0_i32_0 = arith.constant 0 : i32
    return %arg0, %arg1, %c0_i32 : i32, i32, i32
  }
  func.func @transform_1(%arg0: i32, %arg1: i32) -> (i32, i32, i32) {
    %c0_i32 = arith.constant 0 : i32
    %c0_i32_0 = arith.constant 0 : i32
    %c0_i32_1 = arith.constant 0 : i32
    return %arg0, %c0_i32, %c0_i32_0 : i32, i32, i32
  }
  func.func @transform_2(%arg0: i32, %arg1: i32) -> (i32, i32, i32) {
    %c0_i32 = arith.constant 0 : i32
    %c0_i32_0 = arith.constant 0 : i32
    return %arg0, %arg1, %c0_i32 : i32, i32, i32
  }
  func.func @transform_3(%arg0: i32, %arg1: i32) -> (i32, i32) {
    %c0_i32 = arith.constant 0 : i32
    %c0_i32_0 = arith.constant 0 : i32
    %c0_i32_1 = arith.constant 0 : i32
    return %c0_i32, %c0_i32_0 : i32, i32
  }
  func.func @transform_4(%arg0: i32, %arg1: i32) -> (i32, i32) {
    %c0_i32 = arith.constant 0 : i32
    %c0_i32_0 = arith.constant 0 : i32
    %c0_i32_1 = arith.constant 0 : i32
    return %c0_i32, %c0_i32_0 : i32, i32
  }
  func.func @transform_5(%arg0: i32, %arg1: i32) -> (i32, i32, i32) {
    %c0_i32 = arith.constant 0 : i32
    %c0_i32_0 = arith.constant 0 : i32
    return %arg0, %arg1, %c0_i32 : i32, i32, i32
  }
}

</mosaic_0001>

<llo_original>
// kernel: tile.17
$region0: #{tile.17}
  %s0 = inlined_call_operand.vmem [shape: f32[2,2,4,32], index: 0, kind: input, shape index: {}]
  %s1 = inlined_call_operand.vmem [shape: f32[2,2,128], index: 1, kind: output, shape index: {}]
  $region1: #{tile.17} parent=0
    #allocation0 [shape = 'u8[8192]{0}', space=vmem, size = 0x2000, scoped, tag = 'scoped mem for output reshape']
    #allocation1 [shape = 'u8[16384]{0}', space=vmem, size = 0x4000, scoped, tag = 'scoped mem for input reshape']
    %s3 = sshllo.u32 0, 4
    %s4 = smul.addr 4, 3
    %s5 = scalar_lea.vmem %s0, %s4
    %v6 = vld [vmem:[%s5] sm:%s3]
    %s7 = scalar_lea.vmem [#allocation1], 24
    %8 = vst [vmem:[%s7] sm:%s3] %v6
    %s9 = smul.addr 4, 2
    %s10 = scalar_lea.vmem %s0, %s9
    %v11 = vld [vmem:[%s10] sm:%s3]
    %s12 = scalar_lea.vmem [#allocation1], 16
    %13 = vst [vmem:[%s12] sm:%s3] %v11
    %s14 = scalar_lea.vmem %s0, 4
    %v15 = vld [vmem:[%s14] sm:%s3]
    %s16 = scalar_lea.vmem [#allocation1], 8
    %17 = vst [vmem:[%s16] sm:%s3] %v15
    %v18 = vld [vmem:[%s0] sm:%s3]
    %19 = vst [vmem:[#allocation1] sm:%s3] %v18
    %v20 = vld [vmem:[#allocation1] ss:$8 sm:$0xf]
    %vm21 = vcmask 261120
    %22 = vst.msk [vmem:[#allocation0] sm:$0x3] %vm21, %v20
    %s23 = scalar_lea.vmem [#allocation0], 6
    %24 = vst.msk [vmem:[%s23] sm:$0xc] %vm21, %v20
    %s25 = scalar_lea.vmem [#allocation1], 3
    %v26 = vld [vmem:[%s25] ss:$8 sm:$0xf]
    %27 = vrot.lane.b32.xlu0 %v26, 96
    %v28 = vpop.permute.xlu0 %27
    %vm29 = vcmask 1048320
    %30 = vst.msk [vmem:[#allocation0] sm:$0x3] %vm29, %v28
    %s31 = scalar_lea.vmem [#allocation0], 6
    %32 = vst.msk [vmem:[%s31] sm:$0xc] %vm29, %v28
    %s33 = scalar_lea.vmem [#allocation1], 2
    %v34 = vld [vmem:[%s33] ss:$8 sm:$0xf]
    %35 = vrot.lane.b32.xlu0 %v34, 64
    %v36 = vpop.permute.xlu0 %35
    %vm37 = vcmask 785920
    %38 = vst.msk [vmem:[#allocation0] sm:$0x3] %vm37, %v36
    %s39 = scalar_lea.vmem [#allocation0], 6
    %40 = vst.msk [vmem:[%s39] sm:$0xc] %vm37, %v36
    %s41 = scalar_lea.vmem [#allocation1], 1
    %v42 = vld [vmem:[%s41] ss:$8 sm:$0xf]
    %43 = vrot.lane.b32.xlu0 %v42, 32
    %v44 = vpop.permute.xlu0 %43
    %vm45 = vcmask 523520
    %46 = vst.msk [vmem:[#allocation0] sm:$0x3] %vm45, %v44
    %s47 = scalar_lea.vmem [#allocation0], 6
    %48 = vst.msk [vmem:[%s47] sm:$0xc] %vm45, %v44
    %s50 = sshllo.u32 0, 2
    %v52 = vld [vmem:[#allocation0] sm:%s50]
    %s53 = sshllo.u32 0, 2
    %54 = vst [vmem:[%s1] sm:%s53] %v52
    %s55 = scalar_lea.vmem [#allocation0], 8
    %v56 = vld [vmem:[%s55] sm:%s50]
    %s57 = sshllo.u32 0, 2
    %s58 = scalar_lea.vmem %s1, 2
    %59 = vst [vmem:[%s58] sm:%s57] %v56

// kernel: resblock3d_adaptive_forward.5
$region0: #{resblock3d_adaptive_forward.5}
  #allocation0 [shape = 'u32[]', space=smem, size = 0x4, offset = 0x4, fixed_abs, tag = 'smem constant byte address 0x4 - core index']
  #allocation1 [shape = 'u32[144,128]{1,0:T(1,128)}', space=vmem, size = 0x12000, scoped, tag = 'internal scratch']
  %s0 = inlined_call_operand.vmem [shape: bf16[2,64,128], index: 0, kind: input, shape index: {}]
  %s1 = inlined_call_operand.vmem [shape: f32[2,2,128], index: 1, kind: input, shape index: {}]
  %s2 = inlined_call_operand.vmem [shape: bf16[2,64,32], index: 2, kind: input, shape index: {}]
  %s3 = inlined_call_operand.vmem [shape: bf16[32,128], index: 3, kind: input, shape index: {}]
  %s4 = inlined_call_operand.vmem [shape: f32[1,128], index: 4, kind: input, shape index: {}]
  %s5 = inlined_call_operand.vmem [shape: f32[2,64,128], index: 5, kind: output, shape index: {}]
  %s6 = sld [smem:[#allocation0]]
  $region53: #{resblock3d_adaptive_forward.5} parent=0
    _
  %s8 = ssub.s32 1, %s6
  %s9 = scalar_select 0, %s8, %s6
  loop: start=0, step=1, limit=4
  $region2: #{resblock3d_adaptive_forward.5} parent=0 // loop_pre_header
    _
  $region3: #{resblock3d_adaptive_forward.5} parent=0 // loop_header
    %s11 = sphi 0, %s15
    %p12 = scmp.ge.s32.totalorder %s11, 4
    %s18 = sphi 0, %s30
    %s19 = sphi 0, %s26
    %s20 = sphi 0, %s18
    %s21 = sphi 0, %s19
    %s22 = sphi 0, %s20
    %s23 = sphi 0, %s21
    %s35 = sphi 0, %s37
    %s38 = sphi 0, %s35
    %s39 = sphi 0, %s38
    %s55 = sphi 0, %s39
    %s61 = sphi 0, %s63
    %s64 = sphi 0, %s61
    %s65 = sphi 0, %s64
    %s81 = sphi 0, %s65
    %s89 = sphi 0, %s91
    %s92 = sphi 0, %s89
    %s93 = sphi 0, %s92
    %s109 = sphi 0, %s93
    %s113 = sphi 0, %s113
    %s115 = sphi 0, %s113
    %s116 = sphi 0, %s115
    %s130 = sphi 0, %s116
    %s134 = sphi 0, %s134
    %s136 = sphi 0, %s134
    %s137 = sphi 0, %s136
    %s151 = sphi 0, %s137
    %s159 = sphi 0, %s161
    %s162 = sphi 0, %s159
    %s163 = sphi 0, %s162
    %s179 = sphi 0, %s163
  $region4: #{resblock3d_adaptive_forward.5} parent=0 // loop_header_branch
    %14 = sbr.rel (%p12) target = $region8
  $region5: #{resblock3d_adaptive_forward.5} parent=0 // loop_body
    %s16 = ssub.s32 %s11, 1
    %s17 = ssub.s32 %s11, 2
    %s24 = sadd.s32 1, %s19
    %p25 = scmp.ge.s32.totalorder %s24, 1
    %s26 = scalar_select %p25, 0, %s24
    %s27 = sadd.s32 1, %s18
    %s28 = scalar_select %p25, %s27, %s18
    %p29 = scmp.ge.s32.totalorder %s28, 2
    %s30 = scalar_select %p29, 0, %s28
    %s31 = ssub.s32 %s18, %s30
    %s32 = ssub.s32 %s19, %s26
    %s33 = sor.u32 %s31, %s32
    %p34 = scmp.eq.s32.totalorder %s33, 0
    %s36 = sadd.s32 %s35, 1
    %s37 = scalar_select %p34, %s35, %s36
    %p40 = pneg %p34
    %p41 = scmp.eq.s32.totalorder %s11, 1
    %p42 = por %p40, %p41
    %p43 = scmp.ne.s32.totalorder %s35, %s38
    %p44 = scmp.eq.s32.totalorder %s11, 0
    %p45 = por %p43, %p44
    %p46 = scmp.ne.s32.totalorder %s35, %s38
    %p47 = scmp.eq.s32.totalorder %s16, 1
    %p48 = por %p46, %p47
    %p49 = scmp.ne.s32.totalorder %s38, %s39
    %p50 = scmp.eq.s32.totalorder %s16, 0
    %p51 = por %p49, %p50
    %p52 = scmp.ne.s32.totalorder %s38, %s39
    %p53 = scmp.eq.s32.totalorder %s17, 1
    %p54 = por %p52, %p53
    %p56 = scmp.ne.s32.totalorder %s39, %s55
    %p57 = scmp.eq.s32.totalorder %s17, 0
    %p58 = por %p56, %p57
    %s59 = ssub.s32 %s18, %s30
    %p60 = scmp.eq.s32.totalorder %s59, 0
    %s62 = sadd.s32 %s61, 1
    %s63 = scalar_select %p60, %s61, %s62
    %p66 = pneg %p60
    %p67 = scmp.eq.s32.totalorder %s11, 1
    %p68 = por %p66, %p67
    %p69 = scmp.ne.s32.totalorder %s61, %s64
    %p70 = scmp.eq.s32.totalorder %s11, 0
    %p71 = por %p69, %p70
    %p72 = scmp.ne.s32.totalorder %s61, %s64
    %p73 = scmp.eq.s32.totalorder %s16, 1
    %p74 = por %p72, %p73
    %p75 = scmp.ne.s32.totalorder %s64, %s65
    %p76 = scmp.eq.s32.totalorder %s16, 0
    %p77 = por %p75, %p76
    %p78 = scmp.ne.s32.totalorder %s64, %s65
    %p79 = scmp.eq.s32.totalorder %s17, 1
    %p80 = por %p78, %p79
    %p82 = scmp.ne.s32.totalorder %s65, %s81
    %p83 = scmp.eq.s32.totalorder %s17, 0
    %p84 = por %p82, %p83
    %s85 = ssub.s32 %s18, %s30
    %s86 = ssub.s32 %s19, %s26
    %s87 = sor.u32 %s85, %s86
    %p88 = scmp.eq.s32.totalorder %s87, 0
    %s90 = sadd.s32 %s89, 1
    %s91 = scalar_select %p88, %s89, %s90
    %p94 = pneg %p88
    %p95 = scmp.eq.s32.totalorder %s11, 1
    %p96 = por %p94, %p95
    %p97 = scmp.ne.s32.totalorder %s89, %s92
    %p98 = scmp.eq.s32.totalorder %s11, 0
    %p99 = por %p97, %p98
    %p100 = scmp.ne.s32.totalorder %s89, %s92
    %p101 = scmp.eq.s32.totalorder %s16, 1
    %p102 = por %p100, %p101
    %p103 = scmp.ne.s32.totalorder %s92, %s93
    %p104 = scmp.eq.s32.totalorder %s16, 0
    %p105 = por %p103, %p104
    %p106 = scmp.ne.s32.totalorder %s92, %s93
    %p107 = scmp.eq.s32.totalorder %s17, 1
    %p108 = por %p106, %p107
    %p110 = scmp.ne.s32.totalorder %s93, %s109
    %p111 = scmp.eq.s32.totalorder %s17, 0
    %p112 = por %p110, %p111
    %s114 = sadd.s32 %s113, 1
    %p117 = scmp.eq.s32.totalorder %s11, 1
    %p118 = scmp.ne.s32.totalorder %s113, %s115
    %p119 = scmp.eq.s32.totalorder %s11, 0
    %p120 = por %p118, %p119
    %p121 = scmp.ne.s32.totalorder %s113, %s115
    %p122 = scmp.eq.s32.totalorder %s16, 1
    %p123 = por %p121, %p122
    %p124 = scmp.ne.s32.totalorder %s115, %s116
    %p125 = scmp.eq.s32.totalorder %s16, 0
    %p126 = por %p124, %p125
    %p127 = scmp.ne.s32.totalorder %s115, %s116
    %p128 = scmp.eq.s32.totalorder %s17, 1
    %p129 = por %p127, %p128
    %p131 = scmp.ne.s32.totalorder %s116, %s130
    %p132 = scmp.eq.s32.totalorder %s17, 0
    %p133 = por %p131, %p132
    %s135 = sadd.s32 %s134, 1
    %p138 = scmp.eq.s32.totalorder %s11, 1
    %p139 = scmp.ne.s32.totalorder %s134, %s136
    %p140 = scmp.eq.s32.totalorder %s11, 0
    %p141 = por %p139, %p140
    %p142 = scmp.ne.s32.totalorder %s134, %s136
    %p143 = scmp.eq.s32.totalorder %s16, 1
    %p144 = por %p142, %p143
    %p145 = scmp.ne.s32.totalorder %s136, %s137
    %p146 = scmp.eq.s32.totalorder %s16, 0
    %p147 = por %p145, %p146
    %p148 = scmp.ne.s32.totalorder %s136, %s137
    %p149 = scmp.eq.s32.totalorder %s17, 1
    %p150 = por %p148, %p149
    %p152 = scmp.ne.s32.totalorder %s137, %s151
    %p153 = scmp.eq.s32.totalorder %s17, 0
    %p154 = por %p152, %p153
    %s155 = ssub.s32 %s18, %s30
    %s156 = ssub.s32 %s19, %s26
    %s157 = sor.u32 %s155, %s156
    %p158 = scmp.eq.s32.totalorder %s157, 0
    %s160 = sadd.s32 %s159, 1
    %s161 = scalar_select %p158, %s159, %s160
    %p164 = pneg %p158
    %p165 = scmp.eq.s32.totalorder %s11, 1
    %p166 = por %p164, %p165
    %p167 = scmp.ne.s32.totalorder %s159, %s162
    %p168 = scmp.eq.s32.totalorder %s11, 0
    %p169 = por %p167, %p168
    %p170 = scmp.ne.s32.totalorder %s159, %s162
    %p171 = scmp.eq.s32.totalorder %s16, 1
    %p172 = por %p170, %p171
    %p173 = scmp.ne.s32.totalorder %s162, %s163
    %p174 = scmp.eq.s32.totalorder %s16, 0
    %p175 = por %p173, %p174
    %p176 = scmp.ne.s32.totalorder %s162, %s163
    %p177 = scmp.eq.s32.totalorder %s17, 1
    %p178 = por %p176, %p177
    %p180 = scmp.ne.s32.totalorder %s163, %s179
    %p181 = scmp.eq.s32.totalorder %s17, 0
    %p182 = por %p180, %p181
    %p183 = scmp.le.s32.totalorder 1, %s11
    %p184 = scmp.lt.s32.totalorder %s11, 3
    %p185 = pnand %p183, %p184
    %p186 = pneg %p185
    // Predicated region
    $region9: #{resblock3d_adaptive_forward.5} parent=5 // pred_check
      _
    $region10: #{resblock3d_adaptive_forward.5} parent=5 // pred_check_branch
      %188 = sbr.rel (%p185) target = $region12
    $region11: #{resblock3d_adaptive_forward.5} parent=5 // pred_region
      %s189 = ssub.s32 %s11, 1
      // Predicated region
      $region13: #{resblock3d_adaptive_forward.5} parent=11 // pred_check
        %p190 = pneg %p126
      $region14: #{resblock3d_adaptive_forward.5} parent=11 // pred_check_branch
        %192 = sbr.rel (%p190) target = $region16
      $region15: #{resblock3d_adaptive_forward.5} parent=11 // pred_region
        _
      $region16: #{resblock3d_adaptive_forward.5} parent=11 // pred_fallthru
        _
      // Predicated region
      $region17: #{resblock3d_adaptive_forward.5} parent=11 // pred_check
        %p193 = pneg %p147
      $region18: #{resblock3d_adaptive_forward.5} parent=11 // pred_check_branch
        %195 = sbr.rel (%p193) target = $region20
      $region19: #{resblock3d_adaptive_forward.5} parent=11 // pred_region
        _
      $region20: #{resblock3d_adaptive_forward.5} parent=11 // pred_fallthru
        _
    $region12: #{resblock3d_adaptive_forward.5} parent=5 // pred_fallthru
      _
    %p196 = scmp.lt.s32.totalorder %s11, 2
    // Predicated region
    $region21: #{resblock3d_adaptive_forward.5} parent=5 // pred_check
      %p197 = pneg %p196
    $region22: #{resblock3d_adaptive_forward.5} parent=5 // pred_check_branch
      %199 = sbr.rel (%p197) target = $region24
    $region23: #{resblock3d_adaptive_forward.5} parent=5 // pred_region
      // Predicated region
      $region25: #{resblock3d_adaptive_forward.5} parent=23 // pred_check
        %p200 = pneg %p45
      $region26: #{resblock3d_adaptive_forward.5} parent=23 // pred_check_branch
        %202 = sbr.rel (%p200) target = $region28
      $region27: #{resblock3d_adaptive_forward.5} parent=23 // pred_region
        %s203 = smul.u32 8, %s19
        %p204 = scmp.lt.s32.totalorder %s18, 1
        %s205 = scalar_select %p204, %s18, 1
        %p206 = scmp.lt.s32.totalorder %s203, 7
        %s207 = scalar_select %p206, %s203, 7
        %s208 = smul.addr %s205, 8
        %s209 = sadd.s32 %s207, %s208
        %s210 = smul.addr %s209, 4
        %s211 = scalar_lea.vmem %s0, %s210
        %s212 = smul.u32 8, %s19
      $region28: #{resblock3d_adaptive_forward.5} parent=23 // pred_fallthru
        _
      // Predicated region
      $region29: #{resblock3d_adaptive_forward.5} parent=23 // pred_check
        %p213 = pneg %p71
      $region30: #{resblock3d_adaptive_forward.5} parent=23 // pred_check_branch
        %215 = sbr.rel (%p213) target = $region32
      $region31: #{resblock3d_adaptive_forward.5} parent=23 // pred_region
        %p216 = scmp.lt.s32.totalorder %s18, 1
        %s217 = scalar_select %p216, %s18, 1
        %s218 = smul.addr %s217, 2
        %s219 = scalar_lea.vmem %s1, %s218
      $region32: #{resblock3d_adaptive_forward.5} parent=23 // pred_fallthru
        _
      // Predicated region
      $region33: #{resblock3d_adaptive_forward.5} parent=23 // pred_check
        %p220 = pneg %p99
      $region34: #{resblock3d_adaptive_forward.5} parent=23 // pred_check_branch
        %222 = sbr.rel (%p220) target = $region36
      $region35: #{resblock3d_adaptive_forward.5} parent=23 // pred_region
        %s223 = smul.u32 8, %s19
        %p224 = scmp.lt.s32.totalorder %s18, 1
        %s225 = scalar_select %p224, %s18, 1
        %p226 = scmp.lt.s32.totalorder %s223, 7
        %s227 = scalar_select %p226, %s223, 7
        %s228 = smul.addr %s225, 8
        %s229 = sadd.s32 %s227, %s228
        %s230 = smul.addr %s229, 4
        %s231 = scalar_lea.vmem %s2, %s230
        %s232 = smul.u32 8, %s19
      $region36: #{resblock3d_adaptive_forward.5} parent=23 // pred_fallthru
        _
    $region24: #{resblock3d_adaptive_forward.5} parent=5 // pred_fallthru
      _
    %p233 = scmp.le.s32.totalorder 1, %s11
    %p234 = scmp.lt.s32.totalorder %s11, 3
    %p235 = pnand %p233, %p234
    %p236 = pneg %p235
    // Predicated region
    $region37: #{resblock3d_adaptive_forward.5} parent=5 // pred_check
      _
    $region38: #{resblock3d_adaptive_forward.5} parent=5 // pred_check_branch
      %238 = sbr.rel (%p235) target = $region40
    $region39: #{resblock3d_adaptive_forward.5} parent=5 // pred_region
      %s239 = ssub.s32 %s11, 1
      %s240 = smul.u32 8, %s21
      %p241 = scmp.lt.s32.totalorder %s20, 1
      %s242 = scalar_select %p241, %s20, 1
      %p243 = scmp.lt.s32.totalorder %s240, 7
      %s244 = scalar_select %p243, %s240, 7
      %s245 = smul.addr %s242, 8
      %s246 = sadd.s32 %s244, %s245
      %s247 = smul.addr %s246, 4
      %s248 = scalar_lea.vmem %s0, %s247
      %p249 = pneg %p51
      %p250 = pneg %p48
      %p251 = scmp.lt.s32.totalorder %s20, 1
      %s252 = scalar_select %p251, %s20, 1
      %s253 = smul.addr %s252, 2
      %s254 = scalar_lea.vmem %s1, %s253
      %p255 = pneg %p77
      %p256 = pneg %p74
      %s257 = smul.u32 8, %s21
      %p258 = scmp.lt.s32.totalorder %s20, 1
      %s259 = scalar_select %p258, %s20, 1
      %p260 = scmp.lt.s32.totalorder %s257, 7
      %s261 = scalar_select %p260, %s257, 7
      %s262 = smul.addr %s259, 8
      %s263 = sadd.s32 %s261, %s262
      %s264 = smul.addr %s263, 4
      %s265 = scalar_lea.vmem %s2, %s264
      %p266 = pneg %p105
      %p267 = pneg %p102
      %p268 = pneg %p126
      %p269 = pneg %p123
      %p270 = pneg %p147
      %p271 = pneg %p144
      %p272 = pneg %p175
      %p273 = pneg %p172
      %s274 = smul.u32 8, %s21
      %p275 = scmp.lt.s32.totalorder %s20, 1
      %s276 = scalar_select %p275, %s20, 1
      %p277 = scmp.lt.s32.totalorder %s274, 7
      %s278 = scalar_select %p277, %s274, 7
      %s279 = smul.addr %s276, 8
      %s280 = sadd.s32 %s278, %s279
      %s281 = smul.addr %s280, 8
      %s282 = scalar_lea.vmem %s5, %s281
      %s283 = smul.u32 8, %s21
      %p284 = scmp.lt.s32.totalorder %s20, 1
      %s285 = scalar_select %p284, %s20, 1
      %p286 = scmp.lt.s32.totalorder %s283, 7
      %s287 = scalar_select %p286, %s283, 7
      %s288 = smul.addr %s285, 8
      %s289 = sadd.s32 %s287, %s288
      %s290 = smul.addr %s289, 4
      %s291 = scalar_lea.vmem %s0, %s290
      %s292 = smul.u32 8, %s21
      %p293 = scmp.lt.s32.totalorder %s20, 1
      %s294 = scalar_select %p293, %s20, 1
      %s295 = smul.addr %s294, 2
      %s296 = scalar_lea.vmem %s1, %s295
      %s297 = smul.u32 8, %s21
      %p298 = scmp.lt.s32.totalorder %s20, 1
      %s299 = scalar_select %p298, %s20, 1
      %p300 = scmp.lt.s32.totalorder %s297, 7
      %s301 = scalar_select %p300, %s297, 7
      %s302 = smul.addr %s299, 8
      %s303 = sadd.s32 %s301, %s302
      %s304 = smul.addr %s303, 4
      %s305 = scalar_lea.vmem %s2, %s304
      %s306 = smul.u32 8, %s21
      %s307 = smul.u32 8, %s21
      %p308 = scmp.lt.s32.totalorder %s20, 1
      %s309 = scalar_select %p308, %s20, 1
      %p310 = scmp.lt.s32.totalorder %s307, 7
      %s311 = scalar_select %p310, %s307, 7
      %s312 = smul.addr %s309, 8
      %s313 = sadd.s32 %s311, %s312
      %s314 = smul.addr %s313, 8
      %s315 = scalar_lea.vmem %s5, %s314
      %s316 = smul.u32 8, %s21
      %v318 = vld [vmem:[%s291] sm:$0xf]
      %v319 = vld [vmem:[%s291 + $0x4] sm:$0xf]
      %v320 = vld [vmem:[%s291 + $0x8] sm:$0xf]
      %v321 = vld [vmem:[%s291 + $0xc] sm:$0xf]
      %v322 = vld [vmem:[%s291 + $0x10] sm:$0xf]
      %v323 = vld [vmem:[%s291 + $0x14] sm:$0xf]
      %v324 = vld [vmem:[%s291 + $0x18] sm:$0xf]
      %v325 = vld [vmem:[%s291 + $0x1c] sm:$0xf]
      %v326 = vunpack.c.l.bf16 %v318
      %v327 = vunpack.c.l.bf16 %v319
      %v328 = vunpack.c.l.bf16 %v320
      %v329 = vunpack.c.l.bf16 %v321
      %v330 = vunpack.c.l.bf16 %v322
      %v331 = vunpack.c.l.bf16 %v323
      %v332 = vunpack.c.l.bf16 %v324
      %v333 = vunpack.c.l.bf16 %v325
      %v334 = vld [vmem:[%s296] sm:$0x1]
      %v335 = vlaneseq
      %v336 = vshrl.u32 %v335, 7
      %v337 = vsub.s32 0, %v336
      %v338 = vrot.slane %v334, %v337
      %v339 = vmul.f32 %v326, %v338
      %v340 = vmul.f32 %v327, %v338
      %v341 = vmul.f32 %v328, %v338
      %v342 = vmul.f32 %v329, %v338
      %v343 = vmul.f32 %v330, %v338
      %v344 = vmul.f32 %v331, %v338
      %v345 = vmul.f32 %v332, %v338
      %v346 = vmul.f32 %v333, %v338
      %v347 = vld [vmem:[%s296 + $0x1] sm:$0x1]
      %v348 = vlaneseq
      %v349 = vshrl.u32 %v348, 7
      %v350 = vsub.s32 0, %v349
      %v351 = vrot.slane %v347, %v350
      %v352 = vadd.f32 %v339, %v351
      %v353 = vadd.f32 %v340, %v351
      %v354 = vadd.f32 %v341, %v351
      %v355 = vadd.f32 %v342, %v351
      %v356 = vadd.f32 %v343, %v351
      %v357 = vadd.f32 %v344, %v351
      %v358 = vadd.f32 %v345, %v351
      %v359 = vadd.f32 %v346, %v351
      %v360 = vld [vmem:[%s305] sm:$0xf]
      %v361 = vld [vmem:[%s305 + $0x4] sm:$0xf]
      %v362 = vld [vmem:[%s305 + $0x8] sm:$0xf]
      %v363 = vld [vmem:[%s305 + $0xc] sm:$0xf]
      %v364 = vld [vmem:[%s305 + $0x10] sm:$0xf]
      %v365 = vld [vmem:[%s305 + $0x14] sm:$0xf]
      %v366 = vld [vmem:[%s305 + $0x18] sm:$0xf]
      %v367 = vld [vmem:[%s305 + $0x1c] sm:$0xf]
      %v368 = vld [vmem:[%s3] sm:$0xf]
      %v369 = vld [vmem:[%s3 + $0x4] sm:$0xf]
      %v370 = vld [vmem:[%s3 + $0x8] sm:$0xf]
      %v371 = vld [vmem:[%s3 + $0xc] sm:$0xf]
      %v372 = vld [vmem:[%s4] sm:$0x1]
      %v374 = vlaneseq
      %v375 = vshrl.u32 %v374, 7
      %v376 = vsub.s32 0, %v375
      %v377 = vrot.slane %v372, %v376
      %v387 = vunpack.c.l.b16 %v360
      %v388 = vunpack.c.l.b16 %v361
      %v389 = vunpack.c.l.b16 %v362
      %v390 = vunpack.c.l.b16 %v363
      %v391 = vunpack.c.l.b16 %v364
      %v392 = vunpack.c.l.b16 %v365
      %v393 = vunpack.c.l.b16 %v366
      %v394 = vunpack.c.l.b16 %v367
      %v395 = vpack.c.b16 %v388, %v387
      %v396 = vpack.c.b16 %v390, %v389
      %v397 = vpack.c.b16 %v392, %v391
      %v398 = vpack.c.b16 %v394, %v393
      %v403 = vunpack.c.l.b16 %v368
      %v404 = vunpack.c.l.b16 %v369
      %v405 = vunpack.c.l.b16 %v370
      %v406 = vunpack.c.l.b16 %v371
      %v407 = vpack.c.b16 %v404, %v403
      %v408 = vpack.c.b16 %v406, %v405
      %vm411 = vcmask 261120
      %v413 = vsel %vm411, %v395, 0
      %v416 = vsel %vm411, %v396, 0
      %v419 = vsel %vm411, %v397, 0
      %v422 = vsel %vm411, %v398, 0
      %424 = vmatprep.subr.bf16.mxu0 0
      %425 = vmatpush1.bf16.msra.mxu0 %v407
      %426 = vmatprep.subr.bf16.mxu0 0
      %427 = vmatpush1.bf16.msra.mxu0 %v408
      %428 = vmatprep.subr.bf16.mxu0 0
      %429 = vmatpush1.bf16.msra.mxu0 0
      %430 = vmatprep.subr.bf16.mxu0 0
      %431 = vmatpush1.bf16.msra.mxu0 0
      %432 = vmatprep.subr.bf16.mxu0 0
      %433 = vmatpush1.bf16.msra.mxu0 0
      %434 = vmatprep.subr.bf16.mxu0 0
      %435 = vmatpush1.bf16.msra.mxu0 0
      %436 = vmatprep.subr.bf16.mxu0 0
      %437 = vmatpush1.bf16.msra.mxu0 0
      %438 = vmatprep.subr.bf16.mxu0 0
      %439 = vmatpush1.bf16.msra.mxu0 0
      %440 = vmatprep.subr.bf16.mxu0 0
      %441 = vmatpush1.bf16.msra.mxu0 0
      %442 = vmatprep.subr.bf16.mxu0 0
      %443 = vmatpush1.bf16.msra.mxu0 0
      %444 = vmatprep.subr.bf16.mxu0 0
      %445 = vmatpush1.bf16.msra.mxu0 0
      %446 = vmatprep.subr.bf16.mxu0 0
      %447 = vmatpush1.bf16.msra.mxu0 0
      %448 = vmatprep.subr.bf16.mxu0 0
      %449 = vmatpush1.bf16.msra.mxu0 0
      %450 = vmatprep.subr.bf16.mxu0 0
      %451 = vmatpush1.bf16.msra.mxu0 0
      %452 = vmatprep.subr.bf16.mxu0 0
      %453 = vmatpush1.bf16.msra.mxu0 0
      %454 = vmatprep.subr.bf16.mxu0 0
      %455 = vmatpush1.bf16.msra.mxu0 0
      %456 = vmatprep.mubr.bf16.mxu0 0
      %457 = vmatmul.mubr.bf16.gmra.mrb[0].mxu0 %v413
      %v458 = vpop.f32.mrb[0].mxu0
      %v459 = vadd.f32 %v377, %v458
      %v460 = vpop.f32.mrb[0].mxu0
      %v461 = vpop.f32.mrb[0].mxu0
      %v462 = vadd.f32 %v377, %v461
      %v463 = vpop.f32.mrb[0].mxu0
      %464 = vmatprep.mubr.bf16.mxu0 0
      %465 = vmatmul.mubr.bf16.gmra.mrb[0].mxu0 %v416
      %v466 = vpop.f32.mrb[0].mxu0
      %v467 = vadd.f32 %v377, %v466
      %v468 = vpop.f32.mrb[0].mxu0
      %v469 = vpop.f32.mrb[0].mxu0
      %v470 = vadd.f32 %v377, %v469
      %v471 = vpop.f32.mrb[0].mxu0
      %472 = vmatprep.mubr.bf16.mxu0 0
      %473 = vmatmul.mubr.bf16.gmra.mrb[0].mxu0 %v419
      %v474 = vpop.f32.mrb[0].mxu0
      %v475 = vadd.f32 %v377, %v474
      %v476 = vpop.f32.mrb[0].mxu0
      %v477 = vpop.f32.mrb[0].mxu0
      %v478 = vadd.f32 %v377, %v477
      %v479 = vpop.f32.mrb[0].mxu0
      %480 = vmatprep.mubr.bf16.mxu0 0
      %481 = vmatmul.mubr.bf16.gmra.mrb[0].mxu0 %v422
      %v482 = vpop.f32.mrb[0].mxu0
      %v483 = vadd.f32 %v377, %v482
      %v484 = vpop.f32.mrb[0].mxu0
      %v485 = vpop.f32.mrb[0].mxu0
      %v486 = vadd.f32 %v377, %v485
      %v487 = vpop.f32.mrb[0].mxu0
      %488 = vdwg.mxu0
      %v489 = vadd.f32 %v352, %v459
      %v490 = vadd.f32 %v353, %v462
      %v491 = vadd.f32 %v354, %v467
      %v492 = vadd.f32 %v355, %v470
      %v493 = vadd.f32 %v356, %v475
      %v494 = vadd.f32 %v357, %v478
      %v495 = vadd.f32 %v358, %v483
      %v496 = vadd.f32 %v359, %v486
      %v497 = vmax.f32 %v489, 0.0
      %v498 = vmax.f32 %v490, 0.0
      %v499 = vmax.f32 %v491, 0.0
      %v500 = vmax.f32 %v492, 0.0
      %v501 = vmax.f32 %v493, 0.0
      %v502 = vmax.f32 %v494, 0.0
      %v503 = vmax.f32 %v495, 0.0
      %v504 = vmax.f32 %v496, 0.0
      %505 = vst [vmem:[%s315] sm:$0xff] %v497
      %506 = vst [vmem:[%s315 + $0x8] sm:$0xff] %v498
      %507 = vst [vmem:[%s315 + $0x10] sm:$0xff] %v499
      %508 = vst [vmem:[%s315 + $0x18] sm:$0xff] %v500
      %509 = vst [vmem:[%s315 + $0x20] sm:$0xff] %v501
      %510 = vst [vmem:[%s315 + $0x28] sm:$0xff] %v502
      %511 = vst [vmem:[%s315 + $0x30] sm:$0xff] %v503
      %512 = vst [vmem:[%s315 + $0x38] sm:$0xff] %v504
      %s513 = smul.u32 8, %s21
      %p514 = scmp.lt.s32.totalorder %s20, 1
      %s515 = scalar_select %p514, %s20, 1
      %p516 = scmp.lt.s32.totalorder %s513, 7
      %s517 = scalar_select %p516, %s513, 7
      %s518 = smul.addr %s515, 8
      %s519 = sadd.s32 %s517, %s518
      %s520 = smul.addr %s519, 8
      %s521 = scalar_lea.vmem %s5, %s520
      // Predicated region
      $region41: #{resblock3d_adaptive_forward.5} parent=39 // pred_check
        %p522 = pneg %p172
      $region42: #{resblock3d_adaptive_forward.5} parent=39 // pred_check_branch
        %524 = sbr.rel (%p522) target = $region44
      $region43: #{resblock3d_adaptive_forward.5} parent=39 // pred_region
        %s525 = smul.u32 8, %s21
      $region44: #{resblock3d_adaptive_forward.5} parent=39 // pred_fallthru
        _
    $region40: #{resblock3d_adaptive_forward.5} parent=5 // pred_fallthru
      _
    %p526 = scmp.le.s32.totalorder 2, %s11
    // Predicated region
    $region45: #{resblock3d_adaptive_forward.5} parent=5 // pred_check
      %p527 = pneg %p526
    $region46: #{resblock3d_adaptive_forward.5} parent=5 // pred_check_branch
      %529 = sbr.rel (%p527) target = $region48
    $region47: #{resblock3d_adaptive_forward.5} parent=5 // pred_region
      %s530 = ssub.s32 %s11, 2
      // Predicated region
      $region49: #{resblock3d_adaptive_forward.5} parent=47 // pred_check
        %p531 = pneg %p178
      $region50: #{resblock3d_adaptive_forward.5} parent=47 // pred_check_branch
        %533 = sbr.rel (%p531) target = $region52
      $region51: #{resblock3d_adaptive_forward.5} parent=47 // pred_region
        %s534 = smul.u32 8, %s23
        %p535 = scmp.lt.s32.totalorder %s22, 1
        %s536 = scalar_select %p535, %s22, 1
        %p537 = scmp.lt.s32.totalorder %s534, 7
        %s538 = scalar_select %p537, %s534, 7
        %s539 = smul.addr %s536, 8
        %s540 = sadd.s32 %s538, %s539
        %s541 = smul.addr %s540, 8
        %s542 = scalar_lea.vmem %s5, %s541
      $region52: #{resblock3d_adaptive_forward.5} parent=47 // pred_fallthru
        _
    $region48: #{resblock3d_adaptive_forward.5} parent=5 // pred_fallthru
      _
  $region6: #{resblock3d_adaptive_forward.5} parent=0 // loop_footer
    %s15 = sadd.s32 1, %s11
  $region7: #{resblock3d_adaptive_forward.5} parent=0 // loop_footer_branch
    %10 = sbr.rel target = $region3
  $region8: #{resblock3d_adaptive_forward.5} parent=0 // loop_exit
    _

// kernel: resblock3d_adaptive_forward.3
$region0: #{resblock3d_adaptive_forward.3}
  #allocation0 [shape = 'u32[]', space=smem, size = 0x4, offset = 0x4, fixed_abs, tag = 'smem constant byte address 0x4 - core index']
  #allocation1 [shape = 'u32[144,128]{1,0:T(1,128)}', space=vmem, size = 0x12000, scoped, tag = 'internal scratch']
  #allocation2 [shape = 'bf16[3,10,10,8]{3,2,1,0:T(8,128)(2,1)}', space=vmem, size = 0x1e000, scoped, tag = 'scratch operand']
  %s0 = inlined_call_operand.vmem [shape: bf16[2,4,8,8,8], index: 0, kind: input, shape index: {}, may-alias: {0,1,2}]
  %s1 = inlined_call_operand.vmem [shape: bf16[2,4,8,8,8], index: 1, kind: input, shape index: {}, may-alias: {0,1,2}]
  %s2 = inlined_call_operand.vmem [shape: bf16[2,4,8,8,8], index: 2, kind: input, shape index: {}, may-alias: {0,1,2}]
  %s3 = inlined_call_operand.vmem [shape: bf16[216,32], index: 3, kind: input, shape index: {}]
  %s4 = inlined_call_operand.vmem [shape: f32[1,32], index: 4, kind: input, shape index: {}]
  %s5 = inlined_call_operand.vmem [shape: bf16[2,4,64,32], index: 5, kind: output, shape index: {0}]
  %s6 = inlined_call_operand.vmem [shape: f32[2,2,32], index: 6, kind: output, shape index: {1}]
  %7 = xla_tuple %s5, %s6
  %s8 = sld [smem:[#allocation0]]
  $region65: #{resblock3d_adaptive_forward.3} parent=0
    _
  %s10 = ssub.s32 1, %s8
  %s11 = scalar_select 0, %s10, %s8
  loop: start=0, step=1, limit=10
  $region2: #{resblock3d_adaptive_forward.3} parent=0 // loop_pre_header
    _
  $region3: #{resblock3d_adaptive_forward.3} parent=0 // loop_header
    %s13 = sphi 0, %s17
    %p14 = scmp.ge.s32.totalorder %s13, 10
    %s20 = sphi 0, %s32
    %s21 = sphi 0, %s28
    %s22 = sphi 0, %s20
    %s23 = sphi 0, %s21
    %s24 = sphi 0, %s22
    %s25 = sphi 0, %s23
    %s43 = sphi 0, %s45
    %s46 = sphi 0, %s43
    %s47 = sphi 0, %s46
    %s63 = sphi 0, %s47
    %s71 = sphi 0, %s73
    %s74 = sphi 0, %s71
    %s75 = sphi 0, %s74
    %s91 = sphi 0, %s75
    %s105 = sphi 0, %s107
    %s108 = sphi 0, %s105
    %s109 = sphi 0, %s108
    %s125 = sphi 0, %s109
    %s129 = sphi 0, %s129
    %s131 = sphi 0, %s129
    %s132 = sphi 0, %s131
    %s146 = sphi 0, %s132
    %s150 = sphi 0, %s150
    %s152 = sphi 0, %s150
    %s153 = sphi 0, %s152
    %s167 = sphi 0, %s153
    %s175 = sphi 0, %s177
    %s178 = sphi 0, %s175
    %s179 = sphi 0, %s178
    %s195 = sphi 0, %s179
    %s201 = sphi 0, %s203
    %s204 = sphi 0, %s201
    %s205 = sphi 0, %s204
    %s221 = sphi 0, %s205
  $region4: #{resblock3d_adaptive_forward.3} parent=0 // loop_header_branch
    %16 = sbr.rel (%p14) target = $region8
  $region5: #{resblock3d_adaptive_forward.3} parent=0 // loop_body
    %s18 = ssub.s32 %s13, 1
    %s19 = ssub.s32 %s13, 2
    %s26 = sadd.s32 1, %s21
    %p27 = scmp.ge.s32.totalorder %s26, 4
    %s28 = scalar_select %p27, 0, %s26
    %s29 = sadd.s32 1, %s20
    %s30 = scalar_select %p27, %s29, %s20
    %p31 = scmp.ge.s32.totalorder %s30, 2
    %s32 = scalar_select %p31, 0, %s30
    %s33 = ssub.s32 %s21, 1
    %p34 = scmp.gt.s32.totalorder %s33, 0
    %s35 = scalar_select %p34, %s33, 0
    %s36 = ssub.s32 %s28, 1
    %p37 = scmp.gt.s32.totalorder %s36, 0
    %s38 = scalar_select %p37, %s36, 0
    %s39 = ssub.s32 %s20, %s32
    %s40 = ssub.s32 %s35, %s38
    %s41 = sor.u32 %s39, %s40
    %p42 = scmp.eq.s32.totalorder %s41, 0
    %s44 = sadd.s32 %s43, 1
    %s45 = scalar_select %p42, %s43, %s44
    %p48 = pneg %p42
    %p49 = scmp.eq.s32.totalorder %s13, 7
    %p50 = por %p48, %p49
    %p51 = scmp.ne.s32.totalorder %s43, %s46
    %p52 = scmp.eq.s32.totalorder %s13, 0
    %p53 = por %p51, %p52
    %p54 = scmp.ne.s32.totalorder %s43, %s46
    %p55 = scmp.eq.s32.totalorder %s18, 7
    %p56 = por %p54, %p55
    %p57 = scmp.ne.s32.totalorder %s46, %s47
    %p58 = scmp.eq.s32.totalorder %s18, 0
    %p59 = por %p57, %p58
    %p60 = scmp.ne.s32.totalorder %s46, %s47
    %p61 = scmp.eq.s32.totalorder %s19, 7
    %p62 = por %p60, %p61
    %p64 = scmp.ne.s32.totalorder %s47, %s63
    %p65 = scmp.eq.s32.totalorder %s19, 0
    %p66 = por %p64, %p65
    %s67 = ssub.s32 %s20, %s32
    %s68 = ssub.s32 %s21, %s28
    %s69 = sor.u32 %s67, %s68
    %p70 = scmp.eq.s32.totalorder %s69, 0
    %s72 = sadd.s32 %s71, 1
    %s73 = scalar_select %p70, %s71, %s72
    %p76 = pneg %p70
    %p77 = scmp.eq.s32.totalorder %s13, 7
    %p78 = por %p76, %p77
    %p79 = scmp.ne.s32.totalorder %s71, %s74
    %p80 = scmp.eq.s32.totalorder %s13, 0
    %p81 = por %p79, %p80
    %p82 = scmp.ne.s32.totalorder %s71, %s74
    %p83 = scmp.eq.s32.totalorder %s18, 7
    %p84 = por %p82, %p83
    %p85 = scmp.ne.s32.totalorder %s74, %s75
    %p86 = scmp.eq.s32.totalorder %s18, 0
    %p87 = por %p85, %p86
    %p88 = scmp.ne.s32.totalorder %s74, %s75
    %p89 = scmp.eq.s32.totalorder %s19, 7
    %p90 = por %p88, %p89
    %p92 = scmp.ne.s32.totalorder %s75, %s91
    %p93 = scmp.eq.s32.totalorder %s19, 0
    %p94 = por %p92, %p93
    %s95 = sadd.s32 %s21, 1
    %p96 = scmp.lt.s32.totalorder %s95, 3
    %s97 = scalar_select %p96, %s95, 3
    %s98 = sadd.s32 %s28, 1
    %p99 = scmp.lt.s32.totalorder %s98, 3
    %s100 = scalar_select %p99, %s98, 3
    %s101 = ssub.s32 %s20, %s32
    %s102 = ssub.s32 %s97, %s100
    %s103 = sor.u32 %s101, %s102
    %p104 = scmp.eq.s32.totalorder %s103, 0
    %s106 = sadd.s32 %s105, 1
    %s107 = scalar_select %p104, %s105, %s106
    %p110 = pneg %p104
    %p111 = scmp.eq.s32.totalorder %s13, 7
    %p112 = por %p110, %p111
    %p113 = scmp.ne.s32.totalorder %s105, %s108
    %p114 = scmp.eq.s32.totalorder %s13, 0
    %p115 = por %p113, %p114
    %p116 = scmp.ne.s32.totalorder %s105, %s108
    %p117 = scmp.eq.s32.totalorder %s18, 7
    %p118 = por %p116, %p117
    %p119 = scmp.ne.s32.totalorder %s108, %s109
    %p120 = scmp.eq.s32.totalorder %s18, 0
    %p121 = por %p119, %p120
    %p122 = scmp.ne.s32.totalorder %s108, %s109
    %p123 = scmp.eq.s32.totalorder %s19, 7
    %p124 = por %p122, %p123
    %p126 = scmp.ne.s32.totalorder %s109, %s125
    %p127 = scmp.eq.s32.totalorder %s19, 0
    %p128 = por %p126, %p127
    %s130 = sadd.s32 %s129, 1
    %p133 = scmp.eq.s32.totalorder %s13, 7
    %p134 = scmp.ne.s32.totalorder %s129, %s131
    %p135 = scmp.eq.s32.totalorder %s13, 0
    %p136 = por %p134, %p135
    %p137 = scmp.ne.s32.totalorder %s129, %s131
    %p138 = scmp.eq.s32.totalorder %s18, 7
    %p139 = por %p137, %p138
    %p140 = scmp.ne.s32.totalorder %s131, %s132
    %p141 = scmp.eq.s32.totalorder %s18, 0
    %p142 = por %p140, %p141
    %p143 = scmp.ne.s32.totalorder %s131, %s132
    %p144 = scmp.eq.s32.totalorder %s19, 7
    %p145 = por %p143, %p144
    %p147 = scmp.ne.s32.totalorder %s132, %s146
    %p148 = scmp.eq.s32.totalorder %s19, 0
    %p149 = por %p147, %p148
    %s151 = sadd.s32 %s150, 1
    %p154 = scmp.eq.s32.totalorder %s13, 7
    %p155 = scmp.ne.s32.totalorder %s150, %s152
    %p156 = scmp.eq.s32.totalorder %s13, 0
    %p157 = por %p155, %p156
    %p158 = scmp.ne.s32.totalorder %s150, %s152
    %p159 = scmp.eq.s32.totalorder %s18, 7
    %p160 = por %p158, %p159
    %p161 = scmp.ne.s32.totalorder %s152, %s153
    %p162 = scmp.eq.s32.totalorder %s18, 0
    %p163 = por %p161, %p162
    %p164 = scmp.ne.s32.totalorder %s152, %s153
    %p165 = scmp.eq.s32.totalorder %s19, 7
    %p166 = por %p164, %p165
    %p168 = scmp.ne.s32.totalorder %s153, %s167
    %p169 = scmp.eq.s32.totalorder %s19, 0
    %p170 = por %p168, %p169
    %s171 = ssub.s32 %s20, %s32
    %s172 = ssub.s32 %s21, %s28
    %s173 = sor.u32 %s171, %s172
    %p174 = scmp.eq.s32.totalorder %s173, 0
    %s176 = sadd.s32 %s175, 1
    %s177 = scalar_select %p174, %s175, %s176
    %p180 = pneg %p174
    %p181 = scmp.eq.s32.totalorder %s13, 7
    %p182 = por %p180, %p181
    %p183 = scmp.ne.s32.totalorder %s175, %s178
    %p184 = scmp.eq.s32.totalorder %s13, 0
    %p185 = por %p183, %p184
    %p186 = scmp.ne.s32.totalorder %s175, %s178
    %p187 = scmp.eq.s32.totalorder %s18, 7
    %p188 = por %p186, %p187
    %p189 = scmp.ne.s32.totalorder %s178, %s179
    %p190 = scmp.eq.s32.totalorder %s18, 0
    %p191 = por %p189, %p190
    %p192 = scmp.ne.s32.totalorder %s178, %s179
    %p193 = scmp.eq.s32.totalorder %s19, 7
    %p194 = por %p192, %p193
    %p196 = scmp.ne.s32.totalorder %s179, %s195
    %p197 = scmp.eq.s32.totalorder %s19, 0
    %p198 = por %p196, %p197
    %s199 = ssub.s32 %s20, %s32
    %p200 = scmp.eq.s32.totalorder %s199, 0
    %s202 = sadd.s32 %s201, 1
    %s203 = scalar_select %p200, %s201, %s202
    %p206 = pneg %p200
    %p207 = scmp.eq.s32.totalorder %s13, 7
    %p208 = por %p206, %p207
    %p209 = scmp.ne.s32.totalorder %s201, %s204
    %p210 = scmp.eq.s32.totalorder %s13, 0
    %p211 = por %p209, %p210
    %p212 = scmp.ne.s32.totalorder %s201, %s204
    %p213 = scmp.eq.s32.totalorder %s18, 7
    %p214 = por %p212, %p213
    %p215 = scmp.ne.s32.totalorder %s204, %s205
    %p216 = scmp.eq.s32.totalorder %s18, 0
    %p217 = por %p215, %p216
    %p218 = scmp.ne.s32.totalorder %s204, %s205
    %p219 = scmp.eq.s32.totalorder %s19, 7
    %p220 = por %p218, %p219
    %p222 = scmp.ne.s32.totalorder %s205, %s221
    %p223 = scmp.eq.s32.totalorder %s19, 0
    %p224 = por %p222, %p223
    %p225 = scmp.le.s32.totalorder 1, %s13
    %p226 = scmp.lt.s32.totalorder %s13, 9
    %p227 = pnand %p225, %p226
    %p228 = pneg %p227
    // Predicated region
    $region9: #{resblock3d_adaptive_forward.3} parent=5 // pred_check
      _
    $region10: #{resblock3d_adaptive_forward.3} parent=5 // pred_check_branch
      %230 = sbr.rel (%p227) target = $region12
    $region11: #{resblock3d_adaptive_forward.3} parent=5 // pred_region
      %s231 = ssub.s32 %s13, 1
      // Predicated region
      $region13: #{resblock3d_adaptive_forward.3} parent=11 // pred_check
        %p232 = pneg %p142
      $region14: #{resblock3d_adaptive_forward.3} parent=11 // pred_check_branch
        %234 = sbr.rel (%p232) target = $region16
      $region15: #{resblock3d_adaptive_forward.3} parent=11 // pred_region
        _
      $region16: #{resblock3d_adaptive_forward.3} parent=11 // pred_fallthru
        _
      // Predicated region
      $region17: #{resblock3d_adaptive_forward.3} parent=11 // pred_check
        %p235 = pneg %p163
      $region18: #{resblock3d_adaptive_forward.3} parent=11 // pred_check_branch
        %237 = sbr.rel (%p235) target = $region20
      $region19: #{resblock3d_adaptive_forward.3} parent=11 // pred_region
        _
      $region20: #{resblock3d_adaptive_forward.3} parent=11 // pred_fallthru
        _
    $region12: #{resblock3d_adaptive_forward.3} parent=5 // pred_fallthru
      _
    %p238 = scmp.lt.s32.totalorder %s13, 8
    // Predicated region
    $region21: #{resblock3d_adaptive_forward.3} parent=5 // pred_check
      %p239 = pneg %p238
    $region22: #{resblock3d_adaptive_forward.3} parent=5 // pred_check_branch
      %241 = sbr.rel (%p239) target = $region24
    $region23: #{resblock3d_adaptive_forward.3} parent=5 // pred_region
      // Predicated region
      $region25: #{resblock3d_adaptive_forward.3} parent=23 // pred_check
        %p242 = pneg %p53
      $region26: #{resblock3d_adaptive_forward.3} parent=23 // pred_check_branch
        %244 = sbr.rel (%p242) target = $region28
      $region27: #{resblock3d_adaptive_forward.3} parent=23 // pred_region
        %s245 = ssub.s32 %s21, 1
        %p246 = scmp.gt.s32.totalorder %s245, 0
        %s247 = scalar_select %p246, %s245, 0
        %p248 = scmp.lt.s32.totalorder %s20, 1
        %s249 = scalar_select %p248, %s20, 1
        %p250 = scmp.lt.s32.totalorder %s247, 3
        %s251 = scalar_select %p250, %s247, 3
        %s252 = smul.addr %s251, 8
        %s253 = smul.addr %s249, 32
        %s254 = sadd.s32 %s252, %s253
        %s255 = smul.addr %s254, 4
        %s256 = scalar_lea.vmem %s0, %s255
        %s257 = ssub.s32 %s21, 1
        %p258 = scmp.gt.s32.totalorder %s257, 0
        %s259 = scalar_select %p258, %s257, 0
      $region28: #{resblock3d_adaptive_forward.3} parent=23 // pred_fallthru
        _
      // Predicated region
      $region29: #{resblock3d_adaptive_forward.3} parent=23 // pred_check
        %p260 = pneg %p81
      $region30: #{resblock3d_adaptive_forward.3} parent=23 // pred_check_branch
        %262 = sbr.rel (%p260) target = $region32
      $region31: #{resblock3d_adaptive_forward.3} parent=23 // pred_region
        %p263 = scmp.lt.s32.totalorder %s20, 1
        %s264 = scalar_select %p263, %s20, 1
        %p265 = scmp.lt.s32.totalorder %s21, 3
        %s266 = scalar_select %p265, %s21, 3
        %s267 = smul.addr %s266, 8
        %s268 = smul.addr %s264, 32
        %s269 = sadd.s32 %s267, %s268
        %s270 = smul.addr %s269, 4
        %s271 = scalar_lea.vmem %s1, %s270
      $region32: #{resblock3d_adaptive_forward.3} parent=23 // pred_fallthru
        _
      // Predicated region
      $region33: #{resblock3d_adaptive_forward.3} parent=23 // pred_check
        %p272 = pneg %p115
      $region34: #{resblock3d_adaptive_forward.3} parent=23 // pred_check_branch
        %274 = sbr.rel (%p272) target = $region36
      $region35: #{resblock3d_adaptive_forward.3} parent=23 // pred_region
        %s275 = sadd.s32 %s21, 1
        %p276 = scmp.lt.s32.totalorder %s275, 3
        %s277 = scalar_select %p276, %s275, 3
        %p278 = scmp.lt.s32.totalorder %s20, 1
        %s279 = scalar_select %p278, %s20, 1
        %p280 = scmp.lt.s32.totalorder %s277, 3
        %s281 = scalar_select %p280, %s277, 3
        %s282 = smul.addr %s281, 8
        %s283 = smul.addr %s279, 32
        %s284 = sadd.s32 %s282, %s283
        %s285 = smul.addr %s284, 4
        %s286 = scalar_lea.vmem %s2, %s285
        %s287 = sadd.s32 %s21, 1
        %p288 = scmp.lt.s32.totalorder %s287, 3
        %s289 = scalar_select %p288, %s287, 3
      $region36: #{resblock3d_adaptive_forward.3} parent=23 // pred_fallthru
        _
    $region24: #{resblock3d_adaptive_forward.3} parent=5 // pred_fallthru
      _
    %p290 = scmp.le.s32.totalorder 1, %s13
    %p291 = scmp.lt.s32.totalorder %s13, 9
    %p292 = pnand %p290, %p291
    %p293 = pneg %p292
    // Predicated region
    $region37: #{resblock3d_adaptive_forward.3} parent=5 // pred_check
      _
    $region38: #{resblock3d_adaptive_forward.3} parent=5 // pred_check_branch
      %295 = sbr.rel (%p292) target = $region40
    $region39: #{resblock3d_adaptive_forward.3} parent=5 // pred_region
      %s296 = ssub.s32 %s13, 1
      %s297 = ssub.s32 %s23, 1
      %p298 = scmp.gt.s32.totalorder %s297, 0
      %s299 = scalar_select %p298, %s297, 0
      %p300 = scmp.lt.s32.totalorder %s22, 1
      %s301 = scalar_select %p300, %s22, 1
      %p302 = scmp.lt.s32.totalorder %s299, 3
      %s303 = scalar_select %p302, %s299, 3
      %s304 = smul.addr %s303, 8
      %s305 = smul.addr %s301, 32
      %s306 = sadd.s32 %s304, %s305
      %s307 = smul.addr %s306, 4
      %s308 = scalar_lea.vmem %s0, %s307
      %p309 = pneg %p59
      %p310 = pneg %p56
      %p311 = scmp.lt.s32.totalorder %s22, 1
      %s312 = scalar_select %p311, %s22, 1
      %p313 = scmp.lt.s32.totalorder %s23, 3
      %s314 = scalar_select %p313, %s23, 3
      %s315 = smul.addr %s314, 8
      %s316 = smul.addr %s312, 32
      %s317 = sadd.s32 %s315, %s316
      %s318 = smul.addr %s317, 4
      %s319 = scalar_lea.vmem %s1, %s318
      %p320 = pneg %p87
      %p321 = pneg %p84
      %s322 = sadd.s32 %s23, 1
      %p323 = scmp.lt.s32.totalorder %s322, 3
      %s324 = scalar_select %p323, %s322, 3
      %p325 = scmp.lt.s32.totalorder %s22, 1
      %s326 = scalar_select %p325, %s22, 1
      %p327 = scmp.lt.s32.totalorder %s324, 3
      %s328 = scalar_select %p327, %s324, 3
      %s329 = smul.addr %s328, 8
      %s330 = smul.addr %s326, 32
      %s331 = sadd.s32 %s329, %s330
      %s332 = smul.addr %s331, 4
      %s333 = scalar_lea.vmem %s2, %s332
      %p334 = pneg %p121
      %p335 = pneg %p118
      %p336 = pneg %p142
      %p337 = pneg %p139
      %p338 = pneg %p163
      %p339 = pneg %p160
      %p340 = pneg %p191
      %p341 = pneg %p188
      %p342 = scmp.lt.s32.totalorder %s22, 1
      %s343 = scalar_select %p342, %s22, 1
      %p344 = scmp.lt.s32.totalorder %s23, 3
      %s345 = scalar_select %p344, %s23, 3
      %s346 = smul.addr %s345, 8
      %s347 = smul.addr %s343, 32
      %s348 = sadd.s32 %s346, %s347
      %s349 = smul.addr %s348, 4
      %s350 = scalar_lea.vmem %s5, %s349
      %p351 = pneg %p217
      %p352 = pneg %p214
      %p353 = scmp.lt.s32.totalorder %s22, 1
      %s354 = scalar_select %p353, %s22, 1
      %s355 = smul.addr %s354, 2
      %s356 = scalar_lea.vmem %s6, %s355
      %s357 = ssub.s32 %s23, 1
      %p358 = scmp.gt.s32.totalorder %s357, 0
      %s359 = scalar_select %p358, %s357, 0
      %p360 = scmp.lt.s32.totalorder %s22, 1
      %s361 = scalar_select %p360, %s22, 1
      %p362 = scmp.lt.s32.totalorder %s359, 3
      %s363 = scalar_select %p362, %s359, 3
      %s364 = smul.addr %s363, 8
      %s365 = smul.addr %s361, 32
      %s366 = sadd.s32 %s364, %s365
      %s367 = smul.addr %s366, 4
      %s368 = scalar_lea.vmem %s0, %s367
      %s369 = ssub.s32 %s23, 1
      %p370 = scmp.gt.s32.totalorder %s369, 0
      %s371 = scalar_select %p370, %s369, 0
      %p372 = scmp.lt.s32.totalorder %s22, 1
      %s373 = scalar_select %p372, %s22, 1
      %p374 = scmp.lt.s32.totalorder %s23, 3
      %s375 = scalar_select %p374, %s23, 3
      %s376 = smul.addr %s375, 8
      %s377 = smul.addr %s373, 32
      %s378 = sadd.s32 %s376, %s377
      %s379 = smul.addr %s378, 4
      %s380 = scalar_lea.vmem %s1, %s379
      %s381 = sadd.s32 %s23, 1
      %p382 = scmp.lt.s32.totalorder %s381, 3
      %s383 = scalar_select %p382, %s381, 3
      %p384 = scmp.lt.s32.totalorder %s22, 1
      %s385 = scalar_select %p384, %s22, 1
      %p386 = scmp.lt.s32.totalorder %s383, 3
      %s387 = scalar_select %p386, %s383, 3
      %s388 = smul.addr %s387, 8
      %s389 = smul.addr %s385, 32
      %s390 = sadd.s32 %s388, %s389
      %s391 = smul.addr %s390, 4
      %s392 = scalar_lea.vmem %s2, %s391
      %s393 = sadd.s32 %s23, 1
      %p394 = scmp.lt.s32.totalorder %s393, 3
      %s395 = scalar_select %p394, %s393, 3
      %p396 = scmp.lt.s32.totalorder %s22, 1
      %s397 = scalar_select %p396, %s22, 1
      %p398 = scmp.lt.s32.totalorder %s23, 3
      %s399 = scalar_select %p398, %s23, 3
      %s400 = smul.addr %s399, 8
      %s401 = smul.addr %s397, 32
      %s402 = sadd.s32 %s400, %s401
      %s403 = smul.addr %s402, 4
      %s404 = scalar_lea.vmem %s5, %s403
      %p405 = scmp.lt.s32.totalorder %s22, 1
      %s406 = scalar_select %p405, %s22, 1
      %s407 = smul.addr %s406, 2
      %s408 = scalar_lea.vmem %s6, %s407
      %p410 = scmp.eq.s32.totalorder %s23, 0
      // Predicated region
      $region41: #{resblock3d_adaptive_forward.3} parent=39 // pred_check
        %p411 = pneg %p410
      $region42: #{resblock3d_adaptive_forward.3} parent=39 // pred_check_branch
        %413 = sbr.rel (%p411) target = $region44
      $region43: #{resblock3d_adaptive_forward.3} parent=39 // pred_region
        %vm414 = vcmask 60416
        %415 = vst.msk [vmem:[#allocation2] sm:$0xf] %vm414, 0
        %vm416 = vcmask 57344
        %417 = vst.msk [vmem:[#allocation2 + $0x4] sm:$0x1] %vm416, 0
        %418 = vst.msk [vmem:[#allocation2 + $0x8] sm:$0xf] %vm414, 0
        %419 = vst.msk [vmem:[#allocation2 + $0xc] sm:$0x1] %vm416, 0
        %420 = vst.msk [vmem:[#allocation2 + $0x10] sm:$0xf] %vm414, 0
        %421 = vst.msk [vmem:[#allocation2 + $0x14] sm:$0x1] %vm416, 0
        %422 = vst.msk [vmem:[#allocation2 + $0x18] sm:$0xf] %vm414, 0
        %423 = vst.msk [vmem:[#allocation2 + $0x1c] sm:$0x1] %vm416, 0
        %424 = vst.msk [vmem:[#allocation2 + $0x20] sm:$0xf] %vm414, 0
        %425 = vst.msk [vmem:[#allocation2 + $0x24] sm:$0x1] %vm416, 0
        %426 = vst.msk [vmem:[#allocation2 + $0x28] sm:$0xf] %vm414, 0
        %427 = vst.msk [vmem:[#allocation2 + $0x2c] sm:$0x1] %vm416, 0
        %428 = vst.msk [vmem:[#allocation2 + $0x30] sm:$0xf] %vm414, 0
        %429 = vst.msk [vmem:[#allocation2 + $0x34] sm:$0x1] %vm416, 0
        %430 = vst.msk [vmem:[#allocation2 + $0x38] sm:$0xf] %vm414, 0
        %431 = vst.msk [vmem:[#allocation2 + $0x3c] sm:$0x1] %vm416, 0
        %432 = vst.msk [vmem:[#allocation2 + $0x40] sm:$0xf] %vm414, 0
        %433 = vst.msk [vmem:[#allocation2 + $0x44] sm:$0x1] %vm416, 0
        %434 = vst.msk [vmem:[#allocation2 + $0x48] sm:$0xf] %vm414, 0
        %435 = vst.msk [vmem:[#allocation2 + $0x4c] sm:$0x1] %vm416, 0
        %436 = vst.msk [vmem:[#allocation2 + $0x50] sm:$0xf] %vm414, 0
        %437 = vst.msk [vmem:[#allocation2 + $0x54] sm:$0x1] %vm416, 0
        %438 = vst.msk [vmem:[#allocation2 + $0x58] sm:$0xf] %vm414, 0
        %439 = vst.msk [vmem:[#allocation2 + $0x5c] sm:$0x1] %vm416, 0
        %440 = vst.msk [vmem:[#allocation2 + $0x60] sm:$0xf] %vm414, 0
        %441 = vst.msk [vmem:[#allocation2 + $0x64] sm:$0x1] %vm416, 0
        %442 = vst.msk [vmem:[#allocation2 + $0x68] sm:$0xf] %vm414, 0
        %443 = vst.msk [vmem:[#allocation2 + $0x6c] sm:$0x1] %vm416, 0
        %444 = vst.msk [vmem:[#allocation2 + $0x70] sm:$0xf] %vm414, 0
        %445 = vst.msk [vmem:[#allocation2 + $0x74] sm:$0x1] %vm416, 0
        %446 = vst.msk [vmem:[#allocation2 + $0x78] sm:$0xf] %vm414, 0
        %447 = vst.msk [vmem:[#allocation2 + $0x7c] sm:$0x1] %vm416, 0
        %448 = vst.msk [vmem:[#allocation2 + $0x80] sm:$0xf] %vm414, 0
        %449 = vst.msk [vmem:[#allocation2 + $0x84] sm:$0x1] %vm416, 0
        %450 = vst.msk [vmem:[#allocation2 + $0x88] sm:$0xf] %vm414, 0
        %451 = vst.msk [vmem:[#allocation2 + $0x8c] sm:$0x1] %vm416, 0
        %452 = vst.msk [vmem:[#allocation2 + $0x90] sm:$0xf] %vm414, 0
        %453 = vst.msk [vmem:[#allocation2 + $0x94] sm:$0x1] %vm416, 0
        %454 = vst.msk [vmem:[#allocation2 + $0x98] sm:$0xf] %vm414, 0
        %455 = vst.msk [vmem:[#allocation2 + $0x9c] sm:$0x1] %vm416, 0
        %456 = vst.msk [vmem:[#allocation2 + $0xa0] sm:$0xf] %vm414, 0
        %457 = vst.msk [vmem:[#allocation2 + $0xa4] sm:$0x1] %vm416, 0
        %458 = vst.msk [vmem:[#allocation2 + $0xa8] sm:$0xf] %vm414, 0
        %459 = vst.msk [vmem:[#allocation2 + $0xac] sm:$0x1] %vm416, 0
        %460 = vst.msk [vmem:[#allocation2 + $0xb0] sm:$0xf] %vm414, 0
        %461 = vst.msk [vmem:[#allocation2 + $0xb4] sm:$0x1] %vm416, 0
        %462 = vst.msk [vmem:[#allocation2 + $0xb8] sm:$0xf] %vm414, 0
        %463 = vst.msk [vmem:[#allocation2 + $0xbc] sm:$0x1] %vm416, 0
        %464 = vst.msk [vmem:[#allocation2 + $0xc0] sm:$0xf] %vm414, 0
        %465 = vst.msk [vmem:[#allocation2 + $0xc4] sm:$0x1] %vm416, 0
        %466 = vst.msk [vmem:[#allocation2 + $0xc8] sm:$0xf] %vm414, 0
        %467 = vst.msk [vmem:[#allocation2 + $0xcc] sm:$0x1] %vm416, 0
        %468 = vst.msk [vmem:[#allocation2 + $0xd0] sm:$0xf] %vm414, 0
        %469 = vst.msk [vmem:[#allocation2 + $0xd4] sm:$0x1] %vm416, 0
        %470 = vst.msk [vmem:[#allocation2 + $0xd8] sm:$0xf] %vm414, 0
        %471 = vst.msk [vmem:[#allocation2 + $0xdc] sm:$0x1] %vm416, 0
        %472 = vst.msk [vmem:[#allocation2 + $0xe0] sm:$0xf] %vm414, 0
        %473 = vst.msk [vmem:[#allocation2 + $0xe4] sm:$0x1] %vm416, 0
        %474 = vst.msk [vmem:[#allocation2 + $0xe8] sm:$0xf] %vm414, 0
        %475 = vst.msk [vmem:[#allocation2 + $0xec] sm:$0x1] %vm416, 0
        %vm476 = vcmask 254976
        %477 = vst.msk [vmem:[%s408] sm:$0x3] %vm476, 0.0
      $region44: #{resblock3d_adaptive_forward.3} parent=39 // pred_fallthru
        _
      %v478 = vld [vmem:[%s368] sm:$0xf]
      %v479 = vld [vmem:[%s368 + $0x4] sm:$0xf]
      %v480 = vld [vmem:[%s368 + $0x8] sm:$0xf]
      %v481 = vld [vmem:[%s368 + $0xc] sm:$0xf]
      %v482 = vld [vmem:[%s368 + $0x10] sm:$0xf]
      %v483 = vld [vmem:[%s368 + $0x14] sm:$0xf]
      %v484 = vld [vmem:[%s368 + $0x18] sm:$0xf]
      %v485 = vld [vmem:[%s368 + $0x1c] sm:$0xf]
      %v486 = vunpack.c.l.bf16 %v478
      %v487 = vunpack.c.l.bf16 %v479
      %v488 = vunpack.c.l.bf16 %v480
      %v489 = vunpack.c.l.bf16 %v481
      %v490 = vunpack.c.l.bf16 %v482
      %v491 = vunpack.c.l.bf16 %v483
      %v492 = vunpack.c.l.bf16 %v484
      %v493 = vunpack.c.l.bf16 %v485
      %p494 = scmp.gt.s32.totalorder %s23, 0
      %s495 = scalar_select %p494, 1, 0
      %s496 = scvt.s32.f32 %s495
      %v497 = vstv %s496
      %v498 = vmul.f32 %v486, %v497
      %v499 = vmul.f32 %v487, %v497
      %v500 = vmul.f32 %v488, %v497
      %v501 = vmul.f32 %v489, %v497
      %v502 = vmul.f32 %v490, %v497
      %v503 = vmul.f32 %v491, %v497
      %v504 = vmul.f32 %v492, %v497
      %v505 = vmul.f32 %v493, %v497
      %v506 = vpack.c.bf16 %v498, %v498
      %v507 = vpack.c.bf16 %v499, %v499
      %v508 = vpack.c.bf16 %v500, %v500
      %v509 = vpack.c.bf16 %v501, %v501
      %v510 = vpack.c.bf16 %v502, %v502
      %v511 = vpack.c.bf16 %v503, %v503
      %v512 = vpack.c.bf16 %v504, %v504
      %v513 = vpack.c.bf16 %v505, %v505
      %v522 = vunpack.c.l.b16 %v506
      %v523 = vunpack.c.l.b16 %v507
      %v524 = vunpack.c.l.b16 %v508
      %v525 = vunpack.c.l.b16 %v509
      %v526 = vunpack.c.l.b16 %v510
      %v527 = vunpack.c.l.b16 %v511
      %v528 = vunpack.c.l.b16 %v512
      %v529 = vunpack.c.l.b16 %v513
      %v530 = vpack.c.b16 %v522, %v522
      %v531 = vpack.c.b16 %v523, %v523
      %v532 = vpack.c.b16 %v524, %v524
      %v533 = vpack.c.b16 %v525, %v525
      %v534 = vpack.c.b16 %v526, %v526
      %v535 = vpack.c.b16 %v527, %v527
      %v536 = vpack.c.b16 %v528, %v528
      %v537 = vpack.c.b16 %v529, %v529
      %v539 = vshrl.u32 %v530, 16
      %v541 = vrot.slane %v539, 7
      %v542 = vshll.u32 %v530, 16
      %v544 = vor.u32 %v541, %v542
      %v545 = vrot.slane %v541, 4
      %v547 = vshrl.u32 %v531, 16
      %v549 = vrot.slane %v547, 7
      %v550 = vshll.u32 %v531, 16
      %v552 = vor.u32 %v549, %v550
      %v553 = vrot.slane %v549, 4
      %v555 = vshrl.u32 %v532, 16
      %v557 = vrot.slane %v555, 7
      %v558 = vshll.u32 %v532, 16
      %v560 = vor.u32 %v557, %v558
      %v561 = vrot.slane %v557, 4
      %v563 = vshrl.u32 %v533, 16
      %v565 = vrot.slane %v563, 7
      %v566 = vshll.u32 %v533, 16
      %v568 = vor.u32 %v565, %v566
      %v569 = vrot.slane %v565, 4
      %v571 = vshrl.u32 %v534, 16
      %v573 = vrot.slane %v571, 7
      %v574 = vshll.u32 %v534, 16
      %v576 = vor.u32 %v573, %v574
      %v577 = vrot.slane %v573, 4
      %v579 = vshrl.u32 %v535, 16
      %v581 = vrot.slane %v579, 7
      %v582 = vshll.u32 %v535, 16
      %v584 = vor.u32 %v581, %v582
      %v585 = vrot.slane %v581, 4
      %v587 = vshrl.u32 %v536, 16
      %v589 = vrot.slane %v587, 7
      %v590 = vshll.u32 %v536, 16
      %v592 = vor.u32 %v589, %v590
      %v593 = vrot.slane %v589, 4
      %v595 = vshrl.u32 %v537, 16
      %v597 = vrot.slane %v595, 7
      %v598 = vshll.u32 %v537, 16
      %v600 = vor.u32 %v597, %v598
      %v601 = vrot.slane %v597, 4
      %s618 = scalar_lea.vmem [#allocation2], 8
      %vm619 = vcmask 60416
      %vm620 = vsmask.f32 7938
      %vm621 = vmand %vm619, %vm620
      %v622 = vld [vmem:[%s618] sm:$0xf]
      %v623 = vsel %vm621, %v544, %v622
      %624 = vst [vmem:[%s618] sm:$0xf] %v623
      %vm625 = vcmask 57344
      %vm626 = vsmask.f32 256
      %vm627 = vmand %vm625, %vm626
      %v628 = vld [vmem:[%s618 + $0x4] sm:$0x1]
      %v629 = vsel %vm627, %v545, %v628
      %630 = vst [vmem:[%s618 + $0x4] sm:$0x1] %v629
      %v631 = vld [vmem:[%s618 + $0x8] sm:$0xf]
      %v632 = vsel %vm621, %v552, %v631
      %633 = vst [vmem:[%s618 + $0x8] sm:$0xf] %v632
      %v634 = vld [vmem:[%s618 + $0xc] sm:$0x1]
      %v635 = vsel %vm627, %v553, %v634
      %636 = vst [vmem:[%s618 + $0xc] sm:$0x1] %v635
      %v637 = vld [vmem:[%s618 + $0x10] sm:$0xf]
      %v638 = vsel %vm621, %v560, %v637
      %639 = vst [vmem:[%s618 + $0x10] sm:$0xf] %v638
      %v640 = vld [vmem:[%s618 + $0x14] sm:$0x1]
      %v641 = vsel %vm627, %v561, %v640
      %642 = vst [vmem:[%s618 + $0x14] sm:$0x1] %v641
      %v643 = vld [vmem:[%s618 + $0x18] sm:$0xf]
      %v644 = vsel %vm621, %v568, %v643
      %645 = vst [vmem:[%s618 + $0x18] sm:$0xf] %v644
      %v646 = vld [vmem:[%s618 + $0x1c] sm:$0x1]
      %v647 = vsel %vm627, %v569, %v646
      %648 = vst [vmem:[%s618 + $0x1c] sm:$0x1] %v647
      %v649 = vld [vmem:[%s618 + $0x20] sm:$0xf]
      %v650 = vsel %vm621, %v576, %v649
      %651 = vst [vmem:[%s618 + $0x20] sm:$0xf] %v650
      %v652 = vld [vmem:[%s618 + $0x24] sm:$0x1]
      %v653 = vsel %vm627, %v577, %v652
      %654 = vst [vmem:[%s618 + $0x24] sm:$0x1] %v653
      %v655 = vld [vmem:[%s618 + $0x28] sm:$0xf]
      %v656 = vsel %vm621, %v584, %v655
      %657 = vst [vmem:[%s618 + $0x28] sm:$0xf] %v656
      %v658 = vld [vmem:[%s618 + $0x2c] sm:$0x1]
      %v659 = vsel %vm627, %v585, %v658
      %660 = vst [vmem:[%s618 + $0x2c] sm:$0x1] %v659
      %v661 = vld [vmem:[%s618 + $0x30] sm:$0xf]
      %v662 = vsel %vm621, %v592, %v661
      %663 = vst [vmem:[%s618 + $0x30] sm:$0xf] %v662
      %v664 = vld [vmem:[%s618 + $0x34] sm:$0x1]
      %v665 = vsel %vm627, %v593, %v664
      %666 = vst [vmem:[%s618 + $0x34] sm:$0x1] %v665
      %v667 = vld [vmem:[%s618 + $0x38] sm:$0xf]
      %v668 = vsel %vm621, %v600, %v667
      %669 = vst [vmem:[%s618 + $0x38] sm:$0xf] %v668
      %v670 = vld [vmem:[%s618 + $0x3c] sm:$0x1]
      %v671 = vsel %vm627, %v601, %v670
      %672 = vst [vmem:[%s618 + $0x3c] sm:$0x1] %v671
      %v673 = vld [vmem:[%s380] sm:$0xf]
      %v674 = vld [vmem:[%s380 + $0x4] sm:$0xf]
      %v675 = vld [vmem:[%s380 + $0x8] sm:$0xf]
      %v676 = vld [vmem:[%s380 + $0xc] sm:$0xf]
      %v677 = vld [vmem:[%s380 + $0x10] sm:$0xf]
      %v678 = vld [vmem:[%s380 + $0x14] sm:$0xf]
      %v679 = vld [vmem:[%s380 + $0x18] sm:$0xf]
      %v680 = vld [vmem:[%s380 + $0x1c] sm:$0xf]
      %v682 = vshrl.u32 %v673, 16
      %v684 = vrot.slane %v682, 7
      %v685 = vshll.u32 %v673, 16
      %v687 = vor.u32 %v684, %v685
      %v688 = vrot.slane %v684, 4
      %v690 = vshrl.u32 %v674, 16
      %v692 = vrot.slane %v690, 7
      %v693 = vshll.u32 %v674, 16
      %v695 = vor.u32 %v692, %v693
      %v696 = vrot.slane %v692, 4
      %v698 = vshrl.u32 %v675, 16
      %v700 = vrot.slane %v698, 7
      %v701 = vshll.u32 %v675, 16
      %v703 = vor.u32 %v700, %v701
      %v704 = vrot.slane %v700, 4
      %v706 = vshrl.u32 %v676, 16
      %v708 = vrot.slane %v706, 7
      %v709 = vshll.u32 %v676, 16
      %v711 = vor.u32 %v708, %v709
      %v712 = vrot.slane %v708, 4
      %v714 = vshrl.u32 %v677, 16
      %v716 = vrot.slane %v714, 7
      %v717 = vshll.u32 %v677, 16
      %v719 = vor.u32 %v716, %v717
      %v720 = vrot.slane %v716, 4
      %v722 = vshrl.u32 %v678, 16
      %v724 = vrot.slane %v722, 7
      %v725 = vshll.u32 %v678, 16
      %v727 = vor.u32 %v724, %v725
      %v728 = vrot.slane %v724, 4
      %v730 = vshrl.u32 %v679, 16
      %v732 = vrot.slane %v730, 7
      %v733 = vshll.u32 %v679, 16
      %v735 = vor.u32 %v732, %v733
      %v736 = vrot.slane %v732, 4
      %v738 = vshrl.u32 %v680, 16
      %v740 = vrot.slane %v738, 7
      %v741 = vshll.u32 %v680, 16
      %v743 = vor.u32 %v740, %v741
      %v744 = vrot.slane %v740, 4
      %s761 = scalar_lea.vmem [#allocation2], 88
      %v762 = vld [vmem:[%s761] sm:$0xf]
      %v763 = vsel %vm621, %v687, %v762
      %764 = vst [vmem:[%s761] sm:$0xf] %v763
      %v765 = vld [vmem:[%s761 + $0x4] sm:$0x1]
      %v766 = vsel %vm627, %v688, %v765
      %767 = vst [vmem:[%s761 + $0x4] sm:$0x1] %v766
      %v768 = vld [vmem:[%s761 + $0x8] sm:$0xf]
      %v769 = vsel %vm621, %v695, %v768
      %770 = vst [vmem:[%s761 + $0x8] sm:$0xf] %v769
      %v771 = vld [vmem:[%s761 + $0xc] sm:$0x1]
      %v772 = vsel %vm627, %v696, %v771
      %773 = vst [vmem:[%s761 + $0xc] sm:$0x1] %v772
      %v774 = vld [vmem:[%s761 + $0x10] sm:$0xf]
      %v775 = vsel %vm621, %v703, %v774
      %776 = vst [vmem:[%s761 + $0x10] sm:$0xf] %v775
      %v777 = vld [vmem:[%s761 + $0x14] sm:$0x1]
      %v778 = vsel %vm627, %v704, %v777
      %779 = vst [vmem:[%s761 + $0x14] sm:$0x1] %v778
      %v780 = vld [vmem:[%s761 + $0x18] sm:$0xf]
      %v781 = vsel %vm621, %v711, %v780
      %782 = vst [vmem:[%s761 + $0x18] sm:$0xf] %v781
      %v783 = vld [vmem:[%s761 + $0x1c] sm:$0x1]
      %v784 = vsel %vm627, %v712, %v783
      %785 = vst [vmem:[%s761 + $0x1c] sm:$0x1] %v784
      %v786 = vld [vmem:[%s761 + $0x20] sm:$0xf]
      %v787 = vsel %vm621, %v719, %v786
      %788 = vst [vmem:[%s761 + $0x20] sm:$0xf] %v787
      %v789 = vld [vmem:[%s761 + $0x24] sm:$0x1]
      %v790 = vsel %vm627, %v720, %v789
      %791 = vst [vmem:[%s761 + $0x24] sm:$0x1] %v790
      %v792 = vld [vmem:[%s761 + $0x28] sm:$0xf]
      %v793 = vsel %vm621, %v727, %v792
      %794 = vst [vmem:[%s761 + $0x28] sm:$0xf] %v793
      %v795 = vld [vmem:[%s761 + $0x2c] sm:$0x1]
      %v796 = vsel %vm627, %v728, %v795
      %797 = vst [vmem:[%s761 + $0x2c] sm:$0x1] %v796
      %v798 = vld [vmem:[%s761 + $0x30] sm:$0xf]
      %v799 = vsel %vm621, %v735, %v798
      %800 = vst [vmem:[%s761 + $0x30] sm:$0xf] %v799
      %v801 = vld [vmem:[%s761 + $0x34] sm:$0x1]
      %v802 = vsel %vm627, %v736, %v801
      %803 = vst [vmem:[%s761 + $0x34] sm:$0x1] %v802
      %v804 = vld [vmem:[%s761 + $0x38] sm:$0xf]
      %v805 = vsel %vm621, %v743, %v804
      %806 = vst [vmem:[%s761 + $0x38] sm:$0xf] %v805
      %v807 = vld [vmem:[%s761 + $0x3c] sm:$0x1]
      %v808 = vsel %vm627, %v744, %v807
      %809 = vst [vmem:[%s761 + $0x3c] sm:$0x1] %v808
      %v810 = vld [vmem:[%s392] sm:$0xf]
      %v811 = vld [vmem:[%s392 + $0x4] sm:$0xf]
      %v812 = vld [vmem:[%s392 + $0x8] sm:$0xf]
      %v813 = vld [vmem:[%s392 + $0xc] sm:$0xf]
      %v814 = vld [vmem:[%s392 + $0x10] sm:$0xf]
      %v815 = vld [vmem:[%s392 + $0x14] sm:$0xf]
      %v816 = vld [vmem:[%s392 + $0x18] sm:$0xf]
      %v817 = vld [vmem:[%s392 + $0x1c] sm:$0xf]
      %v818 = vunpack.c.l.bf16 %v810
      %v819 = vunpack.c.l.bf16 %v811
      %v820 = vunpack.c.l.bf16 %v812
      %v821 = vunpack.c.l.bf16 %v813
      %v822 = vunpack.c.l.bf16 %v814
      %v823 = vunpack.c.l.bf16 %v815
      %v824 = vunpack.c.l.bf16 %v816
      %v825 = vunpack.c.l.bf16 %v817
      %p826 = scmp.lt.s32.totalorder %s23, 3
      %s827 = scalar_select %p826, 1, 0
      %s828 = scvt.s32.f32 %s827
      %v829 = vstv %s828
      %v830 = vmul.f32 %v818, %v829
      %v831 = vmul.f32 %v819, %v829
      %v832 = vmul.f32 %v820, %v829
      %v833 = vmul.f32 %v821, %v829
      %v834 = vmul.f32 %v822, %v829
      %v835 = vmul.f32 %v823, %v829
      %v836 = vmul.f32 %v824, %v829
      %v837 = vmul.f32 %v825, %v829
      %v838 = vpack.c.bf16 %v830, %v830
      %v839 = vpack.c.bf16 %v831, %v831
      %v840 = vpack.c.bf16 %v832, %v832
      %v841 = vpack.c.bf16 %v833, %v833
      %v842 = vpack.c.bf16 %v834, %v834
      %v843 = vpack.c.bf16 %v835, %v835
      %v844 = vpack.c.bf16 %v836, %v836
      %v845 = vpack.c.bf16 %v837, %v837
      %v854 = vunpack.c.l.b16 %v838
      %v855 = vunpack.c.l.b16 %v839
      %v856 = vunpack.c.l.b16 %v840
      %v857 = vunpack.c.l.b16 %v841
      %v858 = vunpack.c.l.b16 %v842
      %v859 = vunpack.c.l.b16 %v843
      %v860 = vunpack.c.l.b16 %v844
      %v861 = vunpack.c.l.b16 %v845
      %v862 = vpack.c.b16 %v854, %v854
      %v863 = vpack.c.b16 %v855, %v855
      %v864 = vpack.c.b16 %v856, %v856
      %v865 = vpack.c.b16 %v857, %v857
      %v866 = vpack.c.b16 %v858, %v858
      %v867 = vpack.c.b16 %v859, %v859
      %v868 = vpack.c.b16 %v860, %v860
      %v869 = vpack.c.b16 %v861, %v861
      %v871 = vshrl.u32 %v862, 16
      %v873 = vrot.slane %v871, 7
      %v874 = vshll.u32 %v862, 16
      %v876 = vor.u32 %v873, %v874
      %v877 = vrot.slane %v873, 4
      %v879 = vshrl.u32 %v863, 16
      %v881 = vrot.slane %v879, 7
      %v882 = vshll.u32 %v863, 16
      %v884 = vor.u32 %v881, %v882
      %v885 = vrot.slane %v881, 4
      %v887 = vshrl.u32 %v864, 16
      %v889 = vrot.slane %v887, 7
      %v890 = vshll.u32 %v864, 16
      %v892 = vor.u32 %v889, %v890
      %v893 = vrot.slane %v889, 4
      %v895 = vshrl.u32 %v865, 16
      %v897 = vrot.slane %v895, 7
      %v898 = vshll.u32 %v865, 16
      %v900 = vor.u32 %v897, %v898
      %v901 = vrot.slane %v897, 4
      %v903 = vshrl.u32 %v866, 16
      %v905 = vrot.slane %v903, 7
      %v906 = vshll.u32 %v866, 16
      %v908 = vor.u32 %v905, %v906
      %v909 = vrot.slane %v905, 4
      %v911 = vshrl.u32 %v867, 16
      %v913 = vrot.slane %v911, 7
      %v914 = vshll.u32 %v867, 16
      %v916 = vor.u32 %v913, %v914
      %v917 = vrot.slane %v913, 4
      %v919 = vshrl.u32 %v868, 16
      %v921 = vrot.slane %v919, 7
      %v922 = vshll.u32 %v868, 16
      %v924 = vor.u32 %v921, %v922
      %v925 = vrot.slane %v921, 4
      %v927 = vshrl.u32 %v869, 16
      %v929 = vrot.slane %v927, 7
      %v930 = vshll.u32 %v869, 16
      %v932 = vor.u32 %v929, %v930
      %v933 = vrot.slane %v929, 4
      %s950 = scalar_lea.vmem [#allocation2], 168
      %v951 = vld [vmem:[%s950] sm:$0xf]
      %v952 = vsel %vm621, %v876, %v951
      %953 = vst [vmem:[%s950] sm:$0xf] %v952
      %v954 = vld [vmem:[%s950 + $0x4] sm:$0x1]
      %v955 = vsel %vm627, %v877, %v954
      %956 = vst [vmem:[%s950 + $0x4] sm:$0x1] %v955
      %v957 = vld [vmem:[%s950 + $0x8] sm:$0xf]
      %v958 = vsel %vm621, %v884, %v957
      %959 = vst [vmem:[%s950 + $0x8] sm:$0xf] %v958
      %v960 = vld [vmem:[%s950 + $0xc] sm:$0x1]
      %v961 = vsel %vm627, %v885, %v960
      %962 = vst [vmem:[%s950 + $0xc] sm:$0x1] %v961
      %v963 = vld [vmem:[%s950 + $0x10] sm:$0xf]
      %v964 = vsel %vm621, %v892, %v963
      %965 = vst [vmem:[%s950 + $0x10] sm:$0xf] %v964
      %v966 = vld [vmem:[%s950 + $0x14] sm:$0x1]
      %v967 = vsel %vm627, %v893, %v966
      %968 = vst [vmem:[%s950 + $0x14] sm:$0x1] %v967
      %v969 = vld [vmem:[%s950 + $0x18] sm:$0xf]
      %v970 = vsel %vm621, %v900, %v969
      %971 = vst [vmem:[%s950 + $0x18] sm:$0xf] %v970
      %v972 = vld [vmem:[%s950 + $0x1c] sm:$0x1]
      %v973 = vsel %vm627, %v901, %v972
      %974 = vst [vmem:[%s950 + $0x1c] sm:$0x1] %v973
      %v975 = vld [vmem:[%s950 + $0x20] sm:$0xf]
      %v976 = vsel %vm621, %v908, %v975
      %977 = vst [vmem:[%s950 + $0x20] sm:$0xf] %v976
      %v978 = vld [vmem:[%s950 + $0x24] sm:$0x1]
      %v979 = vsel %vm627, %v909, %v978
      %980 = vst [vmem:[%s950 + $0x24] sm:$0x1] %v979
      %v981 = vld [vmem:[%s950 + $0x28] sm:$0xf]
      %v982 = vsel %vm621, %v916, %v981
      %983 = vst [vmem:[%s950 + $0x28] sm:$0xf] %v982
      %v984 = vld [vmem:[%s950 + $0x2c] sm:$0x1]
      %v985 = vsel %vm627, %v917, %v984
      %986 = vst [vmem:[%s950 + $0x2c] sm:$0x1] %v985
      %v987 = vld [vmem:[%s950 + $0x30] sm:$0xf]
      %v988 = vsel %vm621, %v924, %v987
      %989 = vst [vmem:[%s950 + $0x30] sm:$0xf] %v988
      %v990 = vld [vmem:[%s950 + $0x34] sm:$0x1]
      %v991 = vsel %vm627, %v925, %v990
      %992 = vst [vmem:[%s950 + $0x34] sm:$0x1] %v991
      %v993 = vld [vmem:[%s950 + $0x38] sm:$0xf]
      %v994 = vsel %vm621, %v932, %v993
      %995 = vst [vmem:[%s950 + $0x38] sm:$0xf] %v994
      %v996 = vld [vmem:[%s950 + $0x3c] sm:$0x1]
      %v997 = vsel %vm627, %v933, %v996
      %998 = vst [vmem:[%s950 + $0x3c] sm:$0x1] %v997
      %v999 = vld [vmem:[#allocation2] sm:$0xf]
      %v1000 = vld [vmem:[#allocation2 + $0x8] sm:$0xf]
      %v1001 = vld [vmem:[#allocation2 + $0x10] sm:$0xf]
      %v1002 = vld [vmem:[#allocation2 + $0x18] sm:$0xf]
      %v1003 = vld [vmem:[#allocation2 + $0x20] sm:$0xf]
      %v1004 = vld [vmem:[#allocation2 + $0x28] sm:$0xf]
      %v1005 = vld [vmem:[#allocation2 + $0x30] sm:$0xf]
      %v1006 = vld [vmem:[#allocation2 + $0x38] sm:$0xf]
      %v1007 = vld [vmem:[#allocation2 + $0x4] sm:$0x1]
      %v1008 = vld [vmem:[#allocation2 + $0xc] sm:$0x1]
      %v1009 = vld [vmem:[#allocation2 + $0x14] sm:$0x1]
      %v1010 = vld [vmem:[#allocation2 + $0x1c] sm:$0x1]
      %v1011 = vld [vmem:[#allocation2 + $0x24] sm:$0x1]
      %v1012 = vld [vmem:[#allocation2 + $0x2c] sm:$0x1]
      %v1013 = vld [vmem:[#allocation2 + $0x34] sm:$0x1]
      %v1014 = vld [vmem:[#allocation2 + $0x3c] sm:$0x1]
      %vm1015 = vsmask.f32 3328
      %vm1016 = vsmask.f32 7440
      %vm1017 = vmor %vm1015, %vm1016
      %v1019 = vshrl.u32 %v999, 16
      %v1021 = vrot.slane %v1019, 4
      %v1022 = vshll.u32 %v999, 16
      %v1024 = vrot.slane %v1022, 5
      %v1025 = vor.u32 %v1021, %v1024
      %v1026 = vrot.slane %v1025, 4
      %v1028 = vshll.u32 %v1007, 16
      %v1030 = vrot.slane %v1028, 5
      %v1031 = vsel %vm1017, %v1026, %v1030
      %v1033 = vshrl.u32 %v1000, 16
      %v1035 = vrot.slane %v1033, 4
      %v1036 = vshll.u32 %v1000, 16
      %v1038 = vrot.slane %v1036, 5
      %v1039 = vor.u32 %v1035, %v1038
      %v1040 = vrot.slane %v1039, 4
      %v1042 = vshll.u32 %v1008, 16
      %v1044 = vrot.slane %v1042, 5
      %v1045 = vsel %vm1017, %v1040, %v1044
      %v1047 = vshrl.u32 %v1001, 16
      %v1049 = vrot.slane %v1047, 4
      %v1050 = vshll.u32 %v1001, 16
      %v1052 = vrot.slane %v1050, 5
      %v1053 = vor.u32 %v1049, %v1052
      %v1054 = vrot.slane %v1053, 4
      %v1056 = vshll.u32 %v1009, 16
      %v1058 = vrot.slane %v1056, 5
      %v1059 = vsel %vm1017, %v1054, %v1058
      %v1061 = vshrl.u32 %v1002, 16
      %v1063 = vrot.slane %v1061, 4
      %v1064 = vshll.u32 %v1002, 16
      %v1066 = vrot.slane %v1064, 5
      %v1067 = vor.u32 %v1063, %v1066
      %v1068 = vrot.slane %v1067, 4
      %v1070 = vshll.u32 %v1010, 16
      %v1072 = vrot.slane %v1070, 5
      %v1073 = vsel %vm1017, %v1068, %v1072
      %v1075 = vshrl.u32 %v1003, 16
      %v1077 = vrot.slane %v1075, 4
      %v1078 = vshll.u32 %v1003, 16
      %v1080 = vrot.slane %v1078, 5
      %v1081 = vor.u32 %v1077, %v1080
      %v1082 = vrot.slane %v1081, 4
      %v1084 = vshll.u32 %v1011, 16
      %v1086 = vrot.slane %v1084, 5
      %v1087 = vsel %vm1017, %v1082, %v1086
      %v1089 = vshrl.u32 %v1004, 16
      %v1091 = vrot.slane %v1089, 4
      %v1092 = vshll.u32 %v1004, 16
      %v1094 = vrot.slane %v1092, 5
      %v1095 = vor.u32 %v1091, %v1094
      %v1096 = vrot.slane %v1095, 4
      %v1098 = vshll.u32 %v1012, 16
      %v1100 = vrot.slane %v1098, 5
      %v1101 = vsel %vm1017, %v1096, %v1100
      %v1103 = vshrl.u32 %v1005, 16
      %v1105 = vrot.slane %v1103, 4
      %v1106 = vshll.u32 %v1005, 16
      %v1108 = vrot.slane %v1106, 5
      %v1109 = vor.u32 %v1105, %v1108
      %v1110 = vrot.slane %v1109, 4
      %v1112 = vshll.u32 %v1013, 16
      %v1114 = vrot.slane %v1112, 5
      %v1115 = vsel %vm1017, %v1110, %v1114
      %v1117 = vshrl.u32 %v1006, 16
      %v1119 = vrot.slane %v1117, 4
      %v1120 = vshll.u32 %v1006, 16
      %v1122 = vrot.slane %v1120, 5
      %v1123 = vor.u32 %v1119, %v1122
      %v1124 = vrot.slane %v1123, 4
      %v1126 = vshll.u32 %v1014, 16
      %v1128 = vrot.slane %v1126, 5
      %v1129 = vsel %vm1017, %v1124, %v1128
      %v1130 = vld [vmem:[#allocation2] sm:$0xe]
      %v1131 = vld [vmem:[#allocation2 + $0x8] sm:$0xe]
      %v1132 = vld [vmem:[#allocation2 + $0x10] sm:$0xe]
      %v1133 = vld [vmem:[#allocation2 + $0x18] sm:$0xe]
      %v1134 = vld [vmem:[#allocation2 + $0x20] sm:$0xe]
      %v1135 = vld [vmem:[#allocation2 + $0x28] sm:$0xe]
      %v1136 = vld [vmem:[#allocation2 + $0x30] sm:$0xe]
      %v1137 = vld [vmem:[#allocation2 + $0x38] sm:$0xe]
      %vm1154 = vcmask 1042432
      %vm1155 = vcmask 1046532
      %vm1156 = vmor %vm1154, %vm1155
      %v1157 = vrot.slane %v1130, 5
      %v1158 = vrot.slane %v1157, 4
      %v1159 = vrot.slane %v1007, 5
      %v1160 = vsel %vm1156, %v1158, %v1159
      %v1161 = vrot.slane %v1131, 5
      %v1162 = vrot.slane %v1161, 4
      %v1163 = vrot.slane %v1008, 5
      %v1164 = vsel %vm1156, %v1162, %v1163
      %v1165 = vrot.slane %v1132, 5
      %v1166 = vrot.slane %v1165, 4
      %v1167 = vrot.slane %v1009, 5
      %v1168 = vsel %vm1156, %v1166, %v1167
      %v1169 = vrot.slane %v1133, 5
      %v1170 = vrot.slane %v1169, 4
      %v1171 = vrot.slane %v1010, 5
      %v1172 = vsel %vm1156, %v1170, %v1171
      %v1173 = vrot.slane %v1134, 5
      %v1174 = vrot.slane %v1173, 4
      %v1175 = vrot.slane %v1011, 5
      %v1176 = vsel %vm1156, %v1174, %v1175
      %v1177 = vrot.slane %v1135, 5
      %v1178 = vrot.slane %v1177, 4
      %v1179 = vrot.slane %v1012, 5
      %v1180 = vsel %vm1156, %v1178, %v1179
      %v1181 = vrot.slane %v1136, 5
      %v1182 = vrot.slane %v1181, 4
      %v1183 = vrot.slane %v1013, 5
      %v1184 = vsel %vm1156, %v1182, %v1183
      %v1185 = vrot.slane %v1137, 5
      %v1186 = vrot.slane %v1185, 4
      %v1187 = vrot.slane %v1014, 5
      %v1188 = vsel %vm1156, %v1186, %v1187
      %v1189 = vld [vmem:[%s618] sm:$0xf]
      %v1190 = vld [vmem:[%s618 + $0x8] sm:$0xf]
      %v1191 = vld [vmem:[%s618 + $0x10] sm:$0xf]
      %v1192 = vld [vmem:[%s618 + $0x18] sm:$0xf]
      %v1193 = vld [vmem:[%s618 + $0x20] sm:$0xf]
      %v1194 = vld [vmem:[%s618 + $0x28] sm:$0xf]
      %v1195 = vld [vmem:[%s618 + $0x30] sm:$0xf]
      %v1196 = vld [vmem:[%s618 + $0x38] sm:$0xf]
      %v1197 = vld [vmem:[%s618 + $0x4] sm:$0x1]
      %v1198 = vld [vmem:[%s618 + $0xc] sm:$0x1]
      %v1199 = vld [vmem:[%s618 + $0x14] sm:$0x1]
      %v1200 = vld [vmem:[%s618 + $0x1c] sm:$0x1]
      %v1201 = vld [vmem:[%s618 + $0x24] sm:$0x1]
      %v1202 = vld [vmem:[%s618 + $0x2c] sm:$0x1]
      %v1203 = vld [vmem:[%s618 + $0x34] sm:$0x1]
      %v1204 = vld [vmem:[%s618 + $0x3c] sm:$0x1]
      %v1206 = vshrl.u32 %v1189, 16
      %v1208 = vrot.slane %v1206, 4
      %v1209 = vshll.u32 %v1189, 16
      %v1211 = vrot.slane %v1209, 5
      %v1212 = vor.u32 %v1208, %v1211
      %v1213 = vrot.slane %v1212, 4
      %v1215 = vshll.u32 %v1197, 16
      %v1217 = vrot.slane %v1215, 5
      %v1218 = vsel %vm1017, %v1213, %v1217
      %v1220 = vshrl.u32 %v1190, 16
      %v1222 = vrot.slane %v1220, 4
      %v1223 = vshll.u32 %v1190, 16
      %v1225 = vrot.slane %v1223, 5
      %v1226 = vor.u32 %v1222, %v1225
      %v1227 = vrot.slane %v1226, 4
      %v1229 = vshll.u32 %v1198, 16
      %v1231 = vrot.slane %v1229, 5
      %v1232 = vsel %vm1017, %v1227, %v1231
      %v1234 = vshrl.u32 %v1191, 16
      %v1236 = vrot.slane %v1234, 4
      %v1237 = vshll.u32 %v1191, 16
      %v1239 = vrot.slane %v1237, 5
      %v1240 = vor.u32 %v1236, %v1239
      %v1241 = vrot.slane %v1240, 4
      %v1243 = vshll.u32 %v1199, 16
      %v1245 = vrot.slane %v1243, 5
      %v1246 = vsel %vm1017, %v1241, %v1245
      %v1248 = vshrl.u32 %v1192, 16
      %v1250 = vrot.slane %v1248, 4
      %v1251 = vshll.u32 %v1192, 16
      %v1253 = vrot.slane %v1251, 5
      %v1254 = vor.u32 %v1250, %v1253
      %v1255 = vrot.slane %v1254, 4
      %v1257 = vshll.u32 %v1200, 16
      %v1259 = vrot.slane %v1257, 5
      %v1260 = vsel %vm1017, %v1255, %v1259
      %v1262 = vshrl.u32 %v1193, 16
      %v1264 = vrot.slane %v1262, 4
      %v1265 = vshll.u32 %v1193, 16
      %v1267 = vrot.slane %v1265, 5
      %v1268 = vor.u32 %v1264, %v1267
      %v1269 = vrot.slane %v1268, 4
      %v1271 = vshll.u32 %v1201, 16
      %v1273 = vrot.slane %v1271, 5
      %v1274 = vsel %vm1017, %v1269, %v1273
      %v1276 = vshrl.u32 %v1194, 16
      %v1278 = vrot.slane %v1276, 4
      %v1279 = vshll.u32 %v1194, 16
      %v1281 = vrot.slane %v1279, 5
      %v1282 = vor.u32 %v1278, %v1281
      %v1283 = vrot.slane %v1282, 4
      %v1285 = vshll.u32 %v1202, 16
      %v1287 = vrot.slane %v1285, 5
      %v1288 = vsel %vm1017, %v1283, %v1287
      %v1290 = vshrl.u32 %v1195, 16
      %v1292 = vrot.slane %v1290, 4
      %v1293 = vshll.u32 %v1195, 16
      %v1295 = vrot.slane %v1293, 5
      %v1296 = vor.u32 %v1292, %v1295
      %v1297 = vrot.slane %v1296, 4
      %v1299 = vshll.u32 %v1203, 16
      %v1301 = vrot.slane %v1299, 5
      %v1302 = vsel %vm1017, %v1297, %v1301
      %v1304 = vshrl.u32 %v1196, 16
      %v1306 = vrot.slane %v1304, 4
      %v1307 = vshll.u32 %v1196, 16
      %v1309 = vrot.slane %v1307, 5
      %v1310 = vor.u32 %v1306, %v1309
      %v1311 = vrot.slane %v1310, 4
      %v1313 = vshll.u32 %v1204, 16
      %v1315 = vrot.slane %v1313, 5
      %v1316 = vsel %vm1017, %v1311, %v1315
      %v1317 = vld [vmem:[%s618] sm:$0xe]
      %v1318 = vld [vmem:[%s618 + $0x8] sm:$0xe]
      %v1319 = vld [vmem:[%s618 + $0x10] sm:$0xe]
      %v1320 = vld [vmem:[%s618 + $0x18] sm:$0xe]
      %v1321 = vld [vmem:[%s618 + $0x20] sm:$0xe]
      %v1322 = vld [vmem:[%s618 + $0x28] sm:$0xe]
      %v1323 = vld [vmem:[%s618 + $0x30] sm:$0xe]
      %v1324 = vld [vmem:[%s618 + $0x38] sm:$0xe]
      %v1341 = vrot.slane %v1317, 5
      %v1342 = vrot.slane %v1341, 4
      %v1343 = vrot.slane %v1197, 5
      %v1344 = vsel %vm1156, %v1342, %v1343
      %v1345 = vrot.slane %v1318, 5
      %v1346 = vrot.slane %v1345, 4
      %v1347 = vrot.slane %v1198, 5
      %v1348 = vsel %vm1156, %v1346, %v1347
      %v1349 = vrot.slane %v1319, 5
      %v1350 = vrot.slane %v1349, 4
      %v1351 = vrot.slane %v1199, 5
      %v1352 = vsel %vm1156, %v1350, %v1351
      %v1353 = vrot.slane %v1320, 5
      %v1354 = vrot.slane %v1353, 4
      %v1355 = vrot.slane %v1200, 5
      %v1356 = vsel %vm1156, %v1354, %v1355
      %v1357 = vrot.slane %v1321, 5
      %v1358 = vrot.slane %v1357, 4
      %v1359 = vrot.slane %v1201, 5
      %v1360 = vsel %vm1156, %v1358, %v1359
      %v1361 = vrot.slane %v1322, 5
      %v1362 = vrot.slane %v1361, 4
      %v1363 = vrot.slane %v1202, 5
      %v1364 = vsel %vm1156, %v1362, %v1363
      %v1365 = vrot.slane %v1323, 5
      %v1366 = vrot.slane %v1365, 4
      %v1367 = vrot.slane %v1203, 5
      %v1368 = vsel %vm1156, %v1366, %v1367
      %v1369 = vrot.slane %v1324, 5
      %v1370 = vrot.slane %v1369, 4
      %v1371 = vrot.slane %v1204, 5
      %v1372 = vsel %vm1156, %v1370, %v1371
      %s1373 = scalar_lea.vmem [#allocation2], 16
      %v1374 = vld [vmem:[%s1373] sm:$0xf]
      %v1375 = vld [vmem:[%s1373 + $0x8] sm:$0xf]
      %v1376 = vld [vmem:[%s1373 + $0x10] sm:$0xf]
      %v1377 = vld [vmem:[%s1373 + $0x18] sm:$0xf]
      %v1378 = vld [vmem:[%s1373 + $0x20] sm:$0xf]
      %v1379 = vld [vmem:[%s1373 + $0x28] sm:$0xf]
      %v1380 = vld [vmem:[%s1373 + $0x30] sm:$0xf]
      %v1381 = vld [vmem:[%s1373 + $0x38] sm:$0xf]
      %v1382 = vld [vmem:[%s1373 + $0x4] sm:$0x1]
      %v1383 = vld [vmem:[%s1373 + $0xc] sm:$0x1]
      %v1384 = vld [vmem:[%s1373 + $0x14] sm:$0x1]
      %v1385 = vld [vmem:[%s1373 + $0x1c] sm:$0x1]
      %v1386 = vld [vmem:[%s1373 + $0x24] sm:$0x1]
      %v1387 = vld [vmem:[%s1373 + $0x2c] sm:$0x1]
      %v1388 = vld [vmem:[%s1373 + $0x34] sm:$0x1]
      %v1389 = vld [vmem:[%s1373 + $0x3c] sm:$0x1]
      %v1391 = vshrl.u32 %v1374, 16
      %v1393 = vrot.slane %v1391, 4
      %v1394 = vshll.u32 %v1374, 16
      %v1396 = vrot.slane %v1394, 5
      %v1397 = vor.u32 %v1393, %v1396
      %v1398 = vrot.slane %v1397, 4
      %v1400 = vshll.u32 %v1382, 16
      %v1402 = vrot.slane %v1400, 5
      %v1403 = vsel %vm1017, %v1398, %v1402
      %v1405 = vshrl.u32 %v1375, 16
      %v1407 = vrot.slane %v1405, 4
      %v1408 = vshll.u32 %v1375, 16
      %v1410 = vrot.slane %v1408, 5
      %v1411 = vor.u32 %v1407, %v1410
      %v1412 = vrot.slane %v1411, 4
      %v1414 = vshll.u32 %v1383, 16
      %v1416 = vrot.slane %v1414, 5
      %v1417 = vsel %vm1017, %v1412, %v1416
      %v1419 = vshrl.u32 %v1376, 16
      %v1421 = vrot.slane %v1419, 4
      %v1422 = vshll.u32 %v1376, 16
      %v1424 = vrot.slane %v1422, 5
      %v1425 = vor.u32 %v1421, %v1424
      %v1426 = vrot.slane %v1425, 4
      %v1428 = vshll.u32 %v1384, 16
      %v1430 = vrot.slane %v1428, 5
      %v1431 = vsel %vm1017, %v1426, %v1430
      %v1433 = vshrl.u32 %v1377, 16
      %v1435 = vrot.slane %v1433, 4
      %v1436 = vshll.u32 %v1377, 16
      %v1438 = vrot.slane %v1436, 5
      %v1439 = vor.u32 %v1435, %v1438
      %v1440 = vrot.slane %v1439, 4
      %v1442 = vshll.u32 %v1385, 16
      %v1444 = vrot.slane %v1442, 5
      %v1445 = vsel %vm1017, %v1440, %v1444
      %v1447 = vshrl.u32 %v1378, 16
      %v1449 = vrot.slane %v1447, 4
      %v1450 = vshll.u32 %v1378, 16
      %v1452 = vrot.slane %v1450, 5
      %v1453 = vor.u32 %v1449, %v1452
      %v1454 = vrot.slane %v1453, 4
      %v1456 = vshll.u32 %v1386, 16
      %v1458 = vrot.slane %v1456, 5
      %v1459 = vsel %vm1017, %v1454, %v1458
      %v1461 = vshrl.u32 %v1379, 16
      %v1463 = vrot.slane %v1461, 4
      %v1464 = vshll.u32 %v1379, 16
      %v1466 = vrot.slane %v1464, 5
      %v1467 = vor.u32 %v1463, %v1466
      %v1468 = vrot.slane %v1467, 4
      %v1470 = vshll.u32 %v1387, 16
      %v1472 = vrot.slane %v1470, 5
      %v1473 = vsel %vm1017, %v1468, %v1472
      %v1475 = vshrl.u32 %v1380, 16
      %v1477 = vrot.slane %v1475, 4
      %v1478 = vshll.u32 %v1380, 16
      %v1480 = vrot.slane %v1478, 5
      %v1481 = vor.u32 %v1477, %v1480
      %v1482 = vrot.slane %v1481, 4
      %v1484 = vshll.u32 %v1388, 16
      %v1486 = vrot.slane %v1484, 5
      %v1487 = vsel %vm1017, %v1482, %v1486
      %v1489 = vshrl.u32 %v1381, 16
      %v1491 = vrot.slane %v1489, 4
      %v1492 = vshll.u32 %v1381, 16
      %v1494 = vrot.slane %v1492, 5
      %v1495 = vor.u32 %v1491, %v1494
      %v1496 = vrot.slane %v1495, 4
      %v1498 = vshll.u32 %v1389, 16
      %v1500 = vrot.slane %v1498, 5
      %v1501 = vsel %vm1017, %v1496, %v1500
      %v1502 = vld [vmem:[%s1373] sm:$0xe]
      %v1503 = vld [vmem:[%s1373 + $0x8] sm:$0xe]
      %v1504 = vld [vmem:[%s1373 + $0x10] sm:$0xe]
      %v1505 = vld [vmem:[%s1373 + $0x18] sm:$0xe]
      %v1506 = vld [vmem:[%s1373 + $0x20] sm:$0xe]
      %v1507 = vld [vmem:[%s1373 + $0x28] sm:$0xe]
      %v1508 = vld [vmem:[%s1373 + $0x30] sm:$0xe]
      %v1509 = vld [vmem:[%s1373 + $0x38] sm:$0xe]
      %v1526 = vrot.slane %v1502, 5
      %v1527 = vrot.slane %v1526, 4
      %v1528 = vrot.slane %v1382, 5
      %v1529 = vsel %vm1156, %v1527, %v1528
      %v1530 = vrot.slane %v1503, 5
      %v1531 = vrot.slane %v1530, 4
      %v1532 = vrot.slane %v1383, 5
      %v1533 = vsel %vm1156, %v1531, %v1532
      %v1534 = vrot.slane %v1504, 5
      %v1535 = vrot.slane %v1534, 4
      %v1536 = vrot.slane %v1384, 5
      %v1537 = vsel %vm1156, %v1535, %v1536
      %v1538 = vrot.slane %v1505, 5
      %v1539 = vrot.slane %v1538, 4
      %v1540 = vrot.slane %v1385, 5
      %v1541 = vsel %vm1156, %v1539, %v1540
      %v1542 = vrot.slane %v1506, 5
      %v1543 = vrot.slane %v1542, 4
      %v1544 = vrot.slane %v1386, 5
      %v1545 = vsel %vm1156, %v1543, %v1544
      %v1546 = vrot.slane %v1507, 5
      %v1547 = vrot.slane %v1546, 4
      %v1548 = vrot.slane %v1387, 5
      %v1549 = vsel %vm1156, %v1547, %v1548
      %v1550 = vrot.slane %v1508, 5
      %v1551 = vrot.slane %v1550, 4
      %v1552 = vrot.slane %v1388, 5
      %v1553 = vsel %vm1156, %v1551, %v1552
      %v1554 = vrot.slane %v1509, 5
      %v1555 = vrot.slane %v1554, 4
      %v1556 = vrot.slane %v1389, 5
      %v1557 = vsel %vm1156, %v1555, %v1556
      %s1558 = scalar_lea.vmem [#allocation2], 80
      %v1559 = vld [vmem:[%s1558] sm:$0xf]
      %v1560 = vld [vmem:[%s1558 + $0x8] sm:$0xf]
      %v1561 = vld [vmem:[%s1558 + $0x10] sm:$0xf]
      %v1562 = vld [vmem:[%s1558 + $0x18] sm:$0xf]
      %v1563 = vld [vmem:[%s1558 + $0x20] sm:$0xf]
      %v1564 = vld [vmem:[%s1558 + $0x28] sm:$0xf]
      %v1565 = vld [vmem:[%s1558 + $0x30] sm:$0xf]
      %v1566 = vld [vmem:[%s1558 + $0x38] sm:$0xf]
      %v1567 = vld [vmem:[%s1558 + $0x4] sm:$0x1]
      %v1568 = vld [vmem:[%s1558 + $0xc] sm:$0x1]
      %v1569 = vld [vmem:[%s1558 + $0x14] sm:$0x1]
      %v1570 = vld [vmem:[%s1558 + $0x1c] sm:$0x1]
      %v1571 = vld [vmem:[%s1558 + $0x24] sm:$0x1]
      %v1572 = vld [vmem:[%s1558 + $0x2c] sm:$0x1]
      %v1573 = vld [vmem:[%s1558 + $0x34] sm:$0x1]
      %v1574 = vld [vmem:[%s1558 + $0x3c] sm:$0x1]
      %v1576 = vshrl.u32 %v1559, 16
      %v1578 = vrot.slane %v1576, 4
      %v1579 = vshll.u32 %v1559, 16
      %v1581 = vrot.slane %v1579, 5
      %v1582 = vor.u32 %v1578, %v1581
      %v1583 = vrot.slane %v1582, 4
      %v1585 = vshll.u32 %v1567, 16
      %v1587 = vrot.slane %v1585, 5
      %v1588 = vsel %vm1017, %v1583, %v1587
      %v1590 = vshrl.u32 %v1560, 16
      %v1592 = vrot.slane %v1590, 4
      %v1593 = vshll.u32 %v1560, 16
      %v1595 = vrot.slane %v1593, 5
      %v1596 = vor.u32 %v1592, %v1595
      %v1597 = vrot.slane %v1596, 4
      %v1599 = vshll.u32 %v1568, 16
      %v1601 = vrot.slane %v1599, 5
      %v1602 = vsel %vm1017, %v1597, %v1601
      %v1604 = vshrl.u32 %v1561, 16
      %v1606 = vrot.slane %v1604, 4
      %v1607 = vshll.u32 %v1561, 16
      %v1609 = vrot.slane %v1607, 5
      %v1610 = vor.u32 %v1606, %v1609
      %v1611 = vrot.slane %v1610, 4
      %v1613 = vshll.u32 %v1569, 16
      %v1615 = vrot.slane %v1613, 5
      %v1616 = vsel %vm1017, %v1611, %v1615
      %v1618 = vshrl.u32 %v1562, 16
      %v1620 = vrot.slane %v1618, 4
      %v1621 = vshll.u32 %v1562, 16
      %v1623 = vrot.slane %v1621, 5
      %v1624 = vor.u32 %v1620, %v1623
      %v1625 = vrot.slane %v1624, 4
      %v1627 = vshll.u32 %v1570, 16
      %v1629 = vrot.slane %v1627, 5
      %v1630 = vsel %vm1017, %v1625, %v1629
      %v1632 = vshrl.u32 %v1563, 16
      %v1634 = vrot.slane %v1632, 4
      %v1635 = vshll.u32 %v1563, 16
      %v1637 = vrot.slane %v1635, 5
      %v1638 = vor.u32 %v1634, %v1637
      %v1639 = vrot.slane %v1638, 4
      %v1641 = vshll.u32 %v1571, 16
      %v1643 = vrot.slane %v1641, 5
      %v1644 = vsel %vm1017, %v1639, %v1643
      %v1646 = vshrl.u32 %v1564, 16
      %v1648 = vrot.slane %v1646, 4
      %v1649 = vshll.u32 %v1564, 16
      %v1651 = vrot.slane %v1649, 5
      %v1652 = vor.u32 %v1648, %v1651
      %v1653 = vrot.slane %v1652, 4
      %v1655 = vshll.u32 %v1572, 16
      %v1657 = vrot.slane %v1655, 5
      %v1658 = vsel %vm1017, %v1653, %v1657
      %v1660 = vshrl.u32 %v1565, 16
      %v1662 = vrot.slane %v1660, 4
      %v1663 = vshll.u32 %v1565, 16
      %v1665 = vrot.slane %v1663, 5
      %v1666 = vor.u32 %v1662, %v1665
      %v1667 = vrot.slane %v1666, 4
      %v1669 = vshll.u32 %v1573, 16
      %v1671 = vrot.slane %v1669, 5
      %v1672 = vsel %vm1017, %v1667, %v1671
      %v1674 = vshrl.u32 %v1566, 16
      %v1676 = vrot.slane %v1674, 4
      %v1677 = vshll.u32 %v1566, 16
      %v1679 = vrot.slane %v1677, 5
      %v1680 = vor.u32 %v1676, %v1679
      %v1681 = vrot.slane %v1680, 4
      %v1683 = vshll.u32 %v1574, 16
      %v1685 = vrot.slane %v1683, 5
      %v1686 = vsel %vm1017, %v1681, %v1685
      %v1687 = vld [vmem:[%s1558] sm:$0xe]
      %v1688 = vld [vmem:[%s1558 + $0x8] sm:$0xe]
      %v1689 = vld [vmem:[%s1558 + $0x10] sm:$0xe]
      %v1690 = vld [vmem:[%s1558 + $0x18] sm:$0xe]
      %v1691 = vld [vmem:[%s1558 + $0x20] sm:$0xe]
      %v1692 = vld [vmem:[%s1558 + $0x28] sm:$0xe]
      %v1693 = vld [vmem:[%s1558 + $0x30] sm:$0xe]
      %v1694 = vld [vmem:[%s1558 + $0x38] sm:$0xe]
      %v1711 = vrot.slane %v1687, 5
      %v1712 = vrot.slane %v1711, 4
      %v1713 = vrot.slane %v1567, 5
      %v1714 = vsel %vm1156, %v1712, %v1713
      %v1715 = vrot.slane %v1688, 5
      %v1716 = vrot.slane %v1715, 4
      %v1717 = vrot.slane %v1568, 5
      %v1718 = vsel %vm1156, %v1716, %v1717
      %v1719 = vrot.slane %v1689, 5
      %v1720 = vrot.slane %v1719, 4
      %v1721 = vrot.slane %v1569, 5
      %v1722 = vsel %vm1156, %v1720, %v1721
      %v1723 = vrot.slane %v1690, 5
      %v1724 = vrot.slane %v1723, 4
      %v1725 = vrot.slane %v1570, 5
      %v1726 = vsel %vm1156, %v1724, %v1725
      %v1727 = vrot.slane %v1691, 5
      %v1728 = vrot.slane %v1727, 4
      %v1729 = vrot.slane %v1571, 5
      %v1730 = vsel %vm1156, %v1728, %v1729
      %v1731 = vrot.slane %v1692, 5
      %v1732 = vrot.slane %v1731, 4
      %v1733 = vrot.slane %v1572, 5
      %v1734 = vsel %vm1156, %v1732, %v1733
      %v1735 = vrot.slane %v1693, 5
      %v1736 = vrot.slane %v1735, 4
      %v1737 = vrot.slane %v1573, 5
      %v1738 = vsel %vm1156, %v1736, %v1737
      %v1739 = vrot.slane %v1694, 5
      %v1740 = vrot.slane %v1739, 4
      %v1741 = vrot.slane %v1574, 5
      %v1742 = vsel %vm1156, %v1740, %v1741
      %v1743 = vld [vmem:[%s761] sm:$0xf]
      %v1744 = vld [vmem:[%s761 + $0x8] sm:$0xf]
      %v1745 = vld [vmem:[%s761 + $0x10] sm:$0xf]
      %v1746 = vld [vmem:[%s761 + $0x18] sm:$0xf]
      %v1747 = vld [vmem:[%s761 + $0x20] sm:$0xf]
      %v1748 = vld [vmem:[%s761 + $0x28] sm:$0xf]
      %v1749 = vld [vmem:[%s761 + $0x30] sm:$0xf]
      %v1750 = vld [vmem:[%s761 + $0x38] sm:$0xf]
      %v1751 = vld [vmem:[%s761 + $0x4] sm:$0x1]
      %v1752 = vld [vmem:[%s761 + $0xc] sm:$0x1]
      %v1753 = vld [vmem:[%s761 + $0x14] sm:$0x1]
      %v1754 = vld [vmem:[%s761 + $0x1c] sm:$0x1]
      %v1755 = vld [vmem:[%s761 + $0x24] sm:$0x1]
      %v1756 = vld [vmem:[%s761 + $0x2c] sm:$0x1]
      %v1757 = vld [vmem:[%s761 + $0x34] sm:$0x1]
      %v1758 = vld [vmem:[%s761 + $0x3c] sm:$0x1]
      %v1760 = vshrl.u32 %v1743, 16
      %v1762 = vrot.slane %v1760, 4
      %v1763 = vshll.u32 %v1743, 16
      %v1765 = vrot.slane %v1763, 5
      %v1766 = vor.u32 %v1762, %v1765
      %v1767 = vrot.slane %v1766, 4
      %v1769 = vshll.u32 %v1751, 16
      %v1771 = vrot.slane %v1769, 5
      %v1772 = vsel %vm1017, %v1767, %v1771
      %v1774 = vshrl.u32 %v1744, 16
      %v1776 = vrot.slane %v1774, 4
      %v1777 = vshll.u32 %v1744, 16
      %v1779 = vrot.slane %v1777, 5
      %v1780 = vor.u32 %v1776, %v1779
      %v1781 = vrot.slane %v1780, 4
      %v1783 = vshll.u32 %v1752, 16
      %v1785 = vrot.slane %v1783, 5
      %v1786 = vsel %vm1017, %v1781, %v1785
      %v1788 = vshrl.u32 %v1745, 16
      %v1790 = vrot.slane %v1788, 4
      %v1791 = vshll.u32 %v1745, 16
      %v1793 = vrot.slane %v1791, 5
      %v1794 = vor.u32 %v1790, %v1793
      %v1795 = vrot.slane %v1794, 4
      %v1797 = vshll.u32 %v1753, 16
      %v1799 = vrot.slane %v1797, 5
      %v1800 = vsel %vm1017, %v1795, %v1799
      %v1802 = vshrl.u32 %v1746, 16
      %v1804 = vrot.slane %v1802, 4
      %v1805 = vshll.u32 %v1746, 16
      %v1807 = vrot.slane %v1805, 5
      %v1808 = vor.u32 %v1804, %v1807
      %v1809 = vrot.slane %v1808, 4
      %v1811 = vshll.u32 %v1754, 16
      %v1813 = vrot.slane %v1811, 5
      %v1814 = vsel %vm1017, %v1809, %v1813
      %v1816 = vshrl.u32 %v1747, 16
      %v1818 = vrot.slane %v1816, 4
      %v1819 = vshll.u32 %v1747, 16
      %v1821 = vrot.slane %v1819, 5
      %v1822 = vor.u32 %v1818, %v1821
      %v1823 = vrot.slane %v1822, 4
      %v1825 = vshll.u32 %v1755, 16
      %v1827 = vrot.slane %v1825, 5
      %v1828 = vsel %vm1017, %v1823, %v1827
      %v1830 = vshrl.u32 %v1748, 16
      %v1832 = vrot.slane %v1830, 4
      %v1833 = vshll.u32 %v1748, 16
      %v1835 = vrot.slane %v1833, 5
      %v1836 = vor.u32 %v1832, %v1835
      %v1837 = vrot.slane %v1836, 4
      %v1839 = vshll.u32 %v1756, 16
      %v1841 = vrot.slane %v1839, 5
      %v1842 = vsel %vm1017, %v1837, %v1841
      %v1844 = vshrl.u32 %v1749, 16
      %v1846 = vrot.slane %v1844, 4
      %v1847 = vshll.u32 %v1749, 16
      %v1849 = vrot.slane %v1847, 5
      %v1850 = vor.u32 %v1846, %v1849
      %v1851 = vrot.slane %v1850, 4
      %v1853 = vshll.u32 %v1757, 16
      %v1855 = vrot.slane %v1853, 5
      %v1856 = vsel %vm1017, %v1851, %v1855
      %v1858 = vshrl.u32 %v1750, 16
      %v1860 = vrot.slane %v1858, 4
      %v1861 = vshll.u32 %v1750, 16
      %v1863 = vrot.slane %v1861, 5
      %v1864 = vor.u32 %v1860, %v1863
      %v1865 = vrot.slane %v1864, 4
      %v1867 = vshll.u32 %v1758, 16
      %v1869 = vrot.slane %v1867, 5
      %v1870 = vsel %vm1017, %v1865, %v1869
      %v1871 = vld [vmem:[%s761] sm:$0xe]
      %v1872 = vld [vmem:[%s761 + $0x8] sm:$0xe]
      %v1873 = vld [vmem:[%s761 + $0x10] sm:$0xe]
      %v1874 = vld [vmem:[%s761 + $0x18] sm:$0xe]
      %v1875 = vld [vmem:[%s761 + $0x20] sm:$0xe]
      %v1876 = vld [vmem:[%s761 + $0x28] sm:$0xe]
      %v1877 = vld [vmem:[%s761 + $0x30] sm:$0xe]
      %v1878 = vld [vmem:[%s761 + $0x38] sm:$0xe]
      %v1895 = vrot.slane %v1871, 5
      %v1896 = vrot.slane %v1895, 4
      %v1897 = vrot.slane %v1751, 5
      %v1898 = vsel %vm1156, %v1896, %v1897
      %v1899 = vrot.slane %v1872, 5
      %v1900 = vrot.slane %v1899, 4
      %v1901 = vrot.slane %v1752, 5
      %v1902 = vsel %vm1156, %v1900, %v1901
      %v1903 = vrot.slane %v1873, 5
      %v1904 = vrot.slane %v1903, 4
      %v1905 = vrot.slane %v1753, 5
      %v1906 = vsel %vm1156, %v1904, %v1905
      %v1907 = vrot.slane %v1874, 5
      %v1908 = vrot.slane %v1907, 4
      %v1909 = vrot.slane %v1754, 5
      %v1910 = vsel %vm1156, %v1908, %v1909
      %v1911 = vrot.slane %v1875, 5
      %v1912 = vrot.slane %v1911, 4
      %v1913 = vrot.slane %v1755, 5
      %v1914 = vsel %vm1156, %v1912, %v1913
      %v1915 = vrot.slane %v1876, 5
      %v1916 = vrot.slane %v1915, 4
      %v1917 = vrot.slane %v1756, 5
      %v1918 = vsel %vm1156, %v1916, %v1917
      %v1919 = vrot.slane %v1877, 5
      %v1920 = vrot.slane %v1919, 4
      %v1921 = vrot.slane %v1757, 5
      %v1922 = vsel %vm1156, %v1920, %v1921
      %v1923 = vrot.slane %v1878, 5
      %v1924 = vrot.slane %v1923, 4
      %v1925 = vrot.slane %v1758, 5
      %v1926 = vsel %vm1156, %v1924, %v1925
      %s1927 = scalar_lea.vmem [#allocation2], 96
      %v1928 = vld [vmem:[%s1927] sm:$0xf]
      %v1929 = vld [vmem:[%s1927 + $0x8] sm:$0xf]
      %v1930 = vld [vmem:[%s1927 + $0x10] sm:$0xf]
      %v1931 = vld [vmem:[%s1927 + $0x18] sm:$0xf]
      %v1932 = vld [vmem:[%s1927 + $0x20] sm:$0xf]
      %v1933 = vld [vmem:[%s1927 + $0x28] sm:$0xf]
      %v1934 = vld [vmem:[%s1927 + $0x30] sm:$0xf]
      %v1935 = vld [vmem:[%s1927 + $0x38] sm:$0xf]
      %v1936 = vld [vmem:[%s1927 + $0x4] sm:$0x1]
      %v1937 = vld [vmem:[%s1927 + $0xc] sm:$0x1]
      %v1938 = vld [vmem:[%s1927 + $0x14] sm:$0x1]
      %v1939 = vld [vmem:[%s1927 + $0x1c] sm:$0x1]
      %v1940 = vld [vmem:[%s1927 + $0x24] sm:$0x1]
      %v1941 = vld [vmem:[%s1927 + $0x2c] sm:$0x1]
      %v1942 = vld [vmem:[%s1927 + $0x34] sm:$0x1]
      %v1943 = vld [vmem:[%s1927 + $0x3c] sm:$0x1]
      %v1945 = vshrl.u32 %v1928, 16
      %v1947 = vrot.slane %v1945, 4
      %v1948 = vshll.u32 %v1928, 16
      %v1950 = vrot.slane %v1948, 5
      %v1951 = vor.u32 %v1947, %v1950
      %v1952 = vrot.slane %v1951, 4
      %v1954 = vshll.u32 %v1936, 16
      %v1956 = vrot.slane %v1954, 5
      %v1957 = vsel %vm1017, %v1952, %v1956
      %v1959 = vshrl.u32 %v1929, 16
      %v1961 = vrot.slane %v1959, 4
      %v1962 = vshll.u32 %v1929, 16
      %v1964 = vrot.slane %v1962, 5
      %v1965 = vor.u32 %v1961, %v1964
      %v1966 = vrot.slane %v1965, 4
      %v1968 = vshll.u32 %v1937, 16
      %v1970 = vrot.slane %v1968, 5
      %v1971 = vsel %vm1017, %v1966, %v1970
      %v1973 = vshrl.u32 %v1930, 16
      %v1975 = vrot.slane %v1973, 4
      %v1976 = vshll.u32 %v1930, 16
      %v1978 = vrot.slane %v1976, 5
      %v1979 = vor.u32 %v1975, %v1978
      %v1980 = vrot.slane %v1979, 4
      %v1982 = vshll.u32 %v1938, 16
      %v1984 = vrot.slane %v1982, 5
      %v1985 = vsel %vm1017, %v1980, %v1984
      %v1987 = vshrl.u32 %v1931, 16
      %v1989 = vrot.slane %v1987, 4
      %v1990 = vshll.u32 %v1931, 16
      %v1992 = vrot.slane %v1990, 5
      %v1993 = vor.u32 %v1989, %v1992
      %v1994 = vrot.slane %v1993, 4
      %v1996 = vshll.u32 %v1939, 16
      %v1998 = vrot.slane %v1996, 5
      %v1999 = vsel %vm1017, %v1994, %v1998
      %v2001 = vshrl.u32 %v1932, 16
      %v2003 = vrot.slane %v2001, 4
      %v2004 = vshll.u32 %v1932, 16
      %v2006 = vrot.slane %v2004, 5
      %v2007 = vor.u32 %v2003, %v2006
      %v2008 = vrot.slane %v2007, 4
      %v2010 = vshll.u32 %v1940, 16
      %v2012 = vrot.slane %v2010, 5
      %v2013 = vsel %vm1017, %v2008, %v2012
      %v2015 = vshrl.u32 %v1933, 16
      %v2017 = vrot.slane %v2015, 4
      %v2018 = vshll.u32 %v1933, 16
      %v2020 = vrot.slane %v2018, 5
      %v2021 = vor.u32 %v2017, %v2020
      %v2022 = vrot.slane %v2021, 4
      %v2024 = vshll.u32 %v1941, 16
      %v2026 = vrot.slane %v2024, 5
      %v2027 = vsel %vm1017, %v2022, %v2026
      %v2029 = vshrl.u32 %v1934, 16
      %v2031 = vrot.slane %v2029, 4
      %v2032 = vshll.u32 %v1934, 16
      %v2034 = vrot.slane %v2032, 5
      %v2035 = vor.u32 %v2031, %v2034
      %v2036 = vrot.slane %v2035, 4
      %v2038 = vshll.u32 %v1942, 16
      %v2040 = vrot.slane %v2038, 5
      %v2041 = vsel %vm1017, %v2036, %v2040
      %v2043 = vshrl.u32 %v1935, 16
      %v2045 = vrot.slane %v2043, 4
      %v2046 = vshll.u32 %v1935, 16
      %v2048 = vrot.slane %v2046, 5
      %v2049 = vor.u32 %v2045, %v2048
      %v2050 = vrot.slane %v2049, 4
      %v2052 = vshll.u32 %v1943, 16
      %v2054 = vrot.slane %v2052, 5
      %v2055 = vsel %vm1017, %v2050, %v2054
      %v2056 = vld [vmem:[%s1927] sm:$0xe]
      %v2057 = vld [vmem:[%s1927 + $0x8] sm:$0xe]
      %v2058 = vld [vmem:[%s1927 + $0x10] sm:$0xe]
      %v2059 = vld [vmem:[%s1927 + $0x18] sm:$0xe]
      %v2060 = vld [vmem:[%s1927 + $0x20] sm:$0xe]
      %v2061 = vld [vmem:[%s1927 + $0x28] sm:$0xe]
      %v2062 = vld [vmem:[%s1927 + $0x30] sm:$0xe]
      %v2063 = vld [vmem:[%s1927 + $0x38] sm:$0xe]
      %v2080 = vrot.slane %v2056, 5
      %v2081 = vrot.slane %v2080, 4
      %v2082 = vrot.slane %v1936, 5
      %v2083 = vsel %vm1156, %v2081, %v2082
      %v2084 = vrot.slane %v2057, 5
      %v2085 = vrot.slane %v2084, 4
      %v2086 = vrot.slane %v1937, 5
      %v2087 = vsel %vm1156, %v2085, %v2086
      %v2088 = vrot.slane %v2058, 5
      %v2089 = vrot.slane %v2088, 4
      %v2090 = vrot.slane %v1938, 5
      %v2091 = vsel %vm1156, %v2089, %v2090
      %v2092 = vrot.slane %v2059, 5
      %v2093 = vrot.slane %v2092, 4
      %v2094 = vrot.slane %v1939, 5
      %v2095 = vsel %vm1156, %v2093, %v2094
      %v2096 = vrot.slane %v2060, 5
      %v2097 = vrot.slane %v2096, 4
      %v2098 = vrot.slane %v1940, 5
      %v2099 = vsel %vm1156, %v2097, %v2098
      %v2100 = vrot.slane %v2061, 5
      %v2101 = vrot.slane %v2100, 4
      %v2102 = vrot.slane %v1941, 5
      %v2103 = vsel %vm1156, %v2101, %v2102
      %v2104 = vrot.slane %v2062, 5
      %v2105 = vrot.slane %v2104, 4
      %v2106 = vrot.slane %v1942, 5
      %v2107 = vsel %vm1156, %v2105, %v2106
      %v2108 = vrot.slane %v2063, 5
      %v2109 = vrot.slane %v2108, 4
      %v2110 = vrot.slane %v1943, 5
      %v2111 = vsel %vm1156, %v2109, %v2110
      %s2112 = scalar_lea.vmem [#allocation2], 160
      %v2113 = vld [vmem:[%s2112] sm:$0xf]
      %v2114 = vld [vmem:[%s2112 + $0x8] sm:$0xf]
      %v2115 = vld [vmem:[%s2112 + $0x10] sm:$0xf]
      %v2116 = vld [vmem:[%s2112 + $0x18] sm:$0xf]
      %v2117 = vld [vmem:[%s2112 + $0x20] sm:$0xf]
      %v2118 = vld [vmem:[%s2112 + $0x28] sm:$0xf]
      %v2119 = vld [vmem:[%s2112 + $0x30] sm:$0xf]
      %v2120 = vld [vmem:[%s2112 + $0x38] sm:$0xf]
      %v2121 = vld [vmem:[%s2112 + $0x4] sm:$0x1]
      %v2122 = vld [vmem:[%s2112 + $0xc] sm:$0x1]
      %v2123 = vld [vmem:[%s2112 + $0x14] sm:$0x1]
      %v2124 = vld [vmem:[%s2112 + $0x1c] sm:$0x1]
      %v2125 = vld [vmem:[%s2112 + $0x24] sm:$0x1]
      %v2126 = vld [vmem:[%s2112 + $0x2c] sm:$0x1]
      %v2127 = vld [vmem:[%s2112 + $0x34] sm:$0x1]
      %v2128 = vld [vmem:[%s2112 + $0x3c] sm:$0x1]
      %v2130 = vshrl.u32 %v2113, 16
      %v2132 = vrot.slane %v2130, 4
      %v2133 = vshll.u32 %v2113, 16
      %v2135 = vrot.slane %v2133, 5
      %v2136 = vor.u32 %v2132, %v2135
      %v2137 = vrot.slane %v2136, 4
      %v2139 = vshll.u32 %v2121, 16
      %v2141 = vrot.slane %v2139, 5
      %v2142 = vsel %vm1017, %v2137, %v2141
      %v2144 = vshrl.u32 %v2114, 16
      %v2146 = vrot.slane %v2144, 4
      %v2147 = vshll.u32 %v2114, 16
      %v2149 = vrot.slane %v2147, 5
      %v2150 = vor.u32 %v2146, %v2149
      %v2151 = vrot.slane %v2150, 4
      %v2153 = vshll.u32 %v2122, 16
      %v2155 = vrot.slane %v2153, 5
      %v2156 = vsel %vm1017, %v2151, %v2155
      %v2158 = vshrl.u32 %v2115, 16
      %v2160 = vrot.slane %v2158, 4
      %v2161 = vshll.u32 %v2115, 16
      %v2163 = vrot.slane %v2161, 5
      %v2164 = vor.u32 %v2160, %v2163
      %v2165 = vrot.slane %v2164, 4
      %v2167 = vshll.u32 %v2123, 16
      %v2169 = vrot.slane %v2167, 5
      %v2170 = vsel %vm1017, %v2165, %v2169
      %v2172 = vshrl.u32 %v2116, 16
      %v2174 = vrot.slane %v2172, 4
      %v2175 = vshll.u32 %v2116, 16
      %v2177 = vrot.slane %v2175, 5
      %v2178 = vor.u32 %v2174, %v2177
      %v2179 = vrot.slane %v2178, 4
      %v2181 = vshll.u32 %v2124, 16
      %v2183 = vrot.slane %v2181, 5
      %v2184 = vsel %vm1017, %v2179, %v2183
      %v2186 = vshrl.u32 %v2117, 16
      %v2188 = vrot.slane %v2186, 4
      %v2189 = vshll.u32 %v2117, 16
      %v2191 = vrot.slane %v2189, 5
      %v2192 = vor.u32 %v2188, %v2191
      %v2193 = vrot.slane %v2192, 4
      %v2195 = vshll.u32 %v2125, 16
      %v2197 = vrot.slane %v2195, 5
      %v2198 = vsel %vm1017, %v2193, %v2197
      %v2200 = vshrl.u32 %v2118, 16
      %v2202 = vrot.slane %v2200, 4
      %v2203 = vshll.u32 %v2118, 16
      %v2205 = vrot.slane %v2203, 5
      %v2206 = vor.u32 %v2202, %v2205
      %v2207 = vrot.slane %v2206, 4
      %v2209 = vshll.u32 %v2126, 16
      %v2211 = vrot.slane %v2209, 5
      %v2212 = vsel %vm1017, %v2207, %v2211
      %v2214 = vshrl.u32 %v2119, 16
      %v2216 = vrot.slane %v2214, 4
      %v2217 = vshll.u32 %v2119, 16
      %v2219 = vrot.slane %v2217, 5
      %v2220 = vor.u32 %v2216, %v2219
      %v2221 = vrot.slane %v2220, 4
      %v2223 = vshll.u32 %v2127, 16
      %v2225 = vrot.slane %v2223, 5
      %v2226 = vsel %vm1017, %v2221, %v2225
      %v2228 = vshrl.u32 %v2120, 16
      %v2230 = vrot.slane %v2228, 4
      %v2231 = vshll.u32 %v2120, 16
      %v2233 = vrot.slane %v2231, 5
      %v2234 = vor.u32 %v2230, %v2233
      %v2235 = vrot.slane %v2234, 4
      %v2237 = vshll.u32 %v2128, 16
      %v2239 = vrot.slane %v2237, 5
      %v2240 = vsel %vm1017, %v2235, %v2239
      %v2241 = vld [vmem:[%s2112] sm:$0xe]
      %v2242 = vld [vmem:[%s2112 + $0x8] sm:$0xe]
      %v2243 = vld [vmem:[%s2112 + $0x10] sm:$0xe]
      %v2244 = vld [vmem:[%s2112 + $0x18] sm:$0xe]
      %v2245 = vld [vmem:[%s2112 + $0x20] sm:$0xe]
      %v2246 = vld [vmem:[%s2112 + $0x28] sm:$0xe]
      %v2247 = vld [vmem:[%s2112 + $0x30] sm:$0xe]
      %v2248 = vld [vmem:[%s2112 + $0x38] sm:$0xe]
      %v2265 = vrot.slane %v2241, 5
      %v2266 = vrot.slane %v2265, 4
      %v2267 = vrot.slane %v2121, 5
      %v2268 = vsel %vm1156, %v2266, %v2267
      %v2269 = vrot.slane %v2242, 5
      %v2270 = vrot.slane %v2269, 4
      %v2271 = vrot.slane %v2122, 5
      %v2272 = vsel %vm1156, %v2270, %v2271
      %v2273 = vrot.slane %v2243, 5
      %v2274 = vrot.slane %v2273, 4
      %v2275 = vrot.slane %v2123, 5
      %v2276 = vsel %vm1156, %v2274, %v2275
      %v2277 = vrot.slane %v2244, 5
      %v2278 = vrot.slane %v2277, 4
      %v2279 = vrot.slane %v2124, 5
      %v2280 = vsel %vm1156, %v2278, %v2279
      %v2281 = vrot.slane %v2245, 5
      %v2282 = vrot.slane %v2281, 4
      %v2283 = vrot.slane %v2125, 5
      %v2284 = vsel %vm1156, %v2282, %v2283
      %v2285 = vrot.slane %v2246, 5
      %v2286 = vrot.slane %v2285, 4
      %v2287 = vrot.slane %v2126, 5
      %v2288 = vsel %vm1156, %v2286, %v2287
      %v2289 = vrot.slane %v2247, 5
      %v2290 = vrot.slane %v2289, 4
      %v2291 = vrot.slane %v2127, 5
      %v2292 = vsel %vm1156, %v2290, %v2291
      %v2293 = vrot.slane %v2248, 5
      %v2294 = vrot.slane %v2293, 4
      %v2295 = vrot.slane %v2128, 5
      %v2296 = vsel %vm1156, %v2294, %v2295
      %v2297 = vld [vmem:[%s950] sm:$0xf]
      %v2298 = vld [vmem:[%s950 + $0x8] sm:$0xf]
      %v2299 = vld [vmem:[%s950 + $0x10] sm:$0xf]
      %v2300 = vld [vmem:[%s950 + $0x18] sm:$0xf]
      %v2301 = vld [vmem:[%s950 + $0x20] sm:$0xf]
      %v2302 = vld [vmem:[%s950 + $0x28] sm:$0xf]
      %v2303 = vld [vmem:[%s950 + $0x30] sm:$0xf]
      %v2304 = vld [vmem:[%s950 + $0x38] sm:$0xf]
      %v2305 = vld [vmem:[%s950 + $0x4] sm:$0x1]
      %v2306 = vld [vmem:[%s950 + $0xc] sm:$0x1]
      %v2307 = vld [vmem:[%s950 + $0x14] sm:$0x1]
      %v2308 = vld [vmem:[%s950 + $0x1c] sm:$0x1]
      %v2309 = vld [vmem:[%s950 + $0x24] sm:$0x1]
      %v2310 = vld [vmem:[%s950 + $0x2c] sm:$0x1]
      %v2311 = vld [vmem:[%s950 + $0x34] sm:$0x1]
      %v2312 = vld [vmem:[%s950 + $0x3c] sm:$0x1]
      %v2314 = vshrl.u32 %v2297, 16
      %v2316 = vrot.slane %v2314, 4
      %v2317 = vshll.u32 %v2297, 16
      %v2319 = vrot.slane %v2317, 5
      %v2320 = vor.u32 %v2316, %v2319
      %v2321 = vrot.slane %v2320, 4
      %v2323 = vshll.u32 %v2305, 16
      %v2325 = vrot.slane %v2323, 5
      %v2326 = vsel %vm1017, %v2321, %v2325
      %v2328 = vshrl.u32 %v2298, 16
      %v2330 = vrot.slane %v2328, 4
      %v2331 = vshll.u32 %v2298, 16
      %v2333 = vrot.slane %v2331, 5
      %v2334 = vor.u32 %v2330, %v2333
      %v2335 = vrot.slane %v2334, 4
      %v2337 = vshll.u32 %v2306, 16
      %v2339 = vrot.slane %v2337, 5
      %v2340 = vsel %vm1017, %v2335, %v2339
      %v2342 = vshrl.u32 %v2299, 16
      %v2344 = vrot.slane %v2342, 4
      %v2345 = vshll.u32 %v2299, 16
      %v2347 = vrot.slane %v2345, 5
      %v2348 = vor.u32 %v2344, %v2347
      %v2349 = vrot.slane %v2348, 4
      %v2351 = vshll.u32 %v2307, 16
      %v2353 = vrot.slane %v2351, 5
      %v2354 = vsel %vm1017, %v2349, %v2353
      %v2356 = vshrl.u32 %v2300, 16
      %v2358 = vrot.slane %v2356, 4
      %v2359 = vshll.u32 %v2300, 16
      %v2361 = vrot.slane %v2359, 5
      %v2362 = vor.u32 %v2358, %v2361
      %v2363 = vrot.slane %v2362, 4
      %v2365 = vshll.u32 %v2308, 16
      %v2367 = vrot.slane %v2365, 5
      %v2368 = vsel %vm1017, %v2363, %v2367
      %v2370 = vshrl.u32 %v2301, 16
      %v2372 = vrot.slane %v2370, 4
      %v2373 = vshll.u32 %v2301, 16
      %v2375 = vrot.slane %v2373, 5
      %v2376 = vor.u32 %v2372, %v2375
      %v2377 = vrot.slane %v2376, 4
      %v2379 = vshll.u32 %v2309, 16
      %v2381 = vrot.slane %v2379, 5
      %v2382 = vsel %vm1017, %v2377, %v2381
      %v2384 = vshrl.u32 %v2302, 16
      %v2386 = vrot.slane %v2384, 4
      %v2387 = vshll.u32 %v2302, 16
      %v2389 = vrot.slane %v2387, 5
      %v2390 = vor.u32 %v2386, %v2389
      %v2391 = vrot.slane %v2390, 4
      %v2393 = vshll.u32 %v2310, 16
      %v2395 = vrot.slane %v2393, 5
      %v2396 = vsel %vm1017, %v2391, %v2395
      %v2398 = vshrl.u32 %v2303, 16
      %v2400 = vrot.slane %v2398, 4
      %v2401 = vshll.u32 %v2303, 16
      %v2403 = vrot.slane %v2401, 5
      %v2404 = vor.u32 %v2400, %v2403
      %v2405 = vrot.slane %v2404, 4
      %v2407 = vshll.u32 %v2311, 16
      %v2409 = vrot.slane %v2407, 5
      %v2410 = vsel %vm1017, %v2405, %v2409
      %v2412 = vshrl.u32 %v2304, 16
      %v2414 = vrot.slane %v2412, 4
      %v2415 = vshll.u32 %v2304, 16
      %v2417 = vrot.slane %v2415, 5
      %v2418 = vor.u32 %v2414, %v2417
      %v2419 = vrot.slane %v2418, 4
      %v2421 = vshll.u32 %v2312, 16
      %v2423 = vrot.slane %v2421, 5
      %v2424 = vsel %vm1017, %v2419, %v2423
      %v2425 = vld [vmem:[%s950] sm:$0xe]
      %v2426 = vld [vmem:[%s950 + $0x8] sm:$0xe]
      %v2427 = vld [vmem:[%s950 + $0x10] sm:$0xe]
      %v2428 = vld [vmem:[%s950 + $0x18] sm:$0xe]
      %v2429 = vld [vmem:[%s950 + $0x20] sm:$0xe]
      %v2430 = vld [vmem:[%s950 + $0x28] sm:$0xe]
      %v2431 = vld [vmem:[%s950 + $0x30] sm:$0xe]
      %v2432 = vld [vmem:[%s950 + $0x38] sm:$0xe]
      %v2449 = vrot.slane %v2425, 5
      %v2450 = vrot.slane %v2449, 4
      %v2451 = vrot.slane %v2305, 5
      %v2452 = vsel %vm1156, %v2450, %v2451
      %v2453 = vrot.slane %v2426, 5
      %v2454 = vrot.slane %v2453, 4
      %v2455 = vrot.slane %v2306, 5
      %v2456 = vsel %vm1156, %v2454, %v2455
      %v2457 = vrot.slane %v2427, 5
      %v2458 = vrot.slane %v2457, 4
      %v2459 = vrot.slane %v2307, 5
      %v2460 = vsel %vm1156, %v2458, %v2459
      %v2461 = vrot.slane %v2428, 5
      %v2462 = vrot.slane %v2461, 4
      %v2463 = vrot.slane %v2308, 5
      %v2464 = vsel %vm1156, %v2462, %v2463
      %v2465 = vrot.slane %v2429, 5
      %v2466 = vrot.slane %v2465, 4
      %v2467 = vrot.slane %v2309, 5
      %v2468 = vsel %vm1156, %v2466, %v2467
      %v2469 = vrot.slane %v2430, 5
      %v2470 = vrot.slane %v2469, 4
      %v2471 = vrot.slane %v2310, 5
      %v2472 = vsel %vm1156, %v2470, %v2471
      %v2473 = vrot.slane %v2431, 5
      %v2474 = vrot.slane %v2473, 4
      %v2475 = vrot.slane %v2311, 5
      %v2476 = vsel %vm1156, %v2474, %v2475
      %v2477 = vrot.slane %v2432, 5
      %v2478 = vrot.slane %v2477, 4
      %v2479 = vrot.slane %v2312, 5
      %v2480 = vsel %vm1156, %v2478, %v2479
      %s2481 = scalar_lea.vmem [#allocation2], 176
      %v2482 = vld [vmem:[%s2481] sm:$0xf]
      %v2483 = vld [vmem:[%s2481 + $0x8] sm:$0xf]
      %v2484 = vld [vmem:[%s2481 + $0x10] sm:$0xf]
      %v2485 = vld [vmem:[%s2481 + $0x18] sm:$0xf]
      %v2486 = vld [vmem:[%s2481 + $0x20] sm:$0xf]
      %v2487 = vld [vmem:[%s2481 + $0x28] sm:$0xf]
      %v2488 = vld [vmem:[%s2481 + $0x30] sm:$0xf]
      %v2489 = vld [vmem:[%s2481 + $0x38] sm:$0xf]
      %v2490 = vld [vmem:[%s2481 + $0x4] sm:$0x1]
      %v2491 = vld [vmem:[%s2481 + $0xc] sm:$0x1]
      %v2492 = vld [vmem:[%s2481 + $0x14] sm:$0x1]
      %v2493 = vld [vmem:[%s2481 + $0x1c] sm:$0x1]
      %v2494 = vld [vmem:[%s2481 + $0x24] sm:$0x1]
      %v2495 = vld [vmem:[%s2481 + $0x2c] sm:$0x1]
      %v2496 = vld [vmem:[%s2481 + $0x34] sm:$0x1]
      %v2497 = vld [vmem:[%s2481 + $0x3c] sm:$0x1]
      %v2499 = vshrl.u32 %v2482, 16
      %v2501 = vrot.slane %v2499, 4
      %v2502 = vshll.u32 %v2482, 16
      %v2504 = vrot.slane %v2502, 5
      %v2505 = vor.u32 %v2501, %v2504
      %v2506 = vrot.slane %v2505, 4
      %v2508 = vshll.u32 %v2490, 16
      %v2510 = vrot.slane %v2508, 5
      %v2511 = vsel %vm1017, %v2506, %v2510
      %v2513 = vshrl.u32 %v2483, 16
      %v2515 = vrot.slane %v2513, 4
      %v2516 = vshll.u32 %v2483, 16
      %v2518 = vrot.slane %v2516, 5
      %v2519 = vor.u32 %v2515, %v2518
      %v2520 = vrot.slane %v2519, 4
      %v2522 = vshll.u32 %v2491, 16
      %v2524 = vrot.slane %v2522, 5
      %v2525 = vsel %vm1017, %v2520, %v2524
      %v2527 = vshrl.u32 %v2484, 16
      %v2529 = vrot.slane %v2527, 4
      %v2530 = vshll.u32 %v2484, 16
      %v2532 = vrot.slane %v2530, 5
      %v2533 = vor.u32 %v2529, %v2532
      %v2534 = vrot.slane %v2533, 4
      %v2536 = vshll.u32 %v2492, 16
      %v2538 = vrot.slane %v2536, 5
      %v2539 = vsel %vm1017, %v2534, %v2538
      %v2541 = vshrl.u32 %v2485, 16
      %v2543 = vrot.slane %v2541, 4
      %v2544 = vshll.u32 %v2485, 16
      %v2546 = vrot.slane %v2544, 5
      %v2547 = vor.u32 %v2543, %v2546
      %v2548 = vrot.slane %v2547, 4
      %v2550 = vshll.u32 %v2493, 16
      %v2552 = vrot.slane %v2550, 5
      %v2553 = vsel %vm1017, %v2548, %v2552
      %v2555 = vshrl.u32 %v2486, 16
      %v2557 = vrot.slane %v2555, 4
      %v2558 = vshll.u32 %v2486, 16
      %v2560 = vrot.slane %v2558, 5
      %v2561 = vor.u32 %v2557, %v2560
      %v2562 = vrot.slane %v2561, 4
      %v2564 = vshll.u32 %v2494, 16
      %v2566 = vrot.slane %v2564, 5
      %v2567 = vsel %vm1017, %v2562, %v2566
      %v2569 = vshrl.u32 %v2487, 16
      %v2571 = vrot.slane %v2569, 4
      %v2572 = vshll.u32 %v2487, 16
      %v2574 = vrot.slane %v2572, 5
      %v2575 = vor.u32 %v2571, %v2574
      %v2576 = vrot.slane %v2575, 4
      %v2578 = vshll.u32 %v2495, 16
      %v2580 = vrot.slane %v2578, 5
      %v2581 = vsel %vm1017, %v2576, %v2580
      %v2583 = vshrl.u32 %v2488, 16
      %v2585 = vrot.slane %v2583, 4
      %v2586 = vshll.u32 %v2488, 16
      %v2588 = vrot.slane %v2586, 5
      %v2589 = vor.u32 %v2585, %v2588
      %v2590 = vrot.slane %v2589, 4
      %v2592 = vshll.u32 %v2496, 16
      %v2594 = vrot.slane %v2592, 5
      %v2595 = vsel %vm1017, %v2590, %v2594
      %v2597 = vshrl.u32 %v2489, 16
      %v2599 = vrot.slane %v2597, 4
      %v2600 = vshll.u32 %v2489, 16
      %v2602 = vrot.slane %v2600, 5
      %v2603 = vor.u32 %v2599, %v2602
      %v2604 = vrot.slane %v2603, 4
      %v2606 = vshll.u32 %v2497, 16
      %v2608 = vrot.slane %v2606, 5
      %v2609 = vsel %vm1017, %v2604, %v2608
      %v2610 = vld [vmem:[%s2481] sm:$0xe]
      %v2611 = vld [vmem:[%s2481 + $0x8] sm:$0xe]
      %v2612 = vld [vmem:[%s2481 + $0x10] sm:$0xe]
      %v2613 = vld [vmem:[%s2481 + $0x18] sm:$0xe]
      %v2614 = vld [vmem:[%s2481 + $0x20] sm:$0xe]
      %v2615 = vld [vmem:[%s2481 + $0x28] sm:$0xe]
      %v2616 = vld [vmem:[%s2481 + $0x30] sm:$0xe]
      %v2617 = vld [vmem:[%s2481 + $0x38] sm:$0xe]
      %v2634 = vrot.slane %v2610, 5
      %v2635 = vrot.slane %v2634, 4
      %v2636 = vrot.slane %v2490, 5
      %v2637 = vsel %vm1156, %v2635, %v2636
      %v2638 = vrot.slane %v2611, 5
      %v2639 = vrot.slane %v2638, 4
      %v2640 = vrot.slane %v2491, 5
      %v2641 = vsel %vm1156, %v2639, %v2640
      %v2642 = vrot.slane %v2612, 5
      %v2643 = vrot.slane %v2642, 4
      %v2644 = vrot.slane %v2492, 5
      %v2645 = vsel %vm1156, %v2643, %v2644
      %v2646 = vrot.slane %v2613, 5
      %v2647 = vrot.slane %v2646, 4
      %v2648 = vrot.slane %v2493, 5
      %v2649 = vsel %vm1156, %v2647, %v2648
      %v2650 = vrot.slane %v2614, 5
      %v2651 = vrot.slane %v2650, 4
      %v2652 = vrot.slane %v2494, 5
      %v2653 = vsel %vm1156, %v2651, %v2652
      %v2654 = vrot.slane %v2615, 5
      %v2655 = vrot.slane %v2654, 4
      %v2656 = vrot.slane %v2495, 5
      %v2657 = vsel %vm1156, %v2655, %v2656
      %v2658 = vrot.slane %v2616, 5
      %v2659 = vrot.slane %v2658, 4
      %v2660 = vrot.slane %v2496, 5
      %v2661 = vsel %vm1156, %v2659, %v2660
      %v2662 = vrot.slane %v2617, 5
      %v2663 = vrot.slane %v2662, 4
      %v2664 = vrot.slane %v2497, 5
      %v2665 = vsel %vm1156, %v2663, %v2664
      %v2674 = vunpack.c.l.b16 %v999
      %v2675 = vunpack.c.l.b16 %v1000
      %v2676 = vunpack.c.l.b16 %v1001
      %v2677 = vunpack.c.l.b16 %v1002
      %v2678 = vunpack.c.l.b16 %v1003
      %v2679 = vunpack.c.l.b16 %v1004
      %v2680 = vunpack.c.l.b16 %v1005
      %v2681 = vunpack.c.l.b16 %v1006
      %v2682 = vpack.c.b16 %v2675, %v2674
      %v2683 = vpack.c.b16 %v2677, %v2676
      %v2684 = vpack.c.b16 %v2679, %v2678
      %v2685 = vpack.c.b16 %v2681, %v2680
      %v2686 = vunpack.c.l.b16 %v1031
      %v2687 = vunpack.c.l.b16 %v1045
      %v2688 = vunpack.c.l.b16 %v1059
      %v2689 = vunpack.c.l.b16 %v1073
      %v2690 = vunpack.c.l.b16 %v1087
      %v2691 = vunpack.c.l.b16 %v1101
      %v2692 = vunpack.c.l.b16 %v1115
      %v2693 = vunpack.c.l.b16 %v1129
      %v2694 = vpack.c.b16 %v2687, %v2686
      %v2695 = vpack.c.b16 %v2689, %v2688
      %v2696 = vpack.c.b16 %v2691, %v2690
      %v2697 = vpack.c.b16 %v2693, %v2692
      %2698 = vrot.lane.b32.xlu0 %v2694, 8
      %v2699 = vpop.permute.xlu0 %2698
      %2700 = vrot.lane.b32.xlu0 %v2695, 8
      %v2701 = vpop.permute.xlu0 %2700
      %2702 = vrot.lane.b32.xlu0 %v2696, 8
      %v2703 = vpop.permute.xlu0 %2702
      %2704 = vrot.lane.b32.xlu0 %v2697, 8
      %v2705 = vpop.permute.xlu0 %2704
      %v2706 = vunpack.c.l.b16 %v1160
      %v2707 = vunpack.c.l.b16 %v1164
      %v2708 = vunpack.c.l.b16 %v1168
      %v2709 = vunpack.c.l.b16 %v1172
      %v2710 = vunpack.c.l.b16 %v1176
      %v2711 = vunpack.c.l.b16 %v1180
      %v2712 = vunpack.c.l.b16 %v1184
      %v2713 = vunpack.c.l.b16 %v1188
      %v2714 = vpack.c.b16 %v2707, %v2706
      %v2715 = vpack.c.b16 %v2709, %v2708
      %v2716 = vpack.c.b16 %v2711, %v2710
      %v2717 = vpack.c.b16 %v2713, %v2712
      %2718 = vrot.lane.b32.xlu0 %v2714, 16
      %v2719 = vpop.permute.xlu0 %2718
      %2720 = vrot.lane.b32.xlu0 %v2715, 16
      %v2721 = vpop.permute.xlu0 %2720
      %2722 = vrot.lane.b32.xlu0 %v2716, 16
      %v2723 = vpop.permute.xlu0 %2722
      %2724 = vrot.lane.b32.xlu0 %v2717, 16
      %v2725 = vpop.permute.xlu0 %2724
      %v2734 = vunpack.c.l.b16 %v1189
      %v2735 = vunpack.c.l.b16 %v1190
      %v2736 = vunpack.c.l.b16 %v1191
      %v2737 = vunpack.c.l.b16 %v1192
      %v2738 = vunpack.c.l.b16 %v1193
      %v2739 = vunpack.c.l.b16 %v1194
      %v2740 = vunpack.c.l.b16 %v1195
      %v2741 = vunpack.c.l.b16 %v1196
      %v2742 = vpack.c.b16 %v2735, %v2734
      %v2743 = vpack.c.b16 %v2737, %v2736
      %v2744 = vpack.c.b16 %v2739, %v2738
      %v2745 = vpack.c.b16 %v2741, %v2740
      %2746 = vrot.lane.b32.xlu0 %v2742, 24
      %v2747 = vpop.permute.xlu0 %2746
      %2748 = vrot.lane.b32.xlu0 %v2743, 24
      %v2749 = vpop.permute.xlu0 %2748
      %2750 = vrot.lane.b32.xlu0 %v2744, 24
      %v2751 = vpop.permute.xlu0 %2750
      %2752 = vrot.lane.b32.xlu0 %v2745, 24
      %v2753 = vpop.permute.xlu0 %2752
      %v2754 = vunpack.c.l.b16 %v1218
      %v2755 = vunpack.c.l.b16 %v1232
      %v2756 = vunpack.c.l.b16 %v1246
      %v2757 = vunpack.c.l.b16 %v1260
      %v2758 = vunpack.c.l.b16 %v1274
      %v2759 = vunpack.c.l.b16 %v1288
      %v2760 = vunpack.c.l.b16 %v1302
      %v2761 = vunpack.c.l.b16 %v1316
      %v2762 = vpack.c.b16 %v2755, %v2754
      %v2763 = vpack.c.b16 %v2757, %v2756
      %v2764 = vpack.c.b16 %v2759, %v2758
      %v2765 = vpack.c.b16 %v2761, %v2760
      %2766 = vrot.lane.b32.xlu0 %v2762, 32
      %v2767 = vpop.permute.xlu0 %2766
      %2768 = vrot.lane.b32.xlu0 %v2763, 32
      %v2769 = vpop.permute.xlu0 %2768
      %2770 = vrot.lane.b32.xlu0 %v2764, 32
      %v2771 = vpop.permute.xlu0 %2770
      %2772 = vrot.lane.b32.xlu0 %v2765, 32
      %v2773 = vpop.permute.xlu0 %2772
      %v2774 = vunpack.c.l.b16 %v1344
      %v2775 = vunpack.c.l.b16 %v1348
      %v2776 = vunpack.c.l.b16 %v1352
      %v2777 = vunpack.c.l.b16 %v1356
      %v2778 = vunpack.c.l.b16 %v1360
      %v2779 = vunpack.c.l.b16 %v1364
      %v2780 = vunpack.c.l.b16 %v1368
      %v2781 = vunpack.c.l.b16 %v1372
      %v2782 = vpack.c.b16 %v2775, %v2774
      %v2783 = vpack.c.b16 %v2777, %v2776
      %v2784 = vpack.c.b16 %v2779, %v2778
      %v2785 = vpack.c.b16 %v2781, %v2780
      %2786 = vrot.lane.b32.xlu0 %v2782, 40
      %v2787 = vpop.permute.xlu0 %2786
      %2788 = vrot.lane.b32.xlu0 %v2783, 40
      %v2789 = vpop.permute.xlu0 %2788
      %2790 = vrot.lane.b32.xlu0 %v2784, 40
      %v2791 = vpop.permute.xlu0 %2790
      %2792 = vrot.lane.b32.xlu0 %v2785, 40
      %v2793 = vpop.permute.xlu0 %2792
      %v2802 = vunpack.c.l.b16 %v1374
      %v2803 = vunpack.c.l.b16 %v1375
      %v2804 = vunpack.c.l.b16 %v1376
      %v2805 = vunpack.c.l.b16 %v1377
      %v2806 = vunpack.c.l.b16 %v1378
      %v2807 = vunpack.c.l.b16 %v1379
      %v2808 = vunpack.c.l.b16 %v1380
      %v2809 = vunpack.c.l.b16 %v1381
      %v2810 = vpack.c.b16 %v2803, %v2802
      %v2811 = vpack.c.b16 %v2805, %v2804
      %v2812 = vpack.c.b16 %v2807, %v2806
      %v2813 = vpack.c.b16 %v2809, %v2808
      %2814 = vrot.lane.b32.xlu0 %v2810, 48
      %v2815 = vpop.permute.xlu0 %2814
      %2816 = vrot.lane.b32.xlu0 %v2811, 48
      %v2817 = vpop.permute.xlu0 %2816
      %2818 = vrot.lane.b32.xlu0 %v2812, 48
      %v2819 = vpop.permute.xlu0 %2818
      %2820 = vrot.lane.b32.xlu0 %v2813, 48
      %v2821 = vpop.permute.xlu0 %2820
      %v2822 = vunpack.c.l.b16 %v1403
      %v2823 = vunpack.c.l.b16 %v1417
      %v2824 = vunpack.c.l.b16 %v1431
      %v2825 = vunpack.c.l.b16 %v1445
      %v2826 = vunpack.c.l.b16 %v1459
      %v2827 = vunpack.c.l.b16 %v1473
      %v2828 = vunpack.c.l.b16 %v1487
      %v2829 = vunpack.c.l.b16 %v1501
      %v2830 = vpack.c.b16 %v2823, %v2822
      %v2831 = vpack.c.b16 %v2825, %v2824
      %v2832 = vpack.c.b16 %v2827, %v2826
      %v2833 = vpack.c.b16 %v2829, %v2828
      %2834 = vrot.lane.b32.xlu0 %v2830, 56
      %v2835 = vpop.permute.xlu0 %2834
      %2836 = vrot.lane.b32.xlu0 %v2831, 56
      %v2837 = vpop.permute.xlu0 %2836
      %2838 = vrot.lane.b32.xlu0 %v2832, 56
      %v2839 = vpop.permute.xlu0 %2838
      %2840 = vrot.lane.b32.xlu0 %v2833, 56
      %v2841 = vpop.permute.xlu0 %2840
      %v2842 = vunpack.c.l.b16 %v1529
      %v2843 = vunpack.c.l.b16 %v1533
      %v2844 = vunpack.c.l.b16 %v1537
      %v2845 = vunpack.c.l.b16 %v1541
      %v2846 = vunpack.c.l.b16 %v1545
      %v2847 = vunpack.c.l.b16 %v1549
      %v2848 = vunpack.c.l.b16 %v1553
      %v2849 = vunpack.c.l.b16 %v1557
      %v2850 = vpack.c.b16 %v2843, %v2842
      %v2851 = vpack.c.b16 %v2845, %v2844
      %v2852 = vpack.c.b16 %v2847, %v2846
      %v2853 = vpack.c.b16 %v2849, %v2848
      %2854 = vrot.lane.b32.xlu0 %v2850, 64
      %v2855 = vpop.permute.xlu0 %2854
      %2856 = vrot.lane.b32.xlu0 %v2851, 64
      %v2857 = vpop.permute.xlu0 %2856
      %2858 = vrot.lane.b32.xlu0 %v2852, 64
      %v2859 = vpop.permute.xlu0 %2858
      %2860 = vrot.lane.b32.xlu0 %v2853, 64
      %v2861 = vpop.permute.xlu0 %2860
      %v2870 = vunpack.c.l.b16 %v1559
      %v2871 = vunpack.c.l.b16 %v1560
      %v2872 = vunpack.c.l.b16 %v1561
      %v2873 = vunpack.c.l.b16 %v1562
      %v2874 = vunpack.c.l.b16 %v1563
      %v2875 = vunpack.c.l.b16 %v1564
      %v2876 = vunpack.c.l.b16 %v1565
      %v2877 = vunpack.c.l.b16 %v1566
      %v2878 = vpack.c.b16 %v2871, %v2870
      %v2879 = vpack.c.b16 %v2873, %v2872
      %v2880 = vpack.c.b16 %v2875, %v2874
      %v2881 = vpack.c.b16 %v2877, %v2876
      %2882 = vrot.lane.b32.xlu0 %v2878, 72
      %v2883 = vpop.permute.xlu0 %2882
      %2884 = vrot.lane.b32.xlu0 %v2879, 72
      %v2885 = vpop.permute.xlu0 %2884
      %2886 = vrot.lane.b32.xlu0 %v2880, 72
      %v2887 = vpop.permute.xlu0 %2886
      %2888 = vrot.lane.b32.xlu0 %v2881, 72
      %v2889 = vpop.permute.xlu0 %2888
      %v2890 = vunpack.c.l.b16 %v1588
      %v2891 = vunpack.c.l.b16 %v1602
      %v2892 = vunpack.c.l.b16 %v1616
      %v2893 = vunpack.c.l.b16 %v1630
      %v2894 = vunpack.c.l.b16 %v1644
      %v2895 = vunpack.c.l.b16 %v1658
      %v2896 = vunpack.c.l.b16 %v1672
      %v2897 = vunpack.c.l.b16 %v1686
      %v2898 = vpack.c.b16 %v2891, %v2890
      %v2899 = vpack.c.b16 %v2893, %v2892
      %v2900 = vpack.c.b16 %v2895, %v2894
      %v2901 = vpack.c.b16 %v2897, %v2896
      %2902 = vrot.lane.b32.xlu0 %v2898, 80
      %v2903 = vpop.permute.xlu0 %2902
      %2904 = vrot.lane.b32.xlu0 %v2899, 80
      %v2905 = vpop.permute.xlu0 %2904
      %2906 = vrot.lane.b32.xlu0 %v2900, 80
      %v2907 = vpop.permute.xlu0 %2906
      %2908 = vrot.lane.b32.xlu0 %v2901, 80
      %v2909 = vpop.permute.xlu0 %2908
      %v2910 = vunpack.c.l.b16 %v1714
      %v2911 = vunpack.c.l.b16 %v1718
      %v2912 = vunpack.c.l.b16 %v1722
      %v2913 = vunpack.c.l.b16 %v1726
      %v2914 = vunpack.c.l.b16 %v1730
      %v2915 = vunpack.c.l.b16 %v1734
      %v2916 = vunpack.c.l.b16 %v1738
      %v2917 = vunpack.c.l.b16 %v1742
      %v2918 = vpack.c.b16 %v2911, %v2910
      %v2919 = vpack.c.b16 %v2913, %v2912
      %v2920 = vpack.c.b16 %v2915, %v2914
      %v2921 = vpack.c.b16 %v2917, %v2916
      %2922 = vrot.lane.b32.xlu0 %v2918, 88
      %v2923 = vpop.permute.xlu0 %2922
      %2924 = vrot.lane.b32.xlu0 %v2919, 88
      %v2925 = vpop.permute.xlu0 %2924
      %2926 = vrot.lane.b32.xlu0 %v2920, 88
      %v2927 = vpop.permute.xlu0 %2926
      %2928 = vrot.lane.b32.xlu0 %v2921, 88
      %v2929 = vpop.permute.xlu0 %2928
      %v2938 = vunpack.c.l.b16 %v1743
      %v2939 = vunpack.c.l.b16 %v1744
      %v2940 = vunpack.c.l.b16 %v1745
      %v2941 = vunpack.c.l.b16 %v1746
      %v2942 = vunpack.c.l.b16 %v1747
      %v2943 = vunpack.c.l.b16 %v1748
      %v2944 = vunpack.c.l.b16 %v1749
      %v2945 = vunpack.c.l.b16 %v1750
      %v2946 = vpack.c.b16 %v2939, %v2938
      %v2947 = vpack.c.b16 %v2941, %v2940
      %v2948 = vpack.c.b16 %v2943, %v2942
      %v2949 = vpack.c.b16 %v2945, %v2944
      %2950 = vrot.lane.b32.xlu0 %v2946, 96
      %v2951 = vpop.permute.xlu0 %2950
      %2952 = vrot.lane.b32.xlu0 %v2947, 96
      %v2953 = vpop.permute.xlu0 %2952
      %2954 = vrot.lane.b32.xlu0 %v2948, 96
      %v2955 = vpop.permute.xlu0 %2954
      %2956 = vrot.lane.b32.xlu0 %v2949, 96
      %v2957 = vpop.permute.xlu0 %2956
      %v2958 = vunpack.c.l.b16 %v1772
      %v2959 = vunpack.c.l.b16 %v1786
      %v2960 = vunpack.c.l.b16 %v1800
      %v2961 = vunpack.c.l.b16 %v1814
      %v2962 = vunpack.c.l.b16 %v1828
      %v2963 = vunpack.c.l.b16 %v1842
      %v2964 = vunpack.c.l.b16 %v1856
      %v2965 = vunpack.c.l.b16 %v1870
      %v2966 = vpack.c.b16 %v2959, %v2958
      %v2967 = vpack.c.b16 %v2961, %v2960
      %v2968 = vpack.c.b16 %v2963, %v2962
      %v2969 = vpack.c.b16 %v2965, %v2964
      %2970 = vrot.lane.b32.xlu0 %v2966, 104
      %v2971 = vpop.permute.xlu0 %2970
      %2972 = vrot.lane.b32.xlu0 %v2967, 104
      %v2973 = vpop.permute.xlu0 %2972
      %2974 = vrot.lane.b32.xlu0 %v2968, 104
      %v2975 = vpop.permute.xlu0 %2974
      %2976 = vrot.lane.b32.xlu0 %v2969, 104
      %v2977 = vpop.permute.xlu0 %2976
      %v2978 = vunpack.c.l.b16 %v1898
      %v2979 = vunpack.c.l.b16 %v1902
      %v2980 = vunpack.c.l.b16 %v1906
      %v2981 = vunpack.c.l.b16 %v1910
      %v2982 = vunpack.c.l.b16 %v1914
      %v2983 = vunpack.c.l.b16 %v1918
      %v2984 = vunpack.c.l.b16 %v1922
      %v2985 = vunpack.c.l.b16 %v1926
      %v2986 = vpack.c.b16 %v2979, %v2978
      %v2987 = vpack.c.b16 %v2981, %v2980
      %v2988 = vpack.c.b16 %v2983, %v2982
      %v2989 = vpack.c.b16 %v2985, %v2984
      %2990 = vrot.lane.b32.xlu0 %v2986, 112
      %v2991 = vpop.permute.xlu0 %2990
      %2992 = vrot.lane.b32.xlu0 %v2987, 112
      %v2993 = vpop.permute.xlu0 %2992
      %2994 = vrot.lane.b32.xlu0 %v2988, 112
      %v2995 = vpop.permute.xlu0 %2994
      %2996 = vrot.lane.b32.xlu0 %v2989, 112
      %v2997 = vpop.permute.xlu0 %2996
      %v3006 = vunpack.c.l.b16 %v1928
      %v3007 = vunpack.c.l.b16 %v1929
      %v3008 = vunpack.c.l.b16 %v1930
      %v3009 = vunpack.c.l.b16 %v1931
      %v3010 = vunpack.c.l.b16 %v1932
      %v3011 = vunpack.c.l.b16 %v1933
      %v3012 = vunpack.c.l.b16 %v1934
      %v3013 = vunpack.c.l.b16 %v1935
      %v3014 = vpack.c.b16 %v3007, %v3006
      %v3015 = vpack.c.b16 %v3009, %v3008
      %v3016 = vpack.c.b16 %v3011, %v3010
      %v3017 = vpack.c.b16 %v3013, %v3012
      %3018 = vrot.lane.b32.xlu0 %v3014, 120
      %v3019 = vpop.permute.xlu0 %3018
      %3020 = vrot.lane.b32.xlu0 %v3015, 120
      %v3021 = vpop.permute.xlu0 %3020
      %3022 = vrot.lane.b32.xlu0 %v3016, 120
      %v3023 = vpop.permute.xlu0 %3022
      %3024 = vrot.lane.b32.xlu0 %v3017, 120
      %v3025 = vpop.permute.xlu0 %3024
      %vm3026 = vcmask 64512
      %v3029 = vsel %vm3026, %v2682, %v2699
      %v3032 = vsel %vm3026, %v2683, %v2701
      %v3035 = vsel %vm3026, %v2684, %v2703
      %v3038 = vsel %vm3026, %v2685, %v2705
      %vm3039 = vcmask 130048
      %v3041 = vsel %vm3039, %v3029, %v2719
      %v3043 = vsel %vm3039, %v3032, %v2721
      %v3045 = vsel %vm3039, %v3035, %v2723
      %v3047 = vsel %vm3039, %v3038, %v2725
      %vm3048 = vcmask 195584
      %v3050 = vsel %vm3048, %v3041, %v2747
      %v3052 = vsel %vm3048, %v3043, %v2749
      %v3054 = vsel %vm3048, %v3045, %v2751
      %v3056 = vsel %vm3048, %v3047, %v2753
      %vm3057 = vcmask 261120
      %v3059 = vsel %vm3057, %v3050, %v2767
      %v3061 = vsel %vm3057, %v3052, %v2769
      %v3063 = vsel %vm3057, %v3054, %v2771
      %v3065 = vsel %vm3057, %v3056, %v2773
      %vm3066 = vcmask 326656
      %v3068 = vsel %vm3066, %v3059, %v2787
      %v3070 = vsel %vm3066, %v3061, %v2789
      %v3072 = vsel %vm3066, %v3063, %v2791
      %v3074 = vsel %vm3066, %v3065, %v2793
      %vm3075 = vcmask 392192
      %v3077 = vsel %vm3075, %v3068, %v2815
      %v3079 = vsel %vm3075, %v3070, %v2817
      %v3081 = vsel %vm3075, %v3072, %v2819
      %v3083 = vsel %vm3075, %v3074, %v2821
      %vm3084 = vcmask 457728
      %v3086 = vsel %vm3084, %v3077, %v2835
      %v3088 = vsel %vm3084, %v3079, %v2837
      %v3090 = vsel %vm3084, %v3081, %v2839
      %v3092 = vsel %vm3084, %v3083, %v2841
      %vm3093 = vcmask 523264
      %v3095 = vsel %vm3093, %v3086, %v2855
      %v3097 = vsel %vm3093, %v3088, %v2857
      %v3099 = vsel %vm3093, %v3090, %v2859
      %v3101 = vsel %vm3093, %v3092, %v2861
      %vm3102 = vcmask 588800
      %v3104 = vsel %vm3102, %v3095, %v2883
      %v3106 = vsel %vm3102, %v3097, %v2885
      %v3108 = vsel %vm3102, %v3099, %v2887
      %v3110 = vsel %vm3102, %v3101, %v2889
      %vm3111 = vcmask 654336
      %v3113 = vsel %vm3111, %v3104, %v2903
      %v3115 = vsel %vm3111, %v3106, %v2905
      %v3117 = vsel %vm3111, %v3108, %v2907
      %v3119 = vsel %vm3111, %v3110, %v2909
      %vm3120 = vcmask 719872
      %v3122 = vsel %vm3120, %v3113, %v2923
      %v3124 = vsel %vm3120, %v3115, %v2925
      %v3126 = vsel %vm3120, %v3117, %v2927
      %v3128 = vsel %vm3120, %v3119, %v2929
      %vm3129 = vcmask 785408
      %v3131 = vsel %vm3129, %v3122, %v2951
      %v3133 = vsel %vm3129, %v3124, %v2953
      %v3135 = vsel %vm3129, %v3126, %v2955
      %v3137 = vsel %vm3129, %v3128, %v2957
      %vm3138 = vcmask 850944
      %v3140 = vsel %vm3138, %v3131, %v2971
      %v3142 = vsel %vm3138, %v3133, %v2973
      %v3144 = vsel %vm3138, %v3135, %v2975
      %v3146 = vsel %vm3138, %v3137, %v2977
      %vm3147 = vcmask 916480
      %v3149 = vsel %vm3147, %v3140, %v2991
      %v3151 = vsel %vm3147, %v3142, %v2993
      %v3153 = vsel %vm3147, %v3144, %v2995
      %v3155 = vsel %vm3147, %v3146, %v2997
      %vm3156 = vcmask 982016
      %v3158 = vsel %vm3156, %v3149, %v3019
      %v3161 = vsel %vm3156, %v3151, %v3021
      %v3164 = vsel %vm3156, %v3153, %v3023
      %v3167 = vsel %vm3156, %v3155, %v3025
      %v3169 = vunpack.c.l.b16 %v1957
      %v3170 = vunpack.c.l.b16 %v1971
      %v3171 = vunpack.c.l.b16 %v1985
      %v3172 = vunpack.c.l.b16 %v1999
      %v3173 = vunpack.c.l.b16 %v2013
      %v3174 = vunpack.c.l.b16 %v2027
      %v3175 = vunpack.c.l.b16 %v2041
      %v3176 = vunpack.c.l.b16 %v2055
      %v3177 = vpack.c.b16 %v3170, %v3169
      %v3178 = vpack.c.b16 %v3172, %v3171
      %v3179 = vpack.c.b16 %v3174, %v3173
      %v3180 = vpack.c.b16 %v3176, %v3175
      %v3181 = vunpack.c.l.b16 %v2083
      %v3182 = vunpack.c.l.b16 %v2087
      %v3183 = vunpack.c.l.b16 %v2091
      %v3184 = vunpack.c.l.b16 %v2095
      %v3185 = vunpack.c.l.b16 %v2099
      %v3186 = vunpack.c.l.b16 %v2103
      %v3187 = vunpack.c.l.b16 %v2107
      %v3188 = vunpack.c.l.b16 %v2111
      %v3189 = vpack.c.b16 %v3182, %v3181
      %v3190 = vpack.c.b16 %v3184, %v3183
      %v3191 = vpack.c.b16 %v3186, %v3185
      %v3192 = vpack.c.b16 %v3188, %v3187
      %3193 = vrot.lane.b32.xlu0 %v3189, 8
      %v3194 = vpop.permute.xlu0 %3193
      %3195 = vrot.lane.b32.xlu0 %v3190, 8
      %v3196 = vpop.permute.xlu0 %3195
      %3197 = vrot.lane.b32.xlu0 %v3191, 8
      %v3198 = vpop.permute.xlu0 %3197
      %3199 = vrot.lane.b32.xlu0 %v3192, 8
      %v3200 = vpop.permute.xlu0 %3199
      %v3209 = vunpack.c.l.b16 %v2113
      %v3210 = vunpack.c.l.b16 %v2114
      %v3211 = vunpack.c.l.b16 %v2115
      %v3212 = vunpack.c.l.b16 %v2116
      %v3213 = vunpack.c.l.b16 %v2117
      %v3214 = vunpack.c.l.b16 %v2118
      %v3215 = vunpack.c.l.b16 %v2119
      %v3216 = vunpack.c.l.b16 %v2120
      %v3217 = vpack.c.b16 %v3210, %v3209
      %v3218 = vpack.c.b16 %v3212, %v3211
      %v3219 = vpack.c.b16 %v3214, %v3213
      %v3220 = vpack.c.b16 %v3216, %v3215
      %3221 = vrot.lane.b32.xlu0 %v3217, 16
      %v3222 = vpop.permute.xlu0 %3221
      %3223 = vrot.lane.b32.xlu0 %v3218, 16
      %v3224 = vpop.permute.xlu0 %3223
      %3225 = vrot.lane.b32.xlu0 %v3219, 16
      %v3226 = vpop.permute.xlu0 %3225
      %3227 = vrot.lane.b32.xlu0 %v3220, 16
      %v3228 = vpop.permute.xlu0 %3227
      %v3229 = vunpack.c.l.b16 %v2142
      %v3230 = vunpack.c.l.b16 %v2156
      %v3231 = vunpack.c.l.b16 %v2170
      %v3232 = vunpack.c.l.b16 %v2184
      %v3233 = vunpack.c.l.b16 %v2198
      %v3234 = vunpack.c.l.b16 %v2212
      %v3235 = vunpack.c.l.b16 %v2226
      %v3236 = vunpack.c.l.b16 %v2240
      %v3237 = vpack.c.b16 %v3230, %v3229
      %v3238 = vpack.c.b16 %v3232, %v3231
      %v3239 = vpack.c.b16 %v3234, %v3233
      %v3240 = vpack.c.b16 %v3236, %v3235
      %3241 = vrot.lane.b32.xlu0 %v3237, 24
      %v3242 = vpop.permute.xlu0 %3241
      %3243 = vrot.lane.b32.xlu0 %v3238, 24
      %v3244 = vpop.permute.xlu0 %3243
      %3245 = vrot.lane.b32.xlu0 %v3239, 24
      %v3246 = vpop.permute.xlu0 %3245
      %3247 = vrot.lane.b32.xlu0 %v3240, 24
      %v3248 = vpop.permute.xlu0 %3247
      %v3249 = vunpack.c.l.b16 %v2268
      %v3250 = vunpack.c.l.b16 %v2272
      %v3251 = vunpack.c.l.b16 %v2276
      %v3252 = vunpack.c.l.b16 %v2280
      %v3253 = vunpack.c.l.b16 %v2284
      %v3254 = vunpack.c.l.b16 %v2288
      %v3255 = vunpack.c.l.b16 %v2292
      %v3256 = vunpack.c.l.b16 %v2296
      %v3257 = vpack.c.b16 %v3250, %v3249
      %v3258 = vpack.c.b16 %v3252, %v3251
      %v3259 = vpack.c.b16 %v3254, %v3253
      %v3260 = vpack.c.b16 %v3256, %v3255
      %3261 = vrot.lane.b32.xlu0 %v3257, 32
      %v3262 = vpop.permute.xlu0 %3261
      %3263 = vrot.lane.b32.xlu0 %v3258, 32
      %v3264 = vpop.permute.xlu0 %3263
      %3265 = vrot.lane.b32.xlu0 %v3259, 32
      %v3266 = vpop.permute.xlu0 %3265
      %3267 = vrot.lane.b32.xlu0 %v3260, 32
      %v3268 = vpop.permute.xlu0 %3267
      %v3277 = vunpack.c.l.b16 %v2297
      %v3278 = vunpack.c.l.b16 %v2298
      %v3279 = vunpack.c.l.b16 %v2299
      %v3280 = vunpack.c.l.b16 %v2300
      %v3281 = vunpack.c.l.b16 %v2301
      %v3282 = vunpack.c.l.b16 %v2302
      %v3283 = vunpack.c.l.b16 %v2303
      %v3284 = vunpack.c.l.b16 %v2304
      %v3285 = vpack.c.b16 %v3278, %v3277
      %v3286 = vpack.c.b16 %v3280, %v3279
      %v3287 = vpack.c.b16 %v3282, %v3281
      %v3288 = vpack.c.b16 %v3284, %v3283
      %3289 = vrot.lane.b32.xlu0 %v3285, 40
      %v3290 = vpop.permute.xlu0 %3289
      %3291 = vrot.lane.b32.xlu0 %v3286, 40
      %v3292 = vpop.permute.xlu0 %3291
      %3293 = vrot.lane.b32.xlu0 %v3287, 40
      %v3294 = vpop.permute.xlu0 %3293
      %3295 = vrot.lane.b32.xlu0 %v3288, 40
      %v3296 = vpop.permute.xlu0 %3295
      %v3297 = vunpack.c.l.b16 %v2326
      %v3298 = vunpack.c.l.b16 %v2340
      %v3299 = vunpack.c.l.b16 %v2354
      %v3300 = vunpack.c.l.b16 %v2368
      %v3301 = vunpack.c.l.b16 %v2382
      %v3302 = vunpack.c.l.b16 %v2396
      %v3303 = vunpack.c.l.b16 %v2410
      %v3304 = vunpack.c.l.b16 %v2424
      %v3305 = vpack.c.b16 %v3298, %v3297
      %v3306 = vpack.c.b16 %v3300, %v3299
      %v3307 = vpack.c.b16 %v3302, %v3301
      %v3308 = vpack.c.b16 %v3304, %v3303
      %3309 = vrot.lane.b32.xlu0 %v3305, 48
      %v3310 = vpop.permute.xlu0 %3309
      %3311 = vrot.lane.b32.xlu0 %v3306, 48
      %v3312 = vpop.permute.xlu0 %3311
      %3313 = vrot.lane.b32.xlu0 %v3307, 48
      %v3314 = vpop.permute.xlu0 %3313
      %3315 = vrot.lane.b32.xlu0 %v3308, 48
      %v3316 = vpop.permute.xlu0 %3315
      %v3317 = vunpack.c.l.b16 %v2452
      %v3318 = vunpack.c.l.b16 %v2456
      %v3319 = vunpack.c.l.b16 %v2460
      %v3320 = vunpack.c.l.b16 %v2464
      %v3321 = vunpack.c.l.b16 %v2468
      %v3322 = vunpack.c.l.b16 %v2472
      %v3323 = vunpack.c.l.b16 %v2476
      %v3324 = vunpack.c.l.b16 %v2480
      %v3325 = vpack.c.b16 %v3318, %v3317
      %v3326 = vpack.c.b16 %v3320, %v3319
      %v3327 = vpack.c.b16 %v3322, %v3321
      %v3328 = vpack.c.b16 %v3324, %v3323
      %3329 = vrot.lane.b32.xlu0 %v3325, 56
      %v3330 = vpop.permute.xlu0 %3329
      %3331 = vrot.lane.b32.xlu0 %v3326, 56
      %v3332 = vpop.permute.xlu0 %3331
      %3333 = vrot.lane.b32.xlu0 %v3327, 56
      %v3334 = vpop.permute.xlu0 %3333
      %3335 = vrot.lane.b32.xlu0 %v3328, 56
      %v3336 = vpop.permute.xlu0 %3335
      %v3345 = vunpack.c.l.b16 %v2482
      %v3346 = vunpack.c.l.b16 %v2483
      %v3347 = vunpack.c.l.b16 %v2484
      %v3348 = vunpack.c.l.b16 %v2485
      %v3349 = vunpack.c.l.b16 %v2486
      %v3350 = vunpack.c.l.b16 %v2487
      %v3351 = vunpack.c.l.b16 %v2488
      %v3352 = vunpack.c.l.b16 %v2489
      %v3353 = vpack.c.b16 %v3346, %v3345
      %v3354 = vpack.c.b16 %v3348, %v3347
      %v3355 = vpack.c.b16 %v3350, %v3349
      %v3356 = vpack.c.b16 %v3352, %v3351
      %3357 = vrot.lane.b32.xlu0 %v3353, 64
      %v3358 = vpop.permute.xlu0 %3357
      %3359 = vrot.lane.b32.xlu0 %v3354, 64
      %v3360 = vpop.permute.xlu0 %3359
      %3361 = vrot.lane.b32.xlu0 %v3355, 64
      %v3362 = vpop.permute.xlu0 %3361
      %3363 = vrot.lane.b32.xlu0 %v3356, 64
      %v3364 = vpop.permute.xlu0 %3363
      %v3365 = vunpack.c.l.b16 %v2511
      %v3366 = vunpack.c.l.b16 %v2525
      %v3367 = vunpack.c.l.b16 %v2539
      %v3368 = vunpack.c.l.b16 %v2553
      %v3369 = vunpack.c.l.b16 %v2567
      %v3370 = vunpack.c.l.b16 %v2581
      %v3371 = vunpack.c.l.b16 %v2595
      %v3372 = vunpack.c.l.b16 %v2609
      %v3373 = vpack.c.b16 %v3366, %v3365
      %v3374 = vpack.c.b16 %v3368, %v3367
      %v3375 = vpack.c.b16 %v3370, %v3369
      %v3376 = vpack.c.b16 %v3372, %v3371
      %3377 = vrot.lane.b32.xlu0 %v3373, 72
      %v3378 = vpop.permute.xlu0 %3377
      %3379 = vrot.lane.b32.xlu0 %v3374, 72
      %v3380 = vpop.permute.xlu0 %3379
      %3381 = vrot.lane.b32.xlu0 %v3375, 72
      %v3382 = vpop.permute.xlu0 %3381
      %3383 = vrot.lane.b32.xlu0 %v3376, 72
      %v3384 = vpop.permute.xlu0 %3383
      %v3385 = vunpack.c.l.b16 %v2637
      %v3386 = vunpack.c.l.b16 %v2641
      %v3387 = vunpack.c.l.b16 %v2645
      %v3388 = vunpack.c.l.b16 %v2649
      %v3389 = vunpack.c.l.b16 %v2653
      %v3390 = vunpack.c.l.b16 %v2657
      %v3391 = vunpack.c.l.b16 %v2661
      %v3392 = vunpack.c.l.b16 %v2665
      %v3393 = vpack.c.b16 %v3386, %v3385
      %v3394 = vpack.c.b16 %v3388, %v3387
      %v3395 = vpack.c.b16 %v3390, %v3389
      %v3396 = vpack.c.b16 %v3392, %v3391
      %3397 = vrot.lane.b32.xlu0 %v3393, 80
      %v3398 = vpop.permute.xlu0 %3397
      %3399 = vrot.lane.b32.xlu0 %v3394, 80
      %v3400 = vpop.permute.xlu0 %3399
      %3401 = vrot.lane.b32.xlu0 %v3395, 80
      %v3402 = vpop.permute.xlu0 %3401
      %3403 = vrot.lane.b32.xlu0 %v3396, 80
      %v3404 = vpop.permute.xlu0 %3403
      %v3407 = vsel %vm3026, %v3177, %v3194
      %v3410 = vsel %vm3026, %v3178, %v3196
      %v3413 = vsel %vm3026, %v3179, %v3198
      %v3416 = vsel %vm3026, %v3180, %v3200
      %v3418 = vsel %vm3039, %v3407, %v3222
      %v3420 = vsel %vm3039, %v3410, %v3224
      %v3422 = vsel %vm3039, %v3413, %v3226
      %v3424 = vsel %vm3039, %v3416, %v3228
      %v3426 = vsel %vm3048, %v3418, %v3242
      %v3428 = vsel %vm3048, %v3420, %v3244
      %v3430 = vsel %vm3048, %v3422, %v3246
      %v3432 = vsel %vm3048, %v3424, %v3248
      %v3434 = vsel %vm3057, %v3426, %v3262
      %v3436 = vsel %vm3057, %v3428, %v3264
      %v3438 = vsel %vm3057, %v3430, %v3266
      %v3440 = vsel %vm3057, %v3432, %v3268
      %v3442 = vsel %vm3066, %v3434, %v3290
      %v3444 = vsel %vm3066, %v3436, %v3292
      %v3446 = vsel %vm3066, %v3438, %v3294
      %v3448 = vsel %vm3066, %v3440, %v3296
      %v3450 = vsel %vm3075, %v3442, %v3310
      %v3452 = vsel %vm3075, %v3444, %v3312
      %v3454 = vsel %vm3075, %v3446, %v3314
      %v3456 = vsel %vm3075, %v3448, %v3316
      %v3458 = vsel %vm3084, %v3450, %v3330
      %v3460 = vsel %vm3084, %v3452, %v3332
      %v3462 = vsel %vm3084, %v3454, %v3334
      %v3464 = vsel %vm3084, %v3456, %v3336
      %v3466 = vsel %vm3093, %v3458, %v3358
      %v3468 = vsel %vm3093, %v3460, %v3360
      %v3470 = vsel %vm3093, %v3462, %v3362
      %v3472 = vsel %vm3093, %v3464, %v3364
      %v3474 = vsel %vm3102, %v3466, %v3378
      %v3476 = vsel %vm3102, %v3468, %v3380
      %v3478 = vsel %vm3102, %v3470, %v3382
      %v3480 = vsel %vm3102, %v3472, %v3384
      %v3482 = vsel %vm3111, %v3474, %v3398
      %v3484 = vsel %vm3111, %v3476, %v3400
      %v3486 = vsel %vm3111, %v3478, %v3402
      %v3488 = vsel %vm3111, %v3480, %v3404
      %v3489 = vld [vmem:[%s3] sm:$0xf]
      %v3490 = vld [vmem:[%s3 + $0x4] sm:$0xf]
      %v3491 = vld [vmem:[%s3 + $0x8] sm:$0xf]
      %v3492 = vld [vmem:[%s3 + $0xc] sm:$0xf]
      %v3493 = vld [vmem:[%s3 + $0x10] sm:$0xf]
      %v3494 = vld [vmem:[%s3 + $0x14] sm:$0xf]
      %v3495 = vld [vmem:[%s3 + $0x18] sm:$0xf]
      %v3496 = vld [vmem:[%s3 + $0x1c] sm:$0xf]
      %v3497 = vld [vmem:[%s3 + $0x20] sm:$0xf]
      %v3498 = vld [vmem:[%s3 + $0x24] sm:$0xf]
      %v3499 = vld [vmem:[%s3 + $0x28] sm:$0xf]
      %v3500 = vld [vmem:[%s3 + $0x2c] sm:$0xf]
      %v3501 = vld [vmem:[%s3 + $0x30] sm:$0xf]
      %v3502 = vld [vmem:[%s3 + $0x34] sm:$0xf]
      %v3503 = vld [vmem:[%s3 + $0x38] sm:$0xf]
      %v3504 = vld [vmem:[%s3 + $0x3c] sm:$0xf]
      %v3505 = vld [vmem:[%s3 + $0x40] sm:$0xf]
      %v3506 = vld [vmem:[%s3 + $0x44] sm:$0xf]
      %v3507 = vld [vmem:[%s3 + $0x48] sm:$0xf]
      %v3508 = vld [vmem:[%s3 + $0x4c] sm:$0xf]
      %v3509 = vld [vmem:[%s3 + $0x50] sm:$0xf]
      %v3510 = vld [vmem:[%s3 + $0x54] sm:$0xf]
      %v3511 = vld [vmem:[%s3 + $0x58] sm:$0xf]
      %v3512 = vld [vmem:[%s3 + $0x5c] sm:$0xf]
      %v3513 = vld [vmem:[%s3 + $0x60] sm:$0xf]
      %v3514 = vld [vmem:[%s3 + $0x64] sm:$0xf]
      %v3515 = vld [vmem:[%s3 + $0x68] sm:$0xf]
      %v3516 = vld [vmem:[%s4] sm:$0x1]
      %v3518 = vlaneseq
      %v3519 = vshrl.u32 %v3518, 7
      %v3520 = vsub.s32 0, %v3519
      %v3521 = vrot.slane %v3516, %v3520
      %v3550 = vunpack.c.l.b16 %v3489
      %v3551 = vunpack.c.l.b16 %v3490
      %v3552 = vunpack.c.l.b16 %v3491
      %v3553 = vunpack.c.l.b16 %v3492
      %v3554 = vunpack.c.l.b16 %v3493
      %v3555 = vunpack.c.l.b16 %v3494
      %v3556 = vunpack.c.l.b16 %v3495
      %v3557 = vunpack.c.l.b16 %v3496
      %v3558 = vunpack.c.l.b16 %v3497
      %v3559 = vunpack.c.l.b16 %v3498
      %v3560 = vunpack.c.l.b16 %v3499
      %v3561 = vunpack.c.l.b16 %v3500
      %v3562 = vunpack.c.l.b16 %v3501
      %v3563 = vunpack.c.l.b16 %v3502
      %v3564 = vunpack.c.l.b16 %v3503
      %v3565 = vunpack.c.l.b16 %v3504
      %v3566 = vunpack.c.l.b16 %v3505
      %v3567 = vunpack.c.l.b16 %v3506
      %v3568 = vunpack.c.l.b16 %v3507
      %v3569 = vunpack.c.l.b16 %v3508
      %v3570 = vunpack.c.l.b16 %v3509
      %v3571 = vunpack.c.l.b16 %v3510
      %v3572 = vunpack.c.l.b16 %v3511
      %v3573 = vunpack.c.l.b16 %v3512
      %v3574 = vunpack.c.l.b16 %v3513
      %v3575 = vunpack.c.l.b16 %v3514
      %v3576 = vunpack.c.l.b16 %v3515
      %v3577 = vpack.c.b16 %v3551, %v3550
      %v3578 = vpack.c.b16 %v3553, %v3552
      %v3579 = vpack.c.b16 %v3555, %v3554
      %v3580 = vpack.c.b16 %v3557, %v3556
      %v3581 = vpack.c.b16 %v3559, %v3558
      %v3582 = vpack.c.b16 %v3561, %v3560
      %v3583 = vpack.c.b16 %v3563, %v3562
      %v3584 = vpack.c.b16 %v3565, %v3564
      %v3585 = vpack.c.b16 %v3567, %v3566
      %v3586 = vpack.c.b16 %v3569, %v3568
      %v3587 = vpack.c.b16 %v3571, %v3570
      %v3588 = vpack.c.b16 %v3573, %v3572
      %v3589 = vpack.c.b16 %v3575, %v3574
      %v3590 = vpack.c.b16 %v3576, %v3576
      %v3604 = vsel %vm3120, %v3482, 0
      %v3606 = vsel %vm3120, %v3484, 0
      %v3608 = vsel %vm3120, %v3486, 0
      %v3610 = vsel %vm3120, %v3488, 0
      %vm3612 = vcmask 1043456
      %v3614 = vsel %vm3612, %v3590, 0
      %3616 = vmatprep.subr.bf16.mxu0 0
      %3617 = vmatpush1.bf16.msra.mxu0 %v3577
      %3618 = vmatprep.subr.bf16.mxu0 0
      %3619 = vmatpush1.bf16.msra.mxu0 %v3578
      %3620 = vmatprep.subr.bf16.mxu0 0
      %3621 = vmatpush1.bf16.msra.mxu0 %v3579
      %3622 = vmatprep.subr.bf16.mxu0 0
      %3623 = vmatpush1.bf16.msra.mxu0 %v3580
      %3624 = vmatprep.subr.bf16.mxu0 0
      %3625 = vmatpush1.bf16.msra.mxu0 %v3581
      %3626 = vmatprep.subr.bf16.mxu0 0
      %3627 = vmatpush1.bf16.msra.mxu0 %v3582
      %3628 = vmatprep.subr.bf16.mxu0 0
      %3629 = vmatpush1.bf16.msra.mxu0 %v3583
      %3630 = vmatprep.subr.bf16.mxu0 0
      %3631 = vmatpush1.bf16.msra.mxu0 %v3584
      %3632 = vmatprep.subr.bf16.mxu0 0
      %3633 = vmatpush1.bf16.msra.mxu0 %v3585
      %3634 = vmatprep.subr.bf16.mxu0 0
      %3635 = vmatpush1.bf16.msra.mxu0 %v3586
      %3636 = vmatprep.subr.bf16.mxu0 0
      %3637 = vmatpush1.bf16.msra.mxu0 %v3587
      %3638 = vmatprep.subr.bf16.mxu0 0
      %3639 = vmatpush1.bf16.msra.mxu0 %v3588
      %3640 = vmatprep.subr.bf16.mxu0 0
      %3641 = vmatpush1.bf16.msra.mxu0 %v3589
      %3642 = vmatprep.subr.bf16.mxu0 0
      %3643 = vmatpush1.bf16.msra.mxu0 %v3614
      %3644 = vmatprep.subr.bf16.mxu0 0
      %3645 = vmatpush1.bf16.msra.mxu0 0
      %3646 = vmatprep.subr.bf16.mxu0 0
      %3647 = vmatpush1.bf16.msra.mxu0 0
      %3648 = vmatprep.mubr.bf16.mxu0 %v3604
      %3649 = vmatmul.mubr.bf16.gmra.mrb[0].mxu0 %v3158
      %v3650 = vpop.f32.mrb[0].mxu0
      %v3651 = vadd.f32 %v3521, %v3650
      %v3652 = vpop.f32.mrb[0].mxu0
      %v3653 = vpop.f32.mrb[0].mxu0
      %v3654 = vadd.f32 %v3521, %v3653
      %v3655 = vpop.f32.mrb[0].mxu0
      %3656 = vmatprep.mubr.bf16.mxu0 %v3606
      %3657 = vmatmul.mubr.bf16.gmra.mrb[0].mxu0 %v3161
      %v3658 = vpop.f32.mrb[0].mxu0
      %v3659 = vadd.f32 %v3521, %v3658
      %v3660 = vpop.f32.mrb[0].mxu0
      %v3661 = vpop.f32.mrb[0].mxu0
      %v3662 = vadd.f32 %v3521, %v3661
      %v3663 = vpop.f32.mrb[0].mxu0
      %3664 = vmatprep.mubr.bf16.mxu0 %v3608
      %3665 = vmatmul.mubr.bf16.gmra.mrb[0].mxu0 %v3164
      %v3666 = vpop.f32.mrb[0].mxu0
      %v3667 = vadd.f32 %v3521, %v3666
      %v3668 = vpop.f32.mrb[0].mxu0
      %v3669 = vpop.f32.mrb[0].mxu0
      %v3670 = vadd.f32 %v3521, %v3669
      %v3671 = vpop.f32.mrb[0].mxu0
      %3672 = vmatprep.mubr.bf16.mxu0 %v3610
      %3673 = vmatmul.mubr.bf16.gmra.mrb[0].mxu0 %v3167
      %v3674 = vpop.f32.mrb[0].mxu0
      %v3675 = vadd.f32 %v3521, %v3674
      %v3676 = vpop.f32.mrb[0].mxu0
      %v3677 = vpop.f32.mrb[0].mxu0
      %v3678 = vadd.f32 %v3521, %v3677
      %v3679 = vpop.f32.mrb[0].mxu0
      %3680 = vdwg.mxu0
      %v3681 = vld [vmem:[%s408] sm:$0x3]
      %v3682 = vsel %vm3057, %v3651, 0.0
      %v3683 = vsel %vm3057, %v3654, 0.0
      %v3684 = vadd.f32 %v3682, %v3683
      %v3685 = vsel %vm3057, %v3659, 0.0
      %v3686 = vadd.f32 %v3684, %v3685
      %v3687 = vsel %vm3057, %v3662, 0.0
      %v3688 = vadd.f32 %v3686, %v3687
      %v3689 = vsel %vm3057, %v3667, 0.0
      %v3690 = vadd.f32 %v3688, %v3689
      %v3691 = vsel %vm3057, %v3670, 0.0
      %v3692 = vadd.f32 %v3690, %v3691
      %v3693 = vsel %vm3057, %v3675, 0.0
      %v3694 = vadd.f32 %v3692, %v3693
      %v3695 = vsel %vm3057, %v3678, 0.0
      %v3696 = vadd.f32 %v3694, %v3695
      %v3697 = vrot.slane %v3696, 4
      %v3698 = vadd.f32 %v3696, %v3697
      %v3699 = vrot.slane %v3698, 2
      %v3700 = vadd.f32 %v3698, %v3699
      %v3701 = vrot.slane %v3700, 1
      %v3702 = vadd.f32 %v3700, %v3701
      %v3703 = vmul.f32 %v3651, %v3651
      %v3704 = vmul.f32 %v3654, %v3654
      %v3705 = vmul.f32 %v3659, %v3659
      %v3706 = vmul.f32 %v3662, %v3662
      %v3707 = vmul.f32 %v3667, %v3667
      %v3708 = vmul.f32 %v3670, %v3670
      %v3709 = vmul.f32 %v3675, %v3675
      %v3710 = vmul.f32 %v3678, %v3678
      %v3711 = vsel %vm3057, %v3703, 0.0
      %v3712 = vsel %vm3057, %v3704, 0.0
      %v3713 = vadd.f32 %v3711, %v3712
      %v3714 = vsel %vm3057, %v3705, 0.0
      %v3715 = vadd.f32 %v3713, %v3714
      %v3716 = vsel %vm3057, %v3706, 0.0
      %v3717 = vadd.f32 %v3715, %v3716
      %v3718 = vsel %vm3057, %v3707, 0.0
      %v3719 = vadd.f32 %v3717, %v3718
      %v3720 = vsel %vm3057, %v3708, 0.0
      %v3721 = vadd.f32 %v3719, %v3720
      %v3722 = vsel %vm3057, %v3709, 0.0
      %v3723 = vadd.f32 %v3721, %v3722
      %v3724 = vsel %vm3057, %v3710, 0.0
      %v3725 = vadd.f32 %v3723, %v3724
      %v3726 = vrot.slane %v3725, 4
      %v3727 = vadd.f32 %v3725, %v3726
      %v3728 = vrot.slane %v3727, 2
      %v3729 = vadd.f32 %v3727, %v3728
      %v3730 = vrot.slane %v3729, 1
      %v3731 = vadd.f32 %v3729, %v3730
      %vm3732 = vcmask 1040384
      %v3733 = vsel %vm3732, %v3702, %v3731
      %v3734 = vadd.f32 %v3681, %v3733
      %vm3735 = vcmask 254976
      %3736 = vst.msk [vmem:[%s408] sm:$0x3] %vm3735, %v3734
      %v3737 = vpack.c.bf16 %v3654, %v3651
      %v3738 = vpack.c.bf16 %v3662, %v3659
      %v3739 = vpack.c.bf16 %v3670, %v3667
      %v3740 = vpack.c.bf16 %v3678, %v3675
      %v3745 = vunpack.c.l.b16 %v3737
      %v3746 = vunpack.c.h.b16 %v3737
      %v3747 = vunpack.c.l.b16 %v3738
      %v3748 = vunpack.c.h.b16 %v3738
      %v3749 = vunpack.c.l.b16 %v3739
      %v3750 = vunpack.c.h.b16 %v3739
      %v3751 = vunpack.c.l.b16 %v3740
      %v3752 = vunpack.c.h.b16 %v3740
      %v3753 = vpack.c.b16 %v3745, %v3745
      %v3754 = vpack.c.b16 %v3746, %v3746
      %v3755 = vpack.c.b16 %v3747, %v3747
      %v3756 = vpack.c.b16 %v3748, %v3748
      %v3757 = vpack.c.b16 %v3749, %v3749
      %v3758 = vpack.c.b16 %v3750, %v3750
      %v3759 = vpack.c.b16 %v3751, %v3751
      %v3760 = vpack.c.b16 %v3752, %v3752
      %vm3769 = vcmask 257024
      %3770 = vst.msk [vmem:[%s404] sm:$0xf] %vm3769, %v3753
      %3771 = vst.msk [vmem:[%s404 + $0x4] sm:$0xf] %vm3769, %v3754
      %3772 = vst.msk [vmem:[%s404 + $0x8] sm:$0xf] %vm3769, %v3755
      %3773 = vst.msk [vmem:[%s404 + $0xc] sm:$0xf] %vm3769, %v3756
      %3774 = vst.msk [vmem:[%s404 + $0x10] sm:$0xf] %vm3769, %v3757
      %3775 = vst.msk [vmem:[%s404 + $0x14] sm:$0xf] %vm3769, %v3758
      %3776 = vst.msk [vmem:[%s404 + $0x18] sm:$0xf] %vm3769, %v3759
      %3777 = vst.msk [vmem:[%s404 + $0x1c] sm:$0xf] %vm3769, %v3760
      %p3778 = scmp.lt.s32.totalorder %s22, 1
      %s3779 = scalar_select %p3778, %s22, 1
      %p3780 = scmp.lt.s32.totalorder %s23, 3
      %s3781 = scalar_select %p3780, %s23, 3
      %s3782 = smul.addr %s3781, 8
      %s3783 = smul.addr %s3779, 32
      %s3784 = sadd.s32 %s3782, %s3783
      %s3785 = smul.addr %s3784, 4
      %s3786 = scalar_lea.vmem %s5, %s3785
      %p3787 = scmp.lt.s32.totalorder %s22, 1
      %s3788 = scalar_select %p3787, %s22, 1
      %s3789 = smul.addr %s3788, 2
      %s3790 = scalar_lea.vmem %s6, %s3789
      // Predicated region
      $region45: #{resblock3d_adaptive_forward.3} parent=39 // pred_check
        %p3791 = pneg %p188
      $region46: #{resblock3d_adaptive_forward.3} parent=39 // pred_check_branch
        %3793 = sbr.rel (%p3791) target = $region48
      $region47: #{resblock3d_adaptive_forward.3} parent=39 // pred_region
        _
      $region48: #{resblock3d_adaptive_forward.3} parent=39 // pred_fallthru
        _
      // Predicated region
      $region49: #{resblock3d_adaptive_forward.3} parent=39 // pred_check
        %p3794 = pneg %p214
      $region50: #{resblock3d_adaptive_forward.3} parent=39 // pred_check_branch
        %3796 = sbr.rel (%p3794) target = $region52
      $region51: #{resblock3d_adaptive_forward.3} parent=39 // pred_region
        _
      $region52: #{resblock3d_adaptive_forward.3} parent=39 // pred_fallthru
        _
    $region40: #{resblock3d_adaptive_forward.3} parent=5 // pred_fallthru
      _
    %p3797 = scmp.le.s32.totalorder 2, %s13
    // Predicated region
    $region53: #{resblock3d_adaptive_forward.3} parent=5 // pred_check
      %p3798 = pneg %p3797
    $region54: #{resblock3d_adaptive_forward.3} parent=5 // pred_check_branch
      %3800 = sbr.rel (%p3798) target = $region56
    $region55: #{resblock3d_adaptive_forward.3} parent=5 // pred_region
      %s3801 = ssub.s32 %s13, 2
      // Predicated region
      $region57: #{resblock3d_adaptive_forward.3} parent=55 // pred_check
        %p3802 = pneg %p194
      $region58: #{resblock3d_adaptive_forward.3} parent=55 // pred_check_branch
        %3804 = sbr.rel (%p3802) target = $region60
      $region59: #{resblock3d_adaptive_forward.3} parent=55 // pred_region
        %p3805 = scmp.lt.s32.totalorder %s24, 1
        %s3806 = scalar_select %p3805, %s24, 1
        %p3807 = scmp.lt.s32.totalorder %s25, 3
        %s3808 = scalar_select %p3807, %s25, 3
        %s3809 = smul.addr %s3808, 8
        %s3810 = smul.addr %s3806, 32
        %s3811 = sadd.s32 %s3809, %s3810
        %s3812 = smul.addr %s3811, 4
        %s3813 = scalar_lea.vmem %s5, %s3812
      $region60: #{resblock3d_adaptive_forward.3} parent=55 // pred_fallthru
        _
      // Predicated region
      $region61: #{resblock3d_adaptive_forward.3} parent=55 // pred_check
        %p3814 = pneg %p220
      $region62: #{resblock3d_adaptive_forward.3} parent=55 // pred_check_branch
        %3816 = sbr.rel (%p3814) target = $region64
      $region63: #{resblock3d_adaptive_forward.3} parent=55 // pred_region
        %p3817 = scmp.lt.s32.totalorder %s24, 1
        %s3818 = scalar_select %p3817, %s24, 1
        %s3819 = smul.addr %s3818, 2
        %s3820 = scalar_lea.vmem %s6, %s3819
      $region64: #{resblock3d_adaptive_forward.3} parent=55 // pred_fallthru
        _
    $region56: #{resblock3d_adaptive_forward.3} parent=5 // pred_fallthru
      _
  $region6: #{resblock3d_adaptive_forward.3} parent=0 // loop_footer
    %s17 = sadd.s32 1, %s13
  $region7: #{resblock3d_adaptive_forward.3} parent=0 // loop_footer_branch
    %12 = sbr.rel target = $region3
  $region8: #{resblock3d_adaptive_forward.3} parent=0 // loop_exit
    _

// kernel: resblock3d_adaptive_forward.4
$region0: #{resblock3d_adaptive_forward.4}
  #allocation0 [shape = 'u32[]', space=smem, size = 0x4, offset = 0x4, fixed_abs, tag = 'smem constant byte address 0x4 - core index']
  #allocation1 [shape = 'u32[144,128]{1,0:T(1,128)}', space=vmem, size = 0x12000, scoped, tag = 'internal scratch']
  #allocation2 [shape = 'bf16[3,10,10,32]{3,2,1,0:T(8,128)(2,1)}', space=vmem, size = 0x1e000, scoped, tag = 'scratch operand']
  %s0 = inlined_call_operand.vmem [shape: f32[2,2,32], index: 0, kind: input, shape index: {}]
  %s1 = inlined_call_operand.vmem [shape: bf16[2,4,8,8,32], index: 1, kind: input, shape index: {}, may-alias: {1,2,3}]
  %s2 = inlined_call_operand.vmem [shape: bf16[2,4,8,8,32], index: 2, kind: input, shape index: {}, may-alias: {1,2,3}]
  %s3 = inlined_call_operand.vmem [shape: bf16[2,4,8,8,32], index: 3, kind: input, shape index: {}, may-alias: {1,2,3}]
  %s4 = inlined_call_operand.vmem [shape: bf16[864,32], index: 4, kind: input, shape index: {}]
  %s5 = inlined_call_operand.vmem [shape: f32[1,32], index: 5, kind: input, shape index: {}]
  %s6 = inlined_call_operand.vmem [shape: bf16[2,4,64,32], index: 6, kind: output, shape index: {0}]
  %s7 = inlined_call_operand.vmem [shape: f32[2,2,32], index: 7, kind: output, shape index: {1}]
  %8 = xla_tuple %s6, %s7
  %s9 = sld [smem:[#allocation0]]
  $region69: #{resblock3d_adaptive_forward.4} parent=0
    _
  %s11 = ssub.s32 1, %s9
  %s12 = scalar_select 0, %s11, %s9
  loop: start=0, step=1, limit=10
  $region2: #{resblock3d_adaptive_forward.4} parent=0 // loop_pre_header
    _
  $region3: #{resblock3d_adaptive_forward.4} parent=0 // loop_header
    %s14 = sphi 0, %s18
    %p15 = scmp.ge.s32.totalorder %s14, 10
    %s21 = sphi 0, %s33
    %s22 = sphi 0, %s29
    %s23 = sphi 0, %s21
    %s24 = sphi 0, %s22
    %s25 = sphi 0, %s23
    %s26 = sphi 0, %s24
    %s36 = sphi 0, %s38
    %s39 = sphi 0, %s36
    %s40 = sphi 0, %s39
    %s56 = sphi 0, %s40
    %s70 = sphi 0, %s72
    %s73 = sphi 0, %s70
    %s74 = sphi 0, %s73
    %s90 = sphi 0, %s74
    %s98 = sphi 0, %s100
    %s101 = sphi 0, %s98
    %s102 = sphi 0, %s101
    %s118 = sphi 0, %s102
    %s132 = sphi 0, %s134
    %s135 = sphi 0, %s132
    %s136 = sphi 0, %s135
    %s152 = sphi 0, %s136
    %s156 = sphi 0, %s156
    %s158 = sphi 0, %s156
    %s159 = sphi 0, %s158
    %s173 = sphi 0, %s159
    %s177 = sphi 0, %s177
    %s179 = sphi 0, %s177
    %s180 = sphi 0, %s179
    %s194 = sphi 0, %s180
    %s202 = sphi 0, %s204
    %s205 = sphi 0, %s202
    %s206 = sphi 0, %s205
    %s222 = sphi 0, %s206
    %s228 = sphi 0, %s230
    %s231 = sphi 0, %s228
    %s232 = sphi 0, %s231
    %s248 = sphi 0, %s232
  $region4: #{resblock3d_adaptive_forward.4} parent=0 // loop_header_branch
    %17 = sbr.rel (%p15) target = $region8
  $region5: #{resblock3d_adaptive_forward.4} parent=0 // loop_body
    %s19 = ssub.s32 %s14, 1
    %s20 = ssub.s32 %s14, 2
    %s27 = sadd.s32 1, %s22
    %p28 = scmp.ge.s32.totalorder %s27, 4
    %s29 = scalar_select %p28, 0, %s27
    %s30 = sadd.s32 1, %s21
    %s31 = scalar_select %p28, %s30, %s21
    %p32 = scmp.ge.s32.totalorder %s31, 2
    %s33 = scalar_select %p32, 0, %s31
    %s34 = ssub.s32 %s21, %s33
    %p35 = scmp.eq.s32.totalorder %s34, 0
    %s37 = sadd.s32 %s36, 1
    %s38 = scalar_select %p35, %s36, %s37
    %p41 = pneg %p35
    %p42 = scmp.eq.s32.totalorder %s14, 7
    %p43 = por %p41, %p42
    %p44 = scmp.ne.s32.totalorder %s36, %s39
    %p45 = scmp.eq.s32.totalorder %s14, 0
    %p46 = por %p44, %p45
    %p47 = scmp.ne.s32.totalorder %s36, %s39
    %p48 = scmp.eq.s32.totalorder %s19, 7
    %p49 = por %p47, %p48
    %p50 = scmp.ne.s32.totalorder %s39, %s40
    %p51 = scmp.eq.s32.totalorder %s19, 0
    %p52 = por %p50, %p51
    %p53 = scmp.ne.s32.totalorder %s39, %s40
    %p54 = scmp.eq.s32.totalorder %s20, 7
    %p55 = por %p53, %p54
    %p57 = scmp.ne.s32.totalorder %s40, %s56
    %p58 = scmp.eq.s32.totalorder %s20, 0
    %p59 = por %p57, %p58
    %s60 = ssub.s32 %s22, 1
    %p61 = scmp.gt.s32.totalorder %s60, 0
    %s62 = scalar_select %p61, %s60, 0
    %s63 = ssub.s32 %s29, 1
    %p64 = scmp.gt.s32.totalorder %s63, 0
    %s65 = scalar_select %p64, %s63, 0
    %s66 = ssub.s32 %s21, %s33
    %s67 = ssub.s32 %s62, %s65
    %s68 = sor.u32 %s66, %s67
    %p69 = scmp.eq.s32.totalorder %s68, 0
    %s71 = sadd.s32 %s70, 1
    %s72 = scalar_select %p69, %s70, %s71
    %p75 = pneg %p69
    %p76 = scmp.eq.s32.totalorder %s14, 7
    %p77 = por %p75, %p76
    %p78 = scmp.ne.s32.totalorder %s70, %s73
    %p79 = scmp.eq.s32.totalorder %s14, 0
    %p80 = por %p78, %p79
    %p81 = scmp.ne.s32.totalorder %s70, %s73
    %p82 = scmp.eq.s32.totalorder %s19, 7
    %p83 = por %p81, %p82
    %p84 = scmp.ne.s32.totalorder %s73, %s74
    %p85 = scmp.eq.s32.totalorder %s19, 0
    %p86 = por %p84, %p85
    %p87 = scmp.ne.s32.totalorder %s73, %s74
    %p88 = scmp.eq.s32.totalorder %s20, 7
    %p89 = por %p87, %p88
    %p91 = scmp.ne.s32.totalorder %s74, %s90
    %p92 = scmp.eq.s32.totalorder %s20, 0
    %p93 = por %p91, %p92
    %s94 = ssub.s32 %s21, %s33
    %s95 = ssub.s32 %s22, %s29
    %s96 = sor.u32 %s94, %s95
    %p97 = scmp.eq.s32.totalorder %s96, 0
    %s99 = sadd.s32 %s98, 1
    %s100 = scalar_select %p97, %s98, %s99
    %p103 = pneg %p97
    %p104 = scmp.eq.s32.totalorder %s14, 7
    %p105 = por %p103, %p104
    %p106 = scmp.ne.s32.totalorder %s98, %s101
    %p107 = scmp.eq.s32.totalorder %s14, 0
    %p108 = por %p106, %p107
    %p109 = scmp.ne.s32.totalorder %s98, %s101
    %p110 = scmp.eq.s32.totalorder %s19, 7
    %p111 = por %p109, %p110
    %p112 = scmp.ne.s32.totalorder %s101, %s102
    %p113 = scmp.eq.s32.totalorder %s19, 0
    %p114 = por %p112, %p113
    %p115 = scmp.ne.s32.totalorder %s101, %s102
    %p116 = scmp.eq.s32.totalorder %s20, 7
    %p117 = por %p115, %p116
    %p119 = scmp.ne.s32.totalorder %s102, %s118
    %p120 = scmp.eq.s32.totalorder %s20, 0
    %p121 = por %p119, %p120
    %s122 = sadd.s32 %s22, 1
    %p123 = scmp.lt.s32.totalorder %s122, 3
    %s124 = scalar_select %p123, %s122, 3
    %s125 = sadd.s32 %s29, 1
    %p126 = scmp.lt.s32.totalorder %s125, 3
    %s127 = scalar_select %p126, %s125, 3
    %s128 = ssub.s32 %s21, %s33
    %s129 = ssub.s32 %s124, %s127
    %s130 = sor.u32 %s128, %s129
    %p131 = scmp.eq.s32.totalorder %s130, 0
    %s133 = sadd.s32 %s132, 1
    %s134 = scalar_select %p131, %s132, %s133
    %p137 = pneg %p131
    %p138 = scmp.eq.s32.totalorder %s14, 7
    %p139 = por %p137, %p138
    %p140 = scmp.ne.s32.totalorder %s132, %s135
    %p141 = scmp.eq.s32.totalorder %s14, 0
    %p142 = por %p140, %p141
    %p143 = scmp.ne.s32.totalorder %s132, %s135
    %p144 = scmp.eq.s32.totalorder %s19, 7
    %p145 = por %p143, %p144
    %p146 = scmp.ne.s32.totalorder %s135, %s136
    %p147 = scmp.eq.s32.totalorder %s19, 0
    %p148 = por %p146, %p147
    %p149 = scmp.ne.s32.totalorder %s135, %s136
    %p150 = scmp.eq.s32.totalorder %s20, 7
    %p151 = por %p149, %p150
    %p153 = scmp.ne.s32.totalorder %s136, %s152
    %p154 = scmp.eq.s32.totalorder %s20, 0
    %p155 = por %p153, %p154
    %s157 = sadd.s32 %s156, 1
    %p160 = scmp.eq.s32.totalorder %s14, 7
    %p161 = scmp.ne.s32.totalorder %s156, %s158
    %p162 = scmp.eq.s32.totalorder %s14, 0
    %p163 = por %p161, %p162
    %p164 = scmp.ne.s32.totalorder %s156, %s158
    %p165 = scmp.eq.s32.totalorder %s19, 7
    %p166 = por %p164, %p165
    %p167 = scmp.ne.s32.totalorder %s158, %s159
    %p168 = scmp.eq.s32.totalorder %s19, 0
    %p169 = por %p167, %p168
    %p170 = scmp.ne.s32.totalorder %s158, %s159
    %p171 = scmp.eq.s32.totalorder %s20, 7
    %p172 = por %p170, %p171
    %p174 = scmp.ne.s32.totalorder %s159, %s173
    %p175 = scmp.eq.s32.totalorder %s20, 0
    %p176 = por %p174, %p175
    %s178 = sadd.s32 %s177, 1
    %p181 = scmp.eq.s32.totalorder %s14, 7
    %p182 = scmp.ne.s32.totalorder %s177, %s179
    %p183 = scmp.eq.s32.totalorder %s14, 0
    %p184 = por %p182, %p183
    %p185 = scmp.ne.s32.totalorder %s177, %s179
    %p186 = scmp.eq.s32.totalorder %s19, 7
    %p187 = por %p185, %p186
    %p188 = scmp.ne.s32.totalorder %s179, %s180
    %p189 = scmp.eq.s32.totalorder %s19, 0
    %p190 = por %p188, %p189
    %p191 = scmp.ne.s32.totalorder %s179, %s180
    %p192 = scmp.eq.s32.totalorder %s20, 7
    %p193 = por %p191, %p192
    %p195 = scmp.ne.s32.totalorder %s180, %s194
    %p196 = scmp.eq.s32.totalorder %s20, 0
    %p197 = por %p195, %p196
    %s198 = ssub.s32 %s21, %s33
    %s199 = ssub.s32 %s22, %s29
    %s200 = sor.u32 %s198, %s199
    %p201 = scmp.eq.s32.totalorder %s200, 0
    %s203 = sadd.s32 %s202, 1
    %s204 = scalar_select %p201, %s202, %s203
    %p207 = pneg %p201
    %p208 = scmp.eq.s32.totalorder %s14, 7
    %p209 = por %p207, %p208
    %p210 = scmp.ne.s32.totalorder %s202, %s205
    %p211 = scmp.eq.s32.totalorder %s14, 0
    %p212 = por %p210, %p211
    %p213 = scmp.ne.s32.totalorder %s202, %s205
    %p214 = scmp.eq.s32.totalorder %s19, 7
    %p215 = por %p213, %p214
    %p216 = scmp.ne.s32.totalorder %s205, %s206
    %p217 = scmp.eq.s32.totalorder %s19, 0
    %p218 = por %p216, %p217
    %p219 = scmp.ne.s32.totalorder %s205, %s206
    %p220 = scmp.eq.s32.totalorder %s20, 7
    %p221 = por %p219, %p220
    %p223 = scmp.ne.s32.totalorder %s206, %s222
    %p224 = scmp.eq.s32.totalorder %s20, 0
    %p225 = por %p223, %p224
    %s226 = ssub.s32 %s21, %s33
    %p227 = scmp.eq.s32.totalorder %s226, 0
    %s229 = sadd.s32 %s228, 1
    %s230 = scalar_select %p227, %s228, %s229
    %p233 = pneg %p227
    %p234 = scmp.eq.s32.totalorder %s14, 7
    %p235 = por %p233, %p234
    %p236 = scmp.ne.s32.totalorder %s228, %s231
    %p237 = scmp.eq.s32.totalorder %s14, 0
    %p238 = por %p236, %p237
    %p239 = scmp.ne.s32.totalorder %s228, %s231
    %p240 = scmp.eq.s32.totalorder %s19, 7
    %p241 = por %p239, %p240
    %p242 = scmp.ne.s32.totalorder %s231, %s232
    %p243 = scmp.eq.s32.totalorder %s19, 0
    %p244 = por %p242, %p243
    %p245 = scmp.ne.s32.totalorder %s231, %s232
    %p246 = scmp.eq.s32.totalorder %s20, 7
    %p247 = por %p245, %p246
    %p249 = scmp.ne.s32.totalorder %s232, %s248
    %p250 = scmp.eq.s32.totalorder %s20, 0
    %p251 = por %p249, %p250
    %p252 = scmp.le.s32.totalorder 1, %s14
    %p253 = scmp.lt.s32.totalorder %s14, 9
    %p254 = pnand %p252, %p253
    %p255 = pneg %p254
    // Predicated region
    $region9: #{resblock3d_adaptive_forward.4} parent=5 // pred_check
      _
    $region10: #{resblock3d_adaptive_forward.4} parent=5 // pred_check_branch
      %257 = sbr.rel (%p254) target = $region12
    $region11: #{resblock3d_adaptive_forward.4} parent=5 // pred_region
      %s258 = ssub.s32 %s14, 1
      // Predicated region
      $region13: #{resblock3d_adaptive_forward.4} parent=11 // pred_check
        %p259 = pneg %p169
      $region14: #{resblock3d_adaptive_forward.4} parent=11 // pred_check_branch
        %261 = sbr.rel (%p259) target = $region16
      $region15: #{resblock3d_adaptive_forward.4} parent=11 // pred_region
        _
      $region16: #{resblock3d_adaptive_forward.4} parent=11 // pred_fallthru
        _
      // Predicated region
      $region17: #{resblock3d_adaptive_forward.4} parent=11 // pred_check
        %p262 = pneg %p190
      $region18: #{resblock3d_adaptive_forward.4} parent=11 // pred_check_branch
        %264 = sbr.rel (%p262) target = $region20
      $region19: #{resblock3d_adaptive_forward.4} parent=11 // pred_region
        _
      $region20: #{resblock3d_adaptive_forward.4} parent=11 // pred_fallthru
        _
    $region12: #{resblock3d_adaptive_forward.4} parent=5 // pred_fallthru
      _
    %p265 = scmp.lt.s32.totalorder %s14, 8
    // Predicated region
    $region21: #{resblock3d_adaptive_forward.4} parent=5 // pred_check
      %p266 = pneg %p265
    $region22: #{resblock3d_adaptive_forward.4} parent=5 // pred_check_branch
      %268 = sbr.rel (%p266) target = $region24
    $region23: #{resblock3d_adaptive_forward.4} parent=5 // pred_region
      // Predicated region
      $region25: #{resblock3d_adaptive_forward.4} parent=23 // pred_check
        %p269 = pneg %p46
      $region26: #{resblock3d_adaptive_forward.4} parent=23 // pred_check_branch
        %271 = sbr.rel (%p269) target = $region28
      $region27: #{resblock3d_adaptive_forward.4} parent=23 // pred_region
        %p272 = scmp.lt.s32.totalorder %s21, 1
        %s273 = scalar_select %p272, %s21, 1
        %s274 = smul.addr %s273, 2
        %s275 = scalar_lea.vmem %s0, %s274
      $region28: #{resblock3d_adaptive_forward.4} parent=23 // pred_fallthru
        _
      // Predicated region
      $region29: #{resblock3d_adaptive_forward.4} parent=23 // pred_check
        %p276 = pneg %p80
      $region30: #{resblock3d_adaptive_forward.4} parent=23 // pred_check_branch
        %278 = sbr.rel (%p276) target = $region32
      $region31: #{resblock3d_adaptive_forward.4} parent=23 // pred_region
        %s279 = ssub.s32 %s22, 1
        %p280 = scmp.gt.s32.totalorder %s279, 0
        %s281 = scalar_select %p280, %s279, 0
        %p282 = scmp.lt.s32.totalorder %s21, 1
        %s283 = scalar_select %p282, %s21, 1
        %p284 = scmp.lt.s32.totalorder %s281, 3
        %s285 = scalar_select %p284, %s281, 3
        %s286 = smul.addr %s285, 8
        %s287 = smul.addr %s283, 32
        %s288 = sadd.s32 %s286, %s287
        %s289 = smul.addr %s288, 4
        %s290 = scalar_lea.vmem %s1, %s289
        %s291 = ssub.s32 %s22, 1
        %p292 = scmp.gt.s32.totalorder %s291, 0
        %s293 = scalar_select %p292, %s291, 0
      $region32: #{resblock3d_adaptive_forward.4} parent=23 // pred_fallthru
        _
      // Predicated region
      $region33: #{resblock3d_adaptive_forward.4} parent=23 // pred_check
        %p294 = pneg %p108
      $region34: #{resblock3d_adaptive_forward.4} parent=23 // pred_check_branch
        %296 = sbr.rel (%p294) target = $region36
      $region35: #{resblock3d_adaptive_forward.4} parent=23 // pred_region
        %p297 = scmp.lt.s32.totalorder %s21, 1
        %s298 = scalar_select %p297, %s21, 1
        %p299 = scmp.lt.s32.totalorder %s22, 3
        %s300 = scalar_select %p299, %s22, 3
        %s301 = smul.addr %s300, 8
        %s302 = smul.addr %s298, 32
        %s303 = sadd.s32 %s301, %s302
        %s304 = smul.addr %s303, 4
        %s305 = scalar_lea.vmem %s2, %s304
      $region36: #{resblock3d_adaptive_forward.4} parent=23 // pred_fallthru
        _
      // Predicated region
      $region37: #{resblock3d_adaptive_forward.4} parent=23 // pred_check
        %p306 = pneg %p142
      $region38: #{resblock3d_adaptive_forward.4} parent=23 // pred_check_branch
        %308 = sbr.rel (%p306) target = $region40
      $region39: #{resblock3d_adaptive_forward.4} parent=23 // pred_region
        %s309 = sadd.s32 %s22, 1
        %p310 = scmp.lt.s32.totalorder %s309, 3
        %s311 = scalar_select %p310, %s309, 3
        %p312 = scmp.lt.s32.totalorder %s21, 1
        %s313 = scalar_select %p312, %s21, 1
        %p314 = scmp.lt.s32.totalorder %s311, 3
        %s315 = scalar_select %p314, %s311, 3
        %s316 = smul.addr %s315, 8
        %s317 = smul.addr %s313, 32
        %s318 = sadd.s32 %s316, %s317
        %s319 = smul.addr %s318, 4
        %s320 = scalar_lea.vmem %s3, %s319
        %s321 = sadd.s32 %s22, 1
        %p322 = scmp.lt.s32.totalorder %s321, 3
        %s323 = scalar_select %p322, %s321, 3
      $region40: #{resblock3d_adaptive_forward.4} parent=23 // pred_fallthru
        _
    $region24: #{resblock3d_adaptive_forward.4} parent=5 // pred_fallthru
      _
    %p324 = scmp.le.s32.totalorder 1, %s14
    %p325 = scmp.lt.s32.totalorder %s14, 9
    %p326 = pnand %p324, %p325
    %p327 = pneg %p326
    // Predicated region
    $region41: #{resblock3d_adaptive_forward.4} parent=5 // pred_check
      _
    $region42: #{resblock3d_adaptive_forward.4} parent=5 // pred_check_branch
      %329 = sbr.rel (%p326) target = $region44
    $region43: #{resblock3d_adaptive_forward.4} parent=5 // pred_region
      %s330 = ssub.s32 %s14, 1
      %p331 = scmp.lt.s32.totalorder %s23, 1
      %s332 = scalar_select %p331, %s23, 1
      %s333 = smul.addr %s332, 2
      %s334 = scalar_lea.vmem %s0, %s333
      %p335 = pneg %p52
      %p336 = pneg %p49
      %s337 = ssub.s32 %s24, 1
      %p338 = scmp.gt.s32.totalorder %s337, 0
      %s339 = scalar_select %p338, %s337, 0
      %p340 = scmp.lt.s32.totalorder %s23, 1
      %s341 = scalar_select %p340, %s23, 1
      %p342 = scmp.lt.s32.totalorder %s339, 3
      %s343 = scalar_select %p342, %s339, 3
      %s344 = smul.addr %s343, 8
      %s345 = smul.addr %s341, 32
      %s346 = sadd.s32 %s344, %s345
      %s347 = smul.addr %s346, 4
      %s348 = scalar_lea.vmem %s1, %s347
      %p349 = pneg %p86
      %p350 = pneg %p83
      %p351 = scmp.lt.s32.totalorder %s23, 1
      %s352 = scalar_select %p351, %s23, 1
      %p353 = scmp.lt.s32.totalorder %s24, 3
      %s354 = scalar_select %p353, %s24, 3
      %s355 = smul.addr %s354, 8
      %s356 = smul.addr %s352, 32
      %s357 = sadd.s32 %s355, %s356
      %s358 = smul.addr %s357, 4
      %s359 = scalar_lea.vmem %s2, %s358
      %p360 = pneg %p114
      %p361 = pneg %p111
      %s362 = sadd.s32 %s24, 1
      %p363 = scmp.lt.s32.totalorder %s362, 3
      %s364 = scalar_select %p363, %s362, 3
      %p365 = scmp.lt.s32.totalorder %s23, 1
      %s366 = scalar_select %p365, %s23, 1
      %p367 = scmp.lt.s32.totalorder %s364, 3
      %s368 = scalar_select %p367, %s364, 3
      %s369 = smul.addr %s368, 8
      %s370 = smul.addr %s366, 32
      %s371 = sadd.s32 %s369, %s370
      %s372 = smul.addr %s371, 4
      %s373 = scalar_lea.vmem %s3, %s372
      %p374 = pneg %p148
      %p375 = pneg %p145
      %p376 = pneg %p169
      %p377 = pneg %p166
      %p378 = pneg %p190
      %p379 = pneg %p187
      %p380 = pneg %p218
      %p381 = pneg %p215
      %p382 = scmp.lt.s32.totalorder %s23, 1
      %s383 = scalar_select %p382, %s23, 1
      %p384 = scmp.lt.s32.totalorder %s24, 3
      %s385 = scalar_select %p384, %s24, 3
      %s386 = smul.addr %s385, 8
      %s387 = smul.addr %s383, 32
      %s388 = sadd.s32 %s386, %s387
      %s389 = smul.addr %s388, 4
      %s390 = scalar_lea.vmem %s6, %s389
      %p391 = pneg %p244
      %p392 = pneg %p241
      %p393 = scmp.lt.s32.totalorder %s23, 1
      %s394 = scalar_select %p393, %s23, 1
      %s395 = smul.addr %s394, 2
      %s396 = scalar_lea.vmem %s7, %s395
      %p397 = scmp.lt.s32.totalorder %s23, 1
      %s398 = scalar_select %p397, %s23, 1
      %s399 = smul.addr %s398, 2
      %s400 = scalar_lea.vmem %s0, %s399
      %s401 = ssub.s32 %s24, 1
      %p402 = scmp.gt.s32.totalorder %s401, 0
      %s403 = scalar_select %p402, %s401, 0
      %p404 = scmp.lt.s32.totalorder %s23, 1
      %s405 = scalar_select %p404, %s23, 1
      %p406 = scmp.lt.s32.totalorder %s403, 3
      %s407 = scalar_select %p406, %s403, 3
      %s408 = smul.addr %s407, 8
      %s409 = smul.addr %s405, 32
      %s410 = sadd.s32 %s408, %s409
      %s411 = smul.addr %s410, 4
      %s412 = scalar_lea.vmem %s1, %s411
      %s413 = ssub.s32 %s24, 1
      %p414 = scmp.gt.s32.totalorder %s413, 0
      %s415 = scalar_select %p414, %s413, 0
      %p416 = scmp.lt.s32.totalorder %s23, 1
      %s417 = scalar_select %p416, %s23, 1
      %p418 = scmp.lt.s32.totalorder %s24, 3
      %s419 = scalar_select %p418, %s24, 3
      %s420 = smul.addr %s419, 8
      %s421 = smul.addr %s417, 32
      %s422 = sadd.s32 %s420, %s421
      %s423 = smul.addr %s422, 4
      %s424 = scalar_lea.vmem %s2, %s423
      %s425 = sadd.s32 %s24, 1
      %p426 = scmp.lt.s32.totalorder %s425, 3
      %s427 = scalar_select %p426, %s425, 3
      %p428 = scmp.lt.s32.totalorder %s23, 1
      %s429 = scalar_select %p428, %s23, 1
      %p430 = scmp.lt.s32.totalorder %s427, 3
      %s431 = scalar_select %p430, %s427, 3
      %s432 = smul.addr %s431, 8
      %s433 = smul.addr %s429, 32
      %s434 = sadd.s32 %s432, %s433
      %s435 = smul.addr %s434, 4
      %s436 = scalar_lea.vmem %s3, %s435
      %s437 = sadd.s32 %s24, 1
      %p438 = scmp.lt.s32.totalorder %s437, 3
      %s439 = scalar_select %p438, %s437, 3
      %p440 = scmp.lt.s32.totalorder %s23, 1
      %s441 = scalar_select %p440, %s23, 1
      %p442 = scmp.lt.s32.totalorder %s24, 3
      %s443 = scalar_select %p442, %s24, 3
      %s444 = smul.addr %s443, 8
      %s445 = smul.addr %s441, 32
      %s446 = sadd.s32 %s444, %s445
      %s447 = smul.addr %s446, 4
      %s448 = scalar_lea.vmem %s6, %s447
      %p449 = scmp.lt.s32.totalorder %s23, 1
      %s450 = scalar_select %p449, %s23, 1
      %s451 = smul.addr %s450, 2
      %s452 = scalar_lea.vmem %s7, %s451
      %p454 = scmp.eq.s32.totalorder %s24, 0
      // Predicated region
      $region45: #{resblock3d_adaptive_forward.4} parent=43 // pred_check
        %p455 = pneg %p454
      $region46: #{resblock3d_adaptive_forward.4} parent=43 // pred_check_branch
        %457 = sbr.rel (%p455) target = $region48
      $region47: #{resblock3d_adaptive_forward.4} parent=43 // pred_region
        %vm458 = vcmask 257024
        %459 = vst.msk [vmem:[#allocation2] sm:$0xf] %vm458, 0
        %vm460 = vcmask 253952
        %461 = vst.msk [vmem:[#allocation2 + $0x4] sm:$0x1] %vm460, 0
        %462 = vst.msk [vmem:[#allocation2 + $0x8] sm:$0xf] %vm458, 0
        %463 = vst.msk [vmem:[#allocation2 + $0xc] sm:$0x1] %vm460, 0
        %464 = vst.msk [vmem:[#allocation2 + $0x10] sm:$0xf] %vm458, 0
        %465 = vst.msk [vmem:[#allocation2 + $0x14] sm:$0x1] %vm460, 0
        %466 = vst.msk [vmem:[#allocation2 + $0x18] sm:$0xf] %vm458, 0
        %467 = vst.msk [vmem:[#allocation2 + $0x1c] sm:$0x1] %vm460, 0
        %468 = vst.msk [vmem:[#allocation2 + $0x20] sm:$0xf] %vm458, 0
        %469 = vst.msk [vmem:[#allocation2 + $0x24] sm:$0x1] %vm460, 0
        %470 = vst.msk [vmem:[#allocation2 + $0x28] sm:$0xf] %vm458, 0
        %471 = vst.msk [vmem:[#allocation2 + $0x2c] sm:$0x1] %vm460, 0
        %472 = vst.msk [vmem:[#allocation2 + $0x30] sm:$0xf] %vm458, 0
        %473 = vst.msk [vmem:[#allocation2 + $0x34] sm:$0x1] %vm460, 0
        %474 = vst.msk [vmem:[#allocation2 + $0x38] sm:$0xf] %vm458, 0
        %475 = vst.msk [vmem:[#allocation2 + $0x3c] sm:$0x1] %vm460, 0
        %476 = vst.msk [vmem:[#allocation2 + $0x40] sm:$0xf] %vm458, 0
        %477 = vst.msk [vmem:[#allocation2 + $0x44] sm:$0x1] %vm460, 0
        %478 = vst.msk [vmem:[#allocation2 + $0x48] sm:$0xf] %vm458, 0
        %479 = vst.msk [vmem:[#allocation2 + $0x4c] sm:$0x1] %vm460, 0
        %480 = vst.msk [vmem:[#allocation2 + $0x50] sm:$0xf] %vm458, 0
        %481 = vst.msk [vmem:[#allocation2 + $0x54] sm:$0x1] %vm460, 0
        %482 = vst.msk [vmem:[#allocation2 + $0x58] sm:$0xf] %vm458, 0
        %483 = vst.msk [vmem:[#allocation2 + $0x5c] sm:$0x1] %vm460, 0
        %484 = vst.msk [vmem:[#allocation2 + $0x60] sm:$0xf] %vm458, 0
        %485 = vst.msk [vmem:[#allocation2 + $0x64] sm:$0x1] %vm460, 0
        %486 = vst.msk [vmem:[#allocation2 + $0x68] sm:$0xf] %vm458, 0
        %487 = vst.msk [vmem:[#allocation2 + $0x6c] sm:$0x1] %vm460, 0
        %488 = vst.msk [vmem:[#allocation2 + $0x70] sm:$0xf] %vm458, 0
        %489 = vst.msk [vmem:[#allocation2 + $0x74] sm:$0x1] %vm460, 0
        %490 = vst.msk [vmem:[#allocation2 + $0x78] sm:$0xf] %vm458, 0
        %491 = vst.msk [vmem:[#allocation2 + $0x7c] sm:$0x1] %vm460, 0
        %492 = vst.msk [vmem:[#allocation2 + $0x80] sm:$0xf] %vm458, 0
        %493 = vst.msk [vmem:[#allocation2 + $0x84] sm:$0x1] %vm460, 0
        %494 = vst.msk [vmem:[#allocation2 + $0x88] sm:$0xf] %vm458, 0
        %495 = vst.msk [vmem:[#allocation2 + $0x8c] sm:$0x1] %vm460, 0
        %496 = vst.msk [vmem:[#allocation2 + $0x90] sm:$0xf] %vm458, 0
        %497 = vst.msk [vmem:[#allocation2 + $0x94] sm:$0x1] %vm460, 0
        %498 = vst.msk [vmem:[#allocation2 + $0x98] sm:$0xf] %vm458, 0
        %499 = vst.msk [vmem:[#allocation2 + $0x9c] sm:$0x1] %vm460, 0
        %500 = vst.msk [vmem:[#allocation2 + $0xa0] sm:$0xf] %vm458, 0
        %501 = vst.msk [vmem:[#allocation2 + $0xa4] sm:$0x1] %vm460, 0
        %502 = vst.msk [vmem:[#allocation2 + $0xa8] sm:$0xf] %vm458, 0
        %503 = vst.msk [vmem:[#allocation2 + $0xac] sm:$0x1] %vm460, 0
        %504 = vst.msk [vmem:[#allocation2 + $0xb0] sm:$0xf] %vm458, 0
        %505 = vst.msk [vmem:[#allocation2 + $0xb4] sm:$0x1] %vm460, 0
        %506 = vst.msk [vmem:[#allocation2 + $0xb8] sm:$0xf] %vm458, 0
        %507 = vst.msk [vmem:[#allocation2 + $0xbc] sm:$0x1] %vm460, 0
        %508 = vst.msk [vmem:[#allocation2 + $0xc0] sm:$0xf] %vm458, 0
        %509 = vst.msk [vmem:[#allocation2 + $0xc4] sm:$0x1] %vm460, 0
        %510 = vst.msk [vmem:[#allocation2 + $0xc8] sm:$0xf] %vm458, 0
        %511 = vst.msk [vmem:[#allocation2 + $0xcc] sm:$0x1] %vm460, 0
        %512 = vst.msk [vmem:[#allocation2 + $0xd0] sm:$0xf] %vm458, 0
        %513 = vst.msk [vmem:[#allocation2 + $0xd4] sm:$0x1] %vm460, 0
        %514 = vst.msk [vmem:[#allocation2 + $0xd8] sm:$0xf] %vm458, 0
        %515 = vst.msk [vmem:[#allocation2 + $0xdc] sm:$0x1] %vm460, 0
        %516 = vst.msk [vmem:[#allocation2 + $0xe0] sm:$0xf] %vm458, 0
        %517 = vst.msk [vmem:[#allocation2 + $0xe4] sm:$0x1] %vm460, 0
        %518 = vst.msk [vmem:[#allocation2 + $0xe8] sm:$0xf] %vm458, 0
        %519 = vst.msk [vmem:[#allocation2 + $0xec] sm:$0x1] %vm460, 0
        %vm520 = vcmask 254976
        %521 = vst.msk [vmem:[%s452] sm:$0x3] %vm520, 0.0
      $region48: #{resblock3d_adaptive_forward.4} parent=43 // pred_fallthru
        _
      %v522 = vld [vmem:[%s400] sm:$0x1]
      %v523 = vld [vmem:[%s400 + $0x1] sm:$0x1]
      %v524 = vld [vmem:[%s412] sm:$0xf]
      %v525 = vld [vmem:[%s412 + $0x4] sm:$0xf]
      %v526 = vld [vmem:[%s412 + $0x8] sm:$0xf]
      %v527 = vld [vmem:[%s412 + $0xc] sm:$0xf]
      %v528 = vld [vmem:[%s412 + $0x10] sm:$0xf]
      %v529 = vld [vmem:[%s412 + $0x14] sm:$0xf]
      %v530 = vld [vmem:[%s412 + $0x18] sm:$0xf]
      %v531 = vld [vmem:[%s412 + $0x1c] sm:$0xf]
      %v532 = vunpack.c.l.bf16 %v524
      %v533 = vunpack.c.l.bf16 %v525
      %v534 = vunpack.c.l.bf16 %v526
      %v535 = vunpack.c.l.bf16 %v527
      %v536 = vunpack.c.l.bf16 %v528
      %v537 = vunpack.c.l.bf16 %v529
      %v538 = vunpack.c.l.bf16 %v530
      %v539 = vunpack.c.l.bf16 %v531
      %v540 = vlaneseq
      %v541 = vshrl.u32 %v540, 7
      %v542 = vsub.s32 0, %v541
      %v543 = vrot.slane %v522, %v542
      %v544 = vmul.f32 %v532, %v543
      %v545 = vmul.f32 %v533, %v543
      %v546 = vmul.f32 %v534, %v543
      %v547 = vmul.f32 %v535, %v543
      %v548 = vmul.f32 %v536, %v543
      %v549 = vmul.f32 %v537, %v543
      %v550 = vmul.f32 %v538, %v543
      %v551 = vmul.f32 %v539, %v543
      %v552 = vlaneseq
      %v553 = vshrl.u32 %v552, 7
      %v554 = vsub.s32 0, %v553
      %v555 = vrot.slane %v523, %v554
      %v556 = vadd.f32 %v544, %v555
      %v557 = vadd.f32 %v545, %v555
      %v558 = vadd.f32 %v546, %v555
      %v559 = vadd.f32 %v547, %v555
      %v560 = vadd.f32 %v548, %v555
      %v561 = vadd.f32 %v549, %v555
      %v562 = vadd.f32 %v550, %v555
      %v563 = vadd.f32 %v551, %v555
      %v564 = vmax.f32 %v556, 0.0
      %v565 = vmax.f32 %v557, 0.0
      %v566 = vmax.f32 %v558, 0.0
      %v567 = vmax.f32 %v559, 0.0
      %v568 = vmax.f32 %v560, 0.0
      %v569 = vmax.f32 %v561, 0.0
      %v570 = vmax.f32 %v562, 0.0
      %v571 = vmax.f32 %v563, 0.0
      %p572 = scmp.gt.s32.totalorder %s24, 0
      %s573 = scalar_select %p572, 1, 0
      %s574 = scvt.s32.f32 %s573
      %v575 = vstv %s574
      %v576 = vmul.f32 %v564, %v575
      %v577 = vmul.f32 %v565, %v575
      %v578 = vmul.f32 %v566, %v575
      %v579 = vmul.f32 %v567, %v575
      %v580 = vmul.f32 %v568, %v575
      %v581 = vmul.f32 %v569, %v575
      %v582 = vmul.f32 %v570, %v575
      %v583 = vmul.f32 %v571, %v575
      %v584 = vpack.c.bf16 %v576, %v576
      %v585 = vpack.c.bf16 %v577, %v577
      %v586 = vpack.c.bf16 %v578, %v578
      %v587 = vpack.c.bf16 %v579, %v579
      %v588 = vpack.c.bf16 %v580, %v580
      %v589 = vpack.c.bf16 %v581, %v581
      %v590 = vpack.c.bf16 %v582, %v582
      %v591 = vpack.c.bf16 %v583, %v583
      %v600 = vunpack.c.l.b16 %v584
      %v601 = vunpack.c.l.b16 %v585
      %v602 = vunpack.c.l.b16 %v586
      %v603 = vunpack.c.l.b16 %v587
      %v604 = vunpack.c.l.b16 %v588
      %v605 = vunpack.c.l.b16 %v589
      %v606 = vunpack.c.l.b16 %v590
      %v607 = vunpack.c.l.b16 %v591
      %v608 = vpack.c.b16 %v600, %v600
      %v609 = vpack.c.b16 %v601, %v601
      %v610 = vpack.c.b16 %v602, %v602
      %v611 = vpack.c.b16 %v603, %v603
      %v612 = vpack.c.b16 %v604, %v604
      %v613 = vpack.c.b16 %v605, %v605
      %v614 = vpack.c.b16 %v606, %v606
      %v615 = vpack.c.b16 %v607, %v607
      %v617 = vshrl.u32 %v608, 16
      %v619 = vrot.slane %v617, 7
      %v620 = vshll.u32 %v608, 16
      %v622 = vor.u32 %v619, %v620
      %v623 = vrot.slane %v619, 4
      %v625 = vshrl.u32 %v609, 16
      %v627 = vrot.slane %v625, 7
      %v628 = vshll.u32 %v609, 16
      %v630 = vor.u32 %v627, %v628
      %v631 = vrot.slane %v627, 4
      %v633 = vshrl.u32 %v610, 16
      %v635 = vrot.slane %v633, 7
      %v636 = vshll.u32 %v610, 16
      %v638 = vor.u32 %v635, %v636
      %v639 = vrot.slane %v635, 4
      %v641 = vshrl.u32 %v611, 16
      %v643 = vrot.slane %v641, 7
      %v644 = vshll.u32 %v611, 16
      %v646 = vor.u32 %v643, %v644
      %v647 = vrot.slane %v643, 4
      %v649 = vshrl.u32 %v612, 16
      %v651 = vrot.slane %v649, 7
      %v652 = vshll.u32 %v612, 16
      %v654 = vor.u32 %v651, %v652
      %v655 = vrot.slane %v651, 4
      %v657 = vshrl.u32 %v613, 16
      %v659 = vrot.slane %v657, 7
      %v660 = vshll.u32 %v613, 16
      %v662 = vor.u32 %v659, %v660
      %v663 = vrot.slane %v659, 4
      %v665 = vshrl.u32 %v614, 16
      %v667 = vrot.slane %v665, 7
      %v668 = vshll.u32 %v614, 16
      %v670 = vor.u32 %v667, %v668
      %v671 = vrot.slane %v667, 4
      %v673 = vshrl.u32 %v615, 16
      %v675 = vrot.slane %v673, 7
      %v676 = vshll.u32 %v615, 16
      %v678 = vor.u32 %v675, %v676
      %v679 = vrot.slane %v675, 4
      %s696 = scalar_lea.vmem [#allocation2], 8
      %vm697 = vcmask 257024
      %vm698 = vsmask.f32 7938
      %vm699 = vmand %vm697, %vm698
      %v700 = vld [vmem:[%s696] sm:$0xf]
      %v701 = vsel %vm699, %v622, %v700
      %702 = vst [vmem:[%s696] sm:$0xf] %v701
      %vm703 = vcmask 253952
      %vm704 = vsmask.f32 256
      %vm705 = vmand %vm703, %vm704
      %v706 = vld [vmem:[%s696 + $0x4] sm:$0x1]
      %v707 = vsel %vm705, %v623, %v706
      %708 = vst [vmem:[%s696 + $0x4] sm:$0x1] %v707
      %v709 = vld [vmem:[%s696 + $0x8] sm:$0xf]
      %v710 = vsel %vm699, %v630, %v709
      %711 = vst [vmem:[%s696 + $0x8] sm:$0xf] %v710
      %v712 = vld [vmem:[%s696 + $0xc] sm:$0x1]
      %v713 = vsel %vm705, %v631, %v712
      %714 = vst [vmem:[%s696 + $0xc] sm:$0x1] %v713
      %v715 = vld [vmem:[%s696 + $0x10] sm:$0xf]
      %v716 = vsel %vm699, %v638, %v715
      %717 = vst [vmem:[%s696 + $0x10] sm:$0xf] %v716
      %v718 = vld [vmem:[%s696 + $0x14] sm:$0x1]
      %v719 = vsel %vm705, %v639, %v718
      %720 = vst [vmem:[%s696 + $0x14] sm:$0x1] %v719
      %v721 = vld [vmem:[%s696 + $0x18] sm:$0xf]
      %v722 = vsel %vm699, %v646, %v721
      %723 = vst [vmem:[%s696 + $0x18] sm:$0xf] %v722
      %v724 = vld [vmem:[%s696 + $0x1c] sm:$0x1]
      %v725 = vsel %vm705, %v647, %v724
      %726 = vst [vmem:[%s696 + $0x1c] sm:$0x1] %v725
      %v727 = vld [vmem:[%s696 + $0x20] sm:$0xf]
      %v728 = vsel %vm699, %v654, %v727
      %729 = vst [vmem:[%s696 + $0x20] sm:$0xf] %v728
      %v730 = vld [vmem:[%s696 + $0x24] sm:$0x1]
      %v731 = vsel %vm705, %v655, %v730
      %732 = vst [vmem:[%s696 + $0x24] sm:$0x1] %v731
      %v733 = vld [vmem:[%s696 + $0x28] sm:$0xf]
      %v734 = vsel %vm699, %v662, %v733
      %735 = vst [vmem:[%s696 + $0x28] sm:$0xf] %v734
      %v736 = vld [vmem:[%s696 + $0x2c] sm:$0x1]
      %v737 = vsel %vm705, %v663, %v736
      %738 = vst [vmem:[%s696 + $0x2c] sm:$0x1] %v737
      %v739 = vld [vmem:[%s696 + $0x30] sm:$0xf]
      %v740 = vsel %vm699, %v670, %v739
      %741 = vst [vmem:[%s696 + $0x30] sm:$0xf] %v740
      %v742 = vld [vmem:[%s696 + $0x34] sm:$0x1]
      %v743 = vsel %vm705, %v671, %v742
      %744 = vst [vmem:[%s696 + $0x34] sm:$0x1] %v743
      %v745 = vld [vmem:[%s696 + $0x38] sm:$0xf]
      %v746 = vsel %vm699, %v678, %v745
      %747 = vst [vmem:[%s696 + $0x38] sm:$0xf] %v746
      %v748 = vld [vmem:[%s696 + $0x3c] sm:$0x1]
      %v749 = vsel %vm705, %v679, %v748
      %750 = vst [vmem:[%s696 + $0x3c] sm:$0x1] %v749
      %v751 = vld [vmem:[%s424] sm:$0xf]
      %v752 = vld [vmem:[%s424 + $0x4] sm:$0xf]
      %v753 = vld [vmem:[%s424 + $0x8] sm:$0xf]
      %v754 = vld [vmem:[%s424 + $0xc] sm:$0xf]
      %v755 = vld [vmem:[%s424 + $0x10] sm:$0xf]
      %v756 = vld [vmem:[%s424 + $0x14] sm:$0xf]
      %v757 = vld [vmem:[%s424 + $0x18] sm:$0xf]
      %v758 = vld [vmem:[%s424 + $0x1c] sm:$0xf]
      %v759 = vunpack.c.l.bf16 %v751
      %v760 = vunpack.c.l.bf16 %v752
      %v761 = vunpack.c.l.bf16 %v753
      %v762 = vunpack.c.l.bf16 %v754
      %v763 = vunpack.c.l.bf16 %v755
      %v764 = vunpack.c.l.bf16 %v756
      %v765 = vunpack.c.l.bf16 %v757
      %v766 = vunpack.c.l.bf16 %v758
      %v767 = vmul.f32 %v759, %v543
      %v768 = vmul.f32 %v760, %v543
      %v769 = vmul.f32 %v761, %v543
      %v770 = vmul.f32 %v762, %v543
      %v771 = vmul.f32 %v763, %v543
      %v772 = vmul.f32 %v764, %v543
      %v773 = vmul.f32 %v765, %v543
      %v774 = vmul.f32 %v766, %v543
      %v775 = vadd.f32 %v767, %v555
      %v776 = vadd.f32 %v768, %v555
      %v777 = vadd.f32 %v769, %v555
      %v778 = vadd.f32 %v770, %v555
      %v779 = vadd.f32 %v771, %v555
      %v780 = vadd.f32 %v772, %v555
      %v781 = vadd.f32 %v773, %v555
      %v782 = vadd.f32 %v774, %v555
      %v783 = vmax.f32 %v775, 0.0
      %v784 = vmax.f32 %v776, 0.0
      %v785 = vmax.f32 %v777, 0.0
      %v786 = vmax.f32 %v778, 0.0
      %v787 = vmax.f32 %v779, 0.0
      %v788 = vmax.f32 %v780, 0.0
      %v789 = vmax.f32 %v781, 0.0
      %v790 = vmax.f32 %v782, 0.0
      %v791 = vpack.c.bf16 %v783, %v783
      %v792 = vpack.c.bf16 %v784, %v784
      %v793 = vpack.c.bf16 %v785, %v785
      %v794 = vpack.c.bf16 %v786, %v786
      %v795 = vpack.c.bf16 %v787, %v787
      %v796 = vpack.c.bf16 %v788, %v788
      %v797 = vpack.c.bf16 %v789, %v789
      %v798 = vpack.c.bf16 %v790, %v790
      %v807 = vunpack.c.l.b16 %v791
      %v808 = vunpack.c.l.b16 %v792
      %v809 = vunpack.c.l.b16 %v793
      %v810 = vunpack.c.l.b16 %v794
      %v811 = vunpack.c.l.b16 %v795
      %v812 = vunpack.c.l.b16 %v796
      %v813 = vunpack.c.l.b16 %v797
      %v814 = vunpack.c.l.b16 %v798
      %v815 = vpack.c.b16 %v807, %v807
      %v816 = vpack.c.b16 %v808, %v808
      %v817 = vpack.c.b16 %v809, %v809
      %v818 = vpack.c.b16 %v810, %v810
      %v819 = vpack.c.b16 %v811, %v811
      %v820 = vpack.c.b16 %v812, %v812
      %v821 = vpack.c.b16 %v813, %v813
      %v822 = vpack.c.b16 %v814, %v814
      %v824 = vshrl.u32 %v815, 16
      %v826 = vrot.slane %v824, 7
      %v827 = vshll.u32 %v815, 16
      %v829 = vor.u32 %v826, %v827
      %v830 = vrot.slane %v826, 4
      %v832 = vshrl.u32 %v816, 16
      %v834 = vrot.slane %v832, 7
      %v835 = vshll.u32 %v816, 16
      %v837 = vor.u32 %v834, %v835
      %v838 = vrot.slane %v834, 4
      %v840 = vshrl.u32 %v817, 16
      %v842 = vrot.slane %v840, 7
      %v843 = vshll.u32 %v817, 16
      %v845 = vor.u32 %v842, %v843
      %v846 = vrot.slane %v842, 4
      %v848 = vshrl.u32 %v818, 16
      %v850 = vrot.slane %v848, 7
      %v851 = vshll.u32 %v818, 16
      %v853 = vor.u32 %v850, %v851
      %v854 = vrot.slane %v850, 4
      %v856 = vshrl.u32 %v819, 16
      %v858 = vrot.slane %v856, 7
      %v859 = vshll.u32 %v819, 16
      %v861 = vor.u32 %v858, %v859
      %v862 = vrot.slane %v858, 4
      %v864 = vshrl.u32 %v820, 16
      %v866 = vrot.slane %v864, 7
      %v867 = vshll.u32 %v820, 16
      %v869 = vor.u32 %v866, %v867
      %v870 = vrot.slane %v866, 4
      %v872 = vshrl.u32 %v821, 16
      %v874 = vrot.slane %v872, 7
      %v875 = vshll.u32 %v821, 16
      %v877 = vor.u32 %v874, %v875
      %v878 = vrot.slane %v874, 4
      %v880 = vshrl.u32 %v822, 16
      %v882 = vrot.slane %v880, 7
      %v883 = vshll.u32 %v822, 16
      %v885 = vor.u32 %v882, %v883
      %v886 = vrot.slane %v882, 4
      %s903 = scalar_lea.vmem [#allocation2], 88
      %v904 = vld [vmem:[%s903] sm:$0xf]
      %v905 = vsel %vm699, %v829, %v904
      %906 = vst [vmem:[%s903] sm:$0xf] %v905
      %v907 = vld [vmem:[%s903 + $0x4] sm:$0x1]
      %v908 = vsel %vm705, %v830, %v907
      %909 = vst [vmem:[%s903 + $0x4] sm:$0x1] %v908
      %v910 = vld [vmem:[%s903 + $0x8] sm:$0xf]
      %v911 = vsel %vm699, %v837, %v910
      %912 = vst [vmem:[%s903 + $0x8] sm:$0xf] %v911
      %v913 = vld [vmem:[%s903 + $0xc] sm:$0x1]
      %v914 = vsel %vm705, %v838, %v913
      %915 = vst [vmem:[%s903 + $0xc] sm:$0x1] %v914
      %v916 = vld [vmem:[%s903 + $0x10] sm:$0xf]
      %v917 = vsel %vm699, %v845, %v916
      %918 = vst [vmem:[%s903 + $0x10] sm:$0xf] %v917
      %v919 = vld [vmem:[%s903 + $0x14] sm:$0x1]
      %v920 = vsel %vm705, %v846, %v919
      %921 = vst [vmem:[%s903 + $0x14] sm:$0x1] %v920
      %v922 = vld [vmem:[%s903 + $0x18] sm:$0xf]
      %v923 = vsel %vm699, %v853, %v922
      %924 = vst [vmem:[%s903 + $0x18] sm:$0xf] %v923
      %v925 = vld [vmem:[%s903 + $0x1c] sm:$0x1]
      %v926 = vsel %vm705, %v854, %v925
      %927 = vst [vmem:[%s903 + $0x1c] sm:$0x1] %v926
      %v928 = vld [vmem:[%s903 + $0x20] sm:$0xf]
      %v929 = vsel %vm699, %v861, %v928
      %930 = vst [vmem:[%s903 + $0x20] sm:$0xf] %v929
      %v931 = vld [vmem:[%s903 + $0x24] sm:$0x1]
      %v932 = vsel %vm705, %v862, %v931
      %933 = vst [vmem:[%s903 + $0x24] sm:$0x1] %v932
      %v934 = vld [vmem:[%s903 + $0x28] sm:$0xf]
      %v935 = vsel %vm699, %v869, %v934
      %936 = vst [vmem:[%s903 + $0x28] sm:$0xf] %v935
      %v937 = vld [vmem:[%s903 + $0x2c] sm:$0x1]
      %v938 = vsel %vm705, %v870, %v937
      %939 = vst [vmem:[%s903 + $0x2c] sm:$0x1] %v938
      %v940 = vld [vmem:[%s903 + $0x30] sm:$0xf]
      %v941 = vsel %vm699, %v877, %v940
      %942 = vst [vmem:[%s903 + $0x30] sm:$0xf] %v941
      %v943 = vld [vmem:[%s903 + $0x34] sm:$0x1]
      %v944 = vsel %vm705, %v878, %v943
      %945 = vst [vmem:[%s903 + $0x34] sm:$0x1] %v944
      %v946 = vld [vmem:[%s903 + $0x38] sm:$0xf]
      %v947 = vsel %vm699, %v885, %v946
      %948 = vst [vmem:[%s903 + $0x38] sm:$0xf] %v947
      %v949 = vld [vmem:[%s903 + $0x3c] sm:$0x1]
      %v950 = vsel %vm705, %v886, %v949
      %951 = vst [vmem:[%s903 + $0x3c] sm:$0x1] %v950
      %v952 = vld [vmem:[%s436] sm:$0xf]
      %v953 = vld [vmem:[%s436 + $0x4] sm:$0xf]
      %v954 = vld [vmem:[%s436 + $0x8] sm:$0xf]
      %v955 = vld [vmem:[%s436 + $0xc] sm:$0xf]
      %v956 = vld [vmem:[%s436 + $0x10] sm:$0xf]
      %v957 = vld [vmem:[%s436 + $0x14] sm:$0xf]
      %v958 = vld [vmem:[%s436 + $0x18] sm:$0xf]
      %v959 = vld [vmem:[%s436 + $0x1c] sm:$0xf]
      %v960 = vunpack.c.l.bf16 %v952
      %v961 = vunpack.c.l.bf16 %v953
      %v962 = vunpack.c.l.bf16 %v954
      %v963 = vunpack.c.l.bf16 %v955
      %v964 = vunpack.c.l.bf16 %v956
      %v965 = vunpack.c.l.bf16 %v957
      %v966 = vunpack.c.l.bf16 %v958
      %v967 = vunpack.c.l.bf16 %v959
      %v968 = vmul.f32 %v960, %v543
      %v969 = vmul.f32 %v961, %v543
      %v970 = vmul.f32 %v962, %v543
      %v971 = vmul.f32 %v963, %v543
      %v972 = vmul.f32 %v964, %v543
      %v973 = vmul.f32 %v965, %v543
      %v974 = vmul.f32 %v966, %v543
      %v975 = vmul.f32 %v967, %v543
      %v976 = vadd.f32 %v968, %v555
      %v977 = vadd.f32 %v969, %v555
      %v978 = vadd.f32 %v970, %v555
      %v979 = vadd.f32 %v971, %v555
      %v980 = vadd.f32 %v972, %v555
      %v981 = vadd.f32 %v973, %v555
      %v982 = vadd.f32 %v974, %v555
      %v983 = vadd.f32 %v975, %v555
      %v984 = vmax.f32 %v976, 0.0
      %v985 = vmax.f32 %v977, 0.0
      %v986 = vmax.f32 %v978, 0.0
      %v987 = vmax.f32 %v979, 0.0
      %v988 = vmax.f32 %v980, 0.0
      %v989 = vmax.f32 %v981, 0.0
      %v990 = vmax.f32 %v982, 0.0
      %v991 = vmax.f32 %v983, 0.0
      %p992 = scmp.lt.s32.totalorder %s24, 3
      %s993 = scalar_select %p992, 1, 0
      %s994 = scvt.s32.f32 %s993
      %v995 = vstv %s994
      %v996 = vmul.f32 %v984, %v995
      %v997 = vmul.f32 %v985, %v995
      %v998 = vmul.f32 %v986, %v995
      %v999 = vmul.f32 %v987, %v995
      %v1000 = vmul.f32 %v988, %v995
      %v1001 = vmul.f32 %v989, %v995
      %v1002 = vmul.f32 %v990, %v995
      %v1003 = vmul.f32 %v991, %v995
      %v1004 = vpack.c.bf16 %v996, %v996
      %v1005 = vpack.c.bf16 %v997, %v997
      %v1006 = vpack.c.bf16 %v998, %v998
      %v1007 = vpack.c.bf16 %v999, %v999
      %v1008 = vpack.c.bf16 %v1000, %v1000
      %v1009 = vpack.c.bf16 %v1001, %v1001
      %v1010 = vpack.c.bf16 %v1002, %v1002
      %v1011 = vpack.c.bf16 %v1003, %v1003
      %v1020 = vunpack.c.l.b16 %v1004
      %v1021 = vunpack.c.l.b16 %v1005
      %v1022 = vunpack.c.l.b16 %v1006
      %v1023 = vunpack.c.l.b16 %v1007
      %v1024 = vunpack.c.l.b16 %v1008
      %v1025 = vunpack.c.l.b16 %v1009
      %v1026 = vunpack.c.l.b16 %v1010
      %v1027 = vunpack.c.l.b16 %v1011
      %v1028 = vpack.c.b16 %v1020, %v1020
      %v1029 = vpack.c.b16 %v1021, %v1021
      %v1030 = vpack.c.b16 %v1022, %v1022
      %v1031 = vpack.c.b16 %v1023, %v1023
      %v1032 = vpack.c.b16 %v1024, %v1024
      %v1033 = vpack.c.b16 %v1025, %v1025
      %v1034 = vpack.c.b16 %v1026, %v1026
      %v1035 = vpack.c.b16 %v1027, %v1027
      %v1037 = vshrl.u32 %v1028, 16
      %v1039 = vrot.slane %v1037, 7
      %v1040 = vshll.u32 %v1028, 16
      %v1042 = vor.u32 %v1039, %v1040
      %v1043 = vrot.slane %v1039, 4
      %v1045 = vshrl.u32 %v1029, 16
      %v1047 = vrot.slane %v1045, 7
      %v1048 = vshll.u32 %v1029, 16
      %v1050 = vor.u32 %v1047, %v1048
      %v1051 = vrot.slane %v1047, 4
      %v1053 = vshrl.u32 %v1030, 16
      %v1055 = vrot.slane %v1053, 7
      %v1056 = vshll.u32 %v1030, 16
      %v1058 = vor.u32 %v1055, %v1056
      %v1059 = vrot.slane %v1055, 4
      %v1061 = vshrl.u32 %v1031, 16
      %v1063 = vrot.slane %v1061, 7
      %v1064 = vshll.u32 %v1031, 16
      %v1066 = vor.u32 %v1063, %v1064
      %v1067 = vrot.slane %v1063, 4
      %v1069 = vshrl.u32 %v1032, 16
      %v1071 = vrot.slane %v1069, 7
      %v1072 = vshll.u32 %v1032, 16
      %v1074 = vor.u32 %v1071, %v1072
      %v1075 = vrot.slane %v1071, 4
      %v1077 = vshrl.u32 %v1033, 16
      %v1079 = vrot.slane %v1077, 7
      %v1080 = vshll.u32 %v1033, 16
      %v1082 = vor.u32 %v1079, %v1080
      %v1083 = vrot.slane %v1079, 4
      %v1085 = vshrl.u32 %v1034, 16
      %v1087 = vrot.slane %v1085, 7
      %v1088 = vshll.u32 %v1034, 16
      %v1090 = vor.u32 %v1087, %v1088
      %v1091 = vrot.slane %v1087, 4
      %v1093 = vshrl.u32 %v1035, 16
      %v1095 = vrot.slane %v1093, 7
      %v1096 = vshll.u32 %v1035, 16
      %v1098 = vor.u32 %v1095, %v1096
      %v1099 = vrot.slane %v1095, 4
      %s1116 = scalar_lea.vmem [#allocation2], 168
      %v1117 = vld [vmem:[%s1116] sm:$0xf]
      %v1118 = vsel %vm699, %v1042, %v1117
      %1119 = vst [vmem:[%s1116] sm:$0xf] %v1118
      %v1120 = vld [vmem:[%s1116 + $0x4] sm:$0x1]
      %v1121 = vsel %vm705, %v1043, %v1120
      %1122 = vst [vmem:[%s1116 + $0x4] sm:$0x1] %v1121
      %v1123 = vld [vmem:[%s1116 + $0x8] sm:$0xf]
      %v1124 = vsel %vm699, %v1050, %v1123
      %1125 = vst [vmem:[%s1116 + $0x8] sm:$0xf] %v1124
      %v1126 = vld [vmem:[%s1116 + $0xc] sm:$0x1]
      %v1127 = vsel %vm705, %v1051, %v1126
      %1128 = vst [vmem:[%s1116 + $0xc] sm:$0x1] %v1127
      %v1129 = vld [vmem:[%s1116 + $0x10] sm:$0xf]
      %v1130 = vsel %vm699, %v1058, %v1129
      %1131 = vst [vmem:[%s1116 + $0x10] sm:$0xf] %v1130
      %v1132 = vld [vmem:[%s1116 + $0x14] sm:$0x1]
      %v1133 = vsel %vm705, %v1059, %v1132
      %1134 = vst [vmem:[%s1116 + $0x14] sm:$0x1] %v1133
      %v1135 = vld [vmem:[%s1116 + $0x18] sm:$0xf]
      %v1136 = vsel %vm699, %v1066, %v1135
      %1137 = vst [vmem:[%s1116 + $0x18] sm:$0xf] %v1136
      %v1138 = vld [vmem:[%s1116 + $0x1c] sm:$0x1]
      %v1139 = vsel %vm705, %v1067, %v1138
      %1140 = vst [vmem:[%s1116 + $0x1c] sm:$0x1] %v1139
      %v1141 = vld [vmem:[%s1116 + $0x20] sm:$0xf]
      %v1142 = vsel %vm699, %v1074, %v1141
      %1143 = vst [vmem:[%s1116 + $0x20] sm:$0xf] %v1142
      %v1144 = vld [vmem:[%s1116 + $0x24] sm:$0x1]
      %v1145 = vsel %vm705, %v1075, %v1144
      %1146 = vst [vmem:[%s1116 + $0x24] sm:$0x1] %v1145
      %v1147 = vld [vmem:[%s1116 + $0x28] sm:$0xf]
      %v1148 = vsel %vm699, %v1082, %v1147
      %1149 = vst [vmem:[%s1116 + $0x28] sm:$0xf] %v1148
      %v1150 = vld [vmem:[%s1116 + $0x2c] sm:$0x1]
      %v1151 = vsel %vm705, %v1083, %v1150
      %1152 = vst [vmem:[%s1116 + $0x2c] sm:$0x1] %v1151
      %v1153 = vld [vmem:[%s1116 + $0x30] sm:$0xf]
      %v1154 = vsel %vm699, %v1090, %v1153
      %1155 = vst [vmem:[%s1116 + $0x30] sm:$0xf] %v1154
      %v1156 = vld [vmem:[%s1116 + $0x34] sm:$0x1]
      %v1157 = vsel %vm705, %v1091, %v1156
      %1158 = vst [vmem:[%s1116 + $0x34] sm:$0x1] %v1157
      %v1159 = vld [vmem:[%s1116 + $0x38] sm:$0xf]
      %v1160 = vsel %vm699, %v1098, %v1159
      %1161 = vst [vmem:[%s1116 + $0x38] sm:$0xf] %v1160
      %v1162 = vld [vmem:[%s1116 + $0x3c] sm:$0x1]
      %v1163 = vsel %vm705, %v1099, %v1162
      %1164 = vst [vmem:[%s1116 + $0x3c] sm:$0x1] %v1163
      %v1165 = vld [vmem:[#allocation2] sm:$0xf]
      %v1166 = vld [vmem:[#allocation2 + $0x8] sm:$0xf]
      %v1167 = vld [vmem:[#allocation2 + $0x10] sm:$0xf]
      %v1168 = vld [vmem:[#allocation2 + $0x18] sm:$0xf]
      %v1169 = vld [vmem:[#allocation2 + $0x20] sm:$0xf]
      %v1170 = vld [vmem:[#allocation2 + $0x28] sm:$0xf]
      %v1171 = vld [vmem:[#allocation2 + $0x30] sm:$0xf]
      %v1172 = vld [vmem:[#allocation2 + $0x38] sm:$0xf]
      %v1173 = vld [vmem:[#allocation2 + $0x4] sm:$0x1]
      %v1174 = vld [vmem:[#allocation2 + $0xc] sm:$0x1]
      %v1175 = vld [vmem:[#allocation2 + $0x14] sm:$0x1]
      %v1176 = vld [vmem:[#allocation2 + $0x1c] sm:$0x1]
      %v1177 = vld [vmem:[#allocation2 + $0x24] sm:$0x1]
      %v1178 = vld [vmem:[#allocation2 + $0x2c] sm:$0x1]
      %v1179 = vld [vmem:[#allocation2 + $0x34] sm:$0x1]
      %v1180 = vld [vmem:[#allocation2 + $0x3c] sm:$0x1]
      %vm1181 = vsmask.f32 3328
      %vm1182 = vsmask.f32 7440
      %vm1183 = vmor %vm1181, %vm1182
      %v1185 = vshrl.u32 %v1165, 16
      %v1187 = vrot.slane %v1185, 4
      %v1188 = vshll.u32 %v1165, 16
      %v1190 = vrot.slane %v1188, 5
      %v1191 = vor.u32 %v1187, %v1190
      %v1192 = vrot.slane %v1191, 4
      %v1194 = vshll.u32 %v1173, 16
      %v1196 = vrot.slane %v1194, 5
      %v1197 = vsel %vm1183, %v1192, %v1196
      %v1199 = vshrl.u32 %v1166, 16
      %v1201 = vrot.slane %v1199, 4
      %v1202 = vshll.u32 %v1166, 16
      %v1204 = vrot.slane %v1202, 5
      %v1205 = vor.u32 %v1201, %v1204
      %v1206 = vrot.slane %v1205, 4
      %v1208 = vshll.u32 %v1174, 16
      %v1210 = vrot.slane %v1208, 5
      %v1211 = vsel %vm1183, %v1206, %v1210
      %v1213 = vshrl.u32 %v1167, 16
      %v1215 = vrot.slane %v1213, 4
      %v1216 = vshll.u32 %v1167, 16
      %v1218 = vrot.slane %v1216, 5
      %v1219 = vor.u32 %v1215, %v1218
      %v1220 = vrot.slane %v1219, 4
      %v1222 = vshll.u32 %v1175, 16
      %v1224 = vrot.slane %v1222, 5
      %v1225 = vsel %vm1183, %v1220, %v1224
      %v1227 = vshrl.u32 %v1168, 16
      %v1229 = vrot.slane %v1227, 4
      %v1230 = vshll.u32 %v1168, 16
      %v1232 = vrot.slane %v1230, 5
      %v1233 = vor.u32 %v1229, %v1232
      %v1234 = vrot.slane %v1233, 4
      %v1236 = vshll.u32 %v1176, 16
      %v1238 = vrot.slane %v1236, 5
      %v1239 = vsel %vm1183, %v1234, %v1238
      %v1241 = vshrl.u32 %v1169, 16
      %v1243 = vrot.slane %v1241, 4
      %v1244 = vshll.u32 %v1169, 16
      %v1246 = vrot.slane %v1244, 5
      %v1247 = vor.u32 %v1243, %v1246
      %v1248 = vrot.slane %v1247, 4
      %v1250 = vshll.u32 %v1177, 16
      %v1252 = vrot.slane %v1250, 5
      %v1253 = vsel %vm1183, %v1248, %v1252
      %v1255 = vshrl.u32 %v1170, 16
      %v1257 = vrot.slane %v1255, 4
      %v1258 = vshll.u32 %v1170, 16
      %v1260 = vrot.slane %v1258, 5
      %v1261 = vor.u32 %v1257, %v1260
      %v1262 = vrot.slane %v1261, 4
      %v1264 = vshll.u32 %v1178, 16
      %v1266 = vrot.slane %v1264, 5
      %v1267 = vsel %vm1183, %v1262, %v1266
      %v1269 = vshrl.u32 %v1171, 16
      %v1271 = vrot.slane %v1269, 4
      %v1272 = vshll.u32 %v1171, 16
      %v1274 = vrot.slane %v1272, 5
      %v1275 = vor.u32 %v1271, %v1274
      %v1276 = vrot.slane %v1275, 4
      %v1278 = vshll.u32 %v1179, 16
      %v1280 = vrot.slane %v1278, 5
      %v1281 = vsel %vm1183, %v1276, %v1280
      %v1283 = vshrl.u32 %v1172, 16
      %v1285 = vrot.slane %v1283, 4
      %v1286 = vshll.u32 %v1172, 16
      %v1288 = vrot.slane %v1286, 5
      %v1289 = vor.u32 %v1285, %v1288
      %v1290 = vrot.slane %v1289, 4
      %v1292 = vshll.u32 %v1180, 16
      %v1294 = vrot.slane %v1292, 5
      %v1295 = vsel %vm1183, %v1290, %v1294
      %v1296 = vld [vmem:[#allocation2] sm:$0xe]
      %v1297 = vld [vmem:[#allocation2 + $0x8] sm:$0xe]
      %v1298 = vld [vmem:[#allocation2 + $0x10] sm:$0xe]
      %v1299 = vld [vmem:[#allocation2 + $0x18] sm:$0xe]
      %v1300 = vld [vmem:[#allocation2 + $0x20] sm:$0xe]
      %v1301 = vld [vmem:[#allocation2 + $0x28] sm:$0xe]
      %v1302 = vld [vmem:[#allocation2 + $0x30] sm:$0xe]
      %v1303 = vld [vmem:[#allocation2 + $0x38] sm:$0xe]
      %vm1320 = vcmask 1042432
      %vm1321 = vcmask 1046532
      %vm1322 = vmor %vm1320, %vm1321
      %v1323 = vrot.slane %v1296, 5
      %v1324 = vrot.slane %v1323, 4
      %v1325 = vrot.slane %v1173, 5
      %v1326 = vsel %vm1322, %v1324, %v1325
      %v1327 = vrot.slane %v1297, 5
      %v1328 = vrot.slane %v1327, 4
      %v1329 = vrot.slane %v1174, 5
      %v1330 = vsel %vm1322, %v1328, %v1329
      %v1331 = vrot.slane %v1298, 5
      %v1332 = vrot.slane %v1331, 4
      %v1333 = vrot.slane %v1175, 5
      %v1334 = vsel %vm1322, %v1332, %v1333
      %v1335 = vrot.slane %v1299, 5
      %v1336 = vrot.slane %v1335, 4
      %v1337 = vrot.slane %v1176, 5
      %v1338 = vsel %vm1322, %v1336, %v1337
      %v1339 = vrot.slane %v1300, 5
      %v1340 = vrot.slane %v1339, 4
      %v1341 = vrot.slane %v1177, 5
      %v1342 = vsel %vm1322, %v1340, %v1341
      %v1343 = vrot.slane %v1301, 5
      %v1344 = vrot.slane %v1343, 4
      %v1345 = vrot.slane %v1178, 5
      %v1346 = vsel %vm1322, %v1344, %v1345
      %v1347 = vrot.slane %v1302, 5
      %v1348 = vrot.slane %v1347, 4
      %v1349 = vrot.slane %v1179, 5
      %v1350 = vsel %vm1322, %v1348, %v1349
      %v1351 = vrot.slane %v1303, 5
      %v1352 = vrot.slane %v1351, 4
      %v1353 = vrot.slane %v1180, 5
      %v1354 = vsel %vm1322, %v1352, %v1353
      %v1355 = vld [vmem:[%s696] sm:$0xf]
      %v1356 = vld [vmem:[%s696 + $0x8] sm:$0xf]
      %v1357 = vld [vmem:[%s696 + $0x10] sm:$0xf]
      %v1358 = vld [vmem:[%s696 + $0x18] sm:$0xf]
      %v1359 = vld [vmem:[%s696 + $0x20] sm:$0xf]
      %v1360 = vld [vmem:[%s696 + $0x28] sm:$0xf]
      %v1361 = vld [vmem:[%s696 + $0x30] sm:$0xf]
      %v1362 = vld [vmem:[%s696 + $0x38] sm:$0xf]
      %v1363 = vld [vmem:[%s696 + $0x4] sm:$0x1]
      %v1364 = vld [vmem:[%s696 + $0xc] sm:$0x1]
      %v1365 = vld [vmem:[%s696 + $0x14] sm:$0x1]
      %v1366 = vld [vmem:[%s696 + $0x1c] sm:$0x1]
      %v1367 = vld [vmem:[%s696 + $0x24] sm:$0x1]
      %v1368 = vld [vmem:[%s696 + $0x2c] sm:$0x1]
      %v1369 = vld [vmem:[%s696 + $0x34] sm:$0x1]
      %v1370 = vld [vmem:[%s696 + $0x3c] sm:$0x1]
      %v1372 = vshrl.u32 %v1355, 16
      %v1374 = vrot.slane %v1372, 4
      %v1375 = vshll.u32 %v1355, 16
      %v1377 = vrot.slane %v1375, 5
      %v1378 = vor.u32 %v1374, %v1377
      %v1379 = vrot.slane %v1378, 4
      %v1381 = vshll.u32 %v1363, 16
      %v1383 = vrot.slane %v1381, 5
      %v1384 = vsel %vm1183, %v1379, %v1383
      %v1386 = vshrl.u32 %v1356, 16
      %v1388 = vrot.slane %v1386, 4
      %v1389 = vshll.u32 %v1356, 16
      %v1391 = vrot.slane %v1389, 5
      %v1392 = vor.u32 %v1388, %v1391
      %v1393 = vrot.slane %v1392, 4
      %v1395 = vshll.u32 %v1364, 16
      %v1397 = vrot.slane %v1395, 5
      %v1398 = vsel %vm1183, %v1393, %v1397
      %v1400 = vshrl.u32 %v1357, 16
      %v1402 = vrot.slane %v1400, 4
      %v1403 = vshll.u32 %v1357, 16
      %v1405 = vrot.slane %v1403, 5
      %v1406 = vor.u32 %v1402, %v1405
      %v1407 = vrot.slane %v1406, 4
      %v1409 = vshll.u32 %v1365, 16
      %v1411 = vrot.slane %v1409, 5
      %v1412 = vsel %vm1183, %v1407, %v1411
      %v1414 = vshrl.u32 %v1358, 16
      %v1416 = vrot.slane %v1414, 4
      %v1417 = vshll.u32 %v1358, 16
      %v1419 = vrot.slane %v1417, 5
      %v1420 = vor.u32 %v1416, %v1419
      %v1421 = vrot.slane %v1420, 4
      %v1423 = vshll.u32 %v1366, 16
      %v1425 = vrot.slane %v1423, 5
      %v1426 = vsel %vm1183, %v1421, %v1425
      %v1428 = vshrl.u32 %v1359, 16
      %v1430 = vrot.slane %v1428, 4
      %v1431 = vshll.u32 %v1359, 16
      %v1433 = vrot.slane %v1431, 5
      %v1434 = vor.u32 %v1430, %v1433
      %v1435 = vrot.slane %v1434, 4
      %v1437 = vshll.u32 %v1367, 16
      %v1439 = vrot.slane %v1437, 5
      %v1440 = vsel %vm1183, %v1435, %v1439
      %v1442 = vshrl.u32 %v1360, 16
      %v1444 = vrot.slane %v1442, 4
      %v1445 = vshll.u32 %v1360, 16
      %v1447 = vrot.slane %v1445, 5
      %v1448 = vor.u32 %v1444, %v1447
      %v1449 = vrot.slane %v1448, 4
      %v1451 = vshll.u32 %v1368, 16
      %v1453 = vrot.slane %v1451, 5
      %v1454 = vsel %vm1183, %v1449, %v1453
      %v1456 = vshrl.u32 %v1361, 16
      %v1458 = vrot.slane %v1456, 4
      %v1459 = vshll.u32 %v1361, 16
      %v1461 = vrot.slane %v1459, 5
      %v1462 = vor.u32 %v1458, %v1461
      %v1463 = vrot.slane %v1462, 4
      %v1465 = vshll.u32 %v1369, 16
      %v1467 = vrot.slane %v1465, 5
      %v1468 = vsel %vm1183, %v1463, %v1467
      %v1470 = vshrl.u32 %v1362, 16
      %v1472 = vrot.slane %v1470, 4
      %v1473 = vshll.u32 %v1362, 16
      %v1475 = vrot.slane %v1473, 5
      %v1476 = vor.u32 %v1472, %v1475
      %v1477 = vrot.slane %v1476, 4
      %v1479 = vshll.u32 %v1370, 16
      %v1481 = vrot.slane %v1479, 5
      %v1482 = vsel %vm1183, %v1477, %v1481
      %v1483 = vld [vmem:[%s696] sm:$0xe]
      %v1484 = vld [vmem:[%s696 + $0x8] sm:$0xe]
      %v1485 = vld [vmem:[%s696 + $0x10] sm:$0xe]
      %v1486 = vld [vmem:[%s696 + $0x18] sm:$0xe]
      %v1487 = vld [vmem:[%s696 + $0x20] sm:$0xe]
      %v1488 = vld [vmem:[%s696 + $0x28] sm:$0xe]
      %v1489 = vld [vmem:[%s696 + $0x30] sm:$0xe]
      %v1490 = vld [vmem:[%s696 + $0x38] sm:$0xe]
      %v1507 = vrot.slane %v1483, 5
      %v1508 = vrot.slane %v1507, 4
      %v1509 = vrot.slane %v1363, 5
      %v1510 = vsel %vm1322, %v1508, %v1509
      %v1511 = vrot.slane %v1484, 5
      %v1512 = vrot.slane %v1511, 4
      %v1513 = vrot.slane %v1364, 5
      %v1514 = vsel %vm1322, %v1512, %v1513
      %v1515 = vrot.slane %v1485, 5
      %v1516 = vrot.slane %v1515, 4
      %v1517 = vrot.slane %v1365, 5
      %v1518 = vsel %vm1322, %v1516, %v1517
      %v1519 = vrot.slane %v1486, 5
      %v1520 = vrot.slane %v1519, 4
      %v1521 = vrot.slane %v1366, 5
      %v1522 = vsel %vm1322, %v1520, %v1521
      %v1523 = vrot.slane %v1487, 5
      %v1524 = vrot.slane %v1523, 4
      %v1525 = vrot.slane %v1367, 5
      %v1526 = vsel %vm1322, %v1524, %v1525
      %v1527 = vrot.slane %v1488, 5
      %v1528 = vrot.slane %v1527, 4
      %v1529 = vrot.slane %v1368, 5
      %v1530 = vsel %vm1322, %v1528, %v1529
      %v1531 = vrot.slane %v1489, 5
      %v1532 = vrot.slane %v1531, 4
      %v1533 = vrot.slane %v1369, 5
      %v1534 = vsel %vm1322, %v1532, %v1533
      %v1535 = vrot.slane %v1490, 5
      %v1536 = vrot.slane %v1535, 4
      %v1537 = vrot.slane %v1370, 5
      %v1538 = vsel %vm1322, %v1536, %v1537
      %s1539 = scalar_lea.vmem [#allocation2], 16
      %v1540 = vld [vmem:[%s1539] sm:$0xf]
      %v1541 = vld [vmem:[%s1539 + $0x8] sm:$0xf]
      %v1542 = vld [vmem:[%s1539 + $0x10] sm:$0xf]
      %v1543 = vld [vmem:[%s1539 + $0x18] sm:$0xf]
      %v1544 = vld [vmem:[%s1539 + $0x20] sm:$0xf]
      %v1545 = vld [vmem:[%s1539 + $0x28] sm:$0xf]
      %v1546 = vld [vmem:[%s1539 + $0x30] sm:$0xf]
      %v1547 = vld [vmem:[%s1539 + $0x38] sm:$0xf]
      %v1548 = vld [vmem:[%s1539 + $0x4] sm:$0x1]
      %v1549 = vld [vmem:[%s1539 + $0xc] sm:$0x1]
      %v1550 = vld [vmem:[%s1539 + $0x14] sm:$0x1]
      %v1551 = vld [vmem:[%s1539 + $0x1c] sm:$0x1]
      %v1552 = vld [vmem:[%s1539 + $0x24] sm:$0x1]
      %v1553 = vld [vmem:[%s1539 + $0x2c] sm:$0x1]
      %v1554 = vld [vmem:[%s1539 + $0x34] sm:$0x1]
      %v1555 = vld [vmem:[%s1539 + $0x3c] sm:$0x1]
      %v1557 = vshrl.u32 %v1540, 16
      %v1559 = vrot.slane %v1557, 4
      %v1560 = vshll.u32 %v1540, 16
      %v1562 = vrot.slane %v1560, 5
      %v1563 = vor.u32 %v1559, %v1562
      %v1564 = vrot.slane %v1563, 4
      %v1566 = vshll.u32 %v1548, 16
      %v1568 = vrot.slane %v1566, 5
      %v1569 = vsel %vm1183, %v1564, %v1568
      %v1571 = vshrl.u32 %v1541, 16
      %v1573 = vrot.slane %v1571, 4
      %v1574 = vshll.u32 %v1541, 16
      %v1576 = vrot.slane %v1574, 5
      %v1577 = vor.u32 %v1573, %v1576
      %v1578 = vrot.slane %v1577, 4
      %v1580 = vshll.u32 %v1549, 16
      %v1582 = vrot.slane %v1580, 5
      %v1583 = vsel %vm1183, %v1578, %v1582
      %v1585 = vshrl.u32 %v1542, 16
      %v1587 = vrot.slane %v1585, 4
      %v1588 = vshll.u32 %v1542, 16
      %v1590 = vrot.slane %v1588, 5
      %v1591 = vor.u32 %v1587, %v1590
      %v1592 = vrot.slane %v1591, 4
      %v1594 = vshll.u32 %v1550, 16
      %v1596 = vrot.slane %v1594, 5
      %v1597 = vsel %vm1183, %v1592, %v1596
      %v1599 = vshrl.u32 %v1543, 16
      %v1601 = vrot.slane %v1599, 4
      %v1602 = vshll.u32 %v1543, 16
      %v1604 = vrot.slane %v1602, 5
      %v1605 = vor.u32 %v1601, %v1604
      %v1606 = vrot.slane %v1605, 4
      %v1608 = vshll.u32 %v1551, 16
      %v1610 = vrot.slane %v1608, 5
      %v1611 = vsel %vm1183, %v1606, %v1610
      %v1613 = vshrl.u32 %v1544, 16
      %v1615 = vrot.slane %v1613, 4
      %v1616 = vshll.u32 %v1544, 16
      %v1618 = vrot.slane %v1616, 5
      %v1619 = vor.u32 %v1615, %v1618
      %v1620 = vrot.slane %v1619, 4
      %v1622 = vshll.u32 %v1552, 16
      %v1624 = vrot.slane %v1622, 5
      %v1625 = vsel %vm1183, %v1620, %v1624
      %v1627 = vshrl.u32 %v1545, 16
      %v1629 = vrot.slane %v1627, 4
      %v1630 = vshll.u32 %v1545, 16
      %v1632 = vrot.slane %v1630, 5
      %v1633 = vor.u32 %v1629, %v1632
      %v1634 = vrot.slane %v1633, 4
      %v1636 = vshll.u32 %v1553, 16
      %v1638 = vrot.slane %v1636, 5
      %v1639 = vsel %vm1183, %v1634, %v1638
      %v1641 = vshrl.u32 %v1546, 16
      %v1643 = vrot.slane %v1641, 4
      %v1644 = vshll.u32 %v1546, 16
      %v1646 = vrot.slane %v1644, 5
      %v1647 = vor.u32 %v1643, %v1646
      %v1648 = vrot.slane %v1647, 4
      %v1650 = vshll.u32 %v1554, 16
      %v1652 = vrot.slane %v1650, 5
      %v1653 = vsel %vm1183, %v1648, %v1652
      %v1655 = vshrl.u32 %v1547, 16
      %v1657 = vrot.slane %v1655, 4
      %v1658 = vshll.u32 %v1547, 16
      %v1660 = vrot.slane %v1658, 5
      %v1661 = vor.u32 %v1657, %v1660
      %v1662 = vrot.slane %v1661, 4
      %v1664 = vshll.u32 %v1555, 16
      %v1666 = vrot.slane %v1664, 5
      %v1667 = vsel %vm1183, %v1662, %v1666
      %v1668 = vld [vmem:[%s1539] sm:$0xe]
      %v1669 = vld [vmem:[%s1539 + $0x8] sm:$0xe]
      %v1670 = vld [vmem:[%s1539 + $0x10] sm:$0xe]
      %v1671 = vld [vmem:[%s1539 + $0x18] sm:$0xe]
      %v1672 = vld [vmem:[%s1539 + $0x20] sm:$0xe]
      %v1673 = vld [vmem:[%s1539 + $0x28] sm:$0xe]
      %v1674 = vld [vmem:[%s1539 + $0x30] sm:$0xe]
      %v1675 = vld [vmem:[%s1539 + $0x38] sm:$0xe]
      %v1692 = vrot.slane %v1668, 5
      %v1693 = vrot.slane %v1692, 4
      %v1694 = vrot.slane %v1548, 5
      %v1695 = vsel %vm1322, %v1693, %v1694
      %v1696 = vrot.slane %v1669, 5
      %v1697 = vrot.slane %v1696, 4
      %v1698 = vrot.slane %v1549, 5
      %v1699 = vsel %vm1322, %v1697, %v1698
      %v1700 = vrot.slane %v1670, 5
      %v1701 = vrot.slane %v1700, 4
      %v1702 = vrot.slane %v1550, 5
      %v1703 = vsel %vm1322, %v1701, %v1702
      %v1704 = vrot.slane %v1671, 5
      %v1705 = vrot.slane %v1704, 4
      %v1706 = vrot.slane %v1551, 5
      %v1707 = vsel %vm1322, %v1705, %v1706
      %v1708 = vrot.slane %v1672, 5
      %v1709 = vrot.slane %v1708, 4
      %v1710 = vrot.slane %v1552, 5
      %v1711 = vsel %vm1322, %v1709, %v1710
      %v1712 = vrot.slane %v1673, 5
      %v1713 = vrot.slane %v1712, 4
      %v1714 = vrot.slane %v1553, 5
      %v1715 = vsel %vm1322, %v1713, %v1714
      %v1716 = vrot.slane %v1674, 5
      %v1717 = vrot.slane %v1716, 4
      %v1718 = vrot.slane %v1554, 5
      %v1719 = vsel %vm1322, %v1717, %v1718
      %v1720 = vrot.slane %v1675, 5
      %v1721 = vrot.slane %v1720, 4
      %v1722 = vrot.slane %v1555, 5
      %v1723 = vsel %vm1322, %v1721, %v1722
      %s1724 = scalar_lea.vmem [#allocation2], 80
      %v1725 = vld [vmem:[%s1724] sm:$0xf]
      %v1726 = vld [vmem:[%s1724 + $0x8] sm:$0xf]
      %v1727 = vld [vmem:[%s1724 + $0x10] sm:$0xf]
      %v1728 = vld [vmem:[%s1724 + $0x18] sm:$0xf]
      %v1729 = vld [vmem:[%s1724 + $0x20] sm:$0xf]
      %v1730 = vld [vmem:[%s1724 + $0x28] sm:$0xf]
      %v1731 = vld [vmem:[%s1724 + $0x30] sm:$0xf]
      %v1732 = vld [vmem:[%s1724 + $0x38] sm:$0xf]
      %v1733 = vld [vmem:[%s1724 + $0x4] sm:$0x1]
      %v1734 = vld [vmem:[%s1724 + $0xc] sm:$0x1]
      %v1735 = vld [vmem:[%s1724 + $0x14] sm:$0x1]
      %v1736 = vld [vmem:[%s1724 + $0x1c] sm:$0x1]
      %v1737 = vld [vmem:[%s1724 + $0x24] sm:$0x1]
      %v1738 = vld [vmem:[%s1724 + $0x2c] sm:$0x1]
      %v1739 = vld [vmem:[%s1724 + $0x34] sm:$0x1]
      %v1740 = vld [vmem:[%s1724 + $0x3c] sm:$0x1]
      %v1742 = vshrl.u32 %v1725, 16
      %v1744 = vrot.slane %v1742, 4
      %v1745 = vshll.u32 %v1725, 16
      %v1747 = vrot.slane %v1745, 5
      %v1748 = vor.u32 %v1744, %v1747
      %v1749 = vrot.slane %v1748, 4
      %v1751 = vshll.u32 %v1733, 16
      %v1753 = vrot.slane %v1751, 5
      %v1754 = vsel %vm1183, %v1749, %v1753
      %v1756 = vshrl.u32 %v1726, 16
      %v1758 = vrot.slane %v1756, 4
      %v1759 = vshll.u32 %v1726, 16
      %v1761 = vrot.slane %v1759, 5
      %v1762 = vor.u32 %v1758, %v1761
      %v1763 = vrot.slane %v1762, 4
      %v1765 = vshll.u32 %v1734, 16
      %v1767 = vrot.slane %v1765, 5
      %v1768 = vsel %vm1183, %v1763, %v1767
      %v1770 = vshrl.u32 %v1727, 16
      %v1772 = vrot.slane %v1770, 4
      %v1773 = vshll.u32 %v1727, 16
      %v1775 = vrot.slane %v1773, 5
      %v1776 = vor.u32 %v1772, %v1775
      %v1777 = vrot.slane %v1776, 4
      %v1779 = vshll.u32 %v1735, 16
      %v1781 = vrot.slane %v1779, 5
      %v1782 = vsel %vm1183, %v1777, %v1781
      %v1784 = vshrl.u32 %v1728, 16
      %v1786 = vrot.slane %v1784, 4
      %v1787 = vshll.u32 %v1728, 16
      %v1789 = vrot.slane %v1787, 5
      %v1790 = vor.u32 %v1786, %v1789
      %v1791 = vrot.slane %v1790, 4
      %v1793 = vshll.u32 %v1736, 16
      %v1795 = vrot.slane %v1793, 5
      %v1796 = vsel %vm1183, %v1791, %v1795
      %v1798 = vshrl.u32 %v1729, 16
      %v1800 = vrot.slane %v1798, 4
      %v1801 = vshll.u32 %v1729, 16
      %v1803 = vrot.slane %v1801, 5
      %v1804 = vor.u32 %v1800, %v1803
      %v1805 = vrot.slane %v1804, 4
      %v1807 = vshll.u32 %v1737, 16
      %v1809 = vrot.slane %v1807, 5
      %v1810 = vsel %vm1183, %v1805, %v1809
      %v1812 = vshrl.u32 %v1730, 16
      %v1814 = vrot.slane %v1812, 4
      %v1815 = vshll.u32 %v1730, 16
      %v1817 = vrot.slane %v1815, 5
      %v1818 = vor.u32 %v1814, %v1817
      %v1819 = vrot.slane %v1818, 4
      %v1821 = vshll.u32 %v1738, 16
      %v1823 = vrot.slane %v1821, 5
      %v1824 = vsel %vm1183, %v1819, %v1823
      %v1826 = vshrl.u32 %v1731, 16
      %v1828 = vrot.slane %v1826, 4
      %v1829 = vshll.u32 %v1731, 16
      %v1831 = vrot.slane %v1829, 5
      %v1832 = vor.u32 %v1828, %v1831
      %v1833 = vrot.slane %v1832, 4
      %v1835 = vshll.u32 %v1739, 16
      %v1837 = vrot.slane %v1835, 5
      %v1838 = vsel %vm1183, %v1833, %v1837
      %v1840 = vshrl.u32 %v1732, 16
      %v1842 = vrot.slane %v1840, 4
      %v1843 = vshll.u32 %v1732, 16
      %v1845 = vrot.slane %v1843, 5
      %v1846 = vor.u32 %v1842, %v1845
      %v1847 = vrot.slane %v1846, 4
      %v1849 = vshll.u32 %v1740, 16
      %v1851 = vrot.slane %v1849, 5
      %v1852 = vsel %vm1183, %v1847, %v1851
      %v1853 = vld [vmem:[%s1724] sm:$0xe]
      %v1854 = vld [vmem:[%s1724 + $0x8] sm:$0xe]
      %v1855 = vld [vmem:[%s1724 + $0x10] sm:$0xe]
      %v1856 = vld [vmem:[%s1724 + $0x18] sm:$0xe]
      %v1857 = vld [vmem:[%s1724 + $0x20] sm:$0xe]
      %v1858 = vld [vmem:[%s1724 + $0x28] sm:$0xe]
      %v1859 = vld [vmem:[%s1724 + $0x30] sm:$0xe]
      %v1860 = vld [vmem:[%s1724 + $0x38] sm:$0xe]
      %v1877 = vrot.slane %v1853, 5
      %v1878 = vrot.slane %v1877, 4
      %v1879 = vrot.slane %v1733, 5
      %v1880 = vsel %vm1322, %v1878, %v1879
      %v1881 = vrot.slane %v1854, 5
      %v1882 = vrot.slane %v1881, 4
      %v1883 = vrot.slane %v1734, 5
      %v1884 = vsel %vm1322, %v1882, %v1883
      %v1885 = vrot.slane %v1855, 5
      %v1886 = vrot.slane %v1885, 4
      %v1887 = vrot.slane %v1735, 5
      %v1888 = vsel %vm1322, %v1886, %v1887
      %v1889 = vrot.slane %v1856, 5
      %v1890 = vrot.slane %v1889, 4
      %v1891 = vrot.slane %v1736, 5
      %v1892 = vsel %vm1322, %v1890, %v1891
      %v1893 = vrot.slane %v1857, 5
      %v1894 = vrot.slane %v1893, 4
      %v1895 = vrot.slane %v1737, 5
      %v1896 = vsel %vm1322, %v1894, %v1895
      %v1897 = vrot.slane %v1858, 5
      %v1898 = vrot.slane %v1897, 4
      %v1899 = vrot.slane %v1738, 5
      %v1900 = vsel %vm1322, %v1898, %v1899
      %v1901 = vrot.slane %v1859, 5
      %v1902 = vrot.slane %v1901, 4
      %v1903 = vrot.slane %v1739, 5
      %v1904 = vsel %vm1322, %v1902, %v1903
      %v1905 = vrot.slane %v1860, 5
      %v1906 = vrot.slane %v1905, 4
      %v1907 = vrot.slane %v1740, 5
      %v1908 = vsel %vm1322, %v1906, %v1907
      %v1909 = vld [vmem:[%s903] sm:$0xf]
      %v1910 = vld [vmem:[%s903 + $0x8] sm:$0xf]
      %v1911 = vld [vmem:[%s903 + $0x10] sm:$0xf]
      %v1912 = vld [vmem:[%s903 + $0x18] sm:$0xf]
      %v1913 = vld [vmem:[%s903 + $0x20] sm:$0xf]
      %v1914 = vld [vmem:[%s903 + $0x28] sm:$0xf]
      %v1915 = vld [vmem:[%s903 + $0x30] sm:$0xf]
      %v1916 = vld [vmem:[%s903 + $0x38] sm:$0xf]
      %v1917 = vld [vmem:[%s903 + $0x4] sm:$0x1]
      %v1918 = vld [vmem:[%s903 + $0xc] sm:$0x1]
      %v1919 = vld [vmem:[%s903 + $0x14] sm:$0x1]
      %v1920 = vld [vmem:[%s903 + $0x1c] sm:$0x1]
      %v1921 = vld [vmem:[%s903 + $0x24] sm:$0x1]
      %v1922 = vld [vmem:[%s903 + $0x2c] sm:$0x1]
      %v1923 = vld [vmem:[%s903 + $0x34] sm:$0x1]
      %v1924 = vld [vmem:[%s903 + $0x3c] sm:$0x1]
      %v1926 = vshrl.u32 %v1909, 16
      %v1928 = vrot.slane %v1926, 4
      %v1929 = vshll.u32 %v1909, 16
      %v1931 = vrot.slane %v1929, 5
      %v1932 = vor.u32 %v1928, %v1931
      %v1933 = vrot.slane %v1932, 4
      %v1935 = vshll.u32 %v1917, 16
      %v1937 = vrot.slane %v1935, 5
      %v1938 = vsel %vm1183, %v1933, %v1937
      %v1940 = vshrl.u32 %v1910, 16
      %v1942 = vrot.slane %v1940, 4
      %v1943 = vshll.u32 %v1910, 16
      %v1945 = vrot.slane %v1943, 5
      %v1946 = vor.u32 %v1942, %v1945
      %v1947 = vrot.slane %v1946, 4
      %v1949 = vshll.u32 %v1918, 16
      %v1951 = vrot.slane %v1949, 5
      %v1952 = vsel %vm1183, %v1947, %v1951
      %v1954 = vshrl.u32 %v1911, 16
      %v1956 = vrot.slane %v1954, 4
      %v1957 = vshll.u32 %v1911, 16
      %v1959 = vrot.slane %v1957, 5
      %v1960 = vor.u32 %v1956, %v1959
      %v1961 = vrot.slane %v1960, 4
      %v1963 = vshll.u32 %v1919, 16
      %v1965 = vrot.slane %v1963, 5
      %v1966 = vsel %vm1183, %v1961, %v1965
      %v1968 = vshrl.u32 %v1912, 16
      %v1970 = vrot.slane %v1968, 4
      %v1971 = vshll.u32 %v1912, 16
      %v1973 = vrot.slane %v1971, 5
      %v1974 = vor.u32 %v1970, %v1973
      %v1975 = vrot.slane %v1974, 4
      %v1977 = vshll.u32 %v1920, 16
      %v1979 = vrot.slane %v1977, 5
      %v1980 = vsel %vm1183, %v1975, %v1979
      %v1982 = vshrl.u32 %v1913, 16
      %v1984 = vrot.slane %v1982, 4
      %v1985 = vshll.u32 %v1913, 16
      %v1987 = vrot.slane %v1985, 5
      %v1988 = vor.u32 %v1984, %v1987
      %v1989 = vrot.slane %v1988, 4
      %v1991 = vshll.u32 %v1921, 16
      %v1993 = vrot.slane %v1991, 5
      %v1994 = vsel %vm1183, %v1989, %v1993
      %v1996 = vshrl.u32 %v1914, 16
      %v1998 = vrot.slane %v1996, 4
      %v1999 = vshll.u32 %v1914, 16
      %v2001 = vrot.slane %v1999, 5
      %v2002 = vor.u32 %v1998, %v2001
      %v2003 = vrot.slane %v2002, 4
      %v2005 = vshll.u32 %v1922, 16
      %v2007 = vrot.slane %v2005, 5
      %v2008 = vsel %vm1183, %v2003, %v2007
      %v2010 = vshrl.u32 %v1915, 16
      %v2012 = vrot.slane %v2010, 4
      %v2013 = vshll.u32 %v1915, 16
      %v2015 = vrot.slane %v2013, 5
      %v2016 = vor.u32 %v2012, %v2015
      %v2017 = vrot.slane %v2016, 4
      %v2019 = vshll.u32 %v1923, 16
      %v2021 = vrot.slane %v2019, 5
      %v2022 = vsel %vm1183, %v2017, %v2021
      %v2024 = vshrl.u32 %v1916, 16
      %v2026 = vrot.slane %v2024, 4
      %v2027 = vshll.u32 %v1916, 16
      %v2029 = vrot.slane %v2027, 5
      %v2030 = vor.u32 %v2026, %v2029
      %v2031 = vrot.slane %v2030, 4
      %v2033 = vshll.u32 %v1924, 16
      %v2035 = vrot.slane %v2033, 5
      %v2036 = vsel %vm1183, %v2031, %v2035
      %v2037 = vld [vmem:[%s903] sm:$0xe]
      %v2038 = vld [vmem:[%s903 + $0x8] sm:$0xe]
      %v2039 = vld [vmem:[%s903 + $0x10] sm:$0xe]
      %v2040 = vld [vmem:[%s903 + $0x18] sm:$0xe]
      %v2041 = vld [vmem:[%s903 + $0x20] sm:$0xe]
      %v2042 = vld [vmem:[%s903 + $0x28] sm:$0xe]
      %v2043 = vld [vmem:[%s903 + $0x30] sm:$0xe]
      %v2044 = vld [vmem:[%s903 + $0x38] sm:$0xe]
      %v2061 = vrot.slane %v2037, 5
      %v2062 = vrot.slane %v2061, 4
      %v2063 = vrot.slane %v1917, 5
      %v2064 = vsel %vm1322, %v2062, %v2063
      %v2065 = vrot.slane %v2038, 5
      %v2066 = vrot.slane %v2065, 4
      %v2067 = vrot.slane %v1918, 5
      %v2068 = vsel %vm1322, %v2066, %v2067
      %v2069 = vrot.slane %v2039, 5
      %v2070 = vrot.slane %v2069, 4
      %v2071 = vrot.slane %v1919, 5
      %v2072 = vsel %vm1322, %v2070, %v2071
      %v2073 = vrot.slane %v2040, 5
      %v2074 = vrot.slane %v2073, 4
      %v2075 = vrot.slane %v1920, 5
      %v2076 = vsel %vm1322, %v2074, %v2075
      %v2077 = vrot.slane %v2041, 5
      %v2078 = vrot.slane %v2077, 4
      %v2079 = vrot.slane %v1921, 5
      %v2080 = vsel %vm1322, %v2078, %v2079
      %v2081 = vrot.slane %v2042, 5
      %v2082 = vrot.slane %v2081, 4
      %v2083 = vrot.slane %v1922, 5
      %v2084 = vsel %vm1322, %v2082, %v2083
      %v2085 = vrot.slane %v2043, 5
      %v2086 = vrot.slane %v2085, 4
      %v2087 = vrot.slane %v1923, 5
      %v2088 = vsel %vm1322, %v2086, %v2087
      %v2089 = vrot.slane %v2044, 5
      %v2090 = vrot.slane %v2089, 4
      %v2091 = vrot.slane %v1924, 5
      %v2092 = vsel %vm1322, %v2090, %v2091
      %s2093 = scalar_lea.vmem [#allocation2], 96
      %v2094 = vld [vmem:[%s2093] sm:$0xf]
      %v2095 = vld [vmem:[%s2093 + $0x8] sm:$0xf]
      %v2096 = vld [vmem:[%s2093 + $0x10] sm:$0xf]
      %v2097 = vld [vmem:[%s2093 + $0x18] sm:$0xf]
      %v2098 = vld [vmem:[%s2093 + $0x20] sm:$0xf]
      %v2099 = vld [vmem:[%s2093 + $0x28] sm:$0xf]
      %v2100 = vld [vmem:[%s2093 + $0x30] sm:$0xf]
      %v2101 = vld [vmem:[%s2093 + $0x38] sm:$0xf]
      %v2102 = vld [vmem:[%s2093 + $0x4] sm:$0x1]
      %v2103 = vld [vmem:[%s2093 + $0xc] sm:$0x1]
      %v2104 = vld [vmem:[%s2093 + $0x14] sm:$0x1]
      %v2105 = vld [vmem:[%s2093 + $0x1c] sm:$0x1]
      %v2106 = vld [vmem:[%s2093 + $0x24] sm:$0x1]
      %v2107 = vld [vmem:[%s2093 + $0x2c] sm:$0x1]
      %v2108 = vld [vmem:[%s2093 + $0x34] sm:$0x1]
      %v2109 = vld [vmem:[%s2093 + $0x3c] sm:$0x1]
      %v2111 = vshrl.u32 %v2094, 16
      %v2113 = vrot.slane %v2111, 4
      %v2114 = vshll.u32 %v2094, 16
      %v2116 = vrot.slane %v2114, 5
      %v2117 = vor.u32 %v2113, %v2116
      %v2118 = vrot.slane %v2117, 4
      %v2120 = vshll.u32 %v2102, 16
      %v2122 = vrot.slane %v2120, 5
      %v2123 = vsel %vm1183, %v2118, %v2122
      %v2125 = vshrl.u32 %v2095, 16
      %v2127 = vrot.slane %v2125, 4
      %v2128 = vshll.u32 %v2095, 16
      %v2130 = vrot.slane %v2128, 5
      %v2131 = vor.u32 %v2127, %v2130
      %v2132 = vrot.slane %v2131, 4
      %v2134 = vshll.u32 %v2103, 16
      %v2136 = vrot.slane %v2134, 5
      %v2137 = vsel %vm1183, %v2132, %v2136
      %v2139 = vshrl.u32 %v2096, 16
      %v2141 = vrot.slane %v2139, 4
      %v2142 = vshll.u32 %v2096, 16
      %v2144 = vrot.slane %v2142, 5
      %v2145 = vor.u32 %v2141, %v2144
      %v2146 = vrot.slane %v2145, 4
      %v2148 = vshll.u32 %v2104, 16
      %v2150 = vrot.slane %v2148, 5
      %v2151 = vsel %vm1183, %v2146, %v2150
      %v2153 = vshrl.u32 %v2097, 16
      %v2155 = vrot.slane %v2153, 4
      %v2156 = vshll.u32 %v2097, 16
      %v2158 = vrot.slane %v2156, 5
      %v2159 = vor.u32 %v2155, %v2158
      %v2160 = vrot.slane %v2159, 4
      %v2162 = vshll.u32 %v2105, 16
      %v2164 = vrot.slane %v2162, 5
      %v2165 = vsel %vm1183, %v2160, %v2164
      %v2167 = vshrl.u32 %v2098, 16
      %v2169 = vrot.slane %v2167, 4
      %v2170 = vshll.u32 %v2098, 16
      %v2172 = vrot.slane %v2170, 5
      %v2173 = vor.u32 %v2169, %v2172
      %v2174 = vrot.slane %v2173, 4
      %v2176 = vshll.u32 %v2106, 16
      %v2178 = vrot.slane %v2176, 5
      %v2179 = vsel %vm1183, %v2174, %v2178
      %v2181 = vshrl.u32 %v2099, 16
      %v2183 = vrot.slane %v2181, 4
      %v2184 = vshll.u32 %v2099, 16
      %v2186 = vrot.slane %v2184, 5
      %v2187 = vor.u32 %v2183, %v2186
      %v2188 = vrot.slane %v2187, 4
      %v2190 = vshll.u32 %v2107, 16
      %v2192 = vrot.slane %v2190, 5
      %v2193 = vsel %vm1183, %v2188, %v2192
      %v2195 = vshrl.u32 %v2100, 16
      %v2197 = vrot.slane %v2195, 4
      %v2198 = vshll.u32 %v2100, 16
      %v2200 = vrot.slane %v2198, 5
      %v2201 = vor.u32 %v2197, %v2200
      %v2202 = vrot.slane %v2201, 4
      %v2204 = vshll.u32 %v2108, 16
      %v2206 = vrot.slane %v2204, 5
      %v2207 = vsel %vm1183, %v2202, %v2206
      %v2209 = vshrl.u32 %v2101, 16
      %v2211 = vrot.slane %v2209, 4
      %v2212 = vshll.u32 %v2101, 16
      %v2214 = vrot.slane %v2212, 5
      %v2215 = vor.u32 %v2211, %v2214
      %v2216 = vrot.slane %v2215, 4
      %v2218 = vshll.u32 %v2109, 16
      %v2220 = vrot.slane %v2218, 5
      %v2221 = vsel %vm1183, %v2216, %v2220
      %v2222 = vld [vmem:[%s2093] sm:$0xe]
      %v2223 = vld [vmem:[%s2093 + $0x8] sm:$0xe]
      %v2224 = vld [vmem:[%s2093 + $0x10] sm:$0xe]
      %v2225 = vld [vmem:[%s2093 + $0x18] sm:$0xe]
      %v2226 = vld [vmem:[%s2093 + $0x20] sm:$0xe]
      %v2227 = vld [vmem:[%s2093 + $0x28] sm:$0xe]
      %v2228 = vld [vmem:[%s2093 + $0x30] sm:$0xe]
      %v2229 = vld [vmem:[%s2093 + $0x38] sm:$0xe]
      %v2246 = vrot.slane %v2222, 5
      %v2247 = vrot.slane %v2246, 4
      %v2248 = vrot.slane %v2102, 5
      %v2249 = vsel %vm1322, %v2247, %v2248
      %v2250 = vrot.slane %v2223, 5
      %v2251 = vrot.slane %v2250, 4
      %v2252 = vrot.slane %v2103, 5
      %v2253 = vsel %vm1322, %v2251, %v2252
      %v2254 = vrot.slane %v2224, 5
      %v2255 = vrot.slane %v2254, 4
      %v2256 = vrot.slane %v2104, 5
      %v2257 = vsel %vm1322, %v2255, %v2256
      %v2258 = vrot.slane %v2225, 5
      %v2259 = vrot.slane %v2258, 4
      %v2260 = vrot.slane %v2105, 5
      %v2261 = vsel %vm1322, %v2259, %v2260
      %v2262 = vrot.slane %v2226, 5
      %v2263 = vrot.slane %v2262, 4
      %v2264 = vrot.slane %v2106, 5
      %v2265 = vsel %vm1322, %v2263, %v2264
      %v2266 = vrot.slane %v2227, 5
      %v2267 = vrot.slane %v2266, 4
      %v2268 = vrot.slane %v2107, 5
      %v2269 = vsel %vm1322, %v2267, %v2268
      %v2270 = vrot.slane %v2228, 5
      %v2271 = vrot.slane %v2270, 4
      %v2272 = vrot.slane %v2108, 5
      %v2273 = vsel %vm1322, %v2271, %v2272
      %v2274 = vrot.slane %v2229, 5
      %v2275 = vrot.slane %v2274, 4
      %v2276 = vrot.slane %v2109, 5
      %v2277 = vsel %vm1322, %v2275, %v2276
      %s2278 = scalar_lea.vmem [#allocation2], 160
      %v2279 = vld [vmem:[%s2278] sm:$0xf]
      %v2280 = vld [vmem:[%s2278 + $0x8] sm:$0xf]
      %v2281 = vld [vmem:[%s2278 + $0x10] sm:$0xf]
      %v2282 = vld [vmem:[%s2278 + $0x18] sm:$0xf]
      %v2283 = vld [vmem:[%s2278 + $0x20] sm:$0xf]
      %v2284 = vld [vmem:[%s2278 + $0x28] sm:$0xf]
      %v2285 = vld [vmem:[%s2278 + $0x30] sm:$0xf]
      %v2286 = vld [vmem:[%s2278 + $0x38] sm:$0xf]
      %v2287 = vld [vmem:[%s2278 + $0x4] sm:$0x1]
      %v2288 = vld [vmem:[%s2278 + $0xc] sm:$0x1]
      %v2289 = vld [vmem:[%s2278 + $0x14] sm:$0x1]
      %v2290 = vld [vmem:[%s2278 + $0x1c] sm:$0x1]
      %v2291 = vld [vmem:[%s2278 + $0x24] sm:$0x1]
      %v2292 = vld [vmem:[%s2278 + $0x2c] sm:$0x1]
      %v2293 = vld [vmem:[%s2278 + $0x34] sm:$0x1]
      %v2294 = vld [vmem:[%s2278 + $0x3c] sm:$0x1]
      %v2296 = vshrl.u32 %v2279, 16
      %v2298 = vrot.slane %v2296, 4
      %v2299 = vshll.u32 %v2279, 16
      %v2301 = vrot.slane %v2299, 5
      %v2302 = vor.u32 %v2298, %v2301
      %v2303 = vrot.slane %v2302, 4
      %v2305 = vshll.u32 %v2287, 16
      %v2307 = vrot.slane %v2305, 5
      %v2308 = vsel %vm1183, %v2303, %v2307
      %v2310 = vshrl.u32 %v2280, 16
      %v2312 = vrot.slane %v2310, 4
      %v2313 = vshll.u32 %v2280, 16
      %v2315 = vrot.slane %v2313, 5
      %v2316 = vor.u32 %v2312, %v2315
      %v2317 = vrot.slane %v2316, 4
      %v2319 = vshll.u32 %v2288, 16
      %v2321 = vrot.slane %v2319, 5
      %v2322 = vsel %vm1183, %v2317, %v2321
      %v2324 = vshrl.u32 %v2281, 16
      %v2326 = vrot.slane %v2324, 4
      %v2327 = vshll.u32 %v2281, 16
      %v2329 = vrot.slane %v2327, 5
      %v2330 = vor.u32 %v2326, %v2329
      %v2331 = vrot.slane %v2330, 4
      %v2333 = vshll.u32 %v2289, 16
      %v2335 = vrot.slane %v2333, 5
      %v2336 = vsel %vm1183, %v2331, %v2335
      %v2338 = vshrl.u32 %v2282, 16
      %v2340 = vrot.slane %v2338, 4
      %v2341 = vshll.u32 %v2282, 16
      %v2343 = vrot.slane %v2341, 5
      %v2344 = vor.u32 %v2340, %v2343
      %v2345 = vrot.slane %v2344, 4
      %v2347 = vshll.u32 %v2290, 16
      %v2349 = vrot.slane %v2347, 5
      %v2350 = vsel %vm1183, %v2345, %v2349
      %v2352 = vshrl.u32 %v2283, 16
      %v2354 = vrot.slane %v2352, 4
      %v2355 = vshll.u32 %v2283, 16
      %v2357 = vrot.slane %v2355, 5
      %v2358 = vor.u32 %v2354, %v2357
      %v2359 = vrot.slane %v2358, 4
      %v2361 = vshll.u32 %v2291, 16
      %v2363 = vrot.slane %v2361, 5
      %v2364 = vsel %vm1183, %v2359, %v2363
      %v2366 = vshrl.u32 %v2284, 16
      %v2368 = vrot.slane %v2366, 4
      %v2369 = vshll.u32 %v2284, 16
      %v2371 = vrot.slane %v2369, 5
      %v2372 = vor.u32 %v2368, %v2371
      %v2373 = vrot.slane %v2372, 4
      %v2375 = vshll.u32 %v2292, 16
      %v2377 = vrot.slane %v2375, 5
      %v2378 = vsel %vm1183, %v2373, %v2377
      %v2380 = vshrl.u32 %v2285, 16
      %v2382 = vrot.slane %v2380, 4
      %v2383 = vshll.u32 %v2285, 16
      %v2385 = vrot.slane %v2383, 5
      %v2386 = vor.u32 %v2382, %v2385
      %v2387 = vrot.slane %v2386, 4
      %v2389 = vshll.u32 %v2293, 16
      %v2391 = vrot.slane %v2389, 5
      %v2392 = vsel %vm1183, %v2387, %v2391
      %v2394 = vshrl.u32 %v2286, 16
      %v2396 = vrot.slane %v2394, 4
      %v2397 = vshll.u32 %v2286, 16
      %v2399 = vrot.slane %v2397, 5
      %v2400 = vor.u32 %v2396, %v2399
      %v2401 = vrot.slane %v2400, 4
      %v2403 = vshll.u32 %v2294, 16
      %v2405 = vrot.slane %v2403, 5
      %v2406 = vsel %vm1183, %v2401, %v2405
      %v2407 = vld [vmem:[%s2278] sm:$0xe]
      %v2408 = vld [vmem:[%s2278 + $0x8] sm:$0xe]
      %v2409 = vld [vmem:[%s2278 + $0x10] sm:$0xe]
      %v2410 = vld [vmem:[%s2278 + $0x18] sm:$0xe]
      %v2411 = vld [vmem:[%s2278 + $0x20] sm:$0xe]
      %v2412 = vld [vmem:[%s2278 + $0x28] sm:$0xe]
      %v2413 = vld [vmem:[%s2278 + $0x30] sm:$0xe]
      %v2414 = vld [vmem:[%s2278 + $0x38] sm:$0xe]
      %v2431 = vrot.slane %v2407, 5
      %v2432 = vrot.slane %v2431, 4
      %v2433 = vrot.slane %v2287, 5
      %v2434 = vsel %vm1322, %v2432, %v2433
      %v2435 = vrot.slane %v2408, 5
      %v2436 = vrot.slane %v2435, 4
      %v2437 = vrot.slane %v2288, 5
      %v2438 = vsel %vm1322, %v2436, %v2437
      %v2439 = vrot.slane %v2409, 5
      %v2440 = vrot.slane %v2439, 4
      %v2441 = vrot.slane %v2289, 5
      %v2442 = vsel %vm1322, %v2440, %v2441
      %v2443 = vrot.slane %v2410, 5
      %v2444 = vrot.slane %v2443, 4
      %v2445 = vrot.slane %v2290, 5
      %v2446 = vsel %vm1322, %v2444, %v2445
      %v2447 = vrot.slane %v2411, 5
      %v2448 = vrot.slane %v2447, 4
      %v2449 = vrot.slane %v2291, 5
      %v2450 = vsel %vm1322, %v2448, %v2449
      %v2451 = vrot.slane %v2412, 5
      %v2452 = vrot.slane %v2451, 4
      %v2453 = vrot.slane %v2292, 5
      %v2454 = vsel %vm1322, %v2452, %v2453
      %v2455 = vrot.slane %v2413, 5
      %v2456 = vrot.slane %v2455, 4
      %v2457 = vrot.slane %v2293, 5
      %v2458 = vsel %vm1322, %v2456, %v2457
      %v2459 = vrot.slane %v2414, 5
      %v2460 = vrot.slane %v2459, 4
      %v2461 = vrot.slane %v2294, 5
      %v2462 = vsel %vm1322, %v2460, %v2461
      %v2463 = vld [vmem:[%s1116] sm:$0xf]
      %v2464 = vld [vmem:[%s1116 + $0x8] sm:$0xf]
      %v2465 = vld [vmem:[%s1116 + $0x10] sm:$0xf]
      %v2466 = vld [vmem:[%s1116 + $0x18] sm:$0xf]
      %v2467 = vld [vmem:[%s1116 + $0x20] sm:$0xf]
      %v2468 = vld [vmem:[%s1116 + $0x28] sm:$0xf]
      %v2469 = vld [vmem:[%s1116 + $0x30] sm:$0xf]
      %v2470 = vld [vmem:[%s1116 + $0x38] sm:$0xf]
      %v2471 = vld [vmem:[%s1116 + $0x4] sm:$0x1]
      %v2472 = vld [vmem:[%s1116 + $0xc] sm:$0x1]
      %v2473 = vld [vmem:[%s1116 + $0x14] sm:$0x1]
      %v2474 = vld [vmem:[%s1116 + $0x1c] sm:$0x1]
      %v2475 = vld [vmem:[%s1116 + $0x24] sm:$0x1]
      %v2476 = vld [vmem:[%s1116 + $0x2c] sm:$0x1]
      %v2477 = vld [vmem:[%s1116 + $0x34] sm:$0x1]
      %v2478 = vld [vmem:[%s1116 + $0x3c] sm:$0x1]
      %v2480 = vshrl.u32 %v2463, 16
      %v2482 = vrot.slane %v2480, 4
      %v2483 = vshll.u32 %v2463, 16
      %v2485 = vrot.slane %v2483, 5
      %v2486 = vor.u32 %v2482, %v2485
      %v2487 = vrot.slane %v2486, 4
      %v2489 = vshll.u32 %v2471, 16
      %v2491 = vrot.slane %v2489, 5
      %v2492 = vsel %vm1183, %v2487, %v2491
      %v2494 = vshrl.u32 %v2464, 16
      %v2496 = vrot.slane %v2494, 4
      %v2497 = vshll.u32 %v2464, 16
      %v2499 = vrot.slane %v2497, 5
      %v2500 = vor.u32 %v2496, %v2499
      %v2501 = vrot.slane %v2500, 4
      %v2503 = vshll.u32 %v2472, 16
      %v2505 = vrot.slane %v2503, 5
      %v2506 = vsel %vm1183, %v2501, %v2505
      %v2508 = vshrl.u32 %v2465, 16
      %v2510 = vrot.slane %v2508, 4
      %v2511 = vshll.u32 %v2465, 16
      %v2513 = vrot.slane %v2511, 5
      %v2514 = vor.u32 %v2510, %v2513
      %v2515 = vrot.slane %v2514, 4
      %v2517 = vshll.u32 %v2473, 16
      %v2519 = vrot.slane %v2517, 5
      %v2520 = vsel %vm1183, %v2515, %v2519
      %v2522 = vshrl.u32 %v2466, 16
      %v2524 = vrot.slane %v2522, 4
      %v2525 = vshll.u32 %v2466, 16
      %v2527 = vrot.slane %v2525, 5
      %v2528 = vor.u32 %v2524, %v2527
      %v2529 = vrot.slane %v2528, 4
      %v2531 = vshll.u32 %v2474, 16
      %v2533 = vrot.slane %v2531, 5
      %v2534 = vsel %vm1183, %v2529, %v2533
      %v2536 = vshrl.u32 %v2467, 16
      %v2538 = vrot.slane %v2536, 4
      %v2539 = vshll.u32 %v2467, 16
      %v2541 = vrot.slane %v2539, 5
      %v2542 = vor.u32 %v2538, %v2541
      %v2543 = vrot.slane %v2542, 4
      %v2545 = vshll.u32 %v2475, 16
      %v2547 = vrot.slane %v2545, 5
      %v2548 = vsel %vm1183, %v2543, %v2547
      %v2550 = vshrl.u32 %v2468, 16
      %v2552 = vrot.slane %v2550, 4
      %v2553 = vshll.u32 %v2468, 16
      %v2555 = vrot.slane %v2553, 5
      %v2556 = vor.u32 %v2552, %v2555
      %v2557 = vrot.slane %v2556, 4
      %v2559 = vshll.u32 %v2476, 16
      %v2561 = vrot.slane %v2559, 5
      %v2562 = vsel %vm1183, %v2557, %v2561
      %v2564 = vshrl.u32 %v2469, 16
      %v2566 = vrot.slane %v2564, 4
      %v2567 = vshll.u32 %v2469, 16
      %v2569 = vrot.slane %v2567, 5
      %v2570 = vor.u32 %v2566, %v2569
      %v2571 = vrot.slane %v2570, 4
      %v2573 = vshll.u32 %v2477, 16
      %v2575 = vrot.slane %v2573, 5
      %v2576 = vsel %vm1183, %v2571, %v2575
      %v2578 = vshrl.u32 %v2470, 16
      %v2580 = vrot.slane %v2578, 4
      %v2581 = vshll.u32 %v2470, 16
      %v2583 = vrot.slane %v2581, 5
      %v2584 = vor.u32 %v2580, %v2583
      %v2585 = vrot.slane %v2584, 4
      %v2587 = vshll.u32 %v2478, 16
      %v2589 = vrot.slane %v2587, 5
      %v2590 = vsel %vm1183, %v2585, %v2589
      %v2591 = vld [vmem:[%s1116] sm:$0xe]
      %v2592 = vld [vmem:[%s1116 + $0x8] sm:$0xe]
      %v2593 = vld [vmem:[%s1116 + $0x10] sm:$0xe]
      %v2594 = vld [vmem:[%s1116 + $0x18] sm:$0xe]
      %v2595 = vld [vmem:[%s1116 + $0x20] sm:$0xe]
      %v2596 = vld [vmem:[%s1116 + $0x28] sm:$0xe]
      %v2597 = vld [vmem:[%s1116 + $0x30] sm:$0xe]
      %v2598 = vld [vmem:[%s1116 + $0x38] sm:$0xe]
      %v2615 = vrot.slane %v2591, 5
      %v2616 = vrot.slane %v2615, 4
      %v2617 = vrot.slane %v2471, 5
      %v2618 = vsel %vm1322, %v2616, %v2617
      %v2619 = vrot.slane %v2592, 5
      %v2620 = vrot.slane %v2619, 4
      %v2621 = vrot.slane %v2472, 5
      %v2622 = vsel %vm1322, %v2620, %v2621
      %v2623 = vrot.slane %v2593, 5
      %v2624 = vrot.slane %v2623, 4
      %v2625 = vrot.slane %v2473, 5
      %v2626 = vsel %vm1322, %v2624, %v2625
      %v2627 = vrot.slane %v2594, 5
      %v2628 = vrot.slane %v2627, 4
      %v2629 = vrot.slane %v2474, 5
      %v2630 = vsel %vm1322, %v2628, %v2629
      %v2631 = vrot.slane %v2595, 5
      %v2632 = vrot.slane %v2631, 4
      %v2633 = vrot.slane %v2475, 5
      %v2634 = vsel %vm1322, %v2632, %v2633
      %v2635 = vrot.slane %v2596, 5
      %v2636 = vrot.slane %v2635, 4
      %v2637 = vrot.slane %v2476, 5
      %v2638 = vsel %vm1322, %v2636, %v2637
      %v2639 = vrot.slane %v2597, 5
      %v2640 = vrot.slane %v2639, 4
      %v2641 = vrot.slane %v2477, 5
      %v2642 = vsel %vm1322, %v2640, %v2641
      %v2643 = vrot.slane %v2598, 5
      %v2644 = vrot.slane %v2643, 4
      %v2645 = vrot.slane %v2478, 5
      %v2646 = vsel %vm1322, %v2644, %v2645
      %s2647 = scalar_lea.vmem [#allocation2], 176
      %v2648 = vld [vmem:[%s2647] sm:$0xf]
      %v2649 = vld [vmem:[%s2647 + $0x8] sm:$0xf]
      %v2650 = vld [vmem:[%s2647 + $0x10] sm:$0xf]
      %v2651 = vld [vmem:[%s2647 + $0x18] sm:$0xf]
      %v2652 = vld [vmem:[%s2647 + $0x20] sm:$0xf]
      %v2653 = vld [vmem:[%s2647 + $0x28] sm:$0xf]
      %v2654 = vld [vmem:[%s2647 + $0x30] sm:$0xf]
      %v2655 = vld [vmem:[%s2647 + $0x38] sm:$0xf]
      %v2656 = vld [vmem:[%s2647 + $0x4] sm:$0x1]
      %v2657 = vld [vmem:[%s2647 + $0xc] sm:$0x1]
      %v2658 = vld [vmem:[%s2647 + $0x14] sm:$0x1]
      %v2659 = vld [vmem:[%s2647 + $0x1c] sm:$0x1]
      %v2660 = vld [vmem:[%s2647 + $0x24] sm:$0x1]
      %v2661 = vld [vmem:[%s2647 + $0x2c] sm:$0x1]
      %v2662 = vld [vmem:[%s2647 + $0x34] sm:$0x1]
      %v2663 = vld [vmem:[%s2647 + $0x3c] sm:$0x1]
      %v2665 = vshrl.u32 %v2648, 16
      %v2667 = vrot.slane %v2665, 4
      %v2668 = vshll.u32 %v2648, 16
      %v2670 = vrot.slane %v2668, 5
      %v2671 = vor.u32 %v2667, %v2670
      %v2672 = vrot.slane %v2671, 4
      %v2674 = vshll.u32 %v2656, 16
      %v2676 = vrot.slane %v2674, 5
      %v2677 = vsel %vm1183, %v2672, %v2676
      %v2679 = vshrl.u32 %v2649, 16
      %v2681 = vrot.slane %v2679, 4
      %v2682 = vshll.u32 %v2649, 16
      %v2684 = vrot.slane %v2682, 5
      %v2685 = vor.u32 %v2681, %v2684
      %v2686 = vrot.slane %v2685, 4
      %v2688 = vshll.u32 %v2657, 16
      %v2690 = vrot.slane %v2688, 5
      %v2691 = vsel %vm1183, %v2686, %v2690
      %v2693 = vshrl.u32 %v2650, 16
      %v2695 = vrot.slane %v2693, 4
      %v2696 = vshll.u32 %v2650, 16
      %v2698 = vrot.slane %v2696, 5
      %v2699 = vor.u32 %v2695, %v2698
      %v2700 = vrot.slane %v2699, 4
      %v2702 = vshll.u32 %v2658, 16
      %v2704 = vrot.slane %v2702, 5
      %v2705 = vsel %vm1183, %v2700, %v2704
      %v2707 = vshrl.u32 %v2651, 16
      %v2709 = vrot.slane %v2707, 4
      %v2710 = vshll.u32 %v2651, 16
      %v2712 = vrot.slane %v2710, 5
      %v2713 = vor.u32 %v2709, %v2712
      %v2714 = vrot.slane %v2713, 4
      %v2716 = vshll.u32 %v2659, 16
      %v2718 = vrot.slane %v2716, 5
      %v2719 = vsel %vm1183, %v2714, %v2718
      %v2721 = vshrl.u32 %v2652, 16
      %v2723 = vrot.slane %v2721, 4
      %v2724 = vshll.u32 %v2652, 16
      %v2726 = vrot.slane %v2724, 5
      %v2727 = vor.u32 %v2723, %v2726
      %v2728 = vrot.slane %v2727, 4
      %v2730 = vshll.u32 %v2660, 16
      %v2732 = vrot.slane %v2730, 5
      %v2733 = vsel %vm1183, %v2728, %v2732
      %v2735 = vshrl.u32 %v2653, 16
      %v2737 = vrot.slane %v2735, 4
      %v2738 = vshll.u32 %v2653, 16
      %v2740 = vrot.slane %v2738, 5
      %v2741 = vor.u32 %v2737, %v2740
      %v2742 = vrot.slane %v2741, 4
      %v2744 = vshll.u32 %v2661, 16
      %v2746 = vrot.slane %v2744, 5
      %v2747 = vsel %vm1183, %v2742, %v2746
      %v2749 = vshrl.u32 %v2654, 16
      %v2751 = vrot.slane %v2749, 4
      %v2752 = vshll.u32 %v2654, 16
      %v2754 = vrot.slane %v2752, 5
      %v2755 = vor.u32 %v2751, %v2754
      %v2756 = vrot.slane %v2755, 4
      %v2758 = vshll.u32 %v2662, 16
      %v2760 = vrot.slane %v2758, 5
      %v2761 = vsel %vm1183, %v2756, %v2760
      %v2763 = vshrl.u32 %v2655, 16
      %v2765 = vrot.slane %v2763, 4
      %v2766 = vshll.u32 %v2655, 16
      %v2768 = vrot.slane %v2766, 5
      %v2769 = vor.u32 %v2765, %v2768
      %v2770 = vrot.slane %v2769, 4
      %v2772 = vshll.u32 %v2663, 16
      %v2774 = vrot.slane %v2772, 5
      %v2775 = vsel %vm1183, %v2770, %v2774
      %v2776 = vld [vmem:[%s2647] sm:$0xe]
      %v2777 = vld [vmem:[%s2647 + $0x8] sm:$0xe]
      %v2778 = vld [vmem:[%s2647 + $0x10] sm:$0xe]
      %v2779 = vld [vmem:[%s2647 + $0x18] sm:$0xe]
      %v2780 = vld [vmem:[%s2647 + $0x20] sm:$0xe]
      %v2781 = vld [vmem:[%s2647 + $0x28] sm:$0xe]
      %v2782 = vld [vmem:[%s2647 + $0x30] sm:$0xe]
      %v2783 = vld [vmem:[%s2647 + $0x38] sm:$0xe]
      %v2800 = vrot.slane %v2776, 5
      %v2801 = vrot.slane %v2800, 4
      %v2802 = vrot.slane %v2656, 5
      %v2803 = vsel %vm1322, %v2801, %v2802
      %v2804 = vrot.slane %v2777, 5
      %v2805 = vrot.slane %v2804, 4
      %v2806 = vrot.slane %v2657, 5
      %v2807 = vsel %vm1322, %v2805, %v2806
      %v2808 = vrot.slane %v2778, 5
      %v2809 = vrot.slane %v2808, 4
      %v2810 = vrot.slane %v2658, 5
      %v2811 = vsel %vm1322, %v2809, %v2810
      %v2812 = vrot.slane %v2779, 5
      %v2813 = vrot.slane %v2812, 4
      %v2814 = vrot.slane %v2659, 5
      %v2815 = vsel %vm1322, %v2813, %v2814
      %v2816 = vrot.slane %v2780, 5
      %v2817 = vrot.slane %v2816, 4
      %v2818 = vrot.slane %v2660, 5
      %v2819 = vsel %vm1322, %v2817, %v2818
      %v2820 = vrot.slane %v2781, 5
      %v2821 = vrot.slane %v2820, 4
      %v2822 = vrot.slane %v2661, 5
      %v2823 = vsel %vm1322, %v2821, %v2822
      %v2824 = vrot.slane %v2782, 5
      %v2825 = vrot.slane %v2824, 4
      %v2826 = vrot.slane %v2662, 5
      %v2827 = vsel %vm1322, %v2825, %v2826
      %v2828 = vrot.slane %v2783, 5
      %v2829 = vrot.slane %v2828, 4
      %v2830 = vrot.slane %v2663, 5
      %v2831 = vsel %vm1322, %v2829, %v2830
      %v2840 = vunpack.c.l.b16 %v1165
      %v2841 = vunpack.c.l.b16 %v1166
      %v2842 = vunpack.c.l.b16 %v1167
      %v2843 = vunpack.c.l.b16 %v1168
      %v2844 = vunpack.c.l.b16 %v1169
      %v2845 = vunpack.c.l.b16 %v1170
      %v2846 = vunpack.c.l.b16 %v1171
      %v2847 = vunpack.c.l.b16 %v1172
      %v2848 = vpack.c.b16 %v2841, %v2840
      %v2849 = vpack.c.b16 %v2843, %v2842
      %v2850 = vpack.c.b16 %v2845, %v2844
      %v2851 = vpack.c.b16 %v2847, %v2846
      %v2852 = vunpack.c.l.b16 %v1197
      %v2853 = vunpack.c.l.b16 %v1211
      %v2854 = vunpack.c.l.b16 %v1225
      %v2855 = vunpack.c.l.b16 %v1239
      %v2856 = vunpack.c.l.b16 %v1253
      %v2857 = vunpack.c.l.b16 %v1267
      %v2858 = vunpack.c.l.b16 %v1281
      %v2859 = vunpack.c.l.b16 %v1295
      %v2860 = vpack.c.b16 %v2853, %v2852
      %v2861 = vpack.c.b16 %v2855, %v2854
      %v2862 = vpack.c.b16 %v2857, %v2856
      %v2863 = vpack.c.b16 %v2859, %v2858
      %2864 = vrot.lane.b32.xlu0 %v2860, 32
      %v2865 = vpop.permute.xlu0 %2864
      %2866 = vrot.lane.b32.xlu0 %v2861, 32
      %v2867 = vpop.permute.xlu0 %2866
      %2868 = vrot.lane.b32.xlu0 %v2862, 32
      %v2869 = vpop.permute.xlu0 %2868
      %2870 = vrot.lane.b32.xlu0 %v2863, 32
      %v2871 = vpop.permute.xlu0 %2870
      %v2872 = vunpack.c.l.b16 %v1326
      %v2873 = vunpack.c.l.b16 %v1330
      %v2874 = vunpack.c.l.b16 %v1334
      %v2875 = vunpack.c.l.b16 %v1338
      %v2876 = vunpack.c.l.b16 %v1342
      %v2877 = vunpack.c.l.b16 %v1346
      %v2878 = vunpack.c.l.b16 %v1350
      %v2879 = vunpack.c.l.b16 %v1354
      %v2880 = vpack.c.b16 %v2873, %v2872
      %v2881 = vpack.c.b16 %v2875, %v2874
      %v2882 = vpack.c.b16 %v2877, %v2876
      %v2883 = vpack.c.b16 %v2879, %v2878
      %2884 = vrot.lane.b32.xlu0 %v2880, 64
      %v2885 = vpop.permute.xlu0 %2884
      %2886 = vrot.lane.b32.xlu0 %v2881, 64
      %v2887 = vpop.permute.xlu0 %2886
      %2888 = vrot.lane.b32.xlu0 %v2882, 64
      %v2889 = vpop.permute.xlu0 %2888
      %2890 = vrot.lane.b32.xlu0 %v2883, 64
      %v2891 = vpop.permute.xlu0 %2890
      %v2900 = vunpack.c.l.b16 %v1355
      %v2901 = vunpack.c.l.b16 %v1356
      %v2902 = vunpack.c.l.b16 %v1357
      %v2903 = vunpack.c.l.b16 %v1358
      %v2904 = vunpack.c.l.b16 %v1359
      %v2905 = vunpack.c.l.b16 %v1360
      %v2906 = vunpack.c.l.b16 %v1361
      %v2907 = vunpack.c.l.b16 %v1362
      %v2908 = vpack.c.b16 %v2901, %v2900
      %v2909 = vpack.c.b16 %v2903, %v2902
      %v2910 = vpack.c.b16 %v2905, %v2904
      %v2911 = vpack.c.b16 %v2907, %v2906
      %2912 = vrot.lane.b32.xlu0 %v2908, 96
      %v2913 = vpop.permute.xlu0 %2912
      %2914 = vrot.lane.b32.xlu0 %v2909, 96
      %v2915 = vpop.permute.xlu0 %2914
      %2916 = vrot.lane.b32.xlu0 %v2910, 96
      %v2917 = vpop.permute.xlu0 %2916
      %2918 = vrot.lane.b32.xlu0 %v2911, 96
      %v2919 = vpop.permute.xlu0 %2918
      %v2920 = vunpack.c.l.b16 %v1384
      %v2921 = vunpack.c.l.b16 %v1398
      %v2922 = vunpack.c.l.b16 %v1412
      %v2923 = vunpack.c.l.b16 %v1426
      %v2924 = vunpack.c.l.b16 %v1440
      %v2925 = vunpack.c.l.b16 %v1454
      %v2926 = vunpack.c.l.b16 %v1468
      %v2927 = vunpack.c.l.b16 %v1482
      %v2928 = vpack.c.b16 %v2921, %v2920
      %v2929 = vpack.c.b16 %v2923, %v2922
      %v2930 = vpack.c.b16 %v2925, %v2924
      %v2931 = vpack.c.b16 %v2927, %v2926
      %v2932 = vunpack.c.l.b16 %v1510
      %v2933 = vunpack.c.l.b16 %v1514
      %v2934 = vunpack.c.l.b16 %v1518
      %v2935 = vunpack.c.l.b16 %v1522
      %v2936 = vunpack.c.l.b16 %v1526
      %v2937 = vunpack.c.l.b16 %v1530
      %v2938 = vunpack.c.l.b16 %v1534
      %v2939 = vunpack.c.l.b16 %v1538
      %v2940 = vpack.c.b16 %v2933, %v2932
      %v2941 = vpack.c.b16 %v2935, %v2934
      %v2942 = vpack.c.b16 %v2937, %v2936
      %v2943 = vpack.c.b16 %v2939, %v2938
      %2944 = vrot.lane.b32.xlu0 %v2940, 32
      %v2945 = vpop.permute.xlu0 %2944
      %2946 = vrot.lane.b32.xlu0 %v2941, 32
      %v2947 = vpop.permute.xlu0 %2946
      %2948 = vrot.lane.b32.xlu0 %v2942, 32
      %v2949 = vpop.permute.xlu0 %2948
      %2950 = vrot.lane.b32.xlu0 %v2943, 32
      %v2951 = vpop.permute.xlu0 %2950
      %v2960 = vunpack.c.l.b16 %v1540
      %v2961 = vunpack.c.l.b16 %v1541
      %v2962 = vunpack.c.l.b16 %v1542
      %v2963 = vunpack.c.l.b16 %v1543
      %v2964 = vunpack.c.l.b16 %v1544
      %v2965 = vunpack.c.l.b16 %v1545
      %v2966 = vunpack.c.l.b16 %v1546
      %v2967 = vunpack.c.l.b16 %v1547
      %v2968 = vpack.c.b16 %v2961, %v2960
      %v2969 = vpack.c.b16 %v2963, %v2962
      %v2970 = vpack.c.b16 %v2965, %v2964
      %v2971 = vpack.c.b16 %v2967, %v2966
      %2972 = vrot.lane.b32.xlu0 %v2968, 64
      %v2973 = vpop.permute.xlu0 %2972
      %2974 = vrot.lane.b32.xlu0 %v2969, 64
      %v2975 = vpop.permute.xlu0 %2974
      %2976 = vrot.lane.b32.xlu0 %v2970, 64
      %v2977 = vpop.permute.xlu0 %2976
      %2978 = vrot.lane.b32.xlu0 %v2971, 64
      %v2979 = vpop.permute.xlu0 %2978
      %v2980 = vunpack.c.l.b16 %v1569
      %v2981 = vunpack.c.l.b16 %v1583
      %v2982 = vunpack.c.l.b16 %v1597
      %v2983 = vunpack.c.l.b16 %v1611
      %v2984 = vunpack.c.l.b16 %v1625
      %v2985 = vunpack.c.l.b16 %v1639
      %v2986 = vunpack.c.l.b16 %v1653
      %v2987 = vunpack.c.l.b16 %v1667
      %v2988 = vpack.c.b16 %v2981, %v2980
      %v2989 = vpack.c.b16 %v2983, %v2982
      %v2990 = vpack.c.b16 %v2985, %v2984
      %v2991 = vpack.c.b16 %v2987, %v2986
      %2992 = vrot.lane.b32.xlu0 %v2988, 96
      %v2993 = vpop.permute.xlu0 %2992
      %2994 = vrot.lane.b32.xlu0 %v2989, 96
      %v2995 = vpop.permute.xlu0 %2994
      %2996 = vrot.lane.b32.xlu0 %v2990, 96
      %v2997 = vpop.permute.xlu0 %2996
      %2998 = vrot.lane.b32.xlu0 %v2991, 96
      %v2999 = vpop.permute.xlu0 %2998
      %v3000 = vunpack.c.l.b16 %v1695
      %v3001 = vunpack.c.l.b16 %v1699
      %v3002 = vunpack.c.l.b16 %v1703
      %v3003 = vunpack.c.l.b16 %v1707
      %v3004 = vunpack.c.l.b16 %v1711
      %v3005 = vunpack.c.l.b16 %v1715
      %v3006 = vunpack.c.l.b16 %v1719
      %v3007 = vunpack.c.l.b16 %v1723
      %v3008 = vpack.c.b16 %v3001, %v3000
      %v3009 = vpack.c.b16 %v3003, %v3002
      %v3010 = vpack.c.b16 %v3005, %v3004
      %v3011 = vpack.c.b16 %v3007, %v3006
      %v3020 = vunpack.c.l.b16 %v1725
      %v3021 = vunpack.c.l.b16 %v1726
      %v3022 = vunpack.c.l.b16 %v1727
      %v3023 = vunpack.c.l.b16 %v1728
      %v3024 = vunpack.c.l.b16 %v1729
      %v3025 = vunpack.c.l.b16 %v1730
      %v3026 = vunpack.c.l.b16 %v1731
      %v3027 = vunpack.c.l.b16 %v1732
      %v3028 = vpack.c.b16 %v3021, %v3020
      %v3029 = vpack.c.b16 %v3023, %v3022
      %v3030 = vpack.c.b16 %v3025, %v3024
      %v3031 = vpack.c.b16 %v3027, %v3026
      %3032 = vrot.lane.b32.xlu0 %v3028, 32
      %v3033 = vpop.permute.xlu0 %3032
      %3034 = vrot.lane.b32.xlu0 %v3029, 32
      %v3035 = vpop.permute.xlu0 %3034
      %3036 = vrot.lane.b32.xlu0 %v3030, 32
      %v3037 = vpop.permute.xlu0 %3036
      %3038 = vrot.lane.b32.xlu0 %v3031, 32
      %v3039 = vpop.permute.xlu0 %3038
      %v3040 = vunpack.c.l.b16 %v1754
      %v3041 = vunpack.c.l.b16 %v1768
      %v3042 = vunpack.c.l.b16 %v1782
      %v3043 = vunpack.c.l.b16 %v1796
      %v3044 = vunpack.c.l.b16 %v1810
      %v3045 = vunpack.c.l.b16 %v1824
      %v3046 = vunpack.c.l.b16 %v1838
      %v3047 = vunpack.c.l.b16 %v1852
      %v3048 = vpack.c.b16 %v3041, %v3040
      %v3049 = vpack.c.b16 %v3043, %v3042
      %v3050 = vpack.c.b16 %v3045, %v3044
      %v3051 = vpack.c.b16 %v3047, %v3046
      %3052 = vrot.lane.b32.xlu0 %v3048, 64
      %v3053 = vpop.permute.xlu0 %3052
      %3054 = vrot.lane.b32.xlu0 %v3049, 64
      %v3055 = vpop.permute.xlu0 %3054
      %3056 = vrot.lane.b32.xlu0 %v3050, 64
      %v3057 = vpop.permute.xlu0 %3056
      %3058 = vrot.lane.b32.xlu0 %v3051, 64
      %v3059 = vpop.permute.xlu0 %3058
      %v3060 = vunpack.c.l.b16 %v1880
      %v3061 = vunpack.c.l.b16 %v1884
      %v3062 = vunpack.c.l.b16 %v1888
      %v3063 = vunpack.c.l.b16 %v1892
      %v3064 = vunpack.c.l.b16 %v1896
      %v3065 = vunpack.c.l.b16 %v1900
      %v3066 = vunpack.c.l.b16 %v1904
      %v3067 = vunpack.c.l.b16 %v1908
      %v3068 = vpack.c.b16 %v3061, %v3060
      %v3069 = vpack.c.b16 %v3063, %v3062
      %v3070 = vpack.c.b16 %v3065, %v3064
      %v3071 = vpack.c.b16 %v3067, %v3066
      %3072 = vrot.lane.b32.xlu0 %v3068, 96
      %v3073 = vpop.permute.xlu0 %3072
      %3074 = vrot.lane.b32.xlu0 %v3069, 96
      %v3075 = vpop.permute.xlu0 %3074
      %3076 = vrot.lane.b32.xlu0 %v3070, 96
      %v3077 = vpop.permute.xlu0 %3076
      %3078 = vrot.lane.b32.xlu0 %v3071, 96
      %v3079 = vpop.permute.xlu0 %3078
      %v3088 = vunpack.c.l.b16 %v1909
      %v3089 = vunpack.c.l.b16 %v1910
      %v3090 = vunpack.c.l.b16 %v1911
      %v3091 = vunpack.c.l.b16 %v1912
      %v3092 = vunpack.c.l.b16 %v1913
      %v3093 = vunpack.c.l.b16 %v1914
      %v3094 = vunpack.c.l.b16 %v1915
      %v3095 = vunpack.c.l.b16 %v1916
      %v3096 = vpack.c.b16 %v3089, %v3088
      %v3097 = vpack.c.b16 %v3091, %v3090
      %v3098 = vpack.c.b16 %v3093, %v3092
      %v3099 = vpack.c.b16 %v3095, %v3094
      %v3100 = vunpack.c.l.b16 %v1938
      %v3101 = vunpack.c.l.b16 %v1952
      %v3102 = vunpack.c.l.b16 %v1966
      %v3103 = vunpack.c.l.b16 %v1980
      %v3104 = vunpack.c.l.b16 %v1994
      %v3105 = vunpack.c.l.b16 %v2008
      %v3106 = vunpack.c.l.b16 %v2022
      %v3107 = vunpack.c.l.b16 %v2036
      %v3108 = vpack.c.b16 %v3101, %v3100
      %v3109 = vpack.c.b16 %v3103, %v3102
      %v3110 = vpack.c.b16 %v3105, %v3104
      %v3111 = vpack.c.b16 %v3107, %v3106
      %3112 = vrot.lane.b32.xlu0 %v3108, 32
      %v3113 = vpop.permute.xlu0 %3112
      %3114 = vrot.lane.b32.xlu0 %v3109, 32
      %v3115 = vpop.permute.xlu0 %3114
      %3116 = vrot.lane.b32.xlu0 %v3110, 32
      %v3117 = vpop.permute.xlu0 %3116
      %3118 = vrot.lane.b32.xlu0 %v3111, 32
      %v3119 = vpop.permute.xlu0 %3118
      %v3120 = vunpack.c.l.b16 %v2064
      %v3121 = vunpack.c.l.b16 %v2068
      %v3122 = vunpack.c.l.b16 %v2072
      %v3123 = vunpack.c.l.b16 %v2076
      %v3124 = vunpack.c.l.b16 %v2080
      %v3125 = vunpack.c.l.b16 %v2084
      %v3126 = vunpack.c.l.b16 %v2088
      %v3127 = vunpack.c.l.b16 %v2092
      %v3128 = vpack.c.b16 %v3121, %v3120
      %v3129 = vpack.c.b16 %v3123, %v3122
      %v3130 = vpack.c.b16 %v3125, %v3124
      %v3131 = vpack.c.b16 %v3127, %v3126
      %3132 = vrot.lane.b32.xlu0 %v3128, 64
      %v3133 = vpop.permute.xlu0 %3132
      %3134 = vrot.lane.b32.xlu0 %v3129, 64
      %v3135 = vpop.permute.xlu0 %3134
      %3136 = vrot.lane.b32.xlu0 %v3130, 64
      %v3137 = vpop.permute.xlu0 %3136
      %3138 = vrot.lane.b32.xlu0 %v3131, 64
      %v3139 = vpop.permute.xlu0 %3138
      %v3148 = vunpack.c.l.b16 %v2094
      %v3149 = vunpack.c.l.b16 %v2095
      %v3150 = vunpack.c.l.b16 %v2096
      %v3151 = vunpack.c.l.b16 %v2097
      %v3152 = vunpack.c.l.b16 %v2098
      %v3153 = vunpack.c.l.b16 %v2099
      %v3154 = vunpack.c.l.b16 %v2100
      %v3155 = vunpack.c.l.b16 %v2101
      %v3156 = vpack.c.b16 %v3149, %v3148
      %v3157 = vpack.c.b16 %v3151, %v3150
      %v3158 = vpack.c.b16 %v3153, %v3152
      %v3159 = vpack.c.b16 %v3155, %v3154
      %3160 = vrot.lane.b32.xlu0 %v3156, 96
      %v3161 = vpop.permute.xlu0 %3160
      %3162 = vrot.lane.b32.xlu0 %v3157, 96
      %v3163 = vpop.permute.xlu0 %3162
      %3164 = vrot.lane.b32.xlu0 %v3158, 96
      %v3165 = vpop.permute.xlu0 %3164
      %3166 = vrot.lane.b32.xlu0 %v3159, 96
      %v3167 = vpop.permute.xlu0 %3166
      %vm3168 = vcmask 261120
      %v3171 = vsel %vm3168, %v2848, %v2865
      %v3174 = vsel %vm3168, %v2849, %v2867
      %v3177 = vsel %vm3168, %v2850, %v2869
      %v3180 = vsel %vm3168, %v2851, %v2871
      %vm3181 = vcmask 523264
      %v3183 = vsel %vm3181, %v3171, %v2885
      %v3185 = vsel %vm3181, %v3174, %v2887
      %v3187 = vsel %vm3181, %v3177, %v2889
      %v3189 = vsel %vm3181, %v3180, %v2891
      %vm3190 = vcmask 785408
      %v3192 = vsel %vm3190, %v3183, %v2913
      %v3195 = vsel %vm3190, %v3185, %v2915
      %v3198 = vsel %vm3190, %v3187, %v2917
      %v3201 = vsel %vm3190, %v3189, %v2919
      %v3205 = vsel %vm3168, %v2928, %v2945
      %v3208 = vsel %vm3168, %v2929, %v2947
      %v3211 = vsel %vm3168, %v2930, %v2949
      %v3214 = vsel %vm3168, %v2931, %v2951
      %v3216 = vsel %vm3181, %v3205, %v2973
      %v3218 = vsel %vm3181, %v3208, %v2975
      %v3220 = vsel %vm3181, %v3211, %v2977
      %v3222 = vsel %vm3181, %v3214, %v2979
      %v3224 = vsel %vm3190, %v3216, %v2993
      %v3227 = vsel %vm3190, %v3218, %v2995
      %v3230 = vsel %vm3190, %v3220, %v2997
      %v3233 = vsel %vm3190, %v3222, %v2999
      %v3237 = vsel %vm3168, %v3008, %v3033
      %v3240 = vsel %vm3168, %v3009, %v3035
      %v3243 = vsel %vm3168, %v3010, %v3037
      %v3246 = vsel %vm3168, %v3011, %v3039
      %v3248 = vsel %vm3181, %v3237, %v3053
      %v3250 = vsel %vm3181, %v3240, %v3055
      %v3252 = vsel %vm3181, %v3243, %v3057
      %v3254 = vsel %vm3181, %v3246, %v3059
      %v3256 = vsel %vm3190, %v3248, %v3073
      %v3259 = vsel %vm3190, %v3250, %v3075
      %v3262 = vsel %vm3190, %v3252, %v3077
      %v3265 = vsel %vm3190, %v3254, %v3079
      %v3269 = vsel %vm3168, %v3096, %v3113
      %v3272 = vsel %vm3168, %v3097, %v3115
      %v3275 = vsel %vm3168, %v3098, %v3117
      %v3278 = vsel %vm3168, %v3099, %v3119
      %v3280 = vsel %vm3181, %v3269, %v3133
      %v3282 = vsel %vm3181, %v3272, %v3135
      %v3284 = vsel %vm3181, %v3275, %v3137
      %v3286 = vsel %vm3181, %v3278, %v3139
      %v3288 = vsel %vm3190, %v3280, %v3161
      %v3291 = vsel %vm3190, %v3282, %v3163
      %v3294 = vsel %vm3190, %v3284, %v3165
      %v3297 = vsel %vm3190, %v3286, %v3167
      %v3299 = vunpack.c.l.b16 %v2123
      %v3300 = vunpack.c.l.b16 %v2137
      %v3301 = vunpack.c.l.b16 %v2151
      %v3302 = vunpack.c.l.b16 %v2165
      %v3303 = vunpack.c.l.b16 %v2179
      %v3304 = vunpack.c.l.b16 %v2193
      %v3305 = vunpack.c.l.b16 %v2207
      %v3306 = vunpack.c.l.b16 %v2221
      %v3307 = vpack.c.b16 %v3300, %v3299
      %v3308 = vpack.c.b16 %v3302, %v3301
      %v3309 = vpack.c.b16 %v3304, %v3303
      %v3310 = vpack.c.b16 %v3306, %v3305
      %v3311 = vunpack.c.l.b16 %v2249
      %v3312 = vunpack.c.l.b16 %v2253
      %v3313 = vunpack.c.l.b16 %v2257
      %v3314 = vunpack.c.l.b16 %v2261
      %v3315 = vunpack.c.l.b16 %v2265
      %v3316 = vunpack.c.l.b16 %v2269
      %v3317 = vunpack.c.l.b16 %v2273
      %v3318 = vunpack.c.l.b16 %v2277
      %v3319 = vpack.c.b16 %v3312, %v3311
      %v3320 = vpack.c.b16 %v3314, %v3313
      %v3321 = vpack.c.b16 %v3316, %v3315
      %v3322 = vpack.c.b16 %v3318, %v3317
      %3323 = vrot.lane.b32.xlu0 %v3319, 32
      %v3324 = vpop.permute.xlu0 %3323
      %3325 = vrot.lane.b32.xlu0 %v3320, 32
      %v3326 = vpop.permute.xlu0 %3325
      %3327 = vrot.lane.b32.xlu0 %v3321, 32
      %v3328 = vpop.permute.xlu0 %3327
      %3329 = vrot.lane.b32.xlu0 %v3322, 32
      %v3330 = vpop.permute.xlu0 %3329
      %v3339 = vunpack.c.l.b16 %v2279
      %v3340 = vunpack.c.l.b16 %v2280
      %v3341 = vunpack.c.l.b16 %v2281
      %v3342 = vunpack.c.l.b16 %v2282
      %v3343 = vunpack.c.l.b16 %v2283
      %v3344 = vunpack.c.l.b16 %v2284
      %v3345 = vunpack.c.l.b16 %v2285
      %v3346 = vunpack.c.l.b16 %v2286
      %v3347 = vpack.c.b16 %v3340, %v3339
      %v3348 = vpack.c.b16 %v3342, %v3341
      %v3349 = vpack.c.b16 %v3344, %v3343
      %v3350 = vpack.c.b16 %v3346, %v3345
      %3351 = vrot.lane.b32.xlu0 %v3347, 64
      %v3352 = vpop.permute.xlu0 %3351
      %3353 = vrot.lane.b32.xlu0 %v3348, 64
      %v3354 = vpop.permute.xlu0 %3353
      %3355 = vrot.lane.b32.xlu0 %v3349, 64
      %v3356 = vpop.permute.xlu0 %3355
      %3357 = vrot.lane.b32.xlu0 %v3350, 64
      %v3358 = vpop.permute.xlu0 %3357
      %v3359 = vunpack.c.l.b16 %v2308
      %v3360 = vunpack.c.l.b16 %v2322
      %v3361 = vunpack.c.l.b16 %v2336
      %v3362 = vunpack.c.l.b16 %v2350
      %v3363 = vunpack.c.l.b16 %v2364
      %v3364 = vunpack.c.l.b16 %v2378
      %v3365 = vunpack.c.l.b16 %v2392
      %v3366 = vunpack.c.l.b16 %v2406
      %v3367 = vpack.c.b16 %v3360, %v3359
      %v3368 = vpack.c.b16 %v3362, %v3361
      %v3369 = vpack.c.b16 %v3364, %v3363
      %v3370 = vpack.c.b16 %v3366, %v3365
      %3371 = vrot.lane.b32.xlu0 %v3367, 96
      %v3372 = vpop.permute.xlu0 %3371
      %3373 = vrot.lane.b32.xlu0 %v3368, 96
      %v3374 = vpop.permute.xlu0 %3373
      %3375 = vrot.lane.b32.xlu0 %v3369, 96
      %v3376 = vpop.permute.xlu0 %3375
      %3377 = vrot.lane.b32.xlu0 %v3370, 96
      %v3378 = vpop.permute.xlu0 %3377
      %v3379 = vunpack.c.l.b16 %v2434
      %v3380 = vunpack.c.l.b16 %v2438
      %v3381 = vunpack.c.l.b16 %v2442
      %v3382 = vunpack.c.l.b16 %v2446
      %v3383 = vunpack.c.l.b16 %v2450
      %v3384 = vunpack.c.l.b16 %v2454
      %v3385 = vunpack.c.l.b16 %v2458
      %v3386 = vunpack.c.l.b16 %v2462
      %v3387 = vpack.c.b16 %v3380, %v3379
      %v3388 = vpack.c.b16 %v3382, %v3381
      %v3389 = vpack.c.b16 %v3384, %v3383
      %v3390 = vpack.c.b16 %v3386, %v3385
      %v3399 = vunpack.c.l.b16 %v2463
      %v3400 = vunpack.c.l.b16 %v2464
      %v3401 = vunpack.c.l.b16 %v2465
      %v3402 = vunpack.c.l.b16 %v2466
      %v3403 = vunpack.c.l.b16 %v2467
      %v3404 = vunpack.c.l.b16 %v2468
      %v3405 = vunpack.c.l.b16 %v2469
      %v3406 = vunpack.c.l.b16 %v2470
      %v3407 = vpack.c.b16 %v3400, %v3399
      %v3408 = vpack.c.b16 %v3402, %v3401
      %v3409 = vpack.c.b16 %v3404, %v3403
      %v3410 = vpack.c.b16 %v3406, %v3405
      %3411 = vrot.lane.b32.xlu0 %v3407, 32
      %v3412 = vpop.permute.xlu0 %3411
      %3413 = vrot.lane.b32.xlu0 %v3408, 32
      %v3414 = vpop.permute.xlu0 %3413
      %3415 = vrot.lane.b32.xlu0 %v3409, 32
      %v3416 = vpop.permute.xlu0 %3415
      %3417 = vrot.lane.b32.xlu0 %v3410, 32
      %v3418 = vpop.permute.xlu0 %3417
      %v3419 = vunpack.c.l.b16 %v2492
      %v3420 = vunpack.c.l.b16 %v2506
      %v3421 = vunpack.c.l.b16 %v2520
      %v3422 = vunpack.c.l.b16 %v2534
      %v3423 = vunpack.c.l.b16 %v2548
      %v3424 = vunpack.c.l.b16 %v2562
      %v3425 = vunpack.c.l.b16 %v2576
      %v3426 = vunpack.c.l.b16 %v2590
      %v3427 = vpack.c.b16 %v3420, %v3419
      %v3428 = vpack.c.b16 %v3422, %v3421
      %v3429 = vpack.c.b16 %v3424, %v3423
      %v3430 = vpack.c.b16 %v3426, %v3425
      %3431 = vrot.lane.b32.xlu0 %v3427, 64
      %v3432 = vpop.permute.xlu0 %3431
      %3433 = vrot.lane.b32.xlu0 %v3428, 64
      %v3434 = vpop.permute.xlu0 %3433
      %3435 = vrot.lane.b32.xlu0 %v3429, 64
      %v3436 = vpop.permute.xlu0 %3435
      %3437 = vrot.lane.b32.xlu0 %v3430, 64
      %v3438 = vpop.permute.xlu0 %3437
      %v3439 = vunpack.c.l.b16 %v2618
      %v3440 = vunpack.c.l.b16 %v2622
      %v3441 = vunpack.c.l.b16 %v2626
      %v3442 = vunpack.c.l.b16 %v2630
      %v3443 = vunpack.c.l.b16 %v2634
      %v3444 = vunpack.c.l.b16 %v2638
      %v3445 = vunpack.c.l.b16 %v2642
      %v3446 = vunpack.c.l.b16 %v2646
      %v3447 = vpack.c.b16 %v3440, %v3439
      %v3448 = vpack.c.b16 %v3442, %v3441
      %v3449 = vpack.c.b16 %v3444, %v3443
      %v3450 = vpack.c.b16 %v3446, %v3445
      %3451 = vrot.lane.b32.xlu0 %v3447, 96
      %v3452 = vpop.permute.xlu0 %3451
      %3453 = vrot.lane.b32.xlu0 %v3448, 96
      %v3454 = vpop.permute.xlu0 %3453
      %3455 = vrot.lane.b32.xlu0 %v3449, 96
      %v3456 = vpop.permute.xlu0 %3455
      %3457 = vrot.lane.b32.xlu0 %v3450, 96
      %v3458 = vpop.permute.xlu0 %3457
      %v3467 = vunpack.c.l.b16 %v2648
      %v3468 = vunpack.c.l.b16 %v2649
      %v3469 = vunpack.c.l.b16 %v2650
      %v3470 = vunpack.c.l.b16 %v2651
      %v3471 = vunpack.c.l.b16 %v2652
      %v3472 = vunpack.c.l.b16 %v2653
      %v3473 = vunpack.c.l.b16 %v2654
      %v3474 = vunpack.c.l.b16 %v2655
      %v3475 = vpack.c.b16 %v3468, %v3467
      %v3476 = vpack.c.b16 %v3470, %v3469
      %v3477 = vpack.c.b16 %v3472, %v3471
      %v3478 = vpack.c.b16 %v3474, %v3473
      %v3479 = vunpack.c.l.b16 %v2677
      %v3480 = vunpack.c.l.b16 %v2691
      %v3481 = vunpack.c.l.b16 %v2705
      %v3482 = vunpack.c.l.b16 %v2719
      %v3483 = vunpack.c.l.b16 %v2733
      %v3484 = vunpack.c.l.b16 %v2747
      %v3485 = vunpack.c.l.b16 %v2761
      %v3486 = vunpack.c.l.b16 %v2775
      %v3487 = vpack.c.b16 %v3480, %v3479
      %v3488 = vpack.c.b16 %v3482, %v3481
      %v3489 = vpack.c.b16 %v3484, %v3483
      %v3490 = vpack.c.b16 %v3486, %v3485
      %3491 = vrot.lane.b32.xlu0 %v3487, 32
      %v3492 = vpop.permute.xlu0 %3491
      %3493 = vrot.lane.b32.xlu0 %v3488, 32
      %v3494 = vpop.permute.xlu0 %3493
      %3495 = vrot.lane.b32.xlu0 %v3489, 32
      %v3496 = vpop.permute.xlu0 %3495
      %3497 = vrot.lane.b32.xlu0 %v3490, 32
      %v3498 = vpop.permute.xlu0 %3497
      %v3499 = vunpack.c.l.b16 %v2803
      %v3500 = vunpack.c.l.b16 %v2807
      %v3501 = vunpack.c.l.b16 %v2811
      %v3502 = vunpack.c.l.b16 %v2815
      %v3503 = vunpack.c.l.b16 %v2819
      %v3504 = vunpack.c.l.b16 %v2823
      %v3505 = vunpack.c.l.b16 %v2827
      %v3506 = vunpack.c.l.b16 %v2831
      %v3507 = vpack.c.b16 %v3500, %v3499
      %v3508 = vpack.c.b16 %v3502, %v3501
      %v3509 = vpack.c.b16 %v3504, %v3503
      %v3510 = vpack.c.b16 %v3506, %v3505
      %3511 = vrot.lane.b32.xlu0 %v3507, 64
      %v3512 = vpop.permute.xlu0 %3511
      %3513 = vrot.lane.b32.xlu0 %v3508, 64
      %v3514 = vpop.permute.xlu0 %3513
      %3515 = vrot.lane.b32.xlu0 %v3509, 64
      %v3516 = vpop.permute.xlu0 %3515
      %3517 = vrot.lane.b32.xlu0 %v3510, 64
      %v3518 = vpop.permute.xlu0 %3517
      %v3521 = vsel %vm3168, %v3307, %v3324
      %v3524 = vsel %vm3168, %v3308, %v3326
      %v3527 = vsel %vm3168, %v3309, %v3328
      %v3530 = vsel %vm3168, %v3310, %v3330
      %v3532 = vsel %vm3181, %v3521, %v3352
      %v3534 = vsel %vm3181, %v3524, %v3354
      %v3536 = vsel %vm3181, %v3527, %v3356
      %v3538 = vsel %vm3181, %v3530, %v3358
      %v3540 = vsel %vm3190, %v3532, %v3372
      %v3543 = vsel %vm3190, %v3534, %v3374
      %v3546 = vsel %vm3190, %v3536, %v3376
      %v3549 = vsel %vm3190, %v3538, %v3378
      %v3553 = vsel %vm3168, %v3387, %v3412
      %v3556 = vsel %vm3168, %v3388, %v3414
      %v3559 = vsel %vm3168, %v3389, %v3416
      %v3562 = vsel %vm3168, %v3390, %v3418
      %v3564 = vsel %vm3181, %v3553, %v3432
      %v3566 = vsel %vm3181, %v3556, %v3434
      %v3568 = vsel %vm3181, %v3559, %v3436
      %v3570 = vsel %vm3181, %v3562, %v3438
      %v3572 = vsel %vm3190, %v3564, %v3452
      %v3575 = vsel %vm3190, %v3566, %v3454
      %v3578 = vsel %vm3190, %v3568, %v3456
      %v3581 = vsel %vm3190, %v3570, %v3458
      %v3585 = vsel %vm3168, %v3475, %v3492
      %v3588 = vsel %vm3168, %v3476, %v3494
      %v3591 = vsel %vm3168, %v3477, %v3496
      %v3594 = vsel %vm3168, %v3478, %v3498
      %v3596 = vsel %vm3181, %v3585, %v3512
      %v3598 = vsel %vm3181, %v3588, %v3514
      %v3600 = vsel %vm3181, %v3591, %v3516
      %v3602 = vsel %vm3181, %v3594, %v3518
      %v3603 = vld [vmem:[%s4] sm:$0xf]
      %v3604 = vld [vmem:[%s4 + $0x4] sm:$0xf]
      %v3605 = vld [vmem:[%s4 + $0x8] sm:$0xf]
      %v3606 = vld [vmem:[%s4 + $0xc] sm:$0xf]
      %v3607 = vld [vmem:[%s4 + $0x10] sm:$0xf]
      %v3608 = vld [vmem:[%s4 + $0x14] sm:$0xf]
      %v3609 = vld [vmem:[%s4 + $0x18] sm:$0xf]
      %v3610 = vld [vmem:[%s4 + $0x1c] sm:$0xf]
      %v3611 = vld [vmem:[%s4 + $0x20] sm:$0xf]
      %v3612 = vld [vmem:[%s4 + $0x24] sm:$0xf]
      %v3613 = vld [vmem:[%s4 + $0x28] sm:$0xf]
      %v3614 = vld [vmem:[%s4 + $0x2c] sm:$0xf]
      %v3615 = vld [vmem:[%s4 + $0x30] sm:$0xf]
      %v3616 = vld [vmem:[%s4 + $0x34] sm:$0xf]
      %v3617 = vld [vmem:[%s4 + $0x38] sm:$0xf]
      %v3618 = vld [vmem:[%s4 + $0x3c] sm:$0xf]
      %v3619 = vld [vmem:[%s4 + $0x40] sm:$0xf]
      %v3620 = vld [vmem:[%s4 + $0x44] sm:$0xf]
      %v3621 = vld [vmem:[%s4 + $0x48] sm:$0xf]
      %v3622 = vld [vmem:[%s4 + $0x4c] sm:$0xf]
      %v3623 = vld [vmem:[%s4 + $0x50] sm:$0xf]
      %v3624 = vld [vmem:[%s4 + $0x54] sm:$0xf]
      %v3625 = vld [vmem:[%s4 + $0x58] sm:$0xf]
      %v3626 = vld [vmem:[%s4 + $0x5c] sm:$0xf]
      %v3627 = vld [vmem:[%s4 + $0x60] sm:$0xf]
      %v3628 = vld [vmem:[%s4 + $0x64] sm:$0xf]
      %v3629 = vld [vmem:[%s4 + $0x68] sm:$0xf]
      %v3630 = vld [vmem:[%s4 + $0x6c] sm:$0xf]
      %v3631 = vld [vmem:[%s4 + $0x70] sm:$0xf]
      %v3632 = vld [vmem:[%s4 + $0x74] sm:$0xf]
      %v3633 = vld [vmem:[%s4 + $0x78] sm:$0xf]
      %v3634 = vld [vmem:[%s4 + $0x7c] sm:$0xf]
      %v3635 = vld [vmem:[%s4 + $0x80] sm:$0xf]
      %v3636 = vld [vmem:[%s4 + $0x84] sm:$0xf]
      %v3637 = vld [vmem:[%s4 + $0x88] sm:$0xf]
      %v3638 = vld [vmem:[%s4 + $0x8c] sm:$0xf]
      %v3639 = vld [vmem:[%s4 + $0x90] sm:$0xf]
      %v3640 = vld [vmem:[%s4 + $0x94] sm:$0xf]
      %v3641 = vld [vmem:[%s4 + $0x98] sm:$0xf]
      %v3642 = vld [vmem:[%s4 + $0x9c] sm:$0xf]
      %v3643 = vld [vmem:[%s4 + $0xa0] sm:$0xf]
      %v3644 = vld [vmem:[%s4 + $0xa4] sm:$0xf]
      %v3645 = vld [vmem:[%s4 + $0xa8] sm:$0xf]
      %v3646 = vld [vmem:[%s4 + $0xac] sm:$0xf]
      %v3647 = vld [vmem:[%s4 + $0xb0] sm:$0xf]
      %v3648 = vld [vmem:[%s4 + $0xb4] sm:$0xf]
      %v3649 = vld [vmem:[%s4 + $0xb8] sm:$0xf]
      %v3650 = vld [vmem:[%s4 + $0xbc] sm:$0xf]
      %v3651 = vld [vmem:[%s4 + $0xc0] sm:$0xf]
      %v3652 = vld [vmem:[%s4 + $0xc4] sm:$0xf]
      %v3653 = vld [vmem:[%s4 + $0xc8] sm:$0xf]
      %v3654 = vld [vmem:[%s4 + $0xcc] sm:$0xf]
      %v3655 = vld [vmem:[%s4 + $0xd0] sm:$0xf]
      %v3656 = vld [vmem:[%s4 + $0xd4] sm:$0xf]
      %v3657 = vld [vmem:[%s4 + $0xd8] sm:$0xf]
      %v3658 = vld [vmem:[%s4 + $0xdc] sm:$0xf]
      %v3659 = vld [vmem:[%s4 + $0xe0] sm:$0xf]
      %v3660 = vld [vmem:[%s4 + $0xe4] sm:$0xf]
      %v3661 = vld [vmem:[%s4 + $0xe8] sm:$0xf]
      %v3662 = vld [vmem:[%s4 + $0xec] sm:$0xf]
      %v3663 = vld [vmem:[%s4 + $0xf0] sm:$0xf]
      %v3664 = vld [vmem:[%s4 + $0xf4] sm:$0xf]
      %v3665 = vld [vmem:[%s4 + $0xf8] sm:$0xf]
      %v3666 = vld [vmem:[%s4 + $0xfc] sm:$0xf]
      %v3667 = vld [vmem:[%s4 + $0x100] sm:$0xf]
      %v3668 = vld [vmem:[%s4 + $0x104] sm:$0xf]
      %v3669 = vld [vmem:[%s4 + $0x108] sm:$0xf]
      %v3670 = vld [vmem:[%s4 + $0x10c] sm:$0xf]
      %v3671 = vld [vmem:[%s4 + $0x110] sm:$0xf]
      %v3672 = vld [vmem:[%s4 + $0x114] sm:$0xf]
      %v3673 = vld [vmem:[%s4 + $0x118] sm:$0xf]
      %v3674 = vld [vmem:[%s4 + $0x11c] sm:$0xf]
      %v3675 = vld [vmem:[%s4 + $0x120] sm:$0xf]
      %v3676 = vld [vmem:[%s4 + $0x124] sm:$0xf]
      %v3677 = vld [vmem:[%s4 + $0x128] sm:$0xf]
      %v3678 = vld [vmem:[%s4 + $0x12c] sm:$0xf]
      %v3679 = vld [vmem:[%s4 + $0x130] sm:$0xf]
      %v3680 = vld [vmem:[%s4 + $0x134] sm:$0xf]
      %v3681 = vld [vmem:[%s4 + $0x138] sm:$0xf]
      %v3682 = vld [vmem:[%s4 + $0x13c] sm:$0xf]
      %v3683 = vld [vmem:[%s4 + $0x140] sm:$0xf]
      %v3684 = vld [vmem:[%s4 + $0x144] sm:$0xf]
      %v3685 = vld [vmem:[%s4 + $0x148] sm:$0xf]
      %v3686 = vld [vmem:[%s4 + $0x14c] sm:$0xf]
      %v3687 = vld [vmem:[%s4 + $0x150] sm:$0xf]
      %v3688 = vld [vmem:[%s4 + $0x154] sm:$0xf]
      %v3689 = vld [vmem:[%s4 + $0x158] sm:$0xf]
      %v3690 = vld [vmem:[%s4 + $0x15c] sm:$0xf]
      %v3691 = vld [vmem:[%s4 + $0x160] sm:$0xf]
      %v3692 = vld [vmem:[%s4 + $0x164] sm:$0xf]
      %v3693 = vld [vmem:[%s4 + $0x168] sm:$0xf]
      %v3694 = vld [vmem:[%s4 + $0x16c] sm:$0xf]
      %v3695 = vld [vmem:[%s4 + $0x170] sm:$0xf]
      %v3696 = vld [vmem:[%s4 + $0x174] sm:$0xf]
      %v3697 = vld [vmem:[%s4 + $0x178] sm:$0xf]
      %v3698 = vld [vmem:[%s4 + $0x17c] sm:$0xf]
      %v3699 = vld [vmem:[%s4 + $0x180] sm:$0xf]
      %v3700 = vld [vmem:[%s4 + $0x184] sm:$0xf]
      %v3701 = vld [vmem:[%s4 + $0x188] sm:$0xf]
      %v3702 = vld [vmem:[%s4 + $0x18c] sm:$0xf]
      %v3703 = vld [vmem:[%s4 + $0x190] sm:$0xf]
      %v3704 = vld [vmem:[%s4 + $0x194] sm:$0xf]
      %v3705 = vld [vmem:[%s4 + $0x198] sm:$0xf]
      %v3706 = vld [vmem:[%s4 + $0x19c] sm:$0xf]
      %v3707 = vld [vmem:[%s4 + $0x1a0] sm:$0xf]
      %v3708 = vld [vmem:[%s4 + $0x1a4] sm:$0xf]
      %v3709 = vld [vmem:[%s4 + $0x1a8] sm:$0xf]
      %v3710 = vld [vmem:[%s4 + $0x1ac] sm:$0xf]
      %v3711 = vld [vmem:[%s5] sm:$0x1]
      %v3713 = vlaneseq
      %v3714 = vshrl.u32 %v3713, 7
      %v3715 = vsub.s32 0, %v3714
      %v3716 = vrot.slane %v3711, %v3715
      %v3826 = vunpack.c.l.b16 %v3603
      %v3827 = vunpack.c.l.b16 %v3604
      %v3828 = vunpack.c.l.b16 %v3605
      %v3829 = vunpack.c.l.b16 %v3606
      %v3830 = vunpack.c.l.b16 %v3607
      %v3831 = vunpack.c.l.b16 %v3608
      %v3832 = vunpack.c.l.b16 %v3609
      %v3833 = vunpack.c.l.b16 %v3610
      %v3834 = vunpack.c.l.b16 %v3611
      %v3835 = vunpack.c.l.b16 %v3612
      %v3836 = vunpack.c.l.b16 %v3613
      %v3837 = vunpack.c.l.b16 %v3614
      %v3838 = vunpack.c.l.b16 %v3615
      %v3839 = vunpack.c.l.b16 %v3616
      %v3840 = vunpack.c.l.b16 %v3617
      %v3841 = vunpack.c.l.b16 %v3618
      %v3842 = vunpack.c.l.b16 %v3619
      %v3843 = vunpack.c.l.b16 %v3620
      %v3844 = vunpack.c.l.b16 %v3621
      %v3845 = vunpack.c.l.b16 %v3622
      %v3846 = vunpack.c.l.b16 %v3623
      %v3847 = vunpack.c.l.b16 %v3624
      %v3848 = vunpack.c.l.b16 %v3625
      %v3849 = vunpack.c.l.b16 %v3626
      %v3850 = vunpack.c.l.b16 %v3627
      %v3851 = vunpack.c.l.b16 %v3628
      %v3852 = vunpack.c.l.b16 %v3629
      %v3853 = vunpack.c.l.b16 %v3630
      %v3854 = vunpack.c.l.b16 %v3631
      %v3855 = vunpack.c.l.b16 %v3632
      %v3856 = vunpack.c.l.b16 %v3633
      %v3857 = vunpack.c.l.b16 %v3634
      %v3858 = vunpack.c.l.b16 %v3635
      %v3859 = vunpack.c.l.b16 %v3636
      %v3860 = vunpack.c.l.b16 %v3637
      %v3861 = vunpack.c.l.b16 %v3638
      %v3862 = vunpack.c.l.b16 %v3639
      %v3863 = vunpack.c.l.b16 %v3640
      %v3864 = vunpack.c.l.b16 %v3641
      %v3865 = vunpack.c.l.b16 %v3642
      %v3866 = vunpack.c.l.b16 %v3643
      %v3867 = vunpack.c.l.b16 %v3644
      %v3868 = vunpack.c.l.b16 %v3645
      %v3869 = vunpack.c.l.b16 %v3646
      %v3870 = vunpack.c.l.b16 %v3647
      %v3871 = vunpack.c.l.b16 %v3648
      %v3872 = vunpack.c.l.b16 %v3649
      %v3873 = vunpack.c.l.b16 %v3650
      %v3874 = vunpack.c.l.b16 %v3651
      %v3875 = vunpack.c.l.b16 %v3652
      %v3876 = vunpack.c.l.b16 %v3653
      %v3877 = vunpack.c.l.b16 %v3654
      %v3878 = vunpack.c.l.b16 %v3655
      %v3879 = vunpack.c.l.b16 %v3656
      %v3880 = vunpack.c.l.b16 %v3657
      %v3881 = vunpack.c.l.b16 %v3658
      %v3882 = vunpack.c.l.b16 %v3659
      %v3883 = vunpack.c.l.b16 %v3660
      %v3884 = vunpack.c.l.b16 %v3661
      %v3885 = vunpack.c.l.b16 %v3662
      %v3886 = vunpack.c.l.b16 %v3663
      %v3887 = vunpack.c.l.b16 %v3664
      %v3888 = vunpack.c.l.b16 %v3665
      %v3889 = vunpack.c.l.b16 %v3666
      %v3890 = vunpack.c.l.b16 %v3667
      %v3891 = vunpack.c.l.b16 %v3668
      %v3892 = vunpack.c.l.b16 %v3669
      %v3893 = vunpack.c.l.b16 %v3670
      %v3894 = vunpack.c.l.b16 %v3671
      %v3895 = vunpack.c.l.b16 %v3672
      %v3896 = vunpack.c.l.b16 %v3673
      %v3897 = vunpack.c.l.b16 %v3674
      %v3898 = vunpack.c.l.b16 %v3675
      %v3899 = vunpack.c.l.b16 %v3676
      %v3900 = vunpack.c.l.b16 %v3677
      %v3901 = vunpack.c.l.b16 %v3678
      %v3902 = vunpack.c.l.b16 %v3679
      %v3903 = vunpack.c.l.b16 %v3680
      %v3904 = vunpack.c.l.b16 %v3681
      %v3905 = vunpack.c.l.b16 %v3682
      %v3906 = vunpack.c.l.b16 %v3683
      %v3907 = vunpack.c.l.b16 %v3684
      %v3908 = vunpack.c.l.b16 %v3685
      %v3909 = vunpack.c.l.b16 %v3686
      %v3910 = vunpack.c.l.b16 %v3687
      %v3911 = vunpack.c.l.b16 %v3688
      %v3912 = vunpack.c.l.b16 %v3689
      %v3913 = vunpack.c.l.b16 %v3690
      %v3914 = vunpack.c.l.b16 %v3691
      %v3915 = vunpack.c.l.b16 %v3692
      %v3916 = vunpack.c.l.b16 %v3693
      %v3917 = vunpack.c.l.b16 %v3694
      %v3918 = vunpack.c.l.b16 %v3695
      %v3919 = vunpack.c.l.b16 %v3696
      %v3920 = vunpack.c.l.b16 %v3697
      %v3921 = vunpack.c.l.b16 %v3698
      %v3922 = vunpack.c.l.b16 %v3699
      %v3923 = vunpack.c.l.b16 %v3700
      %v3924 = vunpack.c.l.b16 %v3701
      %v3925 = vunpack.c.l.b16 %v3702
      %v3926 = vunpack.c.l.b16 %v3703
      %v3927 = vunpack.c.l.b16 %v3704
      %v3928 = vunpack.c.l.b16 %v3705
      %v3929 = vunpack.c.l.b16 %v3706
      %v3930 = vunpack.c.l.b16 %v3707
      %v3931 = vunpack.c.l.b16 %v3708
      %v3932 = vunpack.c.l.b16 %v3709
      %v3933 = vunpack.c.l.b16 %v3710
      %v3934 = vpack.c.b16 %v3827, %v3826
      %v3935 = vpack.c.b16 %v3829, %v3828
      %v3936 = vpack.c.b16 %v3831, %v3830
      %v3937 = vpack.c.b16 %v3833, %v3832
      %v3938 = vpack.c.b16 %v3835, %v3834
      %v3939 = vpack.c.b16 %v3837, %v3836
      %v3940 = vpack.c.b16 %v3839, %v3838
      %v3941 = vpack.c.b16 %v3841, %v3840
      %v3942 = vpack.c.b16 %v3843, %v3842
      %v3943 = vpack.c.b16 %v3845, %v3844
      %v3944 = vpack.c.b16 %v3847, %v3846
      %v3945 = vpack.c.b16 %v3849, %v3848
      %v3946 = vpack.c.b16 %v3851, %v3850
      %v3947 = vpack.c.b16 %v3853, %v3852
      %v3948 = vpack.c.b16 %v3855, %v3854
      %v3949 = vpack.c.b16 %v3857, %v3856
      %v3950 = vpack.c.b16 %v3859, %v3858
      %v3951 = vpack.c.b16 %v3861, %v3860
      %v3952 = vpack.c.b16 %v3863, %v3862
      %v3953 = vpack.c.b16 %v3865, %v3864
      %v3954 = vpack.c.b16 %v3867, %v3866
      %v3955 = vpack.c.b16 %v3869, %v3868
      %v3956 = vpack.c.b16 %v3871, %v3870
      %v3957 = vpack.c.b16 %v3873, %v3872
      %v3958 = vpack.c.b16 %v3875, %v3874
      %v3959 = vpack.c.b16 %v3877, %v3876
      %v3960 = vpack.c.b16 %v3879, %v3878
      %v3961 = vpack.c.b16 %v3881, %v3880
      %v3962 = vpack.c.b16 %v3883, %v3882
      %v3963 = vpack.c.b16 %v3885, %v3884
      %v3964 = vpack.c.b16 %v3887, %v3886
      %v3965 = vpack.c.b16 %v3889, %v3888
      %v3966 = vpack.c.b16 %v3891, %v3890
      %v3967 = vpack.c.b16 %v3893, %v3892
      %v3968 = vpack.c.b16 %v3895, %v3894
      %v3969 = vpack.c.b16 %v3897, %v3896
      %v3970 = vpack.c.b16 %v3899, %v3898
      %v3971 = vpack.c.b16 %v3901, %v3900
      %v3972 = vpack.c.b16 %v3903, %v3902
      %v3973 = vpack.c.b16 %v3905, %v3904
      %v3974 = vpack.c.b16 %v3907, %v3906
      %v3975 = vpack.c.b16 %v3909, %v3908
      %v3976 = vpack.c.b16 %v3911, %v3910
      %v3977 = vpack.c.b16 %v3913, %v3912
      %v3978 = vpack.c.b16 %v3915, %v3914
      %v3979 = vpack.c.b16 %v3917, %v3916
      %v3980 = vpack.c.b16 %v3919, %v3918
      %v3981 = vpack.c.b16 %v3921, %v3920
      %v3982 = vpack.c.b16 %v3923, %v3922
      %v3983 = vpack.c.b16 %v3925, %v3924
      %v3984 = vpack.c.b16 %v3927, %v3926
      %v3985 = vpack.c.b16 %v3929, %v3928
      %v3986 = vpack.c.b16 %v3931, %v3930
      %v3987 = vpack.c.b16 %v3933, %v3932
      %v4042 = vsel %vm3190, %v3596, 0
      %v4044 = vsel %vm3190, %v3598, 0
      %v4046 = vsel %vm3190, %v3600, 0
      %v4048 = vsel %vm3190, %v3602, 0
      %4050 = vmatprep.subr.bf16.mxu0 0
      %4051 = vmatpush1.bf16.msra.mxu0 %v3934
      %4052 = vmatprep.subr.bf16.mxu0 0
      %4053 = vmatpush1.bf16.msra.mxu0 %v3935
      %4054 = vmatprep.subr.bf16.mxu0 0
      %4055 = vmatpush1.bf16.msra.mxu0 %v3936
      %4056 = vmatprep.subr.bf16.mxu0 0
      %4057 = vmatpush1.bf16.msra.mxu0 %v3937
      %4058 = vmatprep.subr.bf16.mxu0 0
      %4059 = vmatpush1.bf16.msra.mxu0 %v3938
      %4060 = vmatprep.subr.bf16.mxu0 0
      %4061 = vmatpush1.bf16.msra.mxu0 %v3939
      %4062 = vmatprep.subr.bf16.mxu0 0
      %4063 = vmatpush1.bf16.msra.mxu0 %v3940
      %4064 = vmatprep.subr.bf16.mxu0 0
      %4065 = vmatpush1.bf16.msra.mxu0 %v3941
      %4066 = vmatprep.subr.bf16.mxu0 0
      %4067 = vmatpush1.bf16.msra.mxu0 %v3942
      %4068 = vmatprep.subr.bf16.mxu0 0
      %4069 = vmatpush1.bf16.msra.mxu0 %v3943
      %4070 = vmatprep.subr.bf16.mxu0 0
      %4071 = vmatpush1.bf16.msra.mxu0 %v3944
      %4072 = vmatprep.subr.bf16.mxu0 0
      %4073 = vmatpush1.bf16.msra.mxu0 %v3945
      %4074 = vmatprep.subr.bf16.mxu0 0
      %4075 = vmatpush1.bf16.msra.mxu0 %v3946
      %4076 = vmatprep.subr.bf16.mxu0 0
      %4077 = vmatpush1.bf16.msra.mxu0 %v3947
      %4078 = vmatprep.subr.bf16.mxu0 0
      %4079 = vmatpush1.bf16.msra.mxu0 %v3948
      %4080 = vmatprep.subr.bf16.mxu0 0
      %4081 = vmatpush1.bf16.msra.mxu0 %v3949
      %4082 = vmatprep.mubr.bf16.mxu0 %v3224
      %4083 = vmatmul.mubr.bf16.gmra.mrb[0].mxu0 %v3192
      %v4084 = vpop.f32.mrb[0].mxu0
      %v4085 = vadd.f32 %v3716, %v4084
      %v4086 = vpop.f32.mrb[0].mxu0
      %v4087 = vpop.f32.mrb[0].mxu0
      %v4088 = vadd.f32 %v3716, %v4087
      %v4089 = vpop.f32.mrb[0].mxu0
      %4090 = vmatprep.mubr.bf16.mxu0 %v3227
      %4091 = vmatmul.mubr.bf16.gmra.mrb[0].mxu0 %v3195
      %v4092 = vpop.f32.mrb[0].mxu0
      %v4093 = vadd.f32 %v3716, %v4092
      %v4094 = vpop.f32.mrb[0].mxu0
      %v4095 = vpop.f32.mrb[0].mxu0
      %v4096 = vadd.f32 %v3716, %v4095
      %v4097 = vpop.f32.mrb[0].mxu0
      %4098 = vmatprep.mubr.bf16.mxu0 %v3230
      %4099 = vmatmul.mubr.bf16.gmra.mrb[0].mxu0 %v3198
      %v4100 = vpop.f32.mrb[0].mxu0
      %v4101 = vadd.f32 %v3716, %v4100
      %v4102 = vpop.f32.mrb[0].mxu0
      %v4103 = vpop.f32.mrb[0].mxu0
      %v4104 = vadd.f32 %v3716, %v4103
      %v4105 = vpop.f32.mrb[0].mxu0
      %4106 = vmatprep.mubr.bf16.mxu0 %v3233
      %4107 = vmatmul.mubr.bf16.gmra.mrb[0].mxu0 %v3201
      %v4108 = vpop.f32.mrb[0].mxu0
      %v4109 = vadd.f32 %v3716, %v4108
      %v4110 = vpop.f32.mrb[0].mxu0
      %v4111 = vpop.f32.mrb[0].mxu0
      %v4112 = vadd.f32 %v3716, %v4111
      %v4113 = vpop.f32.mrb[0].mxu0
      %4114 = vdwg.mxu0
      %4115 = vmatprep.subr.bf16.mxu0 0
      %4116 = vmatpush1.bf16.msra.mxu0 %v3950
      %4117 = vmatprep.subr.bf16.mxu0 0
      %4118 = vmatpush1.bf16.msra.mxu0 %v3951
      %4119 = vmatprep.subr.bf16.mxu0 0
      %4120 = vmatpush1.bf16.msra.mxu0 %v3952
      %4121 = vmatprep.subr.bf16.mxu0 0
      %4122 = vmatpush1.bf16.msra.mxu0 %v3953
      %4123 = vmatprep.subr.bf16.mxu0 0
      %4124 = vmatpush1.bf16.msra.mxu0 %v3954
      %4125 = vmatprep.subr.bf16.mxu0 0
      %4126 = vmatpush1.bf16.msra.mxu0 %v3955
      %4127 = vmatprep.subr.bf16.mxu0 0
      %4128 = vmatpush1.bf16.msra.mxu0 %v3956
      %4129 = vmatprep.subr.bf16.mxu0 0
      %4130 = vmatpush1.bf16.msra.mxu0 %v3957
      %4131 = vmatprep.subr.bf16.mxu0 0
      %4132 = vmatpush1.bf16.msra.mxu0 %v3958
      %4133 = vmatprep.subr.bf16.mxu0 0
      %4134 = vmatpush1.bf16.msra.mxu0 %v3959
      %4135 = vmatprep.subr.bf16.mxu0 0
      %4136 = vmatpush1.bf16.msra.mxu0 %v3960
      %4137 = vmatprep.subr.bf16.mxu0 0
      %4138 = vmatpush1.bf16.msra.mxu0 %v3961
      %4139 = vmatprep.subr.bf16.mxu0 0
      %4140 = vmatpush1.bf16.msra.mxu0 %v3962
      %4141 = vmatprep.subr.bf16.mxu0 0
      %4142 = vmatpush1.bf16.msra.mxu0 %v3963
      %4143 = vmatprep.subr.bf16.mxu0 0
      %4144 = vmatpush1.bf16.msra.mxu0 %v3964
      %4145 = vmatprep.subr.bf16.mxu0 0
      %4146 = vmatpush1.bf16.msra.mxu0 %v3965
      %4147 = vmatprep.mubr.bf16.mxu0 %v3288
      %4148 = vmatmul.mubr.bf16.gmra.mrb[0].mxu0 %v3256
      %v4149 = vpop.f32.mrb[0].mxu0
      %v4150 = vadd.f32 %v4085, %v4149
      %v4151 = vpop.f32.mrb[0].mxu0
      %v4152 = vpop.f32.mrb[0].mxu0
      %v4153 = vadd.f32 %v4088, %v4152
      %v4154 = vpop.f32.mrb[0].mxu0
      %4155 = vmatprep.mubr.bf16.mxu0 %v3291
      %4156 = vmatmul.mubr.bf16.gmra.mrb[0].mxu0 %v3259
      %v4157 = vpop.f32.mrb[0].mxu0
      %v4158 = vadd.f32 %v4093, %v4157
      %v4159 = vpop.f32.mrb[0].mxu0
      %v4160 = vpop.f32.mrb[0].mxu0
      %v4161 = vadd.f32 %v4096, %v4160
      %v4162 = vpop.f32.mrb[0].mxu0
      %4163 = vmatprep.mubr.bf16.mxu0 %v3294
      %4164 = vmatmul.mubr.bf16.gmra.mrb[0].mxu0 %v3262
      %v4165 = vpop.f32.mrb[0].mxu0
      %v4166 = vadd.f32 %v4101, %v4165
      %v4167 = vpop.f32.mrb[0].mxu0
      %v4168 = vpop.f32.mrb[0].mxu0
      %v4169 = vadd.f32 %v4104, %v4168
      %v4170 = vpop.f32.mrb[0].mxu0
      %4171 = vmatprep.mubr.bf16.mxu0 %v3297
      %4172 = vmatmul.mubr.bf16.gmra.mrb[0].mxu0 %v3265
      %v4173 = vpop.f32.mrb[0].mxu0
      %v4174 = vadd.f32 %v4109, %v4173
      %v4175 = vpop.f32.mrb[0].mxu0
      %v4176 = vpop.f32.mrb[0].mxu0
      %v4177 = vadd.f32 %v4112, %v4176
      %v4178 = vpop.f32.mrb[0].mxu0
      %4179 = vdwg.mxu0
      %4180 = vmatprep.subr.bf16.mxu0 0
      %4181 = vmatpush1.bf16.msra.mxu0 %v3966
      %4182 = vmatprep.subr.bf16.mxu0 0
      %4183 = vmatpush1.bf16.msra.mxu0 %v3967
      %4184 = vmatprep.subr.bf16.mxu0 0
      %4185 = vmatpush1.bf16.msra.mxu0 %v3968
      %4186 = vmatprep.subr.bf16.mxu0 0
      %4187 = vmatpush1.bf16.msra.mxu0 %v3969
      %4188 = vmatprep.subr.bf16.mxu0 0
      %4189 = vmatpush1.bf16.msra.mxu0 %v3970
      %4190 = vmatprep.subr.bf16.mxu0 0
      %4191 = vmatpush1.bf16.msra.mxu0 %v3971
      %4192 = vmatprep.subr.bf16.mxu0 0
      %4193 = vmatpush1.bf16.msra.mxu0 %v3972
      %4194 = vmatprep.subr.bf16.mxu0 0
      %4195 = vmatpush1.bf16.msra.mxu0 %v3973
      %4196 = vmatprep.subr.bf16.mxu0 0
      %4197 = vmatpush1.bf16.msra.mxu0 %v3974
      %4198 = vmatprep.subr.bf16.mxu0 0
      %4199 = vmatpush1.bf16.msra.mxu0 %v3975
      %4200 = vmatprep.subr.bf16.mxu0 0
      %4201 = vmatpush1.bf16.msra.mxu0 %v3976
      %4202 = vmatprep.subr.bf16.mxu0 0
      %4203 = vmatpush1.bf16.msra.mxu0 %v3977
      %4204 = vmatprep.subr.bf16.mxu0 0
      %4205 = vmatpush1.bf16.msra.mxu0 %v3978
      %4206 = vmatprep.subr.bf16.mxu0 0
      %4207 = vmatpush1.bf16.msra.mxu0 %v3979
      %4208 = vmatprep.subr.bf16.mxu0 0
      %4209 = vmatpush1.bf16.msra.mxu0 %v3980
      %4210 = vmatprep.subr.bf16.mxu0 0
      %4211 = vmatpush1.bf16.msra.mxu0 %v3981
      %4212 = vmatprep.mubr.bf16.mxu0 %v3572
      %4213 = vmatmul.mubr.bf16.gmra.mrb[0].mxu0 %v3540
      %v4214 = vpop.f32.mrb[0].mxu0
      %v4215 = vadd.f32 %v4150, %v4214
      %v4216 = vpop.f32.mrb[0].mxu0
      %v4217 = vpop.f32.mrb[0].mxu0
      %v4218 = vadd.f32 %v4153, %v4217
      %v4219 = vpop.f32.mrb[0].mxu0
      %4220 = vmatprep.mubr.bf16.mxu0 %v3575
      %4221 = vmatmul.mubr.bf16.gmra.mrb[0].mxu0 %v3543
      %v4222 = vpop.f32.mrb[0].mxu0
      %v4223 = vadd.f32 %v4158, %v4222
      %v4224 = vpop.f32.mrb[0].mxu0
      %v4225 = vpop.f32.mrb[0].mxu0
      %v4226 = vadd.f32 %v4161, %v4225
      %v4227 = vpop.f32.mrb[0].mxu0
      %4228 = vmatprep.mubr.bf16.mxu0 %v3578
      %4229 = vmatmul.mubr.bf16.gmra.mrb[0].mxu0 %v3546
      %v4230 = vpop.f32.mrb[0].mxu0
      %v4231 = vadd.f32 %v4166, %v4230
      %v4232 = vpop.f32.mrb[0].mxu0
      %v4233 = vpop.f32.mrb[0].mxu0
      %v4234 = vadd.f32 %v4169, %v4233
      %v4235 = vpop.f32.mrb[0].mxu0
      %4236 = vmatprep.mubr.bf16.mxu0 %v3581
      %4237 = vmatmul.mubr.bf16.gmra.mrb[0].mxu0 %v3549
      %v4238 = vpop.f32.mrb[0].mxu0
      %v4239 = vadd.f32 %v4174, %v4238
      %v4240 = vpop.f32.mrb[0].mxu0
      %v4241 = vpop.f32.mrb[0].mxu0
      %v4242 = vadd.f32 %v4177, %v4241
      %v4243 = vpop.f32.mrb[0].mxu0
      %4244 = vdwg.mxu0
      %4245 = vmatprep.subr.bf16.mxu0 0
      %4246 = vmatpush1.bf16.msra.mxu0 %v3982
      %4247 = vmatprep.subr.bf16.mxu0 0
      %4248 = vmatpush1.bf16.msra.mxu0 %v3983
      %4249 = vmatprep.subr.bf16.mxu0 0
      %4250 = vmatpush1.bf16.msra.mxu0 %v3984
      %4251 = vmatprep.subr.bf16.mxu0 0
      %4252 = vmatpush1.bf16.msra.mxu0 %v3985
      %4253 = vmatprep.subr.bf16.mxu0 0
      %4254 = vmatpush1.bf16.msra.mxu0 %v3986
      %4255 = vmatprep.subr.bf16.mxu0 0
      %4256 = vmatpush1.bf16.msra.mxu0 %v3987
      %4257 = vmatprep.subr.bf16.mxu0 0
      %4258 = vmatpush1.bf16.msra.mxu0 0
      %4259 = vmatprep.subr.bf16.mxu0 0
      %4260 = vmatpush1.bf16.msra.mxu0 0
      %4261 = vmatprep.subr.bf16.mxu0 0
      %4262 = vmatpush1.bf16.msra.mxu0 0
      %4263 = vmatprep.subr.bf16.mxu0 0
      %4264 = vmatpush1.bf16.msra.mxu0 0
      %4265 = vmatprep.subr.bf16.mxu0 0
      %4266 = vmatpush1.bf16.msra.mxu0 0
      %4267 = vmatprep.subr.bf16.mxu0 0
      %4268 = vmatpush1.bf16.msra.mxu0 0
      %4269 = vmatprep.subr.bf16.mxu0 0
      %4270 = vmatpush1.bf16.msra.mxu0 0
      %4271 = vmatprep.subr.bf16.mxu0 0
      %4272 = vmatpush1.bf16.msra.mxu0 0
      %4273 = vmatprep.subr.bf16.mxu0 0
      %4274 = vmatpush1.bf16.msra.mxu0 0
      %4275 = vmatprep.subr.bf16.mxu0 0
      %4276 = vmatpush1.bf16.msra.mxu0 0
      %4277 = vmatprep.mubr.bf16.mxu0 0
      %4278 = vmatmul.mubr.bf16.gmra.mrb[0].mxu0 %v4042
      %v4279 = vpop.f32.mrb[0].mxu0
      %v4280 = vadd.f32 %v4215, %v4279
      %v4281 = vpop.f32.mrb[0].mxu0
      %v4282 = vpop.f32.mrb[0].mxu0
      %v4283 = vadd.f32 %v4218, %v4282
      %v4284 = vpop.f32.mrb[0].mxu0
      %4285 = vmatprep.mubr.bf16.mxu0 0
      %4286 = vmatmul.mubr.bf16.gmra.mrb[0].mxu0 %v4044
      %v4287 = vpop.f32.mrb[0].mxu0
      %v4288 = vadd.f32 %v4223, %v4287
      %v4289 = vpop.f32.mrb[0].mxu0
      %v4290 = vpop.f32.mrb[0].mxu0
      %v4291 = vadd.f32 %v4226, %v4290
      %v4292 = vpop.f32.mrb[0].mxu0
      %4293 = vmatprep.mubr.bf16.mxu0 0
      %4294 = vmatmul.mubr.bf16.gmra.mrb[0].mxu0 %v4046
      %v4295 = vpop.f32.mrb[0].mxu0
      %v4296 = vadd.f32 %v4231, %v4295
      %v4297 = vpop.f32.mrb[0].mxu0
      %v4298 = vpop.f32.mrb[0].mxu0
      %v4299 = vadd.f32 %v4234, %v4298
      %v4300 = vpop.f32.mrb[0].mxu0
      %4301 = vmatprep.mubr.bf16.mxu0 0
      %4302 = vmatmul.mubr.bf16.gmra.mrb[0].mxu0 %v4048
      %v4303 = vpop.f32.mrb[0].mxu0
      %v4304 = vadd.f32 %v4239, %v4303
      %v4305 = vpop.f32.mrb[0].mxu0
      %v4306 = vpop.f32.mrb[0].mxu0
      %v4307 = vadd.f32 %v4242, %v4306
      %v4308 = vpop.f32.mrb[0].mxu0
      %4309 = vdwg.mxu0
      %v4310 = vld [vmem:[%s452] sm:$0x3]
      %v4311 = vsel %vm3168, %v4280, 0.0
      %v4312 = vsel %vm3168, %v4283, 0.0
      %v4313 = vadd.f32 %v4311, %v4312
      %v4314 = vsel %vm3168, %v4288, 0.0
      %v4315 = vadd.f32 %v4313, %v4314
      %v4316 = vsel %vm3168, %v4291, 0.0
      %v4317 = vadd.f32 %v4315, %v4316
      %v4318 = vsel %vm3168, %v4296, 0.0
      %v4319 = vadd.f32 %v4317, %v4318
      %v4320 = vsel %vm3168, %v4299, 0.0
      %v4321 = vadd.f32 %v4319, %v4320
      %v4322 = vsel %vm3168, %v4304, 0.0
      %v4323 = vadd.f32 %v4321, %v4322
      %v4324 = vsel %vm3168, %v4307, 0.0
      %v4325 = vadd.f32 %v4323, %v4324
      %v4326 = vrot.slane %v4325, 4
      %v4327 = vadd.f32 %v4325, %v4326
      %v4328 = vrot.slane %v4327, 2
      %v4329 = vadd.f32 %v4327, %v4328
      %v4330 = vrot.slane %v4329, 1
      %v4331 = vadd.f32 %v4329, %v4330
      %v4332 = vmul.f32 %v4280, %v4280
      %v4333 = vmul.f32 %v4283, %v4283
      %v4334 = vmul.f32 %v4288, %v4288
      %v4335 = vmul.f32 %v4291, %v4291
      %v4336 = vmul.f32 %v4296, %v4296
      %v4337 = vmul.f32 %v4299, %v4299
      %v4338 = vmul.f32 %v4304, %v4304
      %v4339 = vmul.f32 %v4307, %v4307
      %v4340 = vsel %vm3168, %v4332, 0.0
      %v4341 = vsel %vm3168, %v4333, 0.0
      %v4342 = vadd.f32 %v4340, %v4341
      %v4343 = vsel %vm3168, %v4334, 0.0
      %v4344 = vadd.f32 %v4342, %v4343
      %v4345 = vsel %vm3168, %v4335, 0.0
      %v4346 = vadd.f32 %v4344, %v4345
      %v4347 = vsel %vm3168, %v4336, 0.0
      %v4348 = vadd.f32 %v4346, %v4347
      %v4349 = vsel %vm3168, %v4337, 0.0
      %v4350 = vadd.f32 %v4348, %v4349
      %v4351 = vsel %vm3168, %v4338, 0.0
      %v4352 = vadd.f32 %v4350, %v4351
      %v4353 = vsel %vm3168, %v4339, 0.0
      %v4354 = vadd.f32 %v4352, %v4353
      %v4355 = vrot.slane %v4354, 4
      %v4356 = vadd.f32 %v4354, %v4355
      %v4357 = vrot.slane %v4356, 2
      %v4358 = vadd.f32 %v4356, %v4357
      %v4359 = vrot.slane %v4358, 1
      %v4360 = vadd.f32 %v4358, %v4359
      %vm4361 = vcmask 1040384
      %v4362 = vsel %vm4361, %v4331, %v4360
      %v4363 = vadd.f32 %v4310, %v4362
      %vm4364 = vcmask 254976
      %4365 = vst.msk [vmem:[%s452] sm:$0x3] %vm4364, %v4363
      %v4366 = vpack.c.bf16 %v4283, %v4280
      %v4367 = vpack.c.bf16 %v4291, %v4288
      %v4368 = vpack.c.bf16 %v4299, %v4296
      %v4369 = vpack.c.bf16 %v4307, %v4304
      %v4374 = vunpack.c.l.b16 %v4366
      %v4375 = vunpack.c.h.b16 %v4366
      %v4376 = vunpack.c.l.b16 %v4367
      %v4377 = vunpack.c.h.b16 %v4367
      %v4378 = vunpack.c.l.b16 %v4368
      %v4379 = vunpack.c.h.b16 %v4368
      %v4380 = vunpack.c.l.b16 %v4369
      %v4381 = vunpack.c.h.b16 %v4369
      %v4382 = vpack.c.b16 %v4374, %v4374
      %v4383 = vpack.c.b16 %v4375, %v4375
      %v4384 = vpack.c.b16 %v4376, %v4376
      %v4385 = vpack.c.b16 %v4377, %v4377
      %v4386 = vpack.c.b16 %v4378, %v4378
      %v4387 = vpack.c.b16 %v4379, %v4379
      %v4388 = vpack.c.b16 %v4380, %v4380
      %v4389 = vpack.c.b16 %v4381, %v4381
      %vm4398 = vcmask 257024
      %4399 = vst.msk [vmem:[%s448] sm:$0xf] %vm4398, %v4382
      %4400 = vst.msk [vmem:[%s448 + $0x4] sm:$0xf] %vm4398, %v4383
      %4401 = vst.msk [vmem:[%s448 + $0x8] sm:$0xf] %vm4398, %v4384
      %4402 = vst.msk [vmem:[%s448 + $0xc] sm:$0xf] %vm4398, %v4385
      %4403 = vst.msk [vmem:[%s448 + $0x10] sm:$0xf] %vm4398, %v4386
      %4404 = vst.msk [vmem:[%s448 + $0x14] sm:$0xf] %vm4398, %v4387
      %4405 = vst.msk [vmem:[%s448 + $0x18] sm:$0xf] %vm4398, %v4388
      %4406 = vst.msk [vmem:[%s448 + $0x1c] sm:$0xf] %vm4398, %v4389
      %p4407 = scmp.lt.s32.totalorder %s23, 1
      %s4408 = scalar_select %p4407, %s23, 1
      %p4409 = scmp.lt.s32.totalorder %s24, 3
      %s4410 = scalar_select %p4409, %s24, 3
      %s4411 = smul.addr %s4410, 8
      %s4412 = smul.addr %s4408, 32
      %s4413 = sadd.s32 %s4411, %s4412
      %s4414 = smul.addr %s4413, 4
      %s4415 = scalar_lea.vmem %s6, %s4414
      %p4416 = scmp.lt.s32.totalorder %s23, 1
      %s4417 = scalar_select %p4416, %s23, 1
      %s4418 = smul.addr %s4417, 2
      %s4419 = scalar_lea.vmem %s7, %s4418
      // Predicated region
      $region49: #{resblock3d_adaptive_forward.4} parent=43 // pred_check
        %p4420 = pneg %p215
      $region50: #{resblock3d_adaptive_forward.4} parent=43 // pred_check_branch
        %4422 = sbr.rel (%p4420) target = $region52
      $region51: #{resblock3d_adaptive_forward.4} parent=43 // pred_region
        _
      $region52: #{resblock3d_adaptive_forward.4} parent=43 // pred_fallthru
        _
      // Predicated region
      $region53: #{resblock3d_adaptive_forward.4} parent=43 // pred_check
        %p4423 = pneg %p241
      $region54: #{resblock3d_adaptive_forward.4} parent=43 // pred_check_branch
        %4425 = sbr.rel (%p4423) target = $region56
      $region55: #{resblock3d_adaptive_forward.4} parent=43 // pred_region
        _
      $region56: #{resblock3d_adaptive_forward.4} parent=43 // pred_fallthru
        _
    $region44: #{resblock3d_adaptive_forward.4} parent=5 // pred_fallthru
      _
    %p4426 = scmp.le.s32.totalorder 2, %s14
    // Predicated region
    $region57: #{resblock3d_adaptive_forward.4} parent=5 // pred_check
      %p4427 = pneg %p4426
    $region58: #{resblock3d_adaptive_forward.4} parent=5 // pred_check_branch
      %4429 = sbr.rel (%p4427) target = $region60
    $region59: #{resblock3d_adaptive_forward.4} parent=5 // pred_region
      %s4430 = ssub.s32 %s14, 2
      // Predicated region
      $region61: #{resblock3d_adaptive_forward.4} parent=59 // pred_check
        %p4431 = pneg %p221
      $region62: #{resblock3d_adaptive_forward.4} parent=59 // pred_check_branch
        %4433 = sbr.rel (%p4431) target = $region64
      $region63: #{resblock3d_adaptive_forward.4} parent=59 // pred_region
        %p4434 = scmp.lt.s32.totalorder %s25, 1
        %s4435 = scalar_select %p4434, %s25, 1
        %p4436 = scmp.lt.s32.totalorder %s26, 3
        %s4437 = scalar_select %p4436, %s26, 3
        %s4438 = smul.addr %s4437, 8
        %s4439 = smul.addr %s4435, 32
        %s4440 = sadd.s32 %s4438, %s4439
        %s4441 = smul.addr %s4440, 4
        %s4442 = scalar_lea.vmem %s6, %s4441
      $region64: #{resblock3d_adaptive_forward.4} parent=59 // pred_fallthru
        _
      // Predicated region
      $region65: #{resblock3d_adaptive_forward.4} parent=59 // pred_check
        %p4443 = pneg %p247
      $region66: #{resblock3d_adaptive_forward.4} parent=59 // pred_check_branch
        %4445 = sbr.rel (%p4443) target = $region68
      $region67: #{resblock3d_adaptive_forward.4} parent=59 // pred_region
        %p4446 = scmp.lt.s32.totalorder %s25, 1
        %s4447 = scalar_select %p4446, %s25, 1
        %s4448 = smul.addr %s4447, 2
        %s4449 = scalar_lea.vmem %s7, %s4448
      $region68: #{resblock3d_adaptive_forward.4} parent=59 // pred_fallthru
        _
    $region60: #{resblock3d_adaptive_forward.4} parent=5 // pred_fallthru
      _
  $region6: #{resblock3d_adaptive_forward.4} parent=0 // loop_footer
    %s18 = sadd.s32 1, %s14
  $region7: #{resblock3d_adaptive_forward.4} parent=0 // loop_footer_branch
    %13 = sbr.rel target = $region3
  $region8: #{resblock3d_adaptive_forward.4} parent=0 // loop_exit
    _

</llo_original>
